<compile_context>
chip_gen: v6e
topology: v6e:2x2x1
jax: 0.10.0
libtpu: 0.0.40
codegen_flags: <defaults>
</compile_context>

<pallas_src>
import functools

import jax
import jax.numpy as jnp
from jax.experimental import pallas as pl
from jax.experimental.pallas import tpu as pltpu

_NEG = -1e30  # bias for padded fc2 columns -> exp() underflows to 0 in the softmax


def _round_up(x, m):
    return (x + m - 1) // m * m


# ------------------ Kernel A: Conv2d(1,32,5x5) + ReLU + MaxPool2d(2x2) ------------------
# patches block: (BT, 576, 32) bf16.  Row index inside an image = slot*144 + (ph*12+pw),
# where slot = dh*2+dw enumerates the 2x2 maxpool window and (ph,pw) is the pooled pixel.
# Columns are the 25 conv taps (kh*5+kw), zero-padded to 32.
def conv_pool_kernel(p_ref, wc_ref, bc_ref, o_ref):
    bt = p_ref.shape[0]
    p2 = p_ref[...].reshape(bt * 576, 32)  # free leading-dim merge (576 % 16 == 0)
    conv = jnp.dot(p2, wc_ref[...], preferred_element_type=jnp.float32)
    conv = jnp.maximum(conv + bc_ref[...], 0.0)  # bias + ReLU
    conv3 = conv.reshape(bt, 576, 32)            # free leading-dim split
    # MaxPool2d((2,2)): max over the 4 pool-window slots (contiguous 144-row slabs)
    pooled = jnp.maximum(
        jnp.maximum(conv3[:, 0:144], conv3[:, 144:288]),
        jnp.maximum(conv3[:, 288:432], conv3[:, 432:576]),
    )
    o_ref[...] = pooled.astype(o_ref.dtype)


def conv_relu_pool(patches, wc, bc, bt):
    n = patches.shape[0]
    cost = pl.CostEstimate(
        flops=2 * n * 576 * 32 * 32,
        transcendentals=0,
        bytes_accessed=patches.size * 2 + n * 144 * 32 * 2 + wc.size * 2 + bc.size * 4,
    )
    return pl.pallas_call(
        conv_pool_kernel,
        out_shape=jax.ShapeDtypeStruct((n, 144, 32), jnp.bfloat16),
        grid_spec=pltpu.PrefetchScalarGridSpec(
            num_scalar_prefetch=0,
            grid=(n // bt,),
            in_specs=[
                pl.BlockSpec((bt, 576, 32), lambda i: (i, 0, 0)),
                pl.BlockSpec((32, 32), lambda i: (0, 0)),  # resident across tiles
                pl.BlockSpec((1, 32), lambda i: (0, 0)),   # resident across tiles
            ],
            out_specs=pl.BlockSpec((bt, 144, 32), lambda i: (i, 0, 0)),
        ),
        compiler_params=pltpu.CompilerParams(dimension_semantics=("parallel",)),
        cost_estimate=cost,
    )(patches, wc, bc)


# ------------- Kernel B: Linear(4608,512) + ReLU + Dropout(id) + Linear(512,62pad128) + Softmax -------------
def mlp_softmax_kernel(x_ref, w1_ref, b1_ref, w2_ref, b2_ref, o_ref):
    h = jnp.dot(x_ref[...], w1_ref[...], preferred_element_type=jnp.float32) + b1_ref[...]
    h = jnp.maximum(h, 0.0)  # ReLU
    # TODO(synk): nn.Dropout(0.5) is treated as identity (inference semantics).
    logits = jnp.dot(h.astype(jnp.bfloat16), w2_ref[...],
                     preferred_element_type=jnp.float32) + b2_ref[...]
    # Softmax over the (lane-dense, 128-wide) class axis; padded columns carry -1e30 bias.
    m = jnp.max(logits, axis=-1, keepdims=True)
    e = jnp.exp(logits - m)
    o_ref[...] = e / jnp.sum(e, axis=-1, keepdims=True)


def mlp_softmax(feat, w1, b1, w2, b2, bt):
    n = feat.shape[0]
    cost = pl.CostEstimate(
        flops=2 * n * 4608 * 512 + 2 * n * 512 * 128,
        transcendentals=n * 128,
        bytes_accessed=(feat.size * 2 + w1.size * 2 + w2.size * 2
                        + b1.size * 4 + b2.size * 4 + n * 128 * 4),
    )
    return pl.pallas_call(
        mlp_softmax_kernel,
        out_shape=jax.ShapeDtypeStruct((n, 128), jnp.float32),
        grid_spec=pltpu.PrefetchScalarGridSpec(
            num_scalar_prefetch=0,
            grid=(n // bt,),
            in_specs=[
                pl.BlockSpec((bt, 4608), lambda i: (i, 0)),
                pl.BlockSpec((4608, 512), lambda i: (0, 0)),  # w1 resident across tiles
                pl.BlockSpec((1, 512), lambda i: (0, 0)),
                pl.BlockSpec((512, 128), lambda i: (0, 0)),   # w2 resident across tiles
                pl.BlockSpec((1, 128), lambda i: (0, 0)),
            ],
            out_specs=pl.BlockSpec((bt, 128), lambda i: (i, 0)),
        ),
        compiler_params=pltpu.CompilerParams(
            dimension_semantics=("parallel",),
            vmem_limit_bytes=48 * 1024 * 1024,  # portable to v7x's 64 MiB VMEM
        ),
        cost_estimate=cost,
    )(feat, w1, b1, w2, b2)


# ------------------------------- glue (plain JAX) -------------------------------
def im2col_pool_slots(x):
    """x: (N, 28, 28) f32 -> (N, 576, 32) bf16 patch matrix (pool-slot-major rows,
    25 taps zero-padded to 32 columns)."""
    n = x.shape[0]
    slots = []
    for dh in range(2):
        for dw in range(2):
            cols = []
            for kh in range(5):
                for kw in range(5):
                    # conv output pixel (2*ph+dh, 2*pw+dw), tap (kh, kw)
                    patch = x[:, dh + kh: dh + kh + 24: 2, dw + kw: dw + kw + 24: 2]
                    cols.append(patch.reshape(n, 144))  # (N, 144), ph*12+pw order
            slots.append(jnp.stack(cols, axis=-1))  # (N, 144, 25)
    p = jnp.concatenate(slots, axis=1)  # (N, 576, 25)
    return jnp.pad(p, ((0, 0), (0, 0), (0, 7))).astype(jnp.bfloat16)


def prepare_params(params):
    """One-time parameter preparation (hoisted out of the forward path)."""
    # Conv weight (32,1,5,5) -> (32taps_padded, 32ch) bf16, rows ordered kh*5+kw
    wc = params["conv_w"].reshape(32, 25).T
    wc = jnp.pad(wc, ((0, 7), (0, 0))).astype(jnp.bfloat16)          # (32, 32)
    bc = params["conv_b"].reshape(1, 32).astype(jnp.float32)
    # fc1 weight: PyTorch CHW flatten (c*144 + ph*12 + pw) -> our HWC flatten (p*32 + c)
    w1 = params["fc1_w"].reshape(512, 32, 12, 12).transpose(2, 3, 1, 0).reshape(4608, 512)
    w1 = w1.astype(jnp.bfloat16)
    b1 = params["fc1_b"].reshape(1, 512).astype(jnp.float32)
    # fc2: pad 62 -> 128 output columns (lane-dense stores); padded bias = -1e30 so the
    # extra columns contribute nothing to the softmax denominator.
    w2 = jnp.pad(params["fc2_w"].T, ((0, 0), (0, 128 - 62))).astype(jnp.bfloat16)  # (512,128)
    b2 = jnp.pad(params["fc2_b"].astype(jnp.float32), (0, 128 - 62),
                 constant_values=_NEG).reshape(1, 128)
    return {"wc": wc, "bc": bc, "w1": w1, "b1": b1, "w2": w2, "b2": b2}


@jax.jit
def neural_network_forward(x, prepared):
    """Equivalent of NeuralNetwork.forward. x: anything with 784 elements per image."""
    n = x.size // 784
    ximg = x.reshape(n, 28, 28).astype(jnp.float32)  # == reshape(-1, 1, 28, 28), C=1 squeezed

    # Batch tiling: small batches pad to a multiple of 8, big batches tile by 128.
    bt_b = 128 if n >= 128 else _round_up(n, 8)
    n_pad = _round_up(n, bt_b)
    bt_a = 8  # n_pad is always a multiple of 8

    patches = im2col_pool_slots(ximg)
    if n_pad != n:
        patches = jnp.pad(patches, ((0, n_pad - n), (0, 0), (0, 0)))

    pooled = conv_relu_pool(patches, prepared["wc"], prepared["bc"], bt_a)  # (n_pad,144,32) bf16
    feat = pooled.reshape(n_pad, 4608)  # HWC flatten (p*32 + c), contiguous -> free in XLA

    probs = mlp_softmax(feat, prepared["w1"], prepared["b1"],
                        prepared["w2"], prepared["b2"], bt_b)  # (n_pad, 128) f32
    return probs[:n, :62]


if __name__ == "__main__":
    key = jax.random.PRNGKey(0)
    k1, k2, k3, k4, k5, k6, kx = jax.random.split(key, 7)
    params = {
        "conv_w": 0.10 * jax.random.normal(k1, (32, 1, 5, 5), jnp.float32),
        "conv_b": 0.10 * jax.random.normal(k2, (32,), jnp.float32),
        "fc1_w": 0.02 * jax.random.normal(k3, (512, 4608), jnp.float32),
        "fc1_b": 0.02 * jax.random.normal(k4, (512,), jnp.float32),
        "fc2_w": 0.05 * jax.random.normal(k5, (62, 512), jnp.float32),
        "fc2_b": 0.05 * jax.random.normal(k6, (62,), jnp.float32),
    }
    prepared = prepare_params(params)  # done once, outside the forward path
    x = jax.random.normal(kx, (2, 784), jnp.float32)  # batch=2, 28*28 per image

    y = neural_network_forward(x, prepared)
    y = jax.block_until_ready(y)
    assert y.shape == (2, 62) and y.dtype == jnp.float32
    assert bool(jnp.all(jnp.isfinite(y)))
    print("KERNEL_OK")
</pallas_src>

<mosaic_0001>
module attributes {stable_mosaic.version = 11 : i64} {
  func.func @conv_pool_kernel(%arg0: i32, %arg1: memref<8x576x32xbf16, #tpu.memory_space<vmem>>, %arg2: memref<32x32xbf16, #tpu.memory_space<vmem>>, %arg3: memref<1x32xf32, #tpu.memory_space<vmem>>, %arg4: memref<8x144x32xbf16, #tpu.memory_space<vmem>>) attributes {dimension_semantics = [#tpu.dimension_semantics<parallel>], iteration_bounds = array<i64: 1>, scalar_prefetch = 0 : i64, scratch_operands = 0 : i64, tpu.core_type = #tpu.core_type<tc>, window_params = [{transform_indices = @transform_0, window_bounds = array<i64: 8, 576, 32>}, {pipeline_mode = #tpu.pipeline_mode<synchronous>, transform_indices = @transform_1, window_bounds = array<i64: 32, 32>}, {pipeline_mode = #tpu.pipeline_mode<synchronous>, transform_indices = @transform_2, window_bounds = array<i64: 1, 32>}, {transform_indices = @transform_3, window_bounds = array<i64: 8, 144, 32>}]} {
    %c0 = arith.constant 0 : index
    %c0_0 = arith.constant 0 : index
    %c0_1 = arith.constant 0 : index
    %0 = vector.load %arg1[%c0, %c0_0, %c0_1] : memref<8x576x32xbf16, #tpu.memory_space<vmem>>, vector<8x576x32xbf16>
    %1 = vector.shape_cast %0 : vector<8x576x32xbf16> to vector<4608x32xbf16>
    %c0_2 = arith.constant 0 : index
    %c0_3 = arith.constant 0 : index
    %2 = vector.load %arg2[%c0_2, %c0_3] : memref<32x32xbf16, #tpu.memory_space<vmem>>, vector<32x32xbf16>
    %cst = arith.constant dense<0.000000e+00> : vector<4608x32xf32>
    %3 = tpu.matmul %1, %2, %cst {dimension_numbers = #tpu.dot_dimension_numbers<[1], [0], [0], [1], [0, 0, 1, 1], [], []>} : vector<4608x32xbf16>, vector<32x32xbf16>, vector<4608x32xf32> -> vector<4608x32xf32>
    %c0_4 = arith.constant 0 : index
    %c0_5 = arith.constant 0 : index
    %4 = vector.load %arg3[%c0_4, %c0_5] : memref<1x32xf32, #tpu.memory_space<vmem>>, vector<1x32xf32>
    %5 = vector.broadcast %4 : vector<1x32xf32> to vector<4608x32xf32>
    %6 = arith.addf %3, %5 : vector<4608x32xf32>
    %cst_6 = arith.constant 0.000000e+00 : f32
    %7 = vector.broadcast %cst_6 : f32 to vector<4608x32xf32>
    %8 = arith.maximumf %6, %7 : vector<4608x32xf32>
    %9 = vector.shape_cast %8 : vector<4608x32xf32> to vector<8x576x32xf32>
    %10 = vector.extract_strided_slice %9 {offsets = [0, 0, 0], sizes = [8, 144, 32], strides = [1, 1, 1]} : vector<8x576x32xf32> to vector<8x144x32xf32>
    %11 = vector.extract_strided_slice %9 {offsets = [0, 144, 0], sizes = [8, 144, 32], strides = [1, 1, 1]} : vector<8x576x32xf32> to vector<8x144x32xf32>
    %12 = arith.maximumf %10, %11 : vector<8x144x32xf32>
    %13 = vector.extract_strided_slice %9 {offsets = [0, 288, 0], sizes = [8, 144, 32], strides = [1, 1, 1]} : vector<8x576x32xf32> to vector<8x144x32xf32>
    %14 = vector.extract_strided_slice %9 {offsets = [0, 432, 0], sizes = [8, 144, 32], strides = [1, 1, 1]} : vector<8x576x32xf32> to vector<8x144x32xf32>
    %15 = arith.maximumf %13, %14 : vector<8x144x32xf32>
    %16 = arith.maximumf %12, %15 : vector<8x144x32xf32>
    %17 = arith.truncf %16 : vector<8x144x32xf32> to vector<8x144x32xbf16>
    %c0_7 = arith.constant 0 : index
    %c0_8 = arith.constant 0 : index
    %c0_9 = arith.constant 0 : index
    %18 = vector.load %arg4[%c0_7, %c0_8, %c0_9] : memref<8x144x32xbf16, #tpu.memory_space<vmem>>, vector<8x144x32xbf16>
    tpu.vector_store %arg4[%c0_7, %c0_8, %c0_9], %17 {strides = array<i32>} : memref<8x144x32xbf16, #tpu.memory_space<vmem>>, vector<8x144x32xbf16>,
    return
  }
  func.func @transform_0(%arg0: i32) -> (i32, i32, i32) {
    %c0_i32 = arith.constant 0 : i32
    %c0_i32_0 = arith.constant 0 : i32
    %c0_i32_1 = arith.constant 0 : i32
    return %arg0, %c0_i32, %c0_i32_0 : i32, i32, i32
  }
  func.func @transform_1(%arg0: i32) -> (i32, i32) {
    %c0_i32 = arith.constant 0 : i32
    %c0_i32_0 = arith.constant 0 : i32
    %c0_i32_1 = arith.constant 0 : i32
    return %c0_i32, %c0_i32_0 : i32, i32
  }
  func.func @transform_2(%arg0: i32) -> (i32, i32) {
    %c0_i32 = arith.constant 0 : i32
    %c0_i32_0 = arith.constant 0 : i32
    %c0_i32_1 = arith.constant 0 : i32
    return %c0_i32, %c0_i32_0 : i32, i32
  }
  func.func @transform_3(%arg0: i32) -> (i32, i32, i32) {
    %c0_i32 = arith.constant 0 : i32
    %c0_i32_0 = arith.constant 0 : i32
    %c0_i32_1 = arith.constant 0 : i32
    return %arg0, %c0_i32, %c0_i32_0 : i32, i32, i32
  }
}

module attributes {stable_mosaic.version = 11 : i64} {
  func.func @mlp_softmax_kernel(%arg0: i32, %arg1: memref<8x4608xbf16, #tpu.memory_space<vmem>>, %arg2: memref<4608x512xbf16, #tpu.memory_space<vmem>>, %arg3: memref<1x512xf32, #tpu.memory_space<vmem>>, %arg4: memref<512x128xbf16, #tpu.memory_space<vmem>>, %arg5: memref<1x128xf32, #tpu.memory_space<vmem>>, %arg6: memref<8x128xf32, #tpu.memory_space<vmem>>) attributes {dimension_semantics = [#tpu.dimension_semantics<parallel>], iteration_bounds = array<i64: 1>, scalar_prefetch = 0 : i64, scratch_operands = 0 : i64, tpu.core_type = #tpu.core_type<tc>, window_params = [{transform_indices = @transform_0, window_bounds = array<i64: 8, 4608>}, {pipeline_mode = #tpu.pipeline_mode<synchronous>, transform_indices = @transform_1, window_bounds = array<i64: 4608, 512>}, {pipeline_mode = #tpu.pipeline_mode<synchronous>, transform_indices = @transform_2, window_bounds = array<i64: 1, 512>}, {pipeline_mode = #tpu.pipeline_mode<synchronous>, transform_indices = @transform_3, window_bounds = array<i64: 512, 128>}, {pipeline_mode = #tpu.pipeline_mode<synchronous>, transform_indices = @transform_4, window_bounds = array<i64: 1, 128>}, {transform_indices = @transform_5, window_bounds = array<i64: 8, 128>}]} {
    %c0 = arith.constant 0 : index
    %c0_0 = arith.constant 0 : index
    %0 = vector.load %arg1[%c0, %c0_0] : memref<8x4608xbf16, #tpu.memory_space<vmem>>, vector<8x4608xbf16>
    %c0_1 = arith.constant 0 : index
    %c0_2 = arith.constant 0 : index
    %1 = vector.load %arg2[%c0_1, %c0_2] : memref<4608x512xbf16, #tpu.memory_space<vmem>>, vector<4608x512xbf16>
    %cst = arith.constant dense<0.000000e+00> : vector<8x512xf32>
    %2 = tpu.matmul %0, %1, %cst {dimension_numbers = #tpu.dot_dimension_numbers<[1], [0], [0], [1], [0, 0, 1, 1], [], []>} : vector<8x4608xbf16>, vector<4608x512xbf16>, vector<8x512xf32> -> vector<8x512xf32>
    %c0_3 = arith.constant 0 : index
    %c0_4 = arith.constant 0 : index
    %3 = vector.load %arg3[%c0_3, %c0_4] : memref<1x512xf32, #tpu.memory_space<vmem>>, vector<1x512xf32>
    %4 = vector.broadcast %3 : vector<1x512xf32> to vector<8x512xf32>
    %5 = arith.addf %2, %4 : vector<8x512xf32>
    %cst_5 = arith.constant 0.000000e+00 : f32
    %6 = vector.broadcast %cst_5 : f32 to vector<8x512xf32>
    %7 = arith.maximumf %5, %6 : vector<8x512xf32>
    %8 = arith.truncf %7 : vector<8x512xf32> to vector<8x512xbf16>
    %c0_6 = arith.constant 0 : index
    %c0_7 = arith.constant 0 : index
    %9 = vector.load %arg4[%c0_6, %c0_7] : memref<512x128xbf16, #tpu.memory_space<vmem>>, vector<512x128xbf16>
    %cst_8 = arith.constant dense<0.000000e+00> : vector<8x128xf32>
    %10 = tpu.matmul %8, %9, %cst_8 {dimension_numbers = #tpu.dot_dimension_numbers<[1], [0], [0], [1], [0, 0, 1, 1], [], []>} : vector<8x512xbf16>, vector<512x128xbf16>, vector<8x128xf32> -> vector<8x128xf32>
    %c0_9 = arith.constant 0 : index
    %c0_10 = arith.constant 0 : index
    %11 = vector.load %arg5[%c0_9, %c0_10] : memref<1x128xf32, #tpu.memory_space<vmem>>, vector<1x128xf32>
    %12 = vector.broadcast %11 : vector<1x128xf32> to vector<8x128xf32>
    %13 = arith.addf %10, %12 : vector<8x128xf32>
    %cst_11 = arith.constant dense<0xFF800000> : vector<8xf32>
    %14 = vector.multi_reduction <maximumf>, %13, %cst_11 [1] : vector<8x128xf32> to vector<8xf32>
    %15 = vector.shape_cast %14 : vector<8xf32> to vector<8x1xf32>
    %16 = vector.broadcast %15 : vector<8x1xf32> to vector<8x128xf32>
    %17 = arith.subf %13, %16 : vector<8x128xf32>
    %18 = math.exp %17 : vector<8x128xf32>
    %cst_12 = arith.constant dense<0.000000e+00> : vector<8xf32>
    %19 = vector.multi_reduction <add>, %18, %cst_12 [1] : vector<8x128xf32> to vector<8xf32>
    %20 = vector.shape_cast %19 : vector<8xf32> to vector<8x1xf32>
    %21 = vector.broadcast %20 : vector<8x1xf32> to vector<8x128xf32>
    %22 = arith.divf %18, %21 : vector<8x128xf32>
    %c0_13 = arith.constant 0 : index
    %c0_14 = arith.constant 0 : index
    %23 = vector.load %arg6[%c0_13, %c0_14] : memref<8x128xf32, #tpu.memory_space<vmem>>, vector<8x128xf32>
    tpu.vector_store %arg6[%c0_13, %c0_14], %22 {strides = array<i32>} : memref<8x128xf32, #tpu.memory_space<vmem>>, vector<8x128xf32>,
    return
  }
  func.func @transform_0(%arg0: i32) -> (i32, i32) {
    %c0_i32 = arith.constant 0 : i32
    %c0_i32_0 = arith.constant 0 : i32
    return %arg0, %c0_i32 : i32, i32
  }
  func.func @transform_1(%arg0: i32) -> (i32, i32) {
    %c0_i32 = arith.constant 0 : i32
    %c0_i32_0 = arith.constant 0 : i32
    %c0_i32_1 = arith.constant 0 : i32
    return %c0_i32, %c0_i32_0 : i32, i32
  }
  func.func @transform_2(%arg0: i32) -> (i32, i32) {
    %c0_i32 = arith.constant 0 : i32
    %c0_i32_0 = arith.constant 0 : i32
    %c0_i32_1 = arith.constant 0 : i32
    return %c0_i32, %c0_i32_0 : i32, i32
  }
  func.func @transform_3(%arg0: i32) -> (i32, i32) {
    %c0_i32 = arith.constant 0 : i32
    %c0_i32_0 = arith.constant 0 : i32
    %c0_i32_1 = arith.constant 0 : i32
    return %c0_i32, %c0_i32_0 : i32, i32
  }
  func.func @transform_4(%arg0: i32) -> (i32, i32) {
    %c0_i32 = arith.constant 0 : i32
    %c0_i32_0 = arith.constant 0 : i32
    %c0_i32_1 = arith.constant 0 : i32
    return %c0_i32, %c0_i32_0 : i32, i32
  }
  func.func @transform_5(%arg0: i32) -> (i32, i32) {
    %c0_i32 = arith.constant 0 : i32
    %c0_i32_0 = arith.constant 0 : i32
    return %arg0, %c0_i32 : i32, i32
  }
}

</mosaic_0001>

<llo_original>
// kernel: neural_network_forward.2
$region0: #{neural_network_forward.2}
  #allocation0 [shape = 'u32[]', space=smem, size = 0x4, offset = 0x4, fixed_abs, tag = 'smem constant byte address 0x4 - core index']
  #allocation1 [shape = 'u32[144,128]{1,0:T(1,128)}', space=vmem, size = 0x12000, scoped, tag = 'internal scratch']
  %s0 = inlined_call_operand.vmem [shape: bf16[8,576,32], index: 0, kind: input, shape index: {}]
  %s1 = inlined_call_operand.hbm [shape: bf16[32,32], index: 1, kind: input, shape index: {}]
  %s2 = inlined_call_operand.hbm [shape: f32[1,32], index: 2, kind: input, shape index: {}]
  %s3 = inlined_call_operand.vmem [shape: bf16[8,144,32], index: 3, kind: output, shape index: {}]
  %s4 = sld [smem:[#allocation0]]
  $region30: #{neural_network_forward.2} parent=0
    _
  %s6 = ssub.s32 1, %s4
  %s7 = scalar_select 0, %s6, %s4
  $region1: #{neural_network_forward.2} parent=0
    #allocation2 [shape = 'u8[8192]{0}', space=vmem, size = 0x2000, scoped, tag = 'input window, operand 1, single buffered']
    #allocation3 [shape = 's32[1]{0}', space=sflag, size = 0x4, scoped, tag = 'scoped memory for neural_network_forward.2']
    #allocation4 [shape = 'u8[512]{0}', space=vmem, size = 0x400, scoped, tag = 'input window, operand 2, single buffered']
    #allocation5 [shape = 's32[1]{0}', space=sflag, size = 0x4, scoped, tag = 'scoped memory for neural_network_forward.2']
    %8 = vsyncpa [#allocation3], 0
    %9 = vsyncpa [#allocation5], 0
    // Predicated region
    $region2: #{neural_network_forward.2} parent=1 // pred_check
      _
    $region3: #{neural_network_forward.2} parent=1 // pred_check_branch
      %11 = sbr.rel (0) target = $region5
    $region4: #{neural_network_forward.2} parent=1 // pred_region
      _
    $region5: #{neural_network_forward.2} parent=1 // pred_fallthru
      _
    // Predicated region
    $region6: #{neural_network_forward.2} parent=1 // pred_check
      _
    $region7: #{neural_network_forward.2} parent=1 // pred_check_branch
      %13 = sbr.rel (0) target = $region9
    $region8: #{neural_network_forward.2} parent=1 // pred_region
      %s15 = ssub.s32 256, 256
      %16 = vsyncadd [#allocation3], %s15
      %s17 = sshll.u32 [#allocation2], 4
      %s18 = int_to_ptr.vmem [resolvable:$true] %s17
      %23 = dma.hbm_to_vmem [thread:$0]  %s1, 256, %s18, [#allocation3], 64, 64, 4
    $region9: #{neural_network_forward.2} parent=1 // pred_fallthru
      _
    // Predicated region
    $region10: #{neural_network_forward.2} parent=1 // pred_check
      _
    $region11: #{neural_network_forward.2} parent=1 // pred_check_branch
      %25 = sbr.rel (0) target = $region13
    $region12: #{neural_network_forward.2} parent=1 // pred_region
      %s27 = ssub.s32 16, 16
      %28 = vsyncadd [#allocation5], %s27
      %s30 = sshll.u32 [#allocation4], 4
      %s31 = int_to_ptr.vmem [resolvable:$true] %s30
      %33 = dma.hbm_to_vmem [thread:$0]  %s2, 16, %s31, [#allocation5]
    $region13: #{neural_network_forward.2} parent=1 // pred_fallthru
      _
    // Predicated region
    $region14: #{neural_network_forward.2} parent=1 // pred_check
      _
    $region15: #{neural_network_forward.2} parent=1 // pred_check_branch
      %35 = sbr.rel (0) target = $region17
    $region16: #{neural_network_forward.2} parent=1 // pred_region
      %36 = dma.done [#allocation3], 256
    $region17: #{neural_network_forward.2} parent=1 // pred_fallthru
      _
    // Predicated region
    $region18: #{neural_network_forward.2} parent=1 // pred_check
      _
    $region19: #{neural_network_forward.2} parent=1 // pred_check_branch
      %38 = sbr.rel (0) target = $region21
    $region20: #{neural_network_forward.2} parent=1 // pred_region
      %39 = dma.done [#allocation5], 16
    $region21: #{neural_network_forward.2} parent=1 // pred_fallthru
      _
    %v41 = vld [vmem:[%s0] sm:$0xf]
    %v42 = vld [vmem:[%s0 + $0x4] sm:$0xf]
    %v43 = vld [vmem:[%s0 + $0x8] sm:$0xf]
    %v44 = vld [vmem:[%s0 + $0xc] sm:$0xf]
    %v45 = vld [vmem:[%s0 + $0x10] sm:$0xf]
    %v46 = vld [vmem:[%s0 + $0x14] sm:$0xf]
    %v47 = vld [vmem:[%s0 + $0x18] sm:$0xf]
    %v48 = vld [vmem:[%s0 + $0x1c] sm:$0xf]
    %v49 = vld [vmem:[%s0 + $0x20] sm:$0xf]
    %v50 = vld [vmem:[%s0 + $0x24] sm:$0xf]
    %v51 = vld [vmem:[%s0 + $0x28] sm:$0xf]
    %v52 = vld [vmem:[%s0 + $0x2c] sm:$0xf]
    %v53 = vld [vmem:[%s0 + $0x30] sm:$0xf]
    %v54 = vld [vmem:[%s0 + $0x34] sm:$0xf]
    %v55 = vld [vmem:[%s0 + $0x38] sm:$0xf]
    %v56 = vld [vmem:[%s0 + $0x3c] sm:$0xf]
    %v57 = vld [vmem:[%s0 + $0x40] sm:$0xf]
    %v58 = vld [vmem:[%s0 + $0x44] sm:$0xf]
    %v59 = vld [vmem:[%s0 + $0x48] sm:$0xf]
    %v60 = vld [vmem:[%s0 + $0x4c] sm:$0xf]
    %v61 = vld [vmem:[%s0 + $0x50] sm:$0xf]
    %v62 = vld [vmem:[%s0 + $0x54] sm:$0xf]
    %v63 = vld [vmem:[%s0 + $0x58] sm:$0xf]
    %v64 = vld [vmem:[%s0 + $0x5c] sm:$0xf]
    %v65 = vld [vmem:[%s0 + $0x60] sm:$0xf]
    %v66 = vld [vmem:[%s0 + $0x64] sm:$0xf]
    %v67 = vld [vmem:[%s0 + $0x68] sm:$0xf]
    %v68 = vld [vmem:[%s0 + $0x6c] sm:$0xf]
    %v69 = vld [vmem:[%s0 + $0x70] sm:$0xf]
    %v70 = vld [vmem:[%s0 + $0x74] sm:$0xf]
    %v71 = vld [vmem:[%s0 + $0x78] sm:$0xf]
    %v72 = vld [vmem:[%s0 + $0x7c] sm:$0xf]
    %v73 = vld [vmem:[%s0 + $0x80] sm:$0xf]
    %v74 = vld [vmem:[%s0 + $0x84] sm:$0xf]
    %v75 = vld [vmem:[%s0 + $0x88] sm:$0xf]
    %v76 = vld [vmem:[%s0 + $0x8c] sm:$0xf]
    %v77 = vld [vmem:[%s0 + $0x90] sm:$0xf]
    %v78 = vld [vmem:[%s0 + $0x94] sm:$0xf]
    %v79 = vld [vmem:[%s0 + $0x98] sm:$0xf]
    %v80 = vld [vmem:[%s0 + $0x9c] sm:$0xf]
    %v81 = vld [vmem:[%s0 + $0xa0] sm:$0xf]
    %v82 = vld [vmem:[%s0 + $0xa4] sm:$0xf]
    %v83 = vld [vmem:[%s0 + $0xa8] sm:$0xf]
    %v84 = vld [vmem:[%s0 + $0xac] sm:$0xf]
    %v85 = vld [vmem:[%s0 + $0xb0] sm:$0xf]
    %v86 = vld [vmem:[%s0 + $0xb4] sm:$0xf]
    %v87 = vld [vmem:[%s0 + $0xb8] sm:$0xf]
    %v88 = vld [vmem:[%s0 + $0xbc] sm:$0xf]
    %v89 = vld [vmem:[%s0 + $0xc0] sm:$0xf]
    %v90 = vld [vmem:[%s0 + $0xc4] sm:$0xf]
    %v91 = vld [vmem:[%s0 + $0xc8] sm:$0xf]
    %v92 = vld [vmem:[%s0 + $0xcc] sm:$0xf]
    %v93 = vld [vmem:[%s0 + $0xd0] sm:$0xf]
    %v94 = vld [vmem:[%s0 + $0xd4] sm:$0xf]
    %v95 = vld [vmem:[%s0 + $0xd8] sm:$0xf]
    %v96 = vld [vmem:[%s0 + $0xdc] sm:$0xf]
    %v97 = vld [vmem:[%s0 + $0xe0] sm:$0xf]
    %v98 = vld [vmem:[%s0 + $0xe4] sm:$0xf]
    %v99 = vld [vmem:[%s0 + $0xe8] sm:$0xf]
    %v100 = vld [vmem:[%s0 + $0xec] sm:$0xf]
    %v101 = vld [vmem:[%s0 + $0xf0] sm:$0xf]
    %v102 = vld [vmem:[%s0 + $0xf4] sm:$0xf]
    %v103 = vld [vmem:[%s0 + $0xf8] sm:$0xf]
    %v104 = vld [vmem:[%s0 + $0xfc] sm:$0xf]
    %v105 = vld [vmem:[%s0 + $0x100] sm:$0xf]
    %v106 = vld [vmem:[%s0 + $0x104] sm:$0xf]
    %v107 = vld [vmem:[%s0 + $0x108] sm:$0xf]
    %v108 = vld [vmem:[%s0 + $0x10c] sm:$0xf]
    %v109 = vld [vmem:[%s0 + $0x110] sm:$0xf]
    %v110 = vld [vmem:[%s0 + $0x114] sm:$0xf]
    %v111 = vld [vmem:[%s0 + $0x118] sm:$0xf]
    %v112 = vld [vmem:[%s0 + $0x11c] sm:$0xf]
    %v113 = vld [vmem:[%s0 + $0x120] sm:$0xf]
    %v114 = vld [vmem:[%s0 + $0x124] sm:$0xf]
    %v115 = vld [vmem:[%s0 + $0x128] sm:$0xf]
    %v116 = vld [vmem:[%s0 + $0x12c] sm:$0xf]
    %v117 = vld [vmem:[%s0 + $0x130] sm:$0xf]
    %v118 = vld [vmem:[%s0 + $0x134] sm:$0xf]
    %v119 = vld [vmem:[%s0 + $0x138] sm:$0xf]
    %v120 = vld [vmem:[%s0 + $0x13c] sm:$0xf]
    %v121 = vld [vmem:[%s0 + $0x140] sm:$0xf]
    %v122 = vld [vmem:[%s0 + $0x144] sm:$0xf]
    %v123 = vld [vmem:[%s0 + $0x148] sm:$0xf]
    %v124 = vld [vmem:[%s0 + $0x14c] sm:$0xf]
    %v125 = vld [vmem:[%s0 + $0x150] sm:$0xf]
    %v126 = vld [vmem:[%s0 + $0x154] sm:$0xf]
    %v127 = vld [vmem:[%s0 + $0x158] sm:$0xf]
    %v128 = vld [vmem:[%s0 + $0x15c] sm:$0xf]
    %v129 = vld [vmem:[%s0 + $0x160] sm:$0xf]
    %v130 = vld [vmem:[%s0 + $0x164] sm:$0xf]
    %v131 = vld [vmem:[%s0 + $0x168] sm:$0xf]
    %v132 = vld [vmem:[%s0 + $0x16c] sm:$0xf]
    %v133 = vld [vmem:[%s0 + $0x170] sm:$0xf]
    %v134 = vld [vmem:[%s0 + $0x174] sm:$0xf]
    %v135 = vld [vmem:[%s0 + $0x178] sm:$0xf]
    %v136 = vld [vmem:[%s0 + $0x17c] sm:$0xf]
    %v137 = vld [vmem:[%s0 + $0x180] sm:$0xf]
    %v138 = vld [vmem:[%s0 + $0x184] sm:$0xf]
    %v139 = vld [vmem:[%s0 + $0x188] sm:$0xf]
    %v140 = vld [vmem:[%s0 + $0x18c] sm:$0xf]
    %v141 = vld [vmem:[%s0 + $0x190] sm:$0xf]
    %v142 = vld [vmem:[%s0 + $0x194] sm:$0xf]
    %v143 = vld [vmem:[%s0 + $0x198] sm:$0xf]
    %v144 = vld [vmem:[%s0 + $0x19c] sm:$0xf]
    %v145 = vld [vmem:[%s0 + $0x1a0] sm:$0xf]
    %v146 = vld [vmem:[%s0 + $0x1a4] sm:$0xf]
    %v147 = vld [vmem:[%s0 + $0x1a8] sm:$0xf]
    %v148 = vld [vmem:[%s0 + $0x1ac] sm:$0xf]
    %v149 = vld [vmem:[%s0 + $0x1b0] sm:$0xf]
    %v150 = vld [vmem:[%s0 + $0x1b4] sm:$0xf]
    %v151 = vld [vmem:[%s0 + $0x1b8] sm:$0xf]
    %v152 = vld [vmem:[%s0 + $0x1bc] sm:$0xf]
    %v153 = vld [vmem:[%s0 + $0x1c0] sm:$0xf]
    %v154 = vld [vmem:[%s0 + $0x1c4] sm:$0xf]
    %v155 = vld [vmem:[%s0 + $0x1c8] sm:$0xf]
    %v156 = vld [vmem:[%s0 + $0x1cc] sm:$0xf]
    %v157 = vld [vmem:[%s0 + $0x1d0] sm:$0xf]
    %v158 = vld [vmem:[%s0 + $0x1d4] sm:$0xf]
    %v159 = vld [vmem:[%s0 + $0x1d8] sm:$0xf]
    %v160 = vld [vmem:[%s0 + $0x1dc] sm:$0xf]
    %v161 = vld [vmem:[%s0 + $0x1e0] sm:$0xf]
    %v162 = vld [vmem:[%s0 + $0x1e4] sm:$0xf]
    %v163 = vld [vmem:[%s0 + $0x1e8] sm:$0xf]
    %v164 = vld [vmem:[%s0 + $0x1ec] sm:$0xf]
    %v165 = vld [vmem:[%s0 + $0x1f0] sm:$0xf]
    %v166 = vld [vmem:[%s0 + $0x1f4] sm:$0xf]
    %v167 = vld [vmem:[%s0 + $0x1f8] sm:$0xf]
    %v168 = vld [vmem:[%s0 + $0x1fc] sm:$0xf]
    %v169 = vld [vmem:[%s0 + $0x200] sm:$0xf]
    %v170 = vld [vmem:[%s0 + $0x204] sm:$0xf]
    %v171 = vld [vmem:[%s0 + $0x208] sm:$0xf]
    %v172 = vld [vmem:[%s0 + $0x20c] sm:$0xf]
    %v173 = vld [vmem:[%s0 + $0x210] sm:$0xf]
    %v174 = vld [vmem:[%s0 + $0x214] sm:$0xf]
    %v175 = vld [vmem:[%s0 + $0x218] sm:$0xf]
    %v176 = vld [vmem:[%s0 + $0x21c] sm:$0xf]
    %v177 = vld [vmem:[%s0 + $0x220] sm:$0xf]
    %v178 = vld [vmem:[%s0 + $0x224] sm:$0xf]
    %v179 = vld [vmem:[%s0 + $0x228] sm:$0xf]
    %v180 = vld [vmem:[%s0 + $0x22c] sm:$0xf]
    %v181 = vld [vmem:[%s0 + $0x230] sm:$0xf]
    %v182 = vld [vmem:[%s0 + $0x234] sm:$0xf]
    %v183 = vld [vmem:[%s0 + $0x238] sm:$0xf]
    %v184 = vld [vmem:[%s0 + $0x23c] sm:$0xf]
    %v185 = vld [vmem:[%s0 + $0x240] sm:$0xf]
    %v186 = vld [vmem:[%s0 + $0x244] sm:$0xf]
    %v187 = vld [vmem:[%s0 + $0x248] sm:$0xf]
    %v188 = vld [vmem:[%s0 + $0x24c] sm:$0xf]
    %v189 = vld [vmem:[%s0 + $0x250] sm:$0xf]
    %v190 = vld [vmem:[%s0 + $0x254] sm:$0xf]
    %v191 = vld [vmem:[%s0 + $0x258] sm:$0xf]
    %v192 = vld [vmem:[%s0 + $0x25c] sm:$0xf]
    %v193 = vld [vmem:[%s0 + $0x260] sm:$0xf]
    %v194 = vld [vmem:[%s0 + $0x264] sm:$0xf]
    %v195 = vld [vmem:[%s0 + $0x268] sm:$0xf]
    %v196 = vld [vmem:[%s0 + $0x26c] sm:$0xf]
    %v197 = vld [vmem:[%s0 + $0x270] sm:$0xf]
    %v198 = vld [vmem:[%s0 + $0x274] sm:$0xf]
    %v199 = vld [vmem:[%s0 + $0x278] sm:$0xf]
    %v200 = vld [vmem:[%s0 + $0x27c] sm:$0xf]
    %v201 = vld [vmem:[%s0 + $0x280] sm:$0xf]
    %v202 = vld [vmem:[%s0 + $0x284] sm:$0xf]
    %v203 = vld [vmem:[%s0 + $0x288] sm:$0xf]
    %v204 = vld [vmem:[%s0 + $0x28c] sm:$0xf]
    %v205 = vld [vmem:[%s0 + $0x290] sm:$0xf]
    %v206 = vld [vmem:[%s0 + $0x294] sm:$0xf]
    %v207 = vld [vmem:[%s0 + $0x298] sm:$0xf]
    %v208 = vld [vmem:[%s0 + $0x29c] sm:$0xf]
    %v209 = vld [vmem:[%s0 + $0x2a0] sm:$0xf]
    %v210 = vld [vmem:[%s0 + $0x2a4] sm:$0xf]
    %v211 = vld [vmem:[%s0 + $0x2a8] sm:$0xf]
    %v212 = vld [vmem:[%s0 + $0x2ac] sm:$0xf]
    %v213 = vld [vmem:[%s0 + $0x2b0] sm:$0xf]
    %v214 = vld [vmem:[%s0 + $0x2b4] sm:$0xf]
    %v215 = vld [vmem:[%s0 + $0x2b8] sm:$0xf]
    %v216 = vld [vmem:[%s0 + $0x2bc] sm:$0xf]
    %v217 = vld [vmem:[%s0 + $0x2c0] sm:$0xf]
    %v218 = vld [vmem:[%s0 + $0x2c4] sm:$0xf]
    %v219 = vld [vmem:[%s0 + $0x2c8] sm:$0xf]
    %v220 = vld [vmem:[%s0 + $0x2cc] sm:$0xf]
    %v221 = vld [vmem:[%s0 + $0x2d0] sm:$0xf]
    %v222 = vld [vmem:[%s0 + $0x2d4] sm:$0xf]
    %v223 = vld [vmem:[%s0 + $0x2d8] sm:$0xf]
    %v224 = vld [vmem:[%s0 + $0x2dc] sm:$0xf]
    %v225 = vld [vmem:[%s0 + $0x2e0] sm:$0xf]
    %v226 = vld [vmem:[%s0 + $0x2e4] sm:$0xf]
    %v227 = vld [vmem:[%s0 + $0x2e8] sm:$0xf]
    %v228 = vld [vmem:[%s0 + $0x2ec] sm:$0xf]
    %v229 = vld [vmem:[%s0 + $0x2f0] sm:$0xf]
    %v230 = vld [vmem:[%s0 + $0x2f4] sm:$0xf]
    %v231 = vld [vmem:[%s0 + $0x2f8] sm:$0xf]
    %v232 = vld [vmem:[%s0 + $0x2fc] sm:$0xf]
    %v233 = vld [vmem:[%s0 + $0x300] sm:$0xf]
    %v234 = vld [vmem:[%s0 + $0x304] sm:$0xf]
    %v235 = vld [vmem:[%s0 + $0x308] sm:$0xf]
    %v236 = vld [vmem:[%s0 + $0x30c] sm:$0xf]
    %v237 = vld [vmem:[%s0 + $0x310] sm:$0xf]
    %v238 = vld [vmem:[%s0 + $0x314] sm:$0xf]
    %v239 = vld [vmem:[%s0 + $0x318] sm:$0xf]
    %v240 = vld [vmem:[%s0 + $0x31c] sm:$0xf]
    %v241 = vld [vmem:[%s0 + $0x320] sm:$0xf]
    %v242 = vld [vmem:[%s0 + $0x324] sm:$0xf]
    %v243 = vld [vmem:[%s0 + $0x328] sm:$0xf]
    %v244 = vld [vmem:[%s0 + $0x32c] sm:$0xf]
    %v245 = vld [vmem:[%s0 + $0x330] sm:$0xf]
    %v246 = vld [vmem:[%s0 + $0x334] sm:$0xf]
    %v247 = vld [vmem:[%s0 + $0x338] sm:$0xf]
    %v248 = vld [vmem:[%s0 + $0x33c] sm:$0xf]
    %v249 = vld [vmem:[%s0 + $0x340] sm:$0xf]
    %v250 = vld [vmem:[%s0 + $0x344] sm:$0xf]
    %v251 = vld [vmem:[%s0 + $0x348] sm:$0xf]
    %v252 = vld [vmem:[%s0 + $0x34c] sm:$0xf]
    %v253 = vld [vmem:[%s0 + $0x350] sm:$0xf]
    %v254 = vld [vmem:[%s0 + $0x354] sm:$0xf]
    %v255 = vld [vmem:[%s0 + $0x358] sm:$0xf]
    %v256 = vld [vmem:[%s0 + $0x35c] sm:$0xf]
    %v257 = vld [vmem:[%s0 + $0x360] sm:$0xf]
    %v258 = vld [vmem:[%s0 + $0x364] sm:$0xf]
    %v259 = vld [vmem:[%s0 + $0x368] sm:$0xf]
    %v260 = vld [vmem:[%s0 + $0x36c] sm:$0xf]
    %v261 = vld [vmem:[%s0 + $0x370] sm:$0xf]
    %v262 = vld [vmem:[%s0 + $0x374] sm:$0xf]
    %v263 = vld [vmem:[%s0 + $0x378] sm:$0xf]
    %v264 = vld [vmem:[%s0 + $0x37c] sm:$0xf]
    %v265 = vld [vmem:[%s0 + $0x380] sm:$0xf]
    %v266 = vld [vmem:[%s0 + $0x384] sm:$0xf]
    %v267 = vld [vmem:[%s0 + $0x388] sm:$0xf]
    %v268 = vld [vmem:[%s0 + $0x38c] sm:$0xf]
    %v269 = vld [vmem:[%s0 + $0x390] sm:$0xf]
    %v270 = vld [vmem:[%s0 + $0x394] sm:$0xf]
    %v271 = vld [vmem:[%s0 + $0x398] sm:$0xf]
    %v272 = vld [vmem:[%s0 + $0x39c] sm:$0xf]
    %v273 = vld [vmem:[%s0 + $0x3a0] sm:$0xf]
    %v274 = vld [vmem:[%s0 + $0x3a4] sm:$0xf]
    %v275 = vld [vmem:[%s0 + $0x3a8] sm:$0xf]
    %v276 = vld [vmem:[%s0 + $0x3ac] sm:$0xf]
    %v277 = vld [vmem:[%s0 + $0x3b0] sm:$0xf]
    %v278 = vld [vmem:[%s0 + $0x3b4] sm:$0xf]
    %v279 = vld [vmem:[%s0 + $0x3b8] sm:$0xf]
    %v280 = vld [vmem:[%s0 + $0x3bc] sm:$0xf]
    %v281 = vld [vmem:[%s0 + $0x3c0] sm:$0xf]
    %v282 = vld [vmem:[%s0 + $0x3c4] sm:$0xf]
    %v283 = vld [vmem:[%s0 + $0x3c8] sm:$0xf]
    %v284 = vld [vmem:[%s0 + $0x3cc] sm:$0xf]
    %v285 = vld [vmem:[%s0 + $0x3d0] sm:$0xf]
    %v286 = vld [vmem:[%s0 + $0x3d4] sm:$0xf]
    %v287 = vld [vmem:[%s0 + $0x3d8] sm:$0xf]
    %v288 = vld [vmem:[%s0 + $0x3dc] sm:$0xf]
    %v289 = vld [vmem:[%s0 + $0x3e0] sm:$0xf]
    %v290 = vld [vmem:[%s0 + $0x3e4] sm:$0xf]
    %v291 = vld [vmem:[%s0 + $0x3e8] sm:$0xf]
    %v292 = vld [vmem:[%s0 + $0x3ec] sm:$0xf]
    %v293 = vld [vmem:[%s0 + $0x3f0] sm:$0xf]
    %v294 = vld [vmem:[%s0 + $0x3f4] sm:$0xf]
    %v295 = vld [vmem:[%s0 + $0x3f8] sm:$0xf]
    %v296 = vld [vmem:[%s0 + $0x3fc] sm:$0xf]
    %v297 = vld [vmem:[%s0 + $0x400] sm:$0xf]
    %v298 = vld [vmem:[%s0 + $0x404] sm:$0xf]
    %v299 = vld [vmem:[%s0 + $0x408] sm:$0xf]
    %v300 = vld [vmem:[%s0 + $0x40c] sm:$0xf]
    %v301 = vld [vmem:[%s0 + $0x410] sm:$0xf]
    %v302 = vld [vmem:[%s0 + $0x414] sm:$0xf]
    %v303 = vld [vmem:[%s0 + $0x418] sm:$0xf]
    %v304 = vld [vmem:[%s0 + $0x41c] sm:$0xf]
    %v305 = vld [vmem:[%s0 + $0x420] sm:$0xf]
    %v306 = vld [vmem:[%s0 + $0x424] sm:$0xf]
    %v307 = vld [vmem:[%s0 + $0x428] sm:$0xf]
    %v308 = vld [vmem:[%s0 + $0x42c] sm:$0xf]
    %v309 = vld [vmem:[%s0 + $0x430] sm:$0xf]
    %v310 = vld [vmem:[%s0 + $0x434] sm:$0xf]
    %v311 = vld [vmem:[%s0 + $0x438] sm:$0xf]
    %v312 = vld [vmem:[%s0 + $0x43c] sm:$0xf]
    %v313 = vld [vmem:[%s0 + $0x440] sm:$0xf]
    %v314 = vld [vmem:[%s0 + $0x444] sm:$0xf]
    %v315 = vld [vmem:[%s0 + $0x448] sm:$0xf]
    %v316 = vld [vmem:[%s0 + $0x44c] sm:$0xf]
    %v317 = vld [vmem:[%s0 + $0x450] sm:$0xf]
    %v318 = vld [vmem:[%s0 + $0x454] sm:$0xf]
    %v319 = vld [vmem:[%s0 + $0x458] sm:$0xf]
    %v320 = vld [vmem:[%s0 + $0x45c] sm:$0xf]
    %v321 = vld [vmem:[%s0 + $0x460] sm:$0xf]
    %v322 = vld [vmem:[%s0 + $0x464] sm:$0xf]
    %v323 = vld [vmem:[%s0 + $0x468] sm:$0xf]
    %v324 = vld [vmem:[%s0 + $0x46c] sm:$0xf]
    %v325 = vld [vmem:[%s0 + $0x470] sm:$0xf]
    %v326 = vld [vmem:[%s0 + $0x474] sm:$0xf]
    %v327 = vld [vmem:[%s0 + $0x478] sm:$0xf]
    %v328 = vld [vmem:[%s0 + $0x47c] sm:$0xf]
    %v329 = vld [vmem:[%s0 + $0x480] sm:$0xf]
    %v330 = vld [vmem:[%s0 + $0x484] sm:$0xf]
    %v331 = vld [vmem:[%s0 + $0x488] sm:$0xf]
    %v332 = vld [vmem:[%s0 + $0x48c] sm:$0xf]
    %v333 = vld [vmem:[%s0 + $0x490] sm:$0xf]
    %v334 = vld [vmem:[%s0 + $0x494] sm:$0xf]
    %v335 = vld [vmem:[%s0 + $0x498] sm:$0xf]
    %v336 = vld [vmem:[%s0 + $0x49c] sm:$0xf]
    %v337 = vld [vmem:[%s0 + $0x4a0] sm:$0xf]
    %v338 = vld [vmem:[%s0 + $0x4a4] sm:$0xf]
    %v339 = vld [vmem:[%s0 + $0x4a8] sm:$0xf]
    %v340 = vld [vmem:[%s0 + $0x4ac] sm:$0xf]
    %v341 = vld [vmem:[%s0 + $0x4b0] sm:$0xf]
    %v342 = vld [vmem:[%s0 + $0x4b4] sm:$0xf]
    %v343 = vld [vmem:[%s0 + $0x4b8] sm:$0xf]
    %v344 = vld [vmem:[%s0 + $0x4bc] sm:$0xf]
    %v345 = vld [vmem:[%s0 + $0x4c0] sm:$0xf]
    %v346 = vld [vmem:[%s0 + $0x4c4] sm:$0xf]
    %v347 = vld [vmem:[%s0 + $0x4c8] sm:$0xf]
    %v348 = vld [vmem:[%s0 + $0x4cc] sm:$0xf]
    %v349 = vld [vmem:[%s0 + $0x4d0] sm:$0xf]
    %v350 = vld [vmem:[%s0 + $0x4d4] sm:$0xf]
    %v351 = vld [vmem:[%s0 + $0x4d8] sm:$0xf]
    %v352 = vld [vmem:[%s0 + $0x4dc] sm:$0xf]
    %v353 = vld [vmem:[%s0 + $0x4e0] sm:$0xf]
    %v354 = vld [vmem:[%s0 + $0x4e4] sm:$0xf]
    %v355 = vld [vmem:[%s0 + $0x4e8] sm:$0xf]
    %v356 = vld [vmem:[%s0 + $0x4ec] sm:$0xf]
    %v357 = vld [vmem:[%s0 + $0x4f0] sm:$0xf]
    %v358 = vld [vmem:[%s0 + $0x4f4] sm:$0xf]
    %v359 = vld [vmem:[%s0 + $0x4f8] sm:$0xf]
    %v360 = vld [vmem:[%s0 + $0x4fc] sm:$0xf]
    %v361 = vld [vmem:[%s0 + $0x500] sm:$0xf]
    %v362 = vld [vmem:[%s0 + $0x504] sm:$0xf]
    %v363 = vld [vmem:[%s0 + $0x508] sm:$0xf]
    %v364 = vld [vmem:[%s0 + $0x50c] sm:$0xf]
    %v365 = vld [vmem:[%s0 + $0x510] sm:$0xf]
    %v366 = vld [vmem:[%s0 + $0x514] sm:$0xf]
    %v367 = vld [vmem:[%s0 + $0x518] sm:$0xf]
    %v368 = vld [vmem:[%s0 + $0x51c] sm:$0xf]
    %v369 = vld [vmem:[%s0 + $0x520] sm:$0xf]
    %v370 = vld [vmem:[%s0 + $0x524] sm:$0xf]
    %v371 = vld [vmem:[%s0 + $0x528] sm:$0xf]
    %v372 = vld [vmem:[%s0 + $0x52c] sm:$0xf]
    %v373 = vld [vmem:[%s0 + $0x530] sm:$0xf]
    %v374 = vld [vmem:[%s0 + $0x534] sm:$0xf]
    %v375 = vld [vmem:[%s0 + $0x538] sm:$0xf]
    %v376 = vld [vmem:[%s0 + $0x53c] sm:$0xf]
    %v377 = vld [vmem:[%s0 + $0x540] sm:$0xf]
    %v378 = vld [vmem:[%s0 + $0x544] sm:$0xf]
    %v379 = vld [vmem:[%s0 + $0x548] sm:$0xf]
    %v380 = vld [vmem:[%s0 + $0x54c] sm:$0xf]
    %v381 = vld [vmem:[%s0 + $0x550] sm:$0xf]
    %v382 = vld [vmem:[%s0 + $0x554] sm:$0xf]
    %v383 = vld [vmem:[%s0 + $0x558] sm:$0xf]
    %v384 = vld [vmem:[%s0 + $0x55c] sm:$0xf]
    %v385 = vld [vmem:[%s0 + $0x560] sm:$0xf]
    %v386 = vld [vmem:[%s0 + $0x564] sm:$0xf]
    %v387 = vld [vmem:[%s0 + $0x568] sm:$0xf]
    %v388 = vld [vmem:[%s0 + $0x56c] sm:$0xf]
    %v389 = vld [vmem:[%s0 + $0x570] sm:$0xf]
    %v390 = vld [vmem:[%s0 + $0x574] sm:$0xf]
    %v391 = vld [vmem:[%s0 + $0x578] sm:$0xf]
    %v392 = vld [vmem:[%s0 + $0x57c] sm:$0xf]
    %v393 = vld [vmem:[%s0 + $0x580] sm:$0xf]
    %v394 = vld [vmem:[%s0 + $0x584] sm:$0xf]
    %v395 = vld [vmem:[%s0 + $0x588] sm:$0xf]
    %v396 = vld [vmem:[%s0 + $0x58c] sm:$0xf]
    %v397 = vld [vmem:[%s0 + $0x590] sm:$0xf]
    %v398 = vld [vmem:[%s0 + $0x594] sm:$0xf]
    %v399 = vld [vmem:[%s0 + $0x598] sm:$0xf]
    %v400 = vld [vmem:[%s0 + $0x59c] sm:$0xf]
    %v401 = vld [vmem:[%s0 + $0x5a0] sm:$0xf]
    %v402 = vld [vmem:[%s0 + $0x5a4] sm:$0xf]
    %v403 = vld [vmem:[%s0 + $0x5a8] sm:$0xf]
    %v404 = vld [vmem:[%s0 + $0x5ac] sm:$0xf]
    %v405 = vld [vmem:[%s0 + $0x5b0] sm:$0xf]
    %v406 = vld [vmem:[%s0 + $0x5b4] sm:$0xf]
    %v407 = vld [vmem:[%s0 + $0x5b8] sm:$0xf]
    %v408 = vld [vmem:[%s0 + $0x5bc] sm:$0xf]
    %v409 = vld [vmem:[%s0 + $0x5c0] sm:$0xf]
    %v410 = vld [vmem:[%s0 + $0x5c4] sm:$0xf]
    %v411 = vld [vmem:[%s0 + $0x5c8] sm:$0xf]
    %v412 = vld [vmem:[%s0 + $0x5cc] sm:$0xf]
    %v413 = vld [vmem:[%s0 + $0x5d0] sm:$0xf]
    %v414 = vld [vmem:[%s0 + $0x5d4] sm:$0xf]
    %v415 = vld [vmem:[%s0 + $0x5d8] sm:$0xf]
    %v416 = vld [vmem:[%s0 + $0x5dc] sm:$0xf]
    %v417 = vld [vmem:[%s0 + $0x5e0] sm:$0xf]
    %v418 = vld [vmem:[%s0 + $0x5e4] sm:$0xf]
    %v419 = vld [vmem:[%s0 + $0x5e8] sm:$0xf]
    %v420 = vld [vmem:[%s0 + $0x5ec] sm:$0xf]
    %v421 = vld [vmem:[%s0 + $0x5f0] sm:$0xf]
    %v422 = vld [vmem:[%s0 + $0x5f4] sm:$0xf]
    %v423 = vld [vmem:[%s0 + $0x5f8] sm:$0xf]
    %v424 = vld [vmem:[%s0 + $0x5fc] sm:$0xf]
    %v425 = vld [vmem:[%s0 + $0x600] sm:$0xf]
    %v426 = vld [vmem:[%s0 + $0x604] sm:$0xf]
    %v427 = vld [vmem:[%s0 + $0x608] sm:$0xf]
    %v428 = vld [vmem:[%s0 + $0x60c] sm:$0xf]
    %v429 = vld [vmem:[%s0 + $0x610] sm:$0xf]
    %v430 = vld [vmem:[%s0 + $0x614] sm:$0xf]
    %v431 = vld [vmem:[%s0 + $0x618] sm:$0xf]
    %v432 = vld [vmem:[%s0 + $0x61c] sm:$0xf]
    %v433 = vld [vmem:[%s0 + $0x620] sm:$0xf]
    %v434 = vld [vmem:[%s0 + $0x624] sm:$0xf]
    %v435 = vld [vmem:[%s0 + $0x628] sm:$0xf]
    %v436 = vld [vmem:[%s0 + $0x62c] sm:$0xf]
    %v437 = vld [vmem:[%s0 + $0x630] sm:$0xf]
    %v438 = vld [vmem:[%s0 + $0x634] sm:$0xf]
    %v439 = vld [vmem:[%s0 + $0x638] sm:$0xf]
    %v440 = vld [vmem:[%s0 + $0x63c] sm:$0xf]
    %v441 = vld [vmem:[%s0 + $0x640] sm:$0xf]
    %v442 = vld [vmem:[%s0 + $0x644] sm:$0xf]
    %v443 = vld [vmem:[%s0 + $0x648] sm:$0xf]
    %v444 = vld [vmem:[%s0 + $0x64c] sm:$0xf]
    %v445 = vld [vmem:[%s0 + $0x650] sm:$0xf]
    %v446 = vld [vmem:[%s0 + $0x654] sm:$0xf]
    %v447 = vld [vmem:[%s0 + $0x658] sm:$0xf]
    %v448 = vld [vmem:[%s0 + $0x65c] sm:$0xf]
    %v449 = vld [vmem:[%s0 + $0x660] sm:$0xf]
    %v450 = vld [vmem:[%s0 + $0x664] sm:$0xf]
    %v451 = vld [vmem:[%s0 + $0x668] sm:$0xf]
    %v452 = vld [vmem:[%s0 + $0x66c] sm:$0xf]
    %v453 = vld [vmem:[%s0 + $0x670] sm:$0xf]
    %v454 = vld [vmem:[%s0 + $0x674] sm:$0xf]
    %v455 = vld [vmem:[%s0 + $0x678] sm:$0xf]
    %v456 = vld [vmem:[%s0 + $0x67c] sm:$0xf]
    %v457 = vld [vmem:[%s0 + $0x680] sm:$0xf]
    %v458 = vld [vmem:[%s0 + $0x684] sm:$0xf]
    %v459 = vld [vmem:[%s0 + $0x688] sm:$0xf]
    %v460 = vld [vmem:[%s0 + $0x68c] sm:$0xf]
    %v461 = vld [vmem:[%s0 + $0x690] sm:$0xf]
    %v462 = vld [vmem:[%s0 + $0x694] sm:$0xf]
    %v463 = vld [vmem:[%s0 + $0x698] sm:$0xf]
    %v464 = vld [vmem:[%s0 + $0x69c] sm:$0xf]
    %v465 = vld [vmem:[%s0 + $0x6a0] sm:$0xf]
    %v466 = vld [vmem:[%s0 + $0x6a4] sm:$0xf]
    %v467 = vld [vmem:[%s0 + $0x6a8] sm:$0xf]
    %v468 = vld [vmem:[%s0 + $0x6ac] sm:$0xf]
    %v469 = vld [vmem:[%s0 + $0x6b0] sm:$0xf]
    %v470 = vld [vmem:[%s0 + $0x6b4] sm:$0xf]
    %v471 = vld [vmem:[%s0 + $0x6b8] sm:$0xf]
    %v472 = vld [vmem:[%s0 + $0x6bc] sm:$0xf]
    %v473 = vld [vmem:[%s0 + $0x6c0] sm:$0xf]
    %v474 = vld [vmem:[%s0 + $0x6c4] sm:$0xf]
    %v475 = vld [vmem:[%s0 + $0x6c8] sm:$0xf]
    %v476 = vld [vmem:[%s0 + $0x6cc] sm:$0xf]
    %v477 = vld [vmem:[%s0 + $0x6d0] sm:$0xf]
    %v478 = vld [vmem:[%s0 + $0x6d4] sm:$0xf]
    %v479 = vld [vmem:[%s0 + $0x6d8] sm:$0xf]
    %v480 = vld [vmem:[%s0 + $0x6dc] sm:$0xf]
    %v481 = vld [vmem:[%s0 + $0x6e0] sm:$0xf]
    %v482 = vld [vmem:[%s0 + $0x6e4] sm:$0xf]
    %v483 = vld [vmem:[%s0 + $0x6e8] sm:$0xf]
    %v484 = vld [vmem:[%s0 + $0x6ec] sm:$0xf]
    %v485 = vld [vmem:[%s0 + $0x6f0] sm:$0xf]
    %v486 = vld [vmem:[%s0 + $0x6f4] sm:$0xf]
    %v487 = vld [vmem:[%s0 + $0x6f8] sm:$0xf]
    %v488 = vld [vmem:[%s0 + $0x6fc] sm:$0xf]
    %v489 = vld [vmem:[%s0 + $0x700] sm:$0xf]
    %v490 = vld [vmem:[%s0 + $0x704] sm:$0xf]
    %v491 = vld [vmem:[%s0 + $0x708] sm:$0xf]
    %v492 = vld [vmem:[%s0 + $0x70c] sm:$0xf]
    %v493 = vld [vmem:[%s0 + $0x710] sm:$0xf]
    %v494 = vld [vmem:[%s0 + $0x714] sm:$0xf]
    %v495 = vld [vmem:[%s0 + $0x718] sm:$0xf]
    %v496 = vld [vmem:[%s0 + $0x71c] sm:$0xf]
    %v497 = vld [vmem:[%s0 + $0x720] sm:$0xf]
    %v498 = vld [vmem:[%s0 + $0x724] sm:$0xf]
    %v499 = vld [vmem:[%s0 + $0x728] sm:$0xf]
    %v500 = vld [vmem:[%s0 + $0x72c] sm:$0xf]
    %v501 = vld [vmem:[%s0 + $0x730] sm:$0xf]
    %v502 = vld [vmem:[%s0 + $0x734] sm:$0xf]
    %v503 = vld [vmem:[%s0 + $0x738] sm:$0xf]
    %v504 = vld [vmem:[%s0 + $0x73c] sm:$0xf]
    %v505 = vld [vmem:[%s0 + $0x740] sm:$0xf]
    %v506 = vld [vmem:[%s0 + $0x744] sm:$0xf]
    %v507 = vld [vmem:[%s0 + $0x748] sm:$0xf]
    %v508 = vld [vmem:[%s0 + $0x74c] sm:$0xf]
    %v509 = vld [vmem:[%s0 + $0x750] sm:$0xf]
    %v510 = vld [vmem:[%s0 + $0x754] sm:$0xf]
    %v511 = vld [vmem:[%s0 + $0x758] sm:$0xf]
    %v512 = vld [vmem:[%s0 + $0x75c] sm:$0xf]
    %v513 = vld [vmem:[%s0 + $0x760] sm:$0xf]
    %v514 = vld [vmem:[%s0 + $0x764] sm:$0xf]
    %v515 = vld [vmem:[%s0 + $0x768] sm:$0xf]
    %v516 = vld [vmem:[%s0 + $0x76c] sm:$0xf]
    %v517 = vld [vmem:[%s0 + $0x770] sm:$0xf]
    %v518 = vld [vmem:[%s0 + $0x774] sm:$0xf]
    %v519 = vld [vmem:[%s0 + $0x778] sm:$0xf]
    %v520 = vld [vmem:[%s0 + $0x77c] sm:$0xf]
    %v521 = vld [vmem:[%s0 + $0x780] sm:$0xf]
    %v522 = vld [vmem:[%s0 + $0x784] sm:$0xf]
    %v523 = vld [vmem:[%s0 + $0x788] sm:$0xf]
    %v524 = vld [vmem:[%s0 + $0x78c] sm:$0xf]
    %v525 = vld [vmem:[%s0 + $0x790] sm:$0xf]
    %v526 = vld [vmem:[%s0 + $0x794] sm:$0xf]
    %v527 = vld [vmem:[%s0 + $0x798] sm:$0xf]
    %v528 = vld [vmem:[%s0 + $0x79c] sm:$0xf]
    %v529 = vld [vmem:[%s0 + $0x7a0] sm:$0xf]
    %v530 = vld [vmem:[%s0 + $0x7a4] sm:$0xf]
    %v531 = vld [vmem:[%s0 + $0x7a8] sm:$0xf]
    %v532 = vld [vmem:[%s0 + $0x7ac] sm:$0xf]
    %v533 = vld [vmem:[%s0 + $0x7b0] sm:$0xf]
    %v534 = vld [vmem:[%s0 + $0x7b4] sm:$0xf]
    %v535 = vld [vmem:[%s0 + $0x7b8] sm:$0xf]
    %v536 = vld [vmem:[%s0 + $0x7bc] sm:$0xf]
    %v537 = vld [vmem:[%s0 + $0x7c0] sm:$0xf]
    %v538 = vld [vmem:[%s0 + $0x7c4] sm:$0xf]
    %v539 = vld [vmem:[%s0 + $0x7c8] sm:$0xf]
    %v540 = vld [vmem:[%s0 + $0x7cc] sm:$0xf]
    %v541 = vld [vmem:[%s0 + $0x7d0] sm:$0xf]
    %v542 = vld [vmem:[%s0 + $0x7d4] sm:$0xf]
    %v543 = vld [vmem:[%s0 + $0x7d8] sm:$0xf]
    %v544 = vld [vmem:[%s0 + $0x7dc] sm:$0xf]
    %v545 = vld [vmem:[%s0 + $0x7e0] sm:$0xf]
    %v546 = vld [vmem:[%s0 + $0x7e4] sm:$0xf]
    %v547 = vld [vmem:[%s0 + $0x7e8] sm:$0xf]
    %v548 = vld [vmem:[%s0 + $0x7ec] sm:$0xf]
    %v549 = vld [vmem:[%s0 + $0x7f0] sm:$0xf]
    %v550 = vld [vmem:[%s0 + $0x7f4] sm:$0xf]
    %v551 = vld [vmem:[%s0 + $0x7f8] sm:$0xf]
    %v552 = vld [vmem:[%s0 + $0x7fc] sm:$0xf]
    %v553 = vld [vmem:[%s0 + $0x800] sm:$0xf]
    %v554 = vld [vmem:[%s0 + $0x804] sm:$0xf]
    %v555 = vld [vmem:[%s0 + $0x808] sm:$0xf]
    %v556 = vld [vmem:[%s0 + $0x80c] sm:$0xf]
    %v557 = vld [vmem:[%s0 + $0x810] sm:$0xf]
    %v558 = vld [vmem:[%s0 + $0x814] sm:$0xf]
    %v559 = vld [vmem:[%s0 + $0x818] sm:$0xf]
    %v560 = vld [vmem:[%s0 + $0x81c] sm:$0xf]
    %v561 = vld [vmem:[%s0 + $0x820] sm:$0xf]
    %v562 = vld [vmem:[%s0 + $0x824] sm:$0xf]
    %v563 = vld [vmem:[%s0 + $0x828] sm:$0xf]
    %v564 = vld [vmem:[%s0 + $0x82c] sm:$0xf]
    %v565 = vld [vmem:[%s0 + $0x830] sm:$0xf]
    %v566 = vld [vmem:[%s0 + $0x834] sm:$0xf]
    %v567 = vld [vmem:[%s0 + $0x838] sm:$0xf]
    %v568 = vld [vmem:[%s0 + $0x83c] sm:$0xf]
    %v569 = vld [vmem:[%s0 + $0x840] sm:$0xf]
    %v570 = vld [vmem:[%s0 + $0x844] sm:$0xf]
    %v571 = vld [vmem:[%s0 + $0x848] sm:$0xf]
    %v572 = vld [vmem:[%s0 + $0x84c] sm:$0xf]
    %v573 = vld [vmem:[%s0 + $0x850] sm:$0xf]
    %v574 = vld [vmem:[%s0 + $0x854] sm:$0xf]
    %v575 = vld [vmem:[%s0 + $0x858] sm:$0xf]
    %v576 = vld [vmem:[%s0 + $0x85c] sm:$0xf]
    %v577 = vld [vmem:[%s0 + $0x860] sm:$0xf]
    %v578 = vld [vmem:[%s0 + $0x864] sm:$0xf]
    %v579 = vld [vmem:[%s0 + $0x868] sm:$0xf]
    %v580 = vld [vmem:[%s0 + $0x86c] sm:$0xf]
    %v581 = vld [vmem:[%s0 + $0x870] sm:$0xf]
    %v582 = vld [vmem:[%s0 + $0x874] sm:$0xf]
    %v583 = vld [vmem:[%s0 + $0x878] sm:$0xf]
    %v584 = vld [vmem:[%s0 + $0x87c] sm:$0xf]
    %v585 = vld [vmem:[%s0 + $0x880] sm:$0xf]
    %v586 = vld [vmem:[%s0 + $0x884] sm:$0xf]
    %v587 = vld [vmem:[%s0 + $0x888] sm:$0xf]
    %v588 = vld [vmem:[%s0 + $0x88c] sm:$0xf]
    %v589 = vld [vmem:[%s0 + $0x890] sm:$0xf]
    %v590 = vld [vmem:[%s0 + $0x894] sm:$0xf]
    %v591 = vld [vmem:[%s0 + $0x898] sm:$0xf]
    %v592 = vld [vmem:[%s0 + $0x89c] sm:$0xf]
    %v593 = vld [vmem:[%s0 + $0x8a0] sm:$0xf]
    %v594 = vld [vmem:[%s0 + $0x8a4] sm:$0xf]
    %v595 = vld [vmem:[%s0 + $0x8a8] sm:$0xf]
    %v596 = vld [vmem:[%s0 + $0x8ac] sm:$0xf]
    %v597 = vld [vmem:[%s0 + $0x8b0] sm:$0xf]
    %v598 = vld [vmem:[%s0 + $0x8b4] sm:$0xf]
    %v599 = vld [vmem:[%s0 + $0x8b8] sm:$0xf]
    %v600 = vld [vmem:[%s0 + $0x8bc] sm:$0xf]
    %v601 = vld [vmem:[%s0 + $0x8c0] sm:$0xf]
    %v602 = vld [vmem:[%s0 + $0x8c4] sm:$0xf]
    %v603 = vld [vmem:[%s0 + $0x8c8] sm:$0xf]
    %v604 = vld [vmem:[%s0 + $0x8cc] sm:$0xf]
    %v605 = vld [vmem:[%s0 + $0x8d0] sm:$0xf]
    %v606 = vld [vmem:[%s0 + $0x8d4] sm:$0xf]
    %v607 = vld [vmem:[%s0 + $0x8d8] sm:$0xf]
    %v608 = vld [vmem:[%s0 + $0x8dc] sm:$0xf]
    %v609 = vld [vmem:[%s0 + $0x8e0] sm:$0xf]
    %v610 = vld [vmem:[%s0 + $0x8e4] sm:$0xf]
    %v611 = vld [vmem:[%s0 + $0x8e8] sm:$0xf]
    %v612 = vld [vmem:[%s0 + $0x8ec] sm:$0xf]
    %v613 = vld [vmem:[%s0 + $0x8f0] sm:$0xf]
    %v614 = vld [vmem:[%s0 + $0x8f4] sm:$0xf]
    %v615 = vld [vmem:[%s0 + $0x8f8] sm:$0xf]
    %v616 = vld [vmem:[%s0 + $0x8fc] sm:$0xf]
    %v617 = vld [vmem:[#allocation2] sm:$0xf]
    %v618 = vld [vmem:[#allocation2 + $0x4] sm:$0xf]
    %v619 = vld [vmem:[#allocation2 + $0x8] sm:$0xf]
    %v620 = vld [vmem:[#allocation2 + $0xc] sm:$0xf]
    %v621 = vld [vmem:[#allocation4] sm:$0x1]
    %v623 = vlaneseq
    %v624 = vshrl.u32 %v623, 7
    %v625 = vsub.s32 0, %v624
    %v626 = vrot.slane %v621, %v625
    %v1204 = vunpack.c.l.b16 %v41
    %v1205 = vunpack.c.l.b16 %v42
    %v1206 = vunpack.c.l.b16 %v43
    %v1207 = vunpack.c.l.b16 %v44
    %v1208 = vunpack.c.l.b16 %v45
    %v1209 = vunpack.c.l.b16 %v46
    %v1210 = vunpack.c.l.b16 %v47
    %v1211 = vunpack.c.l.b16 %v48
    %v1212 = vunpack.c.l.b16 %v49
    %v1213 = vunpack.c.l.b16 %v50
    %v1214 = vunpack.c.l.b16 %v51
    %v1215 = vunpack.c.l.b16 %v52
    %v1216 = vunpack.c.l.b16 %v53
    %v1217 = vunpack.c.l.b16 %v54
    %v1218 = vunpack.c.l.b16 %v55
    %v1219 = vunpack.c.l.b16 %v56
    %v1220 = vunpack.c.l.b16 %v57
    %v1221 = vunpack.c.l.b16 %v58
    %v1222 = vunpack.c.l.b16 %v59
    %v1223 = vunpack.c.l.b16 %v60
    %v1224 = vunpack.c.l.b16 %v61
    %v1225 = vunpack.c.l.b16 %v62
    %v1226 = vunpack.c.l.b16 %v63
    %v1227 = vunpack.c.l.b16 %v64
    %v1228 = vunpack.c.l.b16 %v65
    %v1229 = vunpack.c.l.b16 %v66
    %v1230 = vunpack.c.l.b16 %v67
    %v1231 = vunpack.c.l.b16 %v68
    %v1232 = vunpack.c.l.b16 %v69
    %v1233 = vunpack.c.l.b16 %v70
    %v1234 = vunpack.c.l.b16 %v71
    %v1235 = vunpack.c.l.b16 %v72
    %v1236 = vunpack.c.l.b16 %v73
    %v1237 = vunpack.c.l.b16 %v74
    %v1238 = vunpack.c.l.b16 %v75
    %v1239 = vunpack.c.l.b16 %v76
    %v1240 = vunpack.c.l.b16 %v77
    %v1241 = vunpack.c.l.b16 %v78
    %v1242 = vunpack.c.l.b16 %v79
    %v1243 = vunpack.c.l.b16 %v80
    %v1244 = vunpack.c.l.b16 %v81
    %v1245 = vunpack.c.l.b16 %v82
    %v1246 = vunpack.c.l.b16 %v83
    %v1247 = vunpack.c.l.b16 %v84
    %v1248 = vunpack.c.l.b16 %v85
    %v1249 = vunpack.c.l.b16 %v86
    %v1250 = vunpack.c.l.b16 %v87
    %v1251 = vunpack.c.l.b16 %v88
    %v1252 = vunpack.c.l.b16 %v89
    %v1253 = vunpack.c.l.b16 %v90
    %v1254 = vunpack.c.l.b16 %v91
    %v1255 = vunpack.c.l.b16 %v92
    %v1256 = vunpack.c.l.b16 %v93
    %v1257 = vunpack.c.l.b16 %v94
    %v1258 = vunpack.c.l.b16 %v95
    %v1259 = vunpack.c.l.b16 %v96
    %v1260 = vunpack.c.l.b16 %v97
    %v1261 = vunpack.c.l.b16 %v98
    %v1262 = vunpack.c.l.b16 %v99
    %v1263 = vunpack.c.l.b16 %v100
    %v1264 = vunpack.c.l.b16 %v101
    %v1265 = vunpack.c.l.b16 %v102
    %v1266 = vunpack.c.l.b16 %v103
    %v1267 = vunpack.c.l.b16 %v104
    %v1268 = vunpack.c.l.b16 %v105
    %v1269 = vunpack.c.l.b16 %v106
    %v1270 = vunpack.c.l.b16 %v107
    %v1271 = vunpack.c.l.b16 %v108
    %v1272 = vunpack.c.l.b16 %v109
    %v1273 = vunpack.c.l.b16 %v110
    %v1274 = vunpack.c.l.b16 %v111
    %v1275 = vunpack.c.l.b16 %v112
    %v1276 = vunpack.c.l.b16 %v113
    %v1277 = vunpack.c.l.b16 %v114
    %v1278 = vunpack.c.l.b16 %v115
    %v1279 = vunpack.c.l.b16 %v116
    %v1280 = vunpack.c.l.b16 %v117
    %v1281 = vunpack.c.l.b16 %v118
    %v1282 = vunpack.c.l.b16 %v119
    %v1283 = vunpack.c.l.b16 %v120
    %v1284 = vunpack.c.l.b16 %v121
    %v1285 = vunpack.c.l.b16 %v122
    %v1286 = vunpack.c.l.b16 %v123
    %v1287 = vunpack.c.l.b16 %v124
    %v1288 = vunpack.c.l.b16 %v125
    %v1289 = vunpack.c.l.b16 %v126
    %v1290 = vunpack.c.l.b16 %v127
    %v1291 = vunpack.c.l.b16 %v128
    %v1292 = vunpack.c.l.b16 %v129
    %v1293 = vunpack.c.l.b16 %v130
    %v1294 = vunpack.c.l.b16 %v131
    %v1295 = vunpack.c.l.b16 %v132
    %v1296 = vunpack.c.l.b16 %v133
    %v1297 = vunpack.c.l.b16 %v134
    %v1298 = vunpack.c.l.b16 %v135
    %v1299 = vunpack.c.l.b16 %v136
    %v1300 = vunpack.c.l.b16 %v137
    %v1301 = vunpack.c.l.b16 %v138
    %v1302 = vunpack.c.l.b16 %v139
    %v1303 = vunpack.c.l.b16 %v140
    %v1304 = vunpack.c.l.b16 %v141
    %v1305 = vunpack.c.l.b16 %v142
    %v1306 = vunpack.c.l.b16 %v143
    %v1307 = vunpack.c.l.b16 %v144
    %v1308 = vunpack.c.l.b16 %v145
    %v1309 = vunpack.c.l.b16 %v146
    %v1310 = vunpack.c.l.b16 %v147
    %v1311 = vunpack.c.l.b16 %v148
    %v1312 = vunpack.c.l.b16 %v149
    %v1313 = vunpack.c.l.b16 %v150
    %v1314 = vunpack.c.l.b16 %v151
    %v1315 = vunpack.c.l.b16 %v152
    %v1316 = vunpack.c.l.b16 %v153
    %v1317 = vunpack.c.l.b16 %v154
    %v1318 = vunpack.c.l.b16 %v155
    %v1319 = vunpack.c.l.b16 %v156
    %v1320 = vunpack.c.l.b16 %v157
    %v1321 = vunpack.c.l.b16 %v158
    %v1322 = vunpack.c.l.b16 %v159
    %v1323 = vunpack.c.l.b16 %v160
    %v1324 = vunpack.c.l.b16 %v161
    %v1325 = vunpack.c.l.b16 %v162
    %v1326 = vunpack.c.l.b16 %v163
    %v1327 = vunpack.c.l.b16 %v164
    %v1328 = vunpack.c.l.b16 %v165
    %v1329 = vunpack.c.l.b16 %v166
    %v1330 = vunpack.c.l.b16 %v167
    %v1331 = vunpack.c.l.b16 %v168
    %v1332 = vunpack.c.l.b16 %v169
    %v1333 = vunpack.c.l.b16 %v170
    %v1334 = vunpack.c.l.b16 %v171
    %v1335 = vunpack.c.l.b16 %v172
    %v1336 = vunpack.c.l.b16 %v173
    %v1337 = vunpack.c.l.b16 %v174
    %v1338 = vunpack.c.l.b16 %v175
    %v1339 = vunpack.c.l.b16 %v176
    %v1340 = vunpack.c.l.b16 %v177
    %v1341 = vunpack.c.l.b16 %v178
    %v1342 = vunpack.c.l.b16 %v179
    %v1343 = vunpack.c.l.b16 %v180
    %v1344 = vunpack.c.l.b16 %v181
    %v1345 = vunpack.c.l.b16 %v182
    %v1346 = vunpack.c.l.b16 %v183
    %v1347 = vunpack.c.l.b16 %v184
    %v1348 = vunpack.c.l.b16 %v185
    %v1349 = vunpack.c.l.b16 %v186
    %v1350 = vunpack.c.l.b16 %v187
    %v1351 = vunpack.c.l.b16 %v188
    %v1352 = vunpack.c.l.b16 %v189
    %v1353 = vunpack.c.l.b16 %v190
    %v1354 = vunpack.c.l.b16 %v191
    %v1355 = vunpack.c.l.b16 %v192
    %v1356 = vunpack.c.l.b16 %v193
    %v1357 = vunpack.c.l.b16 %v194
    %v1358 = vunpack.c.l.b16 %v195
    %v1359 = vunpack.c.l.b16 %v196
    %v1360 = vunpack.c.l.b16 %v197
    %v1361 = vunpack.c.l.b16 %v198
    %v1362 = vunpack.c.l.b16 %v199
    %v1363 = vunpack.c.l.b16 %v200
    %v1364 = vunpack.c.l.b16 %v201
    %v1365 = vunpack.c.l.b16 %v202
    %v1366 = vunpack.c.l.b16 %v203
    %v1367 = vunpack.c.l.b16 %v204
    %v1368 = vunpack.c.l.b16 %v205
    %v1369 = vunpack.c.l.b16 %v206
    %v1370 = vunpack.c.l.b16 %v207
    %v1371 = vunpack.c.l.b16 %v208
    %v1372 = vunpack.c.l.b16 %v209
    %v1373 = vunpack.c.l.b16 %v210
    %v1374 = vunpack.c.l.b16 %v211
    %v1375 = vunpack.c.l.b16 %v212
    %v1376 = vunpack.c.l.b16 %v213
    %v1377 = vunpack.c.l.b16 %v214
    %v1378 = vunpack.c.l.b16 %v215
    %v1379 = vunpack.c.l.b16 %v216
    %v1380 = vunpack.c.l.b16 %v217
    %v1381 = vunpack.c.l.b16 %v218
    %v1382 = vunpack.c.l.b16 %v219
    %v1383 = vunpack.c.l.b16 %v220
    %v1384 = vunpack.c.l.b16 %v221
    %v1385 = vunpack.c.l.b16 %v222
    %v1386 = vunpack.c.l.b16 %v223
    %v1387 = vunpack.c.l.b16 %v224
    %v1388 = vunpack.c.l.b16 %v225
    %v1389 = vunpack.c.l.b16 %v226
    %v1390 = vunpack.c.l.b16 %v227
    %v1391 = vunpack.c.l.b16 %v228
    %v1392 = vunpack.c.l.b16 %v229
    %v1393 = vunpack.c.l.b16 %v230
    %v1394 = vunpack.c.l.b16 %v231
    %v1395 = vunpack.c.l.b16 %v232
    %v1396 = vunpack.c.l.b16 %v233
    %v1397 = vunpack.c.l.b16 %v234
    %v1398 = vunpack.c.l.b16 %v235
    %v1399 = vunpack.c.l.b16 %v236
    %v1400 = vunpack.c.l.b16 %v237
    %v1401 = vunpack.c.l.b16 %v238
    %v1402 = vunpack.c.l.b16 %v239
    %v1403 = vunpack.c.l.b16 %v240
    %v1404 = vunpack.c.l.b16 %v241
    %v1405 = vunpack.c.l.b16 %v242
    %v1406 = vunpack.c.l.b16 %v243
    %v1407 = vunpack.c.l.b16 %v244
    %v1408 = vunpack.c.l.b16 %v245
    %v1409 = vunpack.c.l.b16 %v246
    %v1410 = vunpack.c.l.b16 %v247
    %v1411 = vunpack.c.l.b16 %v248
    %v1412 = vunpack.c.l.b16 %v249
    %v1413 = vunpack.c.l.b16 %v250
    %v1414 = vunpack.c.l.b16 %v251
    %v1415 = vunpack.c.l.b16 %v252
    %v1416 = vunpack.c.l.b16 %v253
    %v1417 = vunpack.c.l.b16 %v254
    %v1418 = vunpack.c.l.b16 %v255
    %v1419 = vunpack.c.l.b16 %v256
    %v1420 = vunpack.c.l.b16 %v257
    %v1421 = vunpack.c.l.b16 %v258
    %v1422 = vunpack.c.l.b16 %v259
    %v1423 = vunpack.c.l.b16 %v260
    %v1424 = vunpack.c.l.b16 %v261
    %v1425 = vunpack.c.l.b16 %v262
    %v1426 = vunpack.c.l.b16 %v263
    %v1427 = vunpack.c.l.b16 %v264
    %v1428 = vunpack.c.l.b16 %v265
    %v1429 = vunpack.c.l.b16 %v266
    %v1430 = vunpack.c.l.b16 %v267
    %v1431 = vunpack.c.l.b16 %v268
    %v1432 = vunpack.c.l.b16 %v269
    %v1433 = vunpack.c.l.b16 %v270
    %v1434 = vunpack.c.l.b16 %v271
    %v1435 = vunpack.c.l.b16 %v272
    %v1436 = vunpack.c.l.b16 %v273
    %v1437 = vunpack.c.l.b16 %v274
    %v1438 = vunpack.c.l.b16 %v275
    %v1439 = vunpack.c.l.b16 %v276
    %v1440 = vunpack.c.l.b16 %v277
    %v1441 = vunpack.c.l.b16 %v278
    %v1442 = vunpack.c.l.b16 %v279
    %v1443 = vunpack.c.l.b16 %v280
    %v1444 = vunpack.c.l.b16 %v281
    %v1445 = vunpack.c.l.b16 %v282
    %v1446 = vunpack.c.l.b16 %v283
    %v1447 = vunpack.c.l.b16 %v284
    %v1448 = vunpack.c.l.b16 %v285
    %v1449 = vunpack.c.l.b16 %v286
    %v1450 = vunpack.c.l.b16 %v287
    %v1451 = vunpack.c.l.b16 %v288
    %v1452 = vunpack.c.l.b16 %v289
    %v1453 = vunpack.c.l.b16 %v290
    %v1454 = vunpack.c.l.b16 %v291
    %v1455 = vunpack.c.l.b16 %v292
    %v1456 = vunpack.c.l.b16 %v293
    %v1457 = vunpack.c.l.b16 %v294
    %v1458 = vunpack.c.l.b16 %v295
    %v1459 = vunpack.c.l.b16 %v296
    %v1460 = vunpack.c.l.b16 %v297
    %v1461 = vunpack.c.l.b16 %v298
    %v1462 = vunpack.c.l.b16 %v299
    %v1463 = vunpack.c.l.b16 %v300
    %v1464 = vunpack.c.l.b16 %v301
    %v1465 = vunpack.c.l.b16 %v302
    %v1466 = vunpack.c.l.b16 %v303
    %v1467 = vunpack.c.l.b16 %v304
    %v1468 = vunpack.c.l.b16 %v305
    %v1469 = vunpack.c.l.b16 %v306
    %v1470 = vunpack.c.l.b16 %v307
    %v1471 = vunpack.c.l.b16 %v308
    %v1472 = vunpack.c.l.b16 %v309
    %v1473 = vunpack.c.l.b16 %v310
    %v1474 = vunpack.c.l.b16 %v311
    %v1475 = vunpack.c.l.b16 %v312
    %v1476 = vunpack.c.l.b16 %v313
    %v1477 = vunpack.c.l.b16 %v314
    %v1478 = vunpack.c.l.b16 %v315
    %v1479 = vunpack.c.l.b16 %v316
    %v1480 = vunpack.c.l.b16 %v317
    %v1481 = vunpack.c.l.b16 %v318
    %v1482 = vunpack.c.l.b16 %v319
    %v1483 = vunpack.c.l.b16 %v320
    %v1484 = vunpack.c.l.b16 %v321
    %v1485 = vunpack.c.l.b16 %v322
    %v1486 = vunpack.c.l.b16 %v323
    %v1487 = vunpack.c.l.b16 %v324
    %v1488 = vunpack.c.l.b16 %v325
    %v1489 = vunpack.c.l.b16 %v326
    %v1490 = vunpack.c.l.b16 %v327
    %v1491 = vunpack.c.l.b16 %v328
    %v1492 = vunpack.c.l.b16 %v329
    %v1493 = vunpack.c.l.b16 %v330
    %v1494 = vunpack.c.l.b16 %v331
    %v1495 = vunpack.c.l.b16 %v332
    %v1496 = vunpack.c.l.b16 %v333
    %v1497 = vunpack.c.l.b16 %v334
    %v1498 = vunpack.c.l.b16 %v335
    %v1499 = vunpack.c.l.b16 %v336
    %v1500 = vunpack.c.l.b16 %v337
    %v1501 = vunpack.c.l.b16 %v338
    %v1502 = vunpack.c.l.b16 %v339
    %v1503 = vunpack.c.l.b16 %v340
    %v1504 = vunpack.c.l.b16 %v341
    %v1505 = vunpack.c.l.b16 %v342
    %v1506 = vunpack.c.l.b16 %v343
    %v1507 = vunpack.c.l.b16 %v344
    %v1508 = vunpack.c.l.b16 %v345
    %v1509 = vunpack.c.l.b16 %v346
    %v1510 = vunpack.c.l.b16 %v347
    %v1511 = vunpack.c.l.b16 %v348
    %v1512 = vunpack.c.l.b16 %v349
    %v1513 = vunpack.c.l.b16 %v350
    %v1514 = vunpack.c.l.b16 %v351
    %v1515 = vunpack.c.l.b16 %v352
    %v1516 = vunpack.c.l.b16 %v353
    %v1517 = vunpack.c.l.b16 %v354
    %v1518 = vunpack.c.l.b16 %v355
    %v1519 = vunpack.c.l.b16 %v356
    %v1520 = vunpack.c.l.b16 %v357
    %v1521 = vunpack.c.l.b16 %v358
    %v1522 = vunpack.c.l.b16 %v359
    %v1523 = vunpack.c.l.b16 %v360
    %v1524 = vunpack.c.l.b16 %v361
    %v1525 = vunpack.c.l.b16 %v362
    %v1526 = vunpack.c.l.b16 %v363
    %v1527 = vunpack.c.l.b16 %v364
    %v1528 = vunpack.c.l.b16 %v365
    %v1529 = vunpack.c.l.b16 %v366
    %v1530 = vunpack.c.l.b16 %v367
    %v1531 = vunpack.c.l.b16 %v368
    %v1532 = vunpack.c.l.b16 %v369
    %v1533 = vunpack.c.l.b16 %v370
    %v1534 = vunpack.c.l.b16 %v371
    %v1535 = vunpack.c.l.b16 %v372
    %v1536 = vunpack.c.l.b16 %v373
    %v1537 = vunpack.c.l.b16 %v374
    %v1538 = vunpack.c.l.b16 %v375
    %v1539 = vunpack.c.l.b16 %v376
    %v1540 = vunpack.c.l.b16 %v377
    %v1541 = vunpack.c.l.b16 %v378
    %v1542 = vunpack.c.l.b16 %v379
    %v1543 = vunpack.c.l.b16 %v380
    %v1544 = vunpack.c.l.b16 %v381
    %v1545 = vunpack.c.l.b16 %v382
    %v1546 = vunpack.c.l.b16 %v383
    %v1547 = vunpack.c.l.b16 %v384
    %v1548 = vunpack.c.l.b16 %v385
    %v1549 = vunpack.c.l.b16 %v386
    %v1550 = vunpack.c.l.b16 %v387
    %v1551 = vunpack.c.l.b16 %v388
    %v1552 = vunpack.c.l.b16 %v389
    %v1553 = vunpack.c.l.b16 %v390
    %v1554 = vunpack.c.l.b16 %v391
    %v1555 = vunpack.c.l.b16 %v392
    %v1556 = vunpack.c.l.b16 %v393
    %v1557 = vunpack.c.l.b16 %v394
    %v1558 = vunpack.c.l.b16 %v395
    %v1559 = vunpack.c.l.b16 %v396
    %v1560 = vunpack.c.l.b16 %v397
    %v1561 = vunpack.c.l.b16 %v398
    %v1562 = vunpack.c.l.b16 %v399
    %v1563 = vunpack.c.l.b16 %v400
    %v1564 = vunpack.c.l.b16 %v401
    %v1565 = vunpack.c.l.b16 %v402
    %v1566 = vunpack.c.l.b16 %v403
    %v1567 = vunpack.c.l.b16 %v404
    %v1568 = vunpack.c.l.b16 %v405
    %v1569 = vunpack.c.l.b16 %v406
    %v1570 = vunpack.c.l.b16 %v407
    %v1571 = vunpack.c.l.b16 %v408
    %v1572 = vunpack.c.l.b16 %v409
    %v1573 = vunpack.c.l.b16 %v410
    %v1574 = vunpack.c.l.b16 %v411
    %v1575 = vunpack.c.l.b16 %v412
    %v1576 = vunpack.c.l.b16 %v413
    %v1577 = vunpack.c.l.b16 %v414
    %v1578 = vunpack.c.l.b16 %v415
    %v1579 = vunpack.c.l.b16 %v416
    %v1580 = vunpack.c.l.b16 %v417
    %v1581 = vunpack.c.l.b16 %v418
    %v1582 = vunpack.c.l.b16 %v419
    %v1583 = vunpack.c.l.b16 %v420
    %v1584 = vunpack.c.l.b16 %v421
    %v1585 = vunpack.c.l.b16 %v422
    %v1586 = vunpack.c.l.b16 %v423
    %v1587 = vunpack.c.l.b16 %v424
    %v1588 = vunpack.c.l.b16 %v425
    %v1589 = vunpack.c.l.b16 %v426
    %v1590 = vunpack.c.l.b16 %v427
    %v1591 = vunpack.c.l.b16 %v428
    %v1592 = vunpack.c.l.b16 %v429
    %v1593 = vunpack.c.l.b16 %v430
    %v1594 = vunpack.c.l.b16 %v431
    %v1595 = vunpack.c.l.b16 %v432
    %v1596 = vunpack.c.l.b16 %v433
    %v1597 = vunpack.c.l.b16 %v434
    %v1598 = vunpack.c.l.b16 %v435
    %v1599 = vunpack.c.l.b16 %v436
    %v1600 = vunpack.c.l.b16 %v437
    %v1601 = vunpack.c.l.b16 %v438
    %v1602 = vunpack.c.l.b16 %v439
    %v1603 = vunpack.c.l.b16 %v440
    %v1604 = vunpack.c.l.b16 %v441
    %v1605 = vunpack.c.l.b16 %v442
    %v1606 = vunpack.c.l.b16 %v443
    %v1607 = vunpack.c.l.b16 %v444
    %v1608 = vunpack.c.l.b16 %v445
    %v1609 = vunpack.c.l.b16 %v446
    %v1610 = vunpack.c.l.b16 %v447
    %v1611 = vunpack.c.l.b16 %v448
    %v1612 = vunpack.c.l.b16 %v449
    %v1613 = vunpack.c.l.b16 %v450
    %v1614 = vunpack.c.l.b16 %v451
    %v1615 = vunpack.c.l.b16 %v452
    %v1616 = vunpack.c.l.b16 %v453
    %v1617 = vunpack.c.l.b16 %v454
    %v1618 = vunpack.c.l.b16 %v455
    %v1619 = vunpack.c.l.b16 %v456
    %v1620 = vunpack.c.l.b16 %v457
    %v1621 = vunpack.c.l.b16 %v458
    %v1622 = vunpack.c.l.b16 %v459
    %v1623 = vunpack.c.l.b16 %v460
    %v1624 = vunpack.c.l.b16 %v461
    %v1625 = vunpack.c.l.b16 %v462
    %v1626 = vunpack.c.l.b16 %v463
    %v1627 = vunpack.c.l.b16 %v464
    %v1628 = vunpack.c.l.b16 %v465
    %v1629 = vunpack.c.l.b16 %v466
    %v1630 = vunpack.c.l.b16 %v467
    %v1631 = vunpack.c.l.b16 %v468
    %v1632 = vunpack.c.l.b16 %v469
    %v1633 = vunpack.c.l.b16 %v470
    %v1634 = vunpack.c.l.b16 %v471
    %v1635 = vunpack.c.l.b16 %v472
    %v1636 = vunpack.c.l.b16 %v473
    %v1637 = vunpack.c.l.b16 %v474
    %v1638 = vunpack.c.l.b16 %v475
    %v1639 = vunpack.c.l.b16 %v476
    %v1640 = vunpack.c.l.b16 %v477
    %v1641 = vunpack.c.l.b16 %v478
    %v1642 = vunpack.c.l.b16 %v479
    %v1643 = vunpack.c.l.b16 %v480
    %v1644 = vunpack.c.l.b16 %v481
    %v1645 = vunpack.c.l.b16 %v482
    %v1646 = vunpack.c.l.b16 %v483
    %v1647 = vunpack.c.l.b16 %v484
    %v1648 = vunpack.c.l.b16 %v485
    %v1649 = vunpack.c.l.b16 %v486
    %v1650 = vunpack.c.l.b16 %v487
    %v1651 = vunpack.c.l.b16 %v488
    %v1652 = vunpack.c.l.b16 %v489
    %v1653 = vunpack.c.l.b16 %v490
    %v1654 = vunpack.c.l.b16 %v491
    %v1655 = vunpack.c.l.b16 %v492
    %v1656 = vunpack.c.l.b16 %v493
    %v1657 = vunpack.c.l.b16 %v494
    %v1658 = vunpack.c.l.b16 %v495
    %v1659 = vunpack.c.l.b16 %v496
    %v1660 = vunpack.c.l.b16 %v497
    %v1661 = vunpack.c.l.b16 %v498
    %v1662 = vunpack.c.l.b16 %v499
    %v1663 = vunpack.c.l.b16 %v500
    %v1664 = vunpack.c.l.b16 %v501
    %v1665 = vunpack.c.l.b16 %v502
    %v1666 = vunpack.c.l.b16 %v503
    %v1667 = vunpack.c.l.b16 %v504
    %v1668 = vunpack.c.l.b16 %v505
    %v1669 = vunpack.c.l.b16 %v506
    %v1670 = vunpack.c.l.b16 %v507
    %v1671 = vunpack.c.l.b16 %v508
    %v1672 = vunpack.c.l.b16 %v509
    %v1673 = vunpack.c.l.b16 %v510
    %v1674 = vunpack.c.l.b16 %v511
    %v1675 = vunpack.c.l.b16 %v512
    %v1676 = vunpack.c.l.b16 %v513
    %v1677 = vunpack.c.l.b16 %v514
    %v1678 = vunpack.c.l.b16 %v515
    %v1679 = vunpack.c.l.b16 %v516
    %v1680 = vunpack.c.l.b16 %v517
    %v1681 = vunpack.c.l.b16 %v518
    %v1682 = vunpack.c.l.b16 %v519
    %v1683 = vunpack.c.l.b16 %v520
    %v1684 = vunpack.c.l.b16 %v521
    %v1685 = vunpack.c.l.b16 %v522
    %v1686 = vunpack.c.l.b16 %v523
    %v1687 = vunpack.c.l.b16 %v524
    %v1688 = vunpack.c.l.b16 %v525
    %v1689 = vunpack.c.l.b16 %v526
    %v1690 = vunpack.c.l.b16 %v527
    %v1691 = vunpack.c.l.b16 %v528
    %v1692 = vunpack.c.l.b16 %v529
    %v1693 = vunpack.c.l.b16 %v530
    %v1694 = vunpack.c.l.b16 %v531
    %v1695 = vunpack.c.l.b16 %v532
    %v1696 = vunpack.c.l.b16 %v533
    %v1697 = vunpack.c.l.b16 %v534
    %v1698 = vunpack.c.l.b16 %v535
    %v1699 = vunpack.c.l.b16 %v536
    %v1700 = vunpack.c.l.b16 %v537
    %v1701 = vunpack.c.l.b16 %v538
    %v1702 = vunpack.c.l.b16 %v539
    %v1703 = vunpack.c.l.b16 %v540
    %v1704 = vunpack.c.l.b16 %v541
    %v1705 = vunpack.c.l.b16 %v542
    %v1706 = vunpack.c.l.b16 %v543
    %v1707 = vunpack.c.l.b16 %v544
    %v1708 = vunpack.c.l.b16 %v545
    %v1709 = vunpack.c.l.b16 %v546
    %v1710 = vunpack.c.l.b16 %v547
    %v1711 = vunpack.c.l.b16 %v548
    %v1712 = vunpack.c.l.b16 %v549
    %v1713 = vunpack.c.l.b16 %v550
    %v1714 = vunpack.c.l.b16 %v551
    %v1715 = vunpack.c.l.b16 %v552
    %v1716 = vunpack.c.l.b16 %v553
    %v1717 = vunpack.c.l.b16 %v554
    %v1718 = vunpack.c.l.b16 %v555
    %v1719 = vunpack.c.l.b16 %v556
    %v1720 = vunpack.c.l.b16 %v557
    %v1721 = vunpack.c.l.b16 %v558
    %v1722 = vunpack.c.l.b16 %v559
    %v1723 = vunpack.c.l.b16 %v560
    %v1724 = vunpack.c.l.b16 %v561
    %v1725 = vunpack.c.l.b16 %v562
    %v1726 = vunpack.c.l.b16 %v563
    %v1727 = vunpack.c.l.b16 %v564
    %v1728 = vunpack.c.l.b16 %v565
    %v1729 = vunpack.c.l.b16 %v566
    %v1730 = vunpack.c.l.b16 %v567
    %v1731 = vunpack.c.l.b16 %v568
    %v1732 = vunpack.c.l.b16 %v569
    %v1733 = vunpack.c.l.b16 %v570
    %v1734 = vunpack.c.l.b16 %v571
    %v1735 = vunpack.c.l.b16 %v572
    %v1736 = vunpack.c.l.b16 %v573
    %v1737 = vunpack.c.l.b16 %v574
    %v1738 = vunpack.c.l.b16 %v575
    %v1739 = vunpack.c.l.b16 %v576
    %v1740 = vunpack.c.l.b16 %v577
    %v1741 = vunpack.c.l.b16 %v578
    %v1742 = vunpack.c.l.b16 %v579
    %v1743 = vunpack.c.l.b16 %v580
    %v1744 = vunpack.c.l.b16 %v581
    %v1745 = vunpack.c.l.b16 %v582
    %v1746 = vunpack.c.l.b16 %v583
    %v1747 = vunpack.c.l.b16 %v584
    %v1748 = vunpack.c.l.b16 %v585
    %v1749 = vunpack.c.l.b16 %v586
    %v1750 = vunpack.c.l.b16 %v587
    %v1751 = vunpack.c.l.b16 %v588
    %v1752 = vunpack.c.l.b16 %v589
    %v1753 = vunpack.c.l.b16 %v590
    %v1754 = vunpack.c.l.b16 %v591
    %v1755 = vunpack.c.l.b16 %v592
    %v1756 = vunpack.c.l.b16 %v593
    %v1757 = vunpack.c.l.b16 %v594
    %v1758 = vunpack.c.l.b16 %v595
    %v1759 = vunpack.c.l.b16 %v596
    %v1760 = vunpack.c.l.b16 %v597
    %v1761 = vunpack.c.l.b16 %v598
    %v1762 = vunpack.c.l.b16 %v599
    %v1763 = vunpack.c.l.b16 %v600
    %v1764 = vunpack.c.l.b16 %v601
    %v1765 = vunpack.c.l.b16 %v602
    %v1766 = vunpack.c.l.b16 %v603
    %v1767 = vunpack.c.l.b16 %v604
    %v1768 = vunpack.c.l.b16 %v605
    %v1769 = vunpack.c.l.b16 %v606
    %v1770 = vunpack.c.l.b16 %v607
    %v1771 = vunpack.c.l.b16 %v608
    %v1772 = vunpack.c.l.b16 %v609
    %v1773 = vunpack.c.l.b16 %v610
    %v1774 = vunpack.c.l.b16 %v611
    %v1775 = vunpack.c.l.b16 %v612
    %v1776 = vunpack.c.l.b16 %v613
    %v1777 = vunpack.c.l.b16 %v614
    %v1778 = vunpack.c.l.b16 %v615
    %v1779 = vunpack.c.l.b16 %v616
    %v1780 = vpack.c.b16 %v1205, %v1204
    %v1781 = vpack.c.b16 %v1207, %v1206
    %v1782 = vpack.c.b16 %v1209, %v1208
    %v1783 = vpack.c.b16 %v1211, %v1210
    %v1784 = vpack.c.b16 %v1213, %v1212
    %v1785 = vpack.c.b16 %v1215, %v1214
    %v1786 = vpack.c.b16 %v1217, %v1216
    %v1787 = vpack.c.b16 %v1219, %v1218
    %v1788 = vpack.c.b16 %v1221, %v1220
    %v1789 = vpack.c.b16 %v1223, %v1222
    %v1790 = vpack.c.b16 %v1225, %v1224
    %v1791 = vpack.c.b16 %v1227, %v1226
    %v1792 = vpack.c.b16 %v1229, %v1228
    %v1793 = vpack.c.b16 %v1231, %v1230
    %v1794 = vpack.c.b16 %v1233, %v1232
    %v1795 = vpack.c.b16 %v1235, %v1234
    %v1796 = vpack.c.b16 %v1237, %v1236
    %v1797 = vpack.c.b16 %v1239, %v1238
    %v1798 = vpack.c.b16 %v1241, %v1240
    %v1799 = vpack.c.b16 %v1243, %v1242
    %v1800 = vpack.c.b16 %v1245, %v1244
    %v1801 = vpack.c.b16 %v1247, %v1246
    %v1802 = vpack.c.b16 %v1249, %v1248
    %v1803 = vpack.c.b16 %v1251, %v1250
    %v1804 = vpack.c.b16 %v1253, %v1252
    %v1805 = vpack.c.b16 %v1255, %v1254
    %v1806 = vpack.c.b16 %v1257, %v1256
    %v1807 = vpack.c.b16 %v1259, %v1258
    %v1808 = vpack.c.b16 %v1261, %v1260
    %v1809 = vpack.c.b16 %v1263, %v1262
    %v1810 = vpack.c.b16 %v1265, %v1264
    %v1811 = vpack.c.b16 %v1267, %v1266
    %v1812 = vpack.c.b16 %v1269, %v1268
    %v1813 = vpack.c.b16 %v1271, %v1270
    %v1814 = vpack.c.b16 %v1273, %v1272
    %v1815 = vpack.c.b16 %v1275, %v1274
    %v1816 = vpack.c.b16 %v1277, %v1276
    %v1817 = vpack.c.b16 %v1279, %v1278
    %v1818 = vpack.c.b16 %v1281, %v1280
    %v1819 = vpack.c.b16 %v1283, %v1282
    %v1820 = vpack.c.b16 %v1285, %v1284
    %v1821 = vpack.c.b16 %v1287, %v1286
    %v1822 = vpack.c.b16 %v1289, %v1288
    %v1823 = vpack.c.b16 %v1291, %v1290
    %v1824 = vpack.c.b16 %v1293, %v1292
    %v1825 = vpack.c.b16 %v1295, %v1294
    %v1826 = vpack.c.b16 %v1297, %v1296
    %v1827 = vpack.c.b16 %v1299, %v1298
    %v1828 = vpack.c.b16 %v1301, %v1300
    %v1829 = vpack.c.b16 %v1303, %v1302
    %v1830 = vpack.c.b16 %v1305, %v1304
    %v1831 = vpack.c.b16 %v1307, %v1306
    %v1832 = vpack.c.b16 %v1309, %v1308
    %v1833 = vpack.c.b16 %v1311, %v1310
    %v1834 = vpack.c.b16 %v1313, %v1312
    %v1835 = vpack.c.b16 %v1315, %v1314
    %v1836 = vpack.c.b16 %v1317, %v1316
    %v1837 = vpack.c.b16 %v1319, %v1318
    %v1838 = vpack.c.b16 %v1321, %v1320
    %v1839 = vpack.c.b16 %v1323, %v1322
    %v1840 = vpack.c.b16 %v1325, %v1324
    %v1841 = vpack.c.b16 %v1327, %v1326
    %v1842 = vpack.c.b16 %v1329, %v1328
    %v1843 = vpack.c.b16 %v1331, %v1330
    %v1844 = vpack.c.b16 %v1333, %v1332
    %v1845 = vpack.c.b16 %v1335, %v1334
    %v1846 = vpack.c.b16 %v1337, %v1336
    %v1847 = vpack.c.b16 %v1339, %v1338
    %v1848 = vpack.c.b16 %v1341, %v1340
    %v1849 = vpack.c.b16 %v1343, %v1342
    %v1850 = vpack.c.b16 %v1345, %v1344
    %v1851 = vpack.c.b16 %v1347, %v1346
    %v1852 = vpack.c.b16 %v1349, %v1348
    %v1853 = vpack.c.b16 %v1351, %v1350
    %v1854 = vpack.c.b16 %v1353, %v1352
    %v1855 = vpack.c.b16 %v1355, %v1354
    %v1856 = vpack.c.b16 %v1357, %v1356
    %v1857 = vpack.c.b16 %v1359, %v1358
    %v1858 = vpack.c.b16 %v1361, %v1360
    %v1859 = vpack.c.b16 %v1363, %v1362
    %v1860 = vpack.c.b16 %v1365, %v1364
    %v1861 = vpack.c.b16 %v1367, %v1366
    %v1862 = vpack.c.b16 %v1369, %v1368
    %v1863 = vpack.c.b16 %v1371, %v1370
    %v1864 = vpack.c.b16 %v1373, %v1372
    %v1865 = vpack.c.b16 %v1375, %v1374
    %v1866 = vpack.c.b16 %v1377, %v1376
    %v1867 = vpack.c.b16 %v1379, %v1378
    %v1868 = vpack.c.b16 %v1381, %v1380
    %v1869 = vpack.c.b16 %v1383, %v1382
    %v1870 = vpack.c.b16 %v1385, %v1384
    %v1871 = vpack.c.b16 %v1387, %v1386
    %v1872 = vpack.c.b16 %v1389, %v1388
    %v1873 = vpack.c.b16 %v1391, %v1390
    %v1874 = vpack.c.b16 %v1393, %v1392
    %v1875 = vpack.c.b16 %v1395, %v1394
    %v1876 = vpack.c.b16 %v1397, %v1396
    %v1877 = vpack.c.b16 %v1399, %v1398
    %v1878 = vpack.c.b16 %v1401, %v1400
    %v1879 = vpack.c.b16 %v1403, %v1402
    %v1880 = vpack.c.b16 %v1405, %v1404
    %v1881 = vpack.c.b16 %v1407, %v1406
    %v1882 = vpack.c.b16 %v1409, %v1408
    %v1883 = vpack.c.b16 %v1411, %v1410
    %v1884 = vpack.c.b16 %v1413, %v1412
    %v1885 = vpack.c.b16 %v1415, %v1414
    %v1886 = vpack.c.b16 %v1417, %v1416
    %v1887 = vpack.c.b16 %v1419, %v1418
    %v1888 = vpack.c.b16 %v1421, %v1420
    %v1889 = vpack.c.b16 %v1423, %v1422
    %v1890 = vpack.c.b16 %v1425, %v1424
    %v1891 = vpack.c.b16 %v1427, %v1426
    %v1892 = vpack.c.b16 %v1429, %v1428
    %v1893 = vpack.c.b16 %v1431, %v1430
    %v1894 = vpack.c.b16 %v1433, %v1432
    %v1895 = vpack.c.b16 %v1435, %v1434
    %v1896 = vpack.c.b16 %v1437, %v1436
    %v1897 = vpack.c.b16 %v1439, %v1438
    %v1898 = vpack.c.b16 %v1441, %v1440
    %v1899 = vpack.c.b16 %v1443, %v1442
    %v1900 = vpack.c.b16 %v1445, %v1444
    %v1901 = vpack.c.b16 %v1447, %v1446
    %v1902 = vpack.c.b16 %v1449, %v1448
    %v1903 = vpack.c.b16 %v1451, %v1450
    %v1904 = vpack.c.b16 %v1453, %v1452
    %v1905 = vpack.c.b16 %v1455, %v1454
    %v1906 = vpack.c.b16 %v1457, %v1456
    %v1907 = vpack.c.b16 %v1459, %v1458
    %v1908 = vpack.c.b16 %v1461, %v1460
    %v1909 = vpack.c.b16 %v1463, %v1462
    %v1910 = vpack.c.b16 %v1465, %v1464
    %v1911 = vpack.c.b16 %v1467, %v1466
    %v1912 = vpack.c.b16 %v1469, %v1468
    %v1913 = vpack.c.b16 %v1471, %v1470
    %v1914 = vpack.c.b16 %v1473, %v1472
    %v1915 = vpack.c.b16 %v1475, %v1474
    %v1916 = vpack.c.b16 %v1477, %v1476
    %v1917 = vpack.c.b16 %v1479, %v1478
    %v1918 = vpack.c.b16 %v1481, %v1480
    %v1919 = vpack.c.b16 %v1483, %v1482
    %v1920 = vpack.c.b16 %v1485, %v1484
    %v1921 = vpack.c.b16 %v1487, %v1486
    %v1922 = vpack.c.b16 %v1489, %v1488
    %v1923 = vpack.c.b16 %v1491, %v1490
    %v1924 = vpack.c.b16 %v1493, %v1492
    %v1925 = vpack.c.b16 %v1495, %v1494
    %v1926 = vpack.c.b16 %v1497, %v1496
    %v1927 = vpack.c.b16 %v1499, %v1498
    %v1928 = vpack.c.b16 %v1501, %v1500
    %v1929 = vpack.c.b16 %v1503, %v1502
    %v1930 = vpack.c.b16 %v1505, %v1504
    %v1931 = vpack.c.b16 %v1507, %v1506
    %v1932 = vpack.c.b16 %v1509, %v1508
    %v1933 = vpack.c.b16 %v1511, %v1510
    %v1934 = vpack.c.b16 %v1513, %v1512
    %v1935 = vpack.c.b16 %v1515, %v1514
    %v1936 = vpack.c.b16 %v1517, %v1516
    %v1937 = vpack.c.b16 %v1519, %v1518
    %v1938 = vpack.c.b16 %v1521, %v1520
    %v1939 = vpack.c.b16 %v1523, %v1522
    %v1940 = vpack.c.b16 %v1525, %v1524
    %v1941 = vpack.c.b16 %v1527, %v1526
    %v1942 = vpack.c.b16 %v1529, %v1528
    %v1943 = vpack.c.b16 %v1531, %v1530
    %v1944 = vpack.c.b16 %v1533, %v1532
    %v1945 = vpack.c.b16 %v1535, %v1534
    %v1946 = vpack.c.b16 %v1537, %v1536
    %v1947 = vpack.c.b16 %v1539, %v1538
    %v1948 = vpack.c.b16 %v1541, %v1540
    %v1949 = vpack.c.b16 %v1543, %v1542
    %v1950 = vpack.c.b16 %v1545, %v1544
    %v1951 = vpack.c.b16 %v1547, %v1546
    %v1952 = vpack.c.b16 %v1549, %v1548
    %v1953 = vpack.c.b16 %v1551, %v1550
    %v1954 = vpack.c.b16 %v1553, %v1552
    %v1955 = vpack.c.b16 %v1555, %v1554
    %v1956 = vpack.c.b16 %v1557, %v1556
    %v1957 = vpack.c.b16 %v1559, %v1558
    %v1958 = vpack.c.b16 %v1561, %v1560
    %v1959 = vpack.c.b16 %v1563, %v1562
    %v1960 = vpack.c.b16 %v1565, %v1564
    %v1961 = vpack.c.b16 %v1567, %v1566
    %v1962 = vpack.c.b16 %v1569, %v1568
    %v1963 = vpack.c.b16 %v1571, %v1570
    %v1964 = vpack.c.b16 %v1573, %v1572
    %v1965 = vpack.c.b16 %v1575, %v1574
    %v1966 = vpack.c.b16 %v1577, %v1576
    %v1967 = vpack.c.b16 %v1579, %v1578
    %v1968 = vpack.c.b16 %v1581, %v1580
    %v1969 = vpack.c.b16 %v1583, %v1582
    %v1970 = vpack.c.b16 %v1585, %v1584
    %v1971 = vpack.c.b16 %v1587, %v1586
    %v1972 = vpack.c.b16 %v1589, %v1588
    %v1973 = vpack.c.b16 %v1591, %v1590
    %v1974 = vpack.c.b16 %v1593, %v1592
    %v1975 = vpack.c.b16 %v1595, %v1594
    %v1976 = vpack.c.b16 %v1597, %v1596
    %v1977 = vpack.c.b16 %v1599, %v1598
    %v1978 = vpack.c.b16 %v1601, %v1600
    %v1979 = vpack.c.b16 %v1603, %v1602
    %v1980 = vpack.c.b16 %v1605, %v1604
    %v1981 = vpack.c.b16 %v1607, %v1606
    %v1982 = vpack.c.b16 %v1609, %v1608
    %v1983 = vpack.c.b16 %v1611, %v1610
    %v1984 = vpack.c.b16 %v1613, %v1612
    %v1985 = vpack.c.b16 %v1615, %v1614
    %v1986 = vpack.c.b16 %v1617, %v1616
    %v1987 = vpack.c.b16 %v1619, %v1618
    %v1988 = vpack.c.b16 %v1621, %v1620
    %v1989 = vpack.c.b16 %v1623, %v1622
    %v1990 = vpack.c.b16 %v1625, %v1624
    %v1991 = vpack.c.b16 %v1627, %v1626
    %v1992 = vpack.c.b16 %v1629, %v1628
    %v1993 = vpack.c.b16 %v1631, %v1630
    %v1994 = vpack.c.b16 %v1633, %v1632
    %v1995 = vpack.c.b16 %v1635, %v1634
    %v1996 = vpack.c.b16 %v1637, %v1636
    %v1997 = vpack.c.b16 %v1639, %v1638
    %v1998 = vpack.c.b16 %v1641, %v1640
    %v1999 = vpack.c.b16 %v1643, %v1642
    %v2000 = vpack.c.b16 %v1645, %v1644
    %v2001 = vpack.c.b16 %v1647, %v1646
    %v2002 = vpack.c.b16 %v1649, %v1648
    %v2003 = vpack.c.b16 %v1651, %v1650
    %v2004 = vpack.c.b16 %v1653, %v1652
    %v2005 = vpack.c.b16 %v1655, %v1654
    %v2006 = vpack.c.b16 %v1657, %v1656
    %v2007 = vpack.c.b16 %v1659, %v1658
    %v2008 = vpack.c.b16 %v1661, %v1660
    %v2009 = vpack.c.b16 %v1663, %v1662
    %v2010 = vpack.c.b16 %v1665, %v1664
    %v2011 = vpack.c.b16 %v1667, %v1666
    %v2012 = vpack.c.b16 %v1669, %v1668
    %v2013 = vpack.c.b16 %v1671, %v1670
    %v2014 = vpack.c.b16 %v1673, %v1672
    %v2015 = vpack.c.b16 %v1675, %v1674
    %v2016 = vpack.c.b16 %v1677, %v1676
    %v2017 = vpack.c.b16 %v1679, %v1678
    %v2018 = vpack.c.b16 %v1681, %v1680
    %v2019 = vpack.c.b16 %v1683, %v1682
    %v2020 = vpack.c.b16 %v1685, %v1684
    %v2021 = vpack.c.b16 %v1687, %v1686
    %v2022 = vpack.c.b16 %v1689, %v1688
    %v2023 = vpack.c.b16 %v1691, %v1690
    %v2024 = vpack.c.b16 %v1693, %v1692
    %v2025 = vpack.c.b16 %v1695, %v1694
    %v2026 = vpack.c.b16 %v1697, %v1696
    %v2027 = vpack.c.b16 %v1699, %v1698
    %v2028 = vpack.c.b16 %v1701, %v1700
    %v2029 = vpack.c.b16 %v1703, %v1702
    %v2030 = vpack.c.b16 %v1705, %v1704
    %v2031 = vpack.c.b16 %v1707, %v1706
    %v2032 = vpack.c.b16 %v1709, %v1708
    %v2033 = vpack.c.b16 %v1711, %v1710
    %v2034 = vpack.c.b16 %v1713, %v1712
    %v2035 = vpack.c.b16 %v1715, %v1714
    %v2036 = vpack.c.b16 %v1717, %v1716
    %v2037 = vpack.c.b16 %v1719, %v1718
    %v2038 = vpack.c.b16 %v1721, %v1720
    %v2039 = vpack.c.b16 %v1723, %v1722
    %v2040 = vpack.c.b16 %v1725, %v1724
    %v2041 = vpack.c.b16 %v1727, %v1726
    %v2042 = vpack.c.b16 %v1729, %v1728
    %v2043 = vpack.c.b16 %v1731, %v1730
    %v2044 = vpack.c.b16 %v1733, %v1732
    %v2045 = vpack.c.b16 %v1735, %v1734
    %v2046 = vpack.c.b16 %v1737, %v1736
    %v2047 = vpack.c.b16 %v1739, %v1738
    %v2048 = vpack.c.b16 %v1741, %v1740
    %v2049 = vpack.c.b16 %v1743, %v1742
    %v2050 = vpack.c.b16 %v1745, %v1744
    %v2051 = vpack.c.b16 %v1747, %v1746
    %v2052 = vpack.c.b16 %v1749, %v1748
    %v2053 = vpack.c.b16 %v1751, %v1750
    %v2054 = vpack.c.b16 %v1753, %v1752
    %v2055 = vpack.c.b16 %v1755, %v1754
    %v2056 = vpack.c.b16 %v1757, %v1756
    %v2057 = vpack.c.b16 %v1759, %v1758
    %v2058 = vpack.c.b16 %v1761, %v1760
    %v2059 = vpack.c.b16 %v1763, %v1762
    %v2060 = vpack.c.b16 %v1765, %v1764
    %v2061 = vpack.c.b16 %v1767, %v1766
    %v2062 = vpack.c.b16 %v1769, %v1768
    %v2063 = vpack.c.b16 %v1771, %v1770
    %v2064 = vpack.c.b16 %v1773, %v1772
    %v2065 = vpack.c.b16 %v1775, %v1774
    %v2066 = vpack.c.b16 %v1777, %v1776
    %v2067 = vpack.c.b16 %v1779, %v1778
    %v2072 = vunpack.c.l.b16 %v617
    %v2073 = vunpack.c.l.b16 %v618
    %v2074 = vunpack.c.l.b16 %v619
    %v2075 = vunpack.c.l.b16 %v620
    %v2076 = vpack.c.b16 %v2073, %v2072
    %v2077 = vpack.c.b16 %v2075, %v2074
    %vm2080 = vcmask 261120
    %v2082 = vsel %vm2080, %v1780, 0
    %v2085 = vsel %vm2080, %v1781, 0
    %v2088 = vsel %vm2080, %v1782, 0
    %v2091 = vsel %vm2080, %v1783, 0
    %v2094 = vsel %vm2080, %v1784, 0
    %v2097 = vsel %vm2080, %v1785, 0
    %v2100 = vsel %vm2080, %v1786, 0
    %v2103 = vsel %vm2080, %v1787, 0
    %v2106 = vsel %vm2080, %v1788, 0
    %v2109 = vsel %vm2080, %v1789, 0
    %v2112 = vsel %vm2080, %v1790, 0
    %v2115 = vsel %vm2080, %v1791, 0
    %v2118 = vsel %vm2080, %v1792, 0
    %v2121 = vsel %vm2080, %v1793, 0
    %v2124 = vsel %vm2080, %v1794, 0
    %v2127 = vsel %vm2080, %v1795, 0
    %v2130 = vsel %vm2080, %v1796, 0
    %v2133 = vsel %vm2080, %v1797, 0
    %v2136 = vsel %vm2080, %v1798, 0
    %v2139 = vsel %vm2080, %v1799, 0
    %v2142 = vsel %vm2080, %v1800, 0
    %v2145 = vsel %vm2080, %v1801, 0
    %v2148 = vsel %vm2080, %v1802, 0
    %v2151 = vsel %vm2080, %v1803, 0
    %v2154 = vsel %vm2080, %v1804, 0
    %v2157 = vsel %vm2080, %v1805, 0
    %v2160 = vsel %vm2080, %v1806, 0
    %v2163 = vsel %vm2080, %v1807, 0
    %v2166 = vsel %vm2080, %v1808, 0
    %v2169 = vsel %vm2080, %v1809, 0
    %v2172 = vsel %vm2080, %v1810, 0
    %v2175 = vsel %vm2080, %v1811, 0
    %v2178 = vsel %vm2080, %v1812, 0
    %v2181 = vsel %vm2080, %v1813, 0
    %v2184 = vsel %vm2080, %v1814, 0
    %v2187 = vsel %vm2080, %v1815, 0
    %v2190 = vsel %vm2080, %v1816, 0
    %v2193 = vsel %vm2080, %v1817, 0
    %v2196 = vsel %vm2080, %v1818, 0
    %v2199 = vsel %vm2080, %v1819, 0
    %v2202 = vsel %vm2080, %v1820, 0
    %v2205 = vsel %vm2080, %v1821, 0
    %v2208 = vsel %vm2080, %v1822, 0
    %v2211 = vsel %vm2080, %v1823, 0
    %v2214 = vsel %vm2080, %v1824, 0
    %v2217 = vsel %vm2080, %v1825, 0
    %v2220 = vsel %vm2080, %v1826, 0
    %v2223 = vsel %vm2080, %v1827, 0
    %v2226 = vsel %vm2080, %v1828, 0
    %v2229 = vsel %vm2080, %v1829, 0
    %v2232 = vsel %vm2080, %v1830, 0
    %v2235 = vsel %vm2080, %v1831, 0
    %v2238 = vsel %vm2080, %v1832, 0
    %v2241 = vsel %vm2080, %v1833, 0
    %v2244 = vsel %vm2080, %v1834, 0
    %v2247 = vsel %vm2080, %v1835, 0
    %v2250 = vsel %vm2080, %v1836, 0
    %v2253 = vsel %vm2080, %v1837, 0
    %v2256 = vsel %vm2080, %v1838, 0
    %v2259 = vsel %vm2080, %v1839, 0
    %v2262 = vsel %vm2080, %v1840, 0
    %v2265 = vsel %vm2080, %v1841, 0
    %v2268 = vsel %vm2080, %v1842, 0
    %v2271 = vsel %vm2080, %v1843, 0
    %v2274 = vsel %vm2080, %v1844, 0
    %v2277 = vsel %vm2080, %v1845, 0
    %v2280 = vsel %vm2080, %v1846, 0
    %v2283 = vsel %vm2080, %v1847, 0
    %v2286 = vsel %vm2080, %v1848, 0
    %v2289 = vsel %vm2080, %v1849, 0
    %v2292 = vsel %vm2080, %v1850, 0
    %v2295 = vsel %vm2080, %v1851, 0
    %v2298 = vsel %vm2080, %v1852, 0
    %v2301 = vsel %vm2080, %v1853, 0
    %v2304 = vsel %vm2080, %v1854, 0
    %v2307 = vsel %vm2080, %v1855, 0
    %v2310 = vsel %vm2080, %v1856, 0
    %v2313 = vsel %vm2080, %v1857, 0
    %v2316 = vsel %vm2080, %v1858, 0
    %v2319 = vsel %vm2080, %v1859, 0
    %v2322 = vsel %vm2080, %v1860, 0
    %v2325 = vsel %vm2080, %v1861, 0
    %v2328 = vsel %vm2080, %v1862, 0
    %v2331 = vsel %vm2080, %v1863, 0
    %v2334 = vsel %vm2080, %v1864, 0
    %v2337 = vsel %vm2080, %v1865, 0
    %v2340 = vsel %vm2080, %v1866, 0
    %v2343 = vsel %vm2080, %v1867, 0
    %v2346 = vsel %vm2080, %v1868, 0
    %v2349 = vsel %vm2080, %v1869, 0
    %v2352 = vsel %vm2080, %v1870, 0
    %v2355 = vsel %vm2080, %v1871, 0
    %v2358 = vsel %vm2080, %v1872, 0
    %v2361 = vsel %vm2080, %v1873, 0
    %v2364 = vsel %vm2080, %v1874, 0
    %v2367 = vsel %vm2080, %v1875, 0
    %v2370 = vsel %vm2080, %v1876, 0
    %v2373 = vsel %vm2080, %v1877, 0
    %v2376 = vsel %vm2080, %v1878, 0
    %v2379 = vsel %vm2080, %v1879, 0
    %v2382 = vsel %vm2080, %v1880, 0
    %v2385 = vsel %vm2080, %v1881, 0
    %v2388 = vsel %vm2080, %v1882, 0
    %v2391 = vsel %vm2080, %v1883, 0
    %v2394 = vsel %vm2080, %v1884, 0
    %v2397 = vsel %vm2080, %v1885, 0
    %v2400 = vsel %vm2080, %v1886, 0
    %v2403 = vsel %vm2080, %v1887, 0
    %v2406 = vsel %vm2080, %v1888, 0
    %v2409 = vsel %vm2080, %v1889, 0
    %v2412 = vsel %vm2080, %v1890, 0
    %v2415 = vsel %vm2080, %v1891, 0
    %v2418 = vsel %vm2080, %v1892, 0
    %v2421 = vsel %vm2080, %v1893, 0
    %v2424 = vsel %vm2080, %v1894, 0
    %v2427 = vsel %vm2080, %v1895, 0
    %v2430 = vsel %vm2080, %v1896, 0
    %v2433 = vsel %vm2080, %v1897, 0
    %v2436 = vsel %vm2080, %v1898, 0
    %v2439 = vsel %vm2080, %v1899, 0
    %v2442 = vsel %vm2080, %v1900, 0
    %v2445 = vsel %vm2080, %v1901, 0
    %v2448 = vsel %vm2080, %v1902, 0
    %v2451 = vsel %vm2080, %v1903, 0
    %v2454 = vsel %vm2080, %v1904, 0
    %v2457 = vsel %vm2080, %v1905, 0
    %v2460 = vsel %vm2080, %v1906, 0
    %v2463 = vsel %vm2080, %v1907, 0
    %v2466 = vsel %vm2080, %v1908, 0
    %v2469 = vsel %vm2080, %v1909, 0
    %v2472 = vsel %vm2080, %v1910, 0
    %v2475 = vsel %vm2080, %v1911, 0
    %v2478 = vsel %vm2080, %v1912, 0
    %v2481 = vsel %vm2080, %v1913, 0
    %v2484 = vsel %vm2080, %v1914, 0
    %v2487 = vsel %vm2080, %v1915, 0
    %v2490 = vsel %vm2080, %v1916, 0
    %v2493 = vsel %vm2080, %v1917, 0
    %v2496 = vsel %vm2080, %v1918, 0
    %v2499 = vsel %vm2080, %v1919, 0
    %v2502 = vsel %vm2080, %v1920, 0
    %v2505 = vsel %vm2080, %v1921, 0
    %v2508 = vsel %vm2080, %v1922, 0
    %v2511 = vsel %vm2080, %v1923, 0
    %v2514 = vsel %vm2080, %v1924, 0
    %v2517 = vsel %vm2080, %v1925, 0
    %v2520 = vsel %vm2080, %v1926, 0
    %v2523 = vsel %vm2080, %v1927, 0
    %v2526 = vsel %vm2080, %v1928, 0
    %v2529 = vsel %vm2080, %v1929, 0
    %v2532 = vsel %vm2080, %v1930, 0
    %v2535 = vsel %vm2080, %v1931, 0
    %v2538 = vsel %vm2080, %v1932, 0
    %v2541 = vsel %vm2080, %v1933, 0
    %v2544 = vsel %vm2080, %v1934, 0
    %v2547 = vsel %vm2080, %v1935, 0
    %v2550 = vsel %vm2080, %v1936, 0
    %v2553 = vsel %vm2080, %v1937, 0
    %v2556 = vsel %vm2080, %v1938, 0
    %v2559 = vsel %vm2080, %v1939, 0
    %v2562 = vsel %vm2080, %v1940, 0
    %v2565 = vsel %vm2080, %v1941, 0
    %v2568 = vsel %vm2080, %v1942, 0
    %v2571 = vsel %vm2080, %v1943, 0
    %v2574 = vsel %vm2080, %v1944, 0
    %v2577 = vsel %vm2080, %v1945, 0
    %v2580 = vsel %vm2080, %v1946, 0
    %v2583 = vsel %vm2080, %v1947, 0
    %v2586 = vsel %vm2080, %v1948, 0
    %v2589 = vsel %vm2080, %v1949, 0
    %v2592 = vsel %vm2080, %v1950, 0
    %v2595 = vsel %vm2080, %v1951, 0
    %v2598 = vsel %vm2080, %v1952, 0
    %v2601 = vsel %vm2080, %v1953, 0
    %v2604 = vsel %vm2080, %v1954, 0
    %v2607 = vsel %vm2080, %v1955, 0
    %v2610 = vsel %vm2080, %v1956, 0
    %v2613 = vsel %vm2080, %v1957, 0
    %v2616 = vsel %vm2080, %v1958, 0
    %v2619 = vsel %vm2080, %v1959, 0
    %v2622 = vsel %vm2080, %v1960, 0
    %v2625 = vsel %vm2080, %v1961, 0
    %v2628 = vsel %vm2080, %v1962, 0
    %v2631 = vsel %vm2080, %v1963, 0
    %v2634 = vsel %vm2080, %v1964, 0
    %v2637 = vsel %vm2080, %v1965, 0
    %v2640 = vsel %vm2080, %v1966, 0
    %v2643 = vsel %vm2080, %v1967, 0
    %v2646 = vsel %vm2080, %v1968, 0
    %v2649 = vsel %vm2080, %v1969, 0
    %v2652 = vsel %vm2080, %v1970, 0
    %v2655 = vsel %vm2080, %v1971, 0
    %v2658 = vsel %vm2080, %v1972, 0
    %v2661 = vsel %vm2080, %v1973, 0
    %v2664 = vsel %vm2080, %v1974, 0
    %v2667 = vsel %vm2080, %v1975, 0
    %v2670 = vsel %vm2080, %v1976, 0
    %v2673 = vsel %vm2080, %v1977, 0
    %v2676 = vsel %vm2080, %v1978, 0
    %v2679 = vsel %vm2080, %v1979, 0
    %v2682 = vsel %vm2080, %v1980, 0
    %v2685 = vsel %vm2080, %v1981, 0
    %v2688 = vsel %vm2080, %v1982, 0
    %v2691 = vsel %vm2080, %v1983, 0
    %v2694 = vsel %vm2080, %v1984, 0
    %v2697 = vsel %vm2080, %v1985, 0
    %v2700 = vsel %vm2080, %v1986, 0
    %v2703 = vsel %vm2080, %v1987, 0
    %v2706 = vsel %vm2080, %v1988, 0
    %v2709 = vsel %vm2080, %v1989, 0
    %v2712 = vsel %vm2080, %v1990, 0
    %v2715 = vsel %vm2080, %v1991, 0
    %v2718 = vsel %vm2080, %v1992, 0
    %v2721 = vsel %vm2080, %v1993, 0
    %v2724 = vsel %vm2080, %v1994, 0
    %v2727 = vsel %vm2080, %v1995, 0
    %v2730 = vsel %vm2080, %v1996, 0
    %v2733 = vsel %vm2080, %v1997, 0
    %v2736 = vsel %vm2080, %v1998, 0
    %v2739 = vsel %vm2080, %v1999, 0
    %v2742 = vsel %vm2080, %v2000, 0
    %v2745 = vsel %vm2080, %v2001, 0
    %v2748 = vsel %vm2080, %v2002, 0
    %v2751 = vsel %vm2080, %v2003, 0
    %v2754 = vsel %vm2080, %v2004, 0
    %v2757 = vsel %vm2080, %v2005, 0
    %v2760 = vsel %vm2080, %v2006, 0
    %v2763 = vsel %vm2080, %v2007, 0
    %v2766 = vsel %vm2080, %v2008, 0
    %v2769 = vsel %vm2080, %v2009, 0
    %v2772 = vsel %vm2080, %v2010, 0
    %v2775 = vsel %vm2080, %v2011, 0
    %v2778 = vsel %vm2080, %v2012, 0
    %v2781 = vsel %vm2080, %v2013, 0
    %v2784 = vsel %vm2080, %v2014, 0
    %v2787 = vsel %vm2080, %v2015, 0
    %v2790 = vsel %vm2080, %v2016, 0
    %v2793 = vsel %vm2080, %v2017, 0
    %v2796 = vsel %vm2080, %v2018, 0
    %v2799 = vsel %vm2080, %v2019, 0
    %v2802 = vsel %vm2080, %v2020, 0
    %v2805 = vsel %vm2080, %v2021, 0
    %v2808 = vsel %vm2080, %v2022, 0
    %v2811 = vsel %vm2080, %v2023, 0
    %v2814 = vsel %vm2080, %v2024, 0
    %v2817 = vsel %vm2080, %v2025, 0
    %v2820 = vsel %vm2080, %v2026, 0
    %v2823 = vsel %vm2080, %v2027, 0
    %v2826 = vsel %vm2080, %v2028, 0
    %v2829 = vsel %vm2080, %v2029, 0
    %v2832 = vsel %vm2080, %v2030, 0
    %v2835 = vsel %vm2080, %v2031, 0
    %v2838 = vsel %vm2080, %v2032, 0
    %v2841 = vsel %vm2080, %v2033, 0
    %v2844 = vsel %vm2080, %v2034, 0
    %v2847 = vsel %vm2080, %v2035, 0
    %v2850 = vsel %vm2080, %v2036, 0
    %v2853 = vsel %vm2080, %v2037, 0
    %v2856 = vsel %vm2080, %v2038, 0
    %v2859 = vsel %vm2080, %v2039, 0
    %v2862 = vsel %vm2080, %v2040, 0
    %v2865 = vsel %vm2080, %v2041, 0
    %v2868 = vsel %vm2080, %v2042, 0
    %v2871 = vsel %vm2080, %v2043, 0
    %v2874 = vsel %vm2080, %v2044, 0
    %v2877 = vsel %vm2080, %v2045, 0
    %v2880 = vsel %vm2080, %v2046, 0
    %v2883 = vsel %vm2080, %v2047, 0
    %v2886 = vsel %vm2080, %v2048, 0
    %v2889 = vsel %vm2080, %v2049, 0
    %v2892 = vsel %vm2080, %v2050, 0
    %v2895 = vsel %vm2080, %v2051, 0
    %v2898 = vsel %vm2080, %v2052, 0
    %v2901 = vsel %vm2080, %v2053, 0
    %v2904 = vsel %vm2080, %v2054, 0
    %v2907 = vsel %vm2080, %v2055, 0
    %v2910 = vsel %vm2080, %v2056, 0
    %v2913 = vsel %vm2080, %v2057, 0
    %v2916 = vsel %vm2080, %v2058, 0
    %v2919 = vsel %vm2080, %v2059, 0
    %v2922 = vsel %vm2080, %v2060, 0
    %v2925 = vsel %vm2080, %v2061, 0
    %v2928 = vsel %vm2080, %v2062, 0
    %v2931 = vsel %vm2080, %v2063, 0
    %v2934 = vsel %vm2080, %v2064, 0
    %v2937 = vsel %vm2080, %v2065, 0
    %v2940 = vsel %vm2080, %v2066, 0
    %v2943 = vsel %vm2080, %v2067, 0
    %2945 = vmatprep.subr.bf16.mxu0 0
    %2946 = vmatpush1.bf16.msra.mxu0 0
    %2947 = vmatprep.subr.bf16.mxu0 0
    %2948 = vmatpush1.bf16.msra.mxu0 0
    %2949 = vmatprep.subr.bf16.mxu0 0
    %2950 = vmatpush1.bf16.msra.mxu0 0
    %2951 = vmatprep.subr.bf16.mxu0 0
    %2952 = vmatpush1.bf16.msra.mxu0 0
    %2953 = vmatprep.subr.bf16.mxu0 0
    %2954 = vmatpush1.bf16.msra.mxu0 0
    %2955 = vmatprep.subr.bf16.mxu0 0
    %2956 = vmatpush1.bf16.msra.mxu0 0
    %2957 = vmatprep.subr.bf16.mxu0 0
    %2958 = vmatpush1.bf16.msra.mxu0 %v2077
    %2959 = vmatprep.subr.bf16.mxu0 0
    %2960 = vmatpush1.bf16.msra.mxu0 %v2076
    %2961 = vmatprep.subr.bf16.mxu0 0
    %2962 = vmatpush2.bf16.msra.mxu0 0
    %2963 = vmatprep.subr.bf16.mxu0 0
    %2964 = vmatpush2.bf16.msra.mxu0 0
    %2965 = vmatprep.subr.bf16.mxu0 0
    %2966 = vmatpush2.bf16.msra.mxu0 0
    %2967 = vmatprep.subr.bf16.mxu0 0
    %2968 = vmatpush2.bf16.msra.mxu0 0
    %2969 = vmatprep.subr.bf16.mxu0 0
    %2970 = vmatpush2.bf16.msra.mxu0 0
    %2971 = vmatprep.subr.bf16.mxu0 0
    %2972 = vmatpush2.bf16.msra.mxu0 0
    %2973 = vmatprep.subr.bf16.mxu0 0
    %2974 = vmatpush2.bf16.msra.mxu0 0
    %2975 = vmatprep.subr.bf16.mxu0 0
    %2976 = vmatpush2.bf16.msra.mxu0 0
    %2977 = vmatprep.mubr.bf16.mxu0 0
    %2978 = vmatmul.mubr.bf16.gmra.mxu0 %v2082
    %v2979 = vpop.f32.mrf.mxu0
    %v2980 = vadd.f32 %v626, %v2979
    %v2981 = vpop.f32.mrf.mxu0
    %v2982 = vpop.f32.mrf.mxu0
    %v2983 = vadd.f32 %v626, %v2982
    %v2984 = vpop.f32.mrf.mxu0
    %2985 = vmatprep.mubr.bf16.mxu0 0
    %2986 = vmatmul.mubr.bf16.gmra.mxu0 %v2085
    %v2987 = vpop.f32.mrf.mxu0
    %v2988 = vadd.f32 %v626, %v2987
    %v2989 = vpop.f32.mrf.mxu0
    %v2990 = vpop.f32.mrf.mxu0
    %v2991 = vadd.f32 %v626, %v2990
    %v2992 = vpop.f32.mrf.mxu0
    %2993 = vmatprep.mubr.bf16.mxu0 0
    %2994 = vmatmul.mubr.bf16.gmra.mxu0 %v2088
    %v2995 = vpop.f32.mrf.mxu0
    %v2996 = vadd.f32 %v626, %v2995
    %v2997 = vpop.f32.mrf.mxu0
    %v2998 = vpop.f32.mrf.mxu0
    %v2999 = vadd.f32 %v626, %v2998
    %v3000 = vpop.f32.mrf.mxu0
    %3001 = vmatprep.mubr.bf16.mxu0 0
    %3002 = vmatmul.mubr.bf16.gmra.mxu0 %v2091
    %v3003 = vpop.f32.mrf.mxu0
    %v3004 = vadd.f32 %v626, %v3003
    %v3005 = vpop.f32.mrf.mxu0
    %v3006 = vpop.f32.mrf.mxu0
    %v3007 = vadd.f32 %v626, %v3006
    %v3008 = vpop.f32.mrf.mxu0
    %3009 = vmatprep.mubr.bf16.mxu0 0
    %3010 = vmatmul.mubr.bf16.gmra.mxu0 %v2094
    %v3011 = vpop.f32.mrf.mxu0
    %v3012 = vadd.f32 %v626, %v3011
    %v3013 = vpop.f32.mrf.mxu0
    %v3014 = vpop.f32.mrf.mxu0
    %v3015 = vadd.f32 %v626, %v3014
    %v3016 = vpop.f32.mrf.mxu0
    %3017 = vmatprep.mubr.bf16.mxu0 0
    %3018 = vmatmul.mubr.bf16.gmra.mxu0 %v2097
    %v3019 = vpop.f32.mrf.mxu0
    %v3020 = vadd.f32 %v626, %v3019
    %v3021 = vpop.f32.mrf.mxu0
    %v3022 = vpop.f32.mrf.mxu0
    %v3023 = vadd.f32 %v626, %v3022
    %v3024 = vpop.f32.mrf.mxu0
    %3025 = vmatprep.mubr.bf16.mxu0 0
    %3026 = vmatmul.mubr.bf16.gmra.mxu0 %v2100
    %v3027 = vpop.f32.mrf.mxu0
    %v3028 = vadd.f32 %v626, %v3027
    %v3029 = vpop.f32.mrf.mxu0
    %v3030 = vpop.f32.mrf.mxu0
    %v3031 = vadd.f32 %v626, %v3030
    %v3032 = vpop.f32.mrf.mxu0
    %3033 = vmatprep.mubr.bf16.mxu0 0
    %3034 = vmatmul.mubr.bf16.gmra.mxu0 %v2103
    %v3035 = vpop.f32.mrf.mxu0
    %v3036 = vadd.f32 %v626, %v3035
    %v3037 = vpop.f32.mrf.mxu0
    %v3038 = vpop.f32.mrf.mxu0
    %v3039 = vadd.f32 %v626, %v3038
    %v3040 = vpop.f32.mrf.mxu0
    %3041 = vmatprep.mubr.bf16.mxu0 0
    %3042 = vmatmul.mubr.bf16.gmra.mxu0 %v2106
    %v3043 = vpop.f32.mrf.mxu0
    %v3044 = vadd.f32 %v626, %v3043
    %v3045 = vpop.f32.mrf.mxu0
    %v3046 = vpop.f32.mrf.mxu0
    %v3047 = vadd.f32 %v626, %v3046
    %v3048 = vpop.f32.mrf.mxu0
    %3049 = vmatprep.mubr.bf16.mxu0 0
    %3050 = vmatmul.mubr.bf16.gmra.mxu0 %v2109
    %v3051 = vpop.f32.mrf.mxu0
    %v3052 = vadd.f32 %v626, %v3051
    %v3053 = vpop.f32.mrf.mxu0
    %v3054 = vpop.f32.mrf.mxu0
    %v3055 = vadd.f32 %v626, %v3054
    %v3056 = vpop.f32.mrf.mxu0
    %3057 = vmatprep.mubr.bf16.mxu0 0
    %3058 = vmatmul.mubr.bf16.gmra.mxu0 %v2112
    %v3059 = vpop.f32.mrf.mxu0
    %v3060 = vadd.f32 %v626, %v3059
    %v3061 = vpop.f32.mrf.mxu0
    %v3062 = vpop.f32.mrf.mxu0
    %v3063 = vadd.f32 %v626, %v3062
    %v3064 = vpop.f32.mrf.mxu0
    %3065 = vmatprep.mubr.bf16.mxu0 0
    %3066 = vmatmul.mubr.bf16.gmra.mxu0 %v2115
    %v3067 = vpop.f32.mrf.mxu0
    %v3068 = vadd.f32 %v626, %v3067
    %v3069 = vpop.f32.mrf.mxu0
    %v3070 = vpop.f32.mrf.mxu0
    %v3071 = vadd.f32 %v626, %v3070
    %v3072 = vpop.f32.mrf.mxu0
    %3073 = vmatprep.mubr.bf16.mxu0 0
    %3074 = vmatmul.mubr.bf16.gmra.mxu0 %v2118
    %v3075 = vpop.f32.mrf.mxu0
    %v3076 = vadd.f32 %v626, %v3075
    %v3077 = vpop.f32.mrf.mxu0
    %v3078 = vpop.f32.mrf.mxu0
    %v3079 = vadd.f32 %v626, %v3078
    %v3080 = vpop.f32.mrf.mxu0
    %3081 = vmatprep.mubr.bf16.mxu0 0
    %3082 = vmatmul.mubr.bf16.gmra.mxu0 %v2121
    %v3083 = vpop.f32.mrf.mxu0
    %v3084 = vadd.f32 %v626, %v3083
    %v3085 = vpop.f32.mrf.mxu0
    %v3086 = vpop.f32.mrf.mxu0
    %v3087 = vadd.f32 %v626, %v3086
    %v3088 = vpop.f32.mrf.mxu0
    %3089 = vmatprep.mubr.bf16.mxu0 0
    %3090 = vmatmul.mubr.bf16.gmra.mxu0 %v2124
    %v3091 = vpop.f32.mrf.mxu0
    %v3092 = vadd.f32 %v626, %v3091
    %v3093 = vpop.f32.mrf.mxu0
    %v3094 = vpop.f32.mrf.mxu0
    %v3095 = vadd.f32 %v626, %v3094
    %v3096 = vpop.f32.mrf.mxu0
    %3097 = vmatprep.mubr.bf16.mxu0 0
    %3098 = vmatmul.mubr.bf16.gmra.mxu0 %v2127
    %v3099 = vpop.f32.mrf.mxu0
    %v3100 = vadd.f32 %v626, %v3099
    %v3101 = vpop.f32.mrf.mxu0
    %v3102 = vpop.f32.mrf.mxu0
    %v3103 = vadd.f32 %v626, %v3102
    %v3104 = vpop.f32.mrf.mxu0
    %3105 = vmatprep.mubr.bf16.mxu0 0
    %3106 = vmatmul.mubr.bf16.gmra.mxu0 %v2130
    %v3107 = vpop.f32.mrf.mxu0
    %v3108 = vadd.f32 %v626, %v3107
    %v3109 = vpop.f32.mrf.mxu0
    %v3110 = vpop.f32.mrf.mxu0
    %v3111 = vadd.f32 %v626, %v3110
    %v3112 = vpop.f32.mrf.mxu0
    %3113 = vmatprep.mubr.bf16.mxu0 0
    %3114 = vmatmul.mubr.bf16.gmra.mxu0 %v2133
    %v3115 = vpop.f32.mrf.mxu0
    %v3116 = vadd.f32 %v626, %v3115
    %v3117 = vpop.f32.mrf.mxu0
    %v3118 = vpop.f32.mrf.mxu0
    %v3119 = vadd.f32 %v626, %v3118
    %v3120 = vpop.f32.mrf.mxu0
    %3121 = vmatprep.mubr.bf16.mxu0 0
    %3122 = vmatmul.mubr.bf16.gmra.mxu0 %v2136
    %v3123 = vpop.f32.mrf.mxu0
    %v3124 = vadd.f32 %v626, %v3123
    %v3125 = vpop.f32.mrf.mxu0
    %v3126 = vpop.f32.mrf.mxu0
    %v3127 = vadd.f32 %v626, %v3126
    %v3128 = vpop.f32.mrf.mxu0
    %3129 = vmatprep.mubr.bf16.mxu0 0
    %3130 = vmatmul.mubr.bf16.gmra.mxu0 %v2139
    %v3131 = vpop.f32.mrf.mxu0
    %v3132 = vadd.f32 %v626, %v3131
    %v3133 = vpop.f32.mrf.mxu0
    %v3134 = vpop.f32.mrf.mxu0
    %v3135 = vadd.f32 %v626, %v3134
    %v3136 = vpop.f32.mrf.mxu0
    %3137 = vmatprep.mubr.bf16.mxu0 0
    %3138 = vmatmul.mubr.bf16.gmra.mxu0 %v2142
    %v3139 = vpop.f32.mrf.mxu0
    %v3140 = vadd.f32 %v626, %v3139
    %v3141 = vpop.f32.mrf.mxu0
    %v3142 = vpop.f32.mrf.mxu0
    %v3143 = vadd.f32 %v626, %v3142
    %v3144 = vpop.f32.mrf.mxu0
    %3145 = vmatprep.mubr.bf16.mxu0 0
    %3146 = vmatmul.mubr.bf16.gmra.mxu0 %v2145
    %v3147 = vpop.f32.mrf.mxu0
    %v3148 = vadd.f32 %v626, %v3147
    %v3149 = vpop.f32.mrf.mxu0
    %v3150 = vpop.f32.mrf.mxu0
    %v3151 = vadd.f32 %v626, %v3150
    %v3152 = vpop.f32.mrf.mxu0
    %3153 = vmatprep.mubr.bf16.mxu0 0
    %3154 = vmatmul.mubr.bf16.gmra.mxu0 %v2148
    %v3155 = vpop.f32.mrf.mxu0
    %v3156 = vadd.f32 %v626, %v3155
    %v3157 = vpop.f32.mrf.mxu0
    %v3158 = vpop.f32.mrf.mxu0
    %v3159 = vadd.f32 %v626, %v3158
    %v3160 = vpop.f32.mrf.mxu0
    %3161 = vmatprep.mubr.bf16.mxu0 0
    %3162 = vmatmul.mubr.bf16.gmra.mxu0 %v2151
    %v3163 = vpop.f32.mrf.mxu0
    %v3164 = vadd.f32 %v626, %v3163
    %v3165 = vpop.f32.mrf.mxu0
    %v3166 = vpop.f32.mrf.mxu0
    %v3167 = vadd.f32 %v626, %v3166
    %v3168 = vpop.f32.mrf.mxu0
    %3169 = vmatprep.mubr.bf16.mxu0 0
    %3170 = vmatmul.mubr.bf16.gmra.mxu0 %v2154
    %v3171 = vpop.f32.mrf.mxu0
    %v3172 = vadd.f32 %v626, %v3171
    %v3173 = vpop.f32.mrf.mxu0
    %v3174 = vpop.f32.mrf.mxu0
    %v3175 = vadd.f32 %v626, %v3174
    %v3176 = vpop.f32.mrf.mxu0
    %3177 = vmatprep.mubr.bf16.mxu0 0
    %3178 = vmatmul.mubr.bf16.gmra.mxu0 %v2157
    %v3179 = vpop.f32.mrf.mxu0
    %v3180 = vadd.f32 %v626, %v3179
    %v3181 = vpop.f32.mrf.mxu0
    %v3182 = vpop.f32.mrf.mxu0
    %v3183 = vadd.f32 %v626, %v3182
    %v3184 = vpop.f32.mrf.mxu0
    %3185 = vmatprep.mubr.bf16.mxu0 0
    %3186 = vmatmul.mubr.bf16.gmra.mxu0 %v2160
    %v3187 = vpop.f32.mrf.mxu0
    %v3188 = vadd.f32 %v626, %v3187
    %v3189 = vpop.f32.mrf.mxu0
    %v3190 = vpop.f32.mrf.mxu0
    %v3191 = vadd.f32 %v626, %v3190
    %v3192 = vpop.f32.mrf.mxu0
    %3193 = vmatprep.mubr.bf16.mxu0 0
    %3194 = vmatmul.mubr.bf16.gmra.mxu0 %v2163
    %v3195 = vpop.f32.mrf.mxu0
    %v3196 = vadd.f32 %v626, %v3195
    %v3197 = vpop.f32.mrf.mxu0
    %v3198 = vpop.f32.mrf.mxu0
    %v3199 = vadd.f32 %v626, %v3198
    %v3200 = vpop.f32.mrf.mxu0
    %3201 = vmatprep.mubr.bf16.mxu0 0
    %3202 = vmatmul.mubr.bf16.gmra.mxu0 %v2166
    %v3203 = vpop.f32.mrf.mxu0
    %v3204 = vadd.f32 %v626, %v3203
    %v3205 = vpop.f32.mrf.mxu0
    %v3206 = vpop.f32.mrf.mxu0
    %v3207 = vadd.f32 %v626, %v3206
    %v3208 = vpop.f32.mrf.mxu0
    %3209 = vmatprep.mubr.bf16.mxu0 0
    %3210 = vmatmul.mubr.bf16.gmra.mxu0 %v2169
    %v3211 = vpop.f32.mrf.mxu0
    %v3212 = vadd.f32 %v626, %v3211
    %v3213 = vpop.f32.mrf.mxu0
    %v3214 = vpop.f32.mrf.mxu0
    %v3215 = vadd.f32 %v626, %v3214
    %v3216 = vpop.f32.mrf.mxu0
    %3217 = vmatprep.mubr.bf16.mxu0 0
    %3218 = vmatmul.mubr.bf16.gmra.mxu0 %v2172
    %v3219 = vpop.f32.mrf.mxu0
    %v3220 = vadd.f32 %v626, %v3219
    %v3221 = vpop.f32.mrf.mxu0
    %v3222 = vpop.f32.mrf.mxu0
    %v3223 = vadd.f32 %v626, %v3222
    %v3224 = vpop.f32.mrf.mxu0
    %3225 = vmatprep.mubr.bf16.mxu0 0
    %3226 = vmatmul.mubr.bf16.gmra.mxu0 %v2175
    %v3227 = vpop.f32.mrf.mxu0
    %v3228 = vadd.f32 %v626, %v3227
    %v3229 = vpop.f32.mrf.mxu0
    %v3230 = vpop.f32.mrf.mxu0
    %v3231 = vadd.f32 %v626, %v3230
    %v3232 = vpop.f32.mrf.mxu0
    %3233 = vmatprep.mubr.bf16.mxu0 0
    %3234 = vmatmul.mubr.bf16.gmra.mxu0 %v2178
    %v3235 = vpop.f32.mrf.mxu0
    %v3236 = vadd.f32 %v626, %v3235
    %v3237 = vpop.f32.mrf.mxu0
    %v3238 = vpop.f32.mrf.mxu0
    %v3239 = vadd.f32 %v626, %v3238
    %v3240 = vpop.f32.mrf.mxu0
    %3241 = vmatprep.mubr.bf16.mxu0 0
    %3242 = vmatmul.mubr.bf16.gmra.mxu0 %v2181
    %v3243 = vpop.f32.mrf.mxu0
    %v3244 = vadd.f32 %v626, %v3243
    %v3245 = vpop.f32.mrf.mxu0
    %v3246 = vpop.f32.mrf.mxu0
    %v3247 = vadd.f32 %v626, %v3246
    %v3248 = vpop.f32.mrf.mxu0
    %3249 = vmatprep.mubr.bf16.mxu0 0
    %3250 = vmatmul.mubr.bf16.gmra.mxu0 %v2184
    %v3251 = vpop.f32.mrf.mxu0
    %v3252 = vadd.f32 %v626, %v3251
    %v3253 = vpop.f32.mrf.mxu0
    %v3254 = vpop.f32.mrf.mxu0
    %v3255 = vadd.f32 %v626, %v3254
    %v3256 = vpop.f32.mrf.mxu0
    %3257 = vmatprep.mubr.bf16.mxu0 0
    %3258 = vmatmul.mubr.bf16.gmra.mxu0 %v2187
    %v3259 = vpop.f32.mrf.mxu0
    %v3260 = vadd.f32 %v626, %v3259
    %v3261 = vpop.f32.mrf.mxu0
    %v3262 = vpop.f32.mrf.mxu0
    %v3263 = vadd.f32 %v626, %v3262
    %v3264 = vpop.f32.mrf.mxu0
    %3265 = vmatprep.mubr.bf16.mxu0 0
    %3266 = vmatmul.mubr.bf16.gmra.mxu0 %v2190
    %v3267 = vpop.f32.mrf.mxu0
    %v3268 = vadd.f32 %v626, %v3267
    %v3269 = vpop.f32.mrf.mxu0
    %v3270 = vpop.f32.mrf.mxu0
    %v3271 = vadd.f32 %v626, %v3270
    %v3272 = vpop.f32.mrf.mxu0
    %3273 = vmatprep.mubr.bf16.mxu0 0
    %3274 = vmatmul.mubr.bf16.gmra.mxu0 %v2193
    %v3275 = vpop.f32.mrf.mxu0
    %v3276 = vadd.f32 %v626, %v3275
    %v3277 = vpop.f32.mrf.mxu0
    %v3278 = vpop.f32.mrf.mxu0
    %v3279 = vadd.f32 %v626, %v3278
    %v3280 = vpop.f32.mrf.mxu0
    %3281 = vmatprep.mubr.bf16.mxu0 0
    %3282 = vmatmul.mubr.bf16.gmra.mxu0 %v2196
    %v3283 = vpop.f32.mrf.mxu0
    %v3284 = vadd.f32 %v626, %v3283
    %v3285 = vpop.f32.mrf.mxu0
    %v3286 = vpop.f32.mrf.mxu0
    %v3287 = vadd.f32 %v626, %v3286
    %v3288 = vpop.f32.mrf.mxu0
    %3289 = vmatprep.mubr.bf16.mxu0 0
    %3290 = vmatmul.mubr.bf16.gmra.mxu0 %v2199
    %v3291 = vpop.f32.mrf.mxu0
    %v3292 = vadd.f32 %v626, %v3291
    %v3293 = vpop.f32.mrf.mxu0
    %v3294 = vpop.f32.mrf.mxu0
    %v3295 = vadd.f32 %v626, %v3294
    %v3296 = vpop.f32.mrf.mxu0
    %3297 = vmatprep.mubr.bf16.mxu0 0
    %3298 = vmatmul.mubr.bf16.gmra.mxu0 %v2202
    %v3299 = vpop.f32.mrf.mxu0
    %v3300 = vadd.f32 %v626, %v3299
    %v3301 = vpop.f32.mrf.mxu0
    %v3302 = vpop.f32.mrf.mxu0
    %v3303 = vadd.f32 %v626, %v3302
    %v3304 = vpop.f32.mrf.mxu0
    %3305 = vmatprep.mubr.bf16.mxu0 0
    %3306 = vmatmul.mubr.bf16.gmra.mxu0 %v2205
    %v3307 = vpop.f32.mrf.mxu0
    %v3308 = vadd.f32 %v626, %v3307
    %v3309 = vpop.f32.mrf.mxu0
    %v3310 = vpop.f32.mrf.mxu0
    %v3311 = vadd.f32 %v626, %v3310
    %v3312 = vpop.f32.mrf.mxu0
    %3313 = vmatprep.mubr.bf16.mxu0 0
    %3314 = vmatmul.mubr.bf16.gmra.mxu0 %v2208
    %v3315 = vpop.f32.mrf.mxu0
    %v3316 = vadd.f32 %v626, %v3315
    %v3317 = vpop.f32.mrf.mxu0
    %v3318 = vpop.f32.mrf.mxu0
    %v3319 = vadd.f32 %v626, %v3318
    %v3320 = vpop.f32.mrf.mxu0
    %3321 = vmatprep.mubr.bf16.mxu0 0
    %3322 = vmatmul.mubr.bf16.gmra.mxu0 %v2211
    %v3323 = vpop.f32.mrf.mxu0
    %v3324 = vadd.f32 %v626, %v3323
    %v3325 = vpop.f32.mrf.mxu0
    %v3326 = vpop.f32.mrf.mxu0
    %v3327 = vadd.f32 %v626, %v3326
    %v3328 = vpop.f32.mrf.mxu0
    %3329 = vmatprep.mubr.bf16.mxu0 0
    %3330 = vmatmul.mubr.bf16.gmra.mxu0 %v2214
    %v3331 = vpop.f32.mrf.mxu0
    %v3332 = vadd.f32 %v626, %v3331
    %v3333 = vpop.f32.mrf.mxu0
    %v3334 = vpop.f32.mrf.mxu0
    %v3335 = vadd.f32 %v626, %v3334
    %v3336 = vpop.f32.mrf.mxu0
    %3337 = vmatprep.mubr.bf16.mxu0 0
    %3338 = vmatmul.mubr.bf16.gmra.mxu0 %v2217
    %v3339 = vpop.f32.mrf.mxu0
    %v3340 = vadd.f32 %v626, %v3339
    %v3341 = vpop.f32.mrf.mxu0
    %v3342 = vpop.f32.mrf.mxu0
    %v3343 = vadd.f32 %v626, %v3342
    %v3344 = vpop.f32.mrf.mxu0
    %3345 = vmatprep.mubr.bf16.mxu0 0
    %3346 = vmatmul.mubr.bf16.gmra.mxu0 %v2220
    %v3347 = vpop.f32.mrf.mxu0
    %v3348 = vadd.f32 %v626, %v3347
    %v3349 = vpop.f32.mrf.mxu0
    %v3350 = vpop.f32.mrf.mxu0
    %v3351 = vadd.f32 %v626, %v3350
    %v3352 = vpop.f32.mrf.mxu0
    %3353 = vmatprep.mubr.bf16.mxu0 0
    %3354 = vmatmul.mubr.bf16.gmra.mxu0 %v2223
    %v3355 = vpop.f32.mrf.mxu0
    %v3356 = vadd.f32 %v626, %v3355
    %v3357 = vpop.f32.mrf.mxu0
    %v3358 = vpop.f32.mrf.mxu0
    %v3359 = vadd.f32 %v626, %v3358
    %v3360 = vpop.f32.mrf.mxu0
    %3361 = vmatprep.mubr.bf16.mxu0 0
    %3362 = vmatmul.mubr.bf16.gmra.mxu0 %v2226
    %v3363 = vpop.f32.mrf.mxu0
    %v3364 = vadd.f32 %v626, %v3363
    %v3365 = vpop.f32.mrf.mxu0
    %v3366 = vpop.f32.mrf.mxu0
    %v3367 = vadd.f32 %v626, %v3366
    %v3368 = vpop.f32.mrf.mxu0
    %3369 = vmatprep.mubr.bf16.mxu0 0
    %3370 = vmatmul.mubr.bf16.gmra.mxu0 %v2229
    %v3371 = vpop.f32.mrf.mxu0
    %v3372 = vadd.f32 %v626, %v3371
    %v3373 = vpop.f32.mrf.mxu0
    %v3374 = vpop.f32.mrf.mxu0
    %v3375 = vadd.f32 %v626, %v3374
    %v3376 = vpop.f32.mrf.mxu0
    %3377 = vmatprep.mubr.bf16.mxu0 0
    %3378 = vmatmul.mubr.bf16.gmra.mxu0 %v2232
    %v3379 = vpop.f32.mrf.mxu0
    %v3380 = vadd.f32 %v626, %v3379
    %v3381 = vpop.f32.mrf.mxu0
    %v3382 = vpop.f32.mrf.mxu0
    %v3383 = vadd.f32 %v626, %v3382
    %v3384 = vpop.f32.mrf.mxu0
    %3385 = vmatprep.mubr.bf16.mxu0 0
    %3386 = vmatmul.mubr.bf16.gmra.mxu0 %v2235
    %v3387 = vpop.f32.mrf.mxu0
    %v3388 = vadd.f32 %v626, %v3387
    %v3389 = vpop.f32.mrf.mxu0
    %v3390 = vpop.f32.mrf.mxu0
    %v3391 = vadd.f32 %v626, %v3390
    %v3392 = vpop.f32.mrf.mxu0
    %3393 = vmatprep.mubr.bf16.mxu0 0
    %3394 = vmatmul.mubr.bf16.gmra.mxu0 %v2238
    %v3395 = vpop.f32.mrf.mxu0
    %v3396 = vadd.f32 %v626, %v3395
    %v3397 = vpop.f32.mrf.mxu0
    %v3398 = vpop.f32.mrf.mxu0
    %v3399 = vadd.f32 %v626, %v3398
    %v3400 = vpop.f32.mrf.mxu0
    %3401 = vmatprep.mubr.bf16.mxu0 0
    %3402 = vmatmul.mubr.bf16.gmra.mxu0 %v2241
    %v3403 = vpop.f32.mrf.mxu0
    %v3404 = vadd.f32 %v626, %v3403
    %v3405 = vpop.f32.mrf.mxu0
    %v3406 = vpop.f32.mrf.mxu0
    %v3407 = vadd.f32 %v626, %v3406
    %v3408 = vpop.f32.mrf.mxu0
    %3409 = vmatprep.mubr.bf16.mxu0 0
    %3410 = vmatmul.mubr.bf16.gmra.mxu0 %v2244
    %v3411 = vpop.f32.mrf.mxu0
    %v3412 = vadd.f32 %v626, %v3411
    %v3413 = vpop.f32.mrf.mxu0
    %v3414 = vpop.f32.mrf.mxu0
    %v3415 = vadd.f32 %v626, %v3414
    %v3416 = vpop.f32.mrf.mxu0
    %3417 = vmatprep.mubr.bf16.mxu0 0
    %3418 = vmatmul.mubr.bf16.gmra.mxu0 %v2247
    %v3419 = vpop.f32.mrf.mxu0
    %v3420 = vadd.f32 %v626, %v3419
    %v3421 = vpop.f32.mrf.mxu0
    %v3422 = vpop.f32.mrf.mxu0
    %v3423 = vadd.f32 %v626, %v3422
    %v3424 = vpop.f32.mrf.mxu0
    %3425 = vmatprep.mubr.bf16.mxu0 0
    %3426 = vmatmul.mubr.bf16.gmra.mxu0 %v2250
    %v3427 = vpop.f32.mrf.mxu0
    %v3428 = vadd.f32 %v626, %v3427
    %v3429 = vpop.f32.mrf.mxu0
    %v3430 = vpop.f32.mrf.mxu0
    %v3431 = vadd.f32 %v626, %v3430
    %v3432 = vpop.f32.mrf.mxu0
    %3433 = vmatprep.mubr.bf16.mxu0 0
    %3434 = vmatmul.mubr.bf16.gmra.mxu0 %v2253
    %v3435 = vpop.f32.mrf.mxu0
    %v3436 = vadd.f32 %v626, %v3435
    %v3437 = vpop.f32.mrf.mxu0
    %v3438 = vpop.f32.mrf.mxu0
    %v3439 = vadd.f32 %v626, %v3438
    %v3440 = vpop.f32.mrf.mxu0
    %3441 = vmatprep.mubr.bf16.mxu0 0
    %3442 = vmatmul.mubr.bf16.gmra.mxu0 %v2256
    %v3443 = vpop.f32.mrf.mxu0
    %v3444 = vadd.f32 %v626, %v3443
    %v3445 = vpop.f32.mrf.mxu0
    %v3446 = vpop.f32.mrf.mxu0
    %v3447 = vadd.f32 %v626, %v3446
    %v3448 = vpop.f32.mrf.mxu0
    %3449 = vmatprep.mubr.bf16.mxu0 0
    %3450 = vmatmul.mubr.bf16.gmra.mxu0 %v2259
    %v3451 = vpop.f32.mrf.mxu0
    %v3452 = vadd.f32 %v626, %v3451
    %v3453 = vpop.f32.mrf.mxu0
    %v3454 = vpop.f32.mrf.mxu0
    %v3455 = vadd.f32 %v626, %v3454
    %v3456 = vpop.f32.mrf.mxu0
    %3457 = vmatprep.mubr.bf16.mxu0 0
    %3458 = vmatmul.mubr.bf16.gmra.mxu0 %v2262
    %v3459 = vpop.f32.mrf.mxu0
    %v3460 = vadd.f32 %v626, %v3459
    %v3461 = vpop.f32.mrf.mxu0
    %v3462 = vpop.f32.mrf.mxu0
    %v3463 = vadd.f32 %v626, %v3462
    %v3464 = vpop.f32.mrf.mxu0
    %3465 = vmatprep.mubr.bf16.mxu0 0
    %3466 = vmatmul.mubr.bf16.gmra.mxu0 %v2265
    %v3467 = vpop.f32.mrf.mxu0
    %v3468 = vadd.f32 %v626, %v3467
    %v3469 = vpop.f32.mrf.mxu0
    %v3470 = vpop.f32.mrf.mxu0
    %v3471 = vadd.f32 %v626, %v3470
    %v3472 = vpop.f32.mrf.mxu0
    %3473 = vmatprep.mubr.bf16.mxu0 0
    %3474 = vmatmul.mubr.bf16.gmra.mxu0 %v2268
    %v3475 = vpop.f32.mrf.mxu0
    %v3476 = vadd.f32 %v626, %v3475
    %v3477 = vpop.f32.mrf.mxu0
    %v3478 = vpop.f32.mrf.mxu0
    %v3479 = vadd.f32 %v626, %v3478
    %v3480 = vpop.f32.mrf.mxu0
    %3481 = vmatprep.mubr.bf16.mxu0 0
    %3482 = vmatmul.mubr.bf16.gmra.mxu0 %v2271
    %v3483 = vpop.f32.mrf.mxu0
    %v3484 = vadd.f32 %v626, %v3483
    %v3485 = vpop.f32.mrf.mxu0
    %v3486 = vpop.f32.mrf.mxu0
    %v3487 = vadd.f32 %v626, %v3486
    %v3488 = vpop.f32.mrf.mxu0
    %3489 = vmatprep.mubr.bf16.mxu0 0
    %3490 = vmatmul.mubr.bf16.gmra.mxu0 %v2274
    %v3491 = vpop.f32.mrf.mxu0
    %v3492 = vadd.f32 %v626, %v3491
    %v3493 = vpop.f32.mrf.mxu0
    %v3494 = vpop.f32.mrf.mxu0
    %v3495 = vadd.f32 %v626, %v3494
    %v3496 = vpop.f32.mrf.mxu0
    %3497 = vmatprep.mubr.bf16.mxu0 0
    %3498 = vmatmul.mubr.bf16.gmra.mxu0 %v2277
    %v3499 = vpop.f32.mrf.mxu0
    %v3500 = vadd.f32 %v626, %v3499
    %v3501 = vpop.f32.mrf.mxu0
    %v3502 = vpop.f32.mrf.mxu0
    %v3503 = vadd.f32 %v626, %v3502
    %v3504 = vpop.f32.mrf.mxu0
    %3505 = vmatprep.mubr.bf16.mxu0 0
    %3506 = vmatmul.mubr.bf16.gmra.mxu0 %v2280
    %v3507 = vpop.f32.mrf.mxu0
    %v3508 = vadd.f32 %v626, %v3507
    %v3509 = vpop.f32.mrf.mxu0
    %v3510 = vpop.f32.mrf.mxu0
    %v3511 = vadd.f32 %v626, %v3510
    %v3512 = vpop.f32.mrf.mxu0
    %3513 = vmatprep.mubr.bf16.mxu0 0
    %3514 = vmatmul.mubr.bf16.gmra.mxu0 %v2283
    %v3515 = vpop.f32.mrf.mxu0
    %v3516 = vadd.f32 %v626, %v3515
    %v3517 = vpop.f32.mrf.mxu0
    %v3518 = vpop.f32.mrf.mxu0
    %v3519 = vadd.f32 %v626, %v3518
    %v3520 = vpop.f32.mrf.mxu0
    %3521 = vmatprep.mubr.bf16.mxu0 0
    %3522 = vmatmul.mubr.bf16.gmra.mxu0 %v2286
    %v3523 = vpop.f32.mrf.mxu0
    %v3524 = vadd.f32 %v626, %v3523
    %v3525 = vpop.f32.mrf.mxu0
    %v3526 = vpop.f32.mrf.mxu0
    %v3527 = vadd.f32 %v626, %v3526
    %v3528 = vpop.f32.mrf.mxu0
    %3529 = vmatprep.mubr.bf16.mxu0 0
    %3530 = vmatmul.mubr.bf16.gmra.mxu0 %v2289
    %v3531 = vpop.f32.mrf.mxu0
    %v3532 = vadd.f32 %v626, %v3531
    %v3533 = vpop.f32.mrf.mxu0
    %v3534 = vpop.f32.mrf.mxu0
    %v3535 = vadd.f32 %v626, %v3534
    %v3536 = vpop.f32.mrf.mxu0
    %3537 = vmatprep.mubr.bf16.mxu0 0
    %3538 = vmatmul.mubr.bf16.gmra.mxu0 %v2292
    %v3539 = vpop.f32.mrf.mxu0
    %v3540 = vadd.f32 %v626, %v3539
    %v3541 = vpop.f32.mrf.mxu0
    %v3542 = vpop.f32.mrf.mxu0
    %v3543 = vadd.f32 %v626, %v3542
    %v3544 = vpop.f32.mrf.mxu0
    %3545 = vmatprep.mubr.bf16.mxu0 0
    %3546 = vmatmul.mubr.bf16.gmra.mxu0 %v2295
    %v3547 = vpop.f32.mrf.mxu0
    %v3548 = vadd.f32 %v626, %v3547
    %v3549 = vpop.f32.mrf.mxu0
    %v3550 = vpop.f32.mrf.mxu0
    %v3551 = vadd.f32 %v626, %v3550
    %v3552 = vpop.f32.mrf.mxu0
    %3553 = vmatprep.mubr.bf16.mxu0 0
    %3554 = vmatmul.mubr.bf16.gmra.mxu0 %v2298
    %v3555 = vpop.f32.mrf.mxu0
    %v3556 = vadd.f32 %v626, %v3555
    %v3557 = vpop.f32.mrf.mxu0
    %v3558 = vpop.f32.mrf.mxu0
    %v3559 = vadd.f32 %v626, %v3558
    %v3560 = vpop.f32.mrf.mxu0
    %3561 = vmatprep.mubr.bf16.mxu0 0
    %3562 = vmatmul.mubr.bf16.gmra.mxu0 %v2301
    %v3563 = vpop.f32.mrf.mxu0
    %v3564 = vadd.f32 %v626, %v3563
    %v3565 = vpop.f32.mrf.mxu0
    %v3566 = vpop.f32.mrf.mxu0
    %v3567 = vadd.f32 %v626, %v3566
    %v3568 = vpop.f32.mrf.mxu0
    %3569 = vmatprep.mubr.bf16.mxu0 0
    %3570 = vmatmul.mubr.bf16.gmra.mxu0 %v2304
    %v3571 = vpop.f32.mrf.mxu0
    %v3572 = vadd.f32 %v626, %v3571
    %v3573 = vpop.f32.mrf.mxu0
    %v3574 = vpop.f32.mrf.mxu0
    %v3575 = vadd.f32 %v626, %v3574
    %v3576 = vpop.f32.mrf.mxu0
    %3577 = vmatprep.mubr.bf16.mxu0 0
    %3578 = vmatmul.mubr.bf16.gmra.mxu0 %v2307
    %v3579 = vpop.f32.mrf.mxu0
    %v3580 = vadd.f32 %v626, %v3579
    %v3581 = vpop.f32.mrf.mxu0
    %v3582 = vpop.f32.mrf.mxu0
    %v3583 = vadd.f32 %v626, %v3582
    %v3584 = vpop.f32.mrf.mxu0
    %3585 = vmatprep.mubr.bf16.mxu0 0
    %3586 = vmatmul.mubr.bf16.gmra.mxu0 %v2310
    %v3587 = vpop.f32.mrf.mxu0
    %v3588 = vadd.f32 %v626, %v3587
    %v3589 = vpop.f32.mrf.mxu0
    %v3590 = vpop.f32.mrf.mxu0
    %v3591 = vadd.f32 %v626, %v3590
    %v3592 = vpop.f32.mrf.mxu0
    %3593 = vmatprep.mubr.bf16.mxu0 0
    %3594 = vmatmul.mubr.bf16.gmra.mxu0 %v2313
    %v3595 = vpop.f32.mrf.mxu0
    %v3596 = vadd.f32 %v626, %v3595
    %v3597 = vpop.f32.mrf.mxu0
    %v3598 = vpop.f32.mrf.mxu0
    %v3599 = vadd.f32 %v626, %v3598
    %v3600 = vpop.f32.mrf.mxu0
    %3601 = vmatprep.mubr.bf16.mxu0 0
    %3602 = vmatmul.mubr.bf16.gmra.mxu0 %v2316
    %v3603 = vpop.f32.mrf.mxu0
    %v3604 = vadd.f32 %v626, %v3603
    %v3605 = vpop.f32.mrf.mxu0
    %v3606 = vpop.f32.mrf.mxu0
    %v3607 = vadd.f32 %v626, %v3606
    %v3608 = vpop.f32.mrf.mxu0
    %3609 = vmatprep.mubr.bf16.mxu0 0
    %3610 = vmatmul.mubr.bf16.gmra.mxu0 %v2319
    %v3611 = vpop.f32.mrf.mxu0
    %v3612 = vadd.f32 %v626, %v3611
    %v3613 = vpop.f32.mrf.mxu0
    %v3614 = vpop.f32.mrf.mxu0
    %v3615 = vadd.f32 %v626, %v3614
    %v3616 = vpop.f32.mrf.mxu0
    %3617 = vmatprep.mubr.bf16.mxu0 0
    %3618 = vmatmul.mubr.bf16.gmra.mxu0 %v2322
    %v3619 = vpop.f32.mrf.mxu0
    %v3620 = vadd.f32 %v626, %v3619
    %v3621 = vpop.f32.mrf.mxu0
    %v3622 = vpop.f32.mrf.mxu0
    %v3623 = vadd.f32 %v626, %v3622
    %v3624 = vpop.f32.mrf.mxu0
    %3625 = vmatprep.mubr.bf16.mxu0 0
    %3626 = vmatmul.mubr.bf16.gmra.mxu0 %v2325
    %v3627 = vpop.f32.mrf.mxu0
    %v3628 = vadd.f32 %v626, %v3627
    %v3629 = vpop.f32.mrf.mxu0
    %v3630 = vpop.f32.mrf.mxu0
    %v3631 = vadd.f32 %v626, %v3630
    %v3632 = vpop.f32.mrf.mxu0
    %3633 = vmatprep.mubr.bf16.mxu0 0
    %3634 = vmatmul.mubr.bf16.gmra.mxu0 %v2328
    %v3635 = vpop.f32.mrf.mxu0
    %v3636 = vadd.f32 %v626, %v3635
    %v3637 = vpop.f32.mrf.mxu0
    %v3638 = vpop.f32.mrf.mxu0
    %v3639 = vadd.f32 %v626, %v3638
    %v3640 = vpop.f32.mrf.mxu0
    %3641 = vmatprep.mubr.bf16.mxu0 0
    %3642 = vmatmul.mubr.bf16.gmra.mxu0 %v2331
    %v3643 = vpop.f32.mrf.mxu0
    %v3644 = vadd.f32 %v626, %v3643
    %v3645 = vpop.f32.mrf.mxu0
    %v3646 = vpop.f32.mrf.mxu0
    %v3647 = vadd.f32 %v626, %v3646
    %v3648 = vpop.f32.mrf.mxu0
    %3649 = vmatprep.mubr.bf16.mxu0 0
    %3650 = vmatmul.mubr.bf16.gmra.mxu0 %v2334
    %v3651 = vpop.f32.mrf.mxu0
    %v3652 = vadd.f32 %v626, %v3651
    %v3653 = vpop.f32.mrf.mxu0
    %v3654 = vpop.f32.mrf.mxu0
    %v3655 = vadd.f32 %v626, %v3654
    %v3656 = vpop.f32.mrf.mxu0
    %3657 = vmatprep.mubr.bf16.mxu0 0
    %3658 = vmatmul.mubr.bf16.gmra.mxu0 %v2337
    %v3659 = vpop.f32.mrf.mxu0
    %v3660 = vadd.f32 %v626, %v3659
    %v3661 = vpop.f32.mrf.mxu0
    %v3662 = vpop.f32.mrf.mxu0
    %v3663 = vadd.f32 %v626, %v3662
    %v3664 = vpop.f32.mrf.mxu0
    %3665 = vmatprep.mubr.bf16.mxu0 0
    %3666 = vmatmul.mubr.bf16.gmra.mxu0 %v2340
    %v3667 = vpop.f32.mrf.mxu0
    %v3668 = vadd.f32 %v626, %v3667
    %v3669 = vpop.f32.mrf.mxu0
    %v3670 = vpop.f32.mrf.mxu0
    %v3671 = vadd.f32 %v626, %v3670
    %v3672 = vpop.f32.mrf.mxu0
    %3673 = vmatprep.mubr.bf16.mxu0 0
    %3674 = vmatmul.mubr.bf16.gmra.mxu0 %v2343
    %v3675 = vpop.f32.mrf.mxu0
    %v3676 = vadd.f32 %v626, %v3675
    %v3677 = vpop.f32.mrf.mxu0
    %v3678 = vpop.f32.mrf.mxu0
    %v3679 = vadd.f32 %v626, %v3678
    %v3680 = vpop.f32.mrf.mxu0
    %3681 = vmatprep.mubr.bf16.mxu0 0
    %3682 = vmatmul.mubr.bf16.gmra.mxu0 %v2346
    %v3683 = vpop.f32.mrf.mxu0
    %v3684 = vadd.f32 %v626, %v3683
    %v3685 = vpop.f32.mrf.mxu0
    %v3686 = vpop.f32.mrf.mxu0
    %v3687 = vadd.f32 %v626, %v3686
    %v3688 = vpop.f32.mrf.mxu0
    %3689 = vmatprep.mubr.bf16.mxu0 0
    %3690 = vmatmul.mubr.bf16.gmra.mxu0 %v2349
    %v3691 = vpop.f32.mrf.mxu0
    %v3692 = vadd.f32 %v626, %v3691
    %v3693 = vpop.f32.mrf.mxu0
    %v3694 = vpop.f32.mrf.mxu0
    %v3695 = vadd.f32 %v626, %v3694
    %v3696 = vpop.f32.mrf.mxu0
    %3697 = vmatprep.mubr.bf16.mxu0 0
    %3698 = vmatmul.mubr.bf16.gmra.mxu0 %v2352
    %v3699 = vpop.f32.mrf.mxu0
    %v3700 = vadd.f32 %v626, %v3699
    %v3701 = vpop.f32.mrf.mxu0
    %v3702 = vpop.f32.mrf.mxu0
    %v3703 = vadd.f32 %v626, %v3702
    %v3704 = vpop.f32.mrf.mxu0
    %3705 = vmatprep.mubr.bf16.mxu0 0
    %3706 = vmatmul.mubr.bf16.gmra.mxu0 %v2355
    %v3707 = vpop.f32.mrf.mxu0
    %v3708 = vadd.f32 %v626, %v3707
    %v3709 = vpop.f32.mrf.mxu0
    %v3710 = vpop.f32.mrf.mxu0
    %v3711 = vadd.f32 %v626, %v3710
    %v3712 = vpop.f32.mrf.mxu0
    %3713 = vmatprep.mubr.bf16.mxu0 0
    %3714 = vmatmul.mubr.bf16.gmra.mxu0 %v2358
    %v3715 = vpop.f32.mrf.mxu0
    %v3716 = vadd.f32 %v626, %v3715
    %v3717 = vpop.f32.mrf.mxu0
    %v3718 = vpop.f32.mrf.mxu0
    %v3719 = vadd.f32 %v626, %v3718
    %v3720 = vpop.f32.mrf.mxu0
    %3721 = vmatprep.mubr.bf16.mxu0 0
    %3722 = vmatmul.mubr.bf16.gmra.mxu0 %v2361
    %v3723 = vpop.f32.mrf.mxu0
    %v3724 = vadd.f32 %v626, %v3723
    %v3725 = vpop.f32.mrf.mxu0
    %v3726 = vpop.f32.mrf.mxu0
    %v3727 = vadd.f32 %v626, %v3726
    %v3728 = vpop.f32.mrf.mxu0
    %3729 = vmatprep.mubr.bf16.mxu0 0
    %3730 = vmatmul.mubr.bf16.gmra.mxu0 %v2364
    %v3731 = vpop.f32.mrf.mxu0
    %v3732 = vadd.f32 %v626, %v3731
    %v3733 = vpop.f32.mrf.mxu0
    %v3734 = vpop.f32.mrf.mxu0
    %v3735 = vadd.f32 %v626, %v3734
    %v3736 = vpop.f32.mrf.mxu0
    %3737 = vmatprep.mubr.bf16.mxu0 0
    %3738 = vmatmul.mubr.bf16.gmra.mxu0 %v2367
    %v3739 = vpop.f32.mrf.mxu0
    %v3740 = vadd.f32 %v626, %v3739
    %v3741 = vpop.f32.mrf.mxu0
    %v3742 = vpop.f32.mrf.mxu0
    %v3743 = vadd.f32 %v626, %v3742
    %v3744 = vpop.f32.mrf.mxu0
    %3745 = vmatprep.mubr.bf16.mxu0 0
    %3746 = vmatmul.mubr.bf16.gmra.mxu0 %v2370
    %v3747 = vpop.f32.mrf.mxu0
    %v3748 = vadd.f32 %v626, %v3747
    %v3749 = vpop.f32.mrf.mxu0
    %v3750 = vpop.f32.mrf.mxu0
    %v3751 = vadd.f32 %v626, %v3750
    %v3752 = vpop.f32.mrf.mxu0
    %3753 = vmatprep.mubr.bf16.mxu0 0
    %3754 = vmatmul.mubr.bf16.gmra.mxu0 %v2373
    %v3755 = vpop.f32.mrf.mxu0
    %v3756 = vadd.f32 %v626, %v3755
    %v3757 = vpop.f32.mrf.mxu0
    %v3758 = vpop.f32.mrf.mxu0
    %v3759 = vadd.f32 %v626, %v3758
    %v3760 = vpop.f32.mrf.mxu0
    %3761 = vmatprep.mubr.bf16.mxu0 0
    %3762 = vmatmul.mubr.bf16.gmra.mxu0 %v2376
    %v3763 = vpop.f32.mrf.mxu0
    %v3764 = vadd.f32 %v626, %v3763
    %v3765 = vpop.f32.mrf.mxu0
    %v3766 = vpop.f32.mrf.mxu0
    %v3767 = vadd.f32 %v626, %v3766
    %v3768 = vpop.f32.mrf.mxu0
    %3769 = vmatprep.mubr.bf16.mxu0 0
    %3770 = vmatmul.mubr.bf16.gmra.mxu0 %v2379
    %v3771 = vpop.f32.mrf.mxu0
    %v3772 = vadd.f32 %v626, %v3771
    %v3773 = vpop.f32.mrf.mxu0
    %v3774 = vpop.f32.mrf.mxu0
    %v3775 = vadd.f32 %v626, %v3774
    %v3776 = vpop.f32.mrf.mxu0
    %3777 = vmatprep.mubr.bf16.mxu0 0
    %3778 = vmatmul.mubr.bf16.gmra.mxu0 %v2382
    %v3779 = vpop.f32.mrf.mxu0
    %v3780 = vadd.f32 %v626, %v3779
    %v3781 = vpop.f32.mrf.mxu0
    %v3782 = vpop.f32.mrf.mxu0
    %v3783 = vadd.f32 %v626, %v3782
    %v3784 = vpop.f32.mrf.mxu0
    %3785 = vmatprep.mubr.bf16.mxu0 0
    %3786 = vmatmul.mubr.bf16.gmra.mxu0 %v2385
    %v3787 = vpop.f32.mrf.mxu0
    %v3788 = vadd.f32 %v626, %v3787
    %v3789 = vpop.f32.mrf.mxu0
    %v3790 = vpop.f32.mrf.mxu0
    %v3791 = vadd.f32 %v626, %v3790
    %v3792 = vpop.f32.mrf.mxu0
    %3793 = vmatprep.mubr.bf16.mxu0 0
    %3794 = vmatmul.mubr.bf16.gmra.mxu0 %v2388
    %v3795 = vpop.f32.mrf.mxu0
    %v3796 = vadd.f32 %v626, %v3795
    %v3797 = vpop.f32.mrf.mxu0
    %v3798 = vpop.f32.mrf.mxu0
    %v3799 = vadd.f32 %v626, %v3798
    %v3800 = vpop.f32.mrf.mxu0
    %3801 = vmatprep.mubr.bf16.mxu0 0
    %3802 = vmatmul.mubr.bf16.gmra.mxu0 %v2391
    %v3803 = vpop.f32.mrf.mxu0
    %v3804 = vadd.f32 %v626, %v3803
    %v3805 = vpop.f32.mrf.mxu0
    %v3806 = vpop.f32.mrf.mxu0
    %v3807 = vadd.f32 %v626, %v3806
    %v3808 = vpop.f32.mrf.mxu0
    %3809 = vmatprep.mubr.bf16.mxu0 0
    %3810 = vmatmul.mubr.bf16.gmra.mxu0 %v2394
    %v3811 = vpop.f32.mrf.mxu0
    %v3812 = vadd.f32 %v626, %v3811
    %v3813 = vpop.f32.mrf.mxu0
    %v3814 = vpop.f32.mrf.mxu0
    %v3815 = vadd.f32 %v626, %v3814
    %v3816 = vpop.f32.mrf.mxu0
    %3817 = vmatprep.mubr.bf16.mxu0 0
    %3818 = vmatmul.mubr.bf16.gmra.mxu0 %v2397
    %v3819 = vpop.f32.mrf.mxu0
    %v3820 = vadd.f32 %v626, %v3819
    %v3821 = vpop.f32.mrf.mxu0
    %v3822 = vpop.f32.mrf.mxu0
    %v3823 = vadd.f32 %v626, %v3822
    %v3824 = vpop.f32.mrf.mxu0
    %3825 = vmatprep.mubr.bf16.mxu0 0
    %3826 = vmatmul.mubr.bf16.gmra.mxu0 %v2400
    %v3827 = vpop.f32.mrf.mxu0
    %v3828 = vadd.f32 %v626, %v3827
    %v3829 = vpop.f32.mrf.mxu0
    %v3830 = vpop.f32.mrf.mxu0
    %v3831 = vadd.f32 %v626, %v3830
    %v3832 = vpop.f32.mrf.mxu0
    %3833 = vmatprep.mubr.bf16.mxu0 0
    %3834 = vmatmul.mubr.bf16.gmra.mxu0 %v2403
    %v3835 = vpop.f32.mrf.mxu0
    %v3836 = vadd.f32 %v626, %v3835
    %v3837 = vpop.f32.mrf.mxu0
    %v3838 = vpop.f32.mrf.mxu0
    %v3839 = vadd.f32 %v626, %v3838
    %v3840 = vpop.f32.mrf.mxu0
    %3841 = vmatprep.mubr.bf16.mxu0 0
    %3842 = vmatmul.mubr.bf16.gmra.mxu0 %v2406
    %v3843 = vpop.f32.mrf.mxu0
    %v3844 = vadd.f32 %v626, %v3843
    %v3845 = vpop.f32.mrf.mxu0
    %v3846 = vpop.f32.mrf.mxu0
    %v3847 = vadd.f32 %v626, %v3846
    %v3848 = vpop.f32.mrf.mxu0
    %3849 = vmatprep.mubr.bf16.mxu0 0
    %3850 = vmatmul.mubr.bf16.gmra.mxu0 %v2409
    %v3851 = vpop.f32.mrf.mxu0
    %v3852 = vadd.f32 %v626, %v3851
    %v3853 = vpop.f32.mrf.mxu0
    %v3854 = vpop.f32.mrf.mxu0
    %v3855 = vadd.f32 %v626, %v3854
    %v3856 = vpop.f32.mrf.mxu0
    %3857 = vmatprep.mubr.bf16.mxu0 0
    %3858 = vmatmul.mubr.bf16.gmra.mxu0 %v2412
    %v3859 = vpop.f32.mrf.mxu0
    %v3860 = vadd.f32 %v626, %v3859
    %v3861 = vpop.f32.mrf.mxu0
    %v3862 = vpop.f32.mrf.mxu0
    %v3863 = vadd.f32 %v626, %v3862
    %v3864 = vpop.f32.mrf.mxu0
    %3865 = vmatprep.mubr.bf16.mxu0 0
    %3866 = vmatmul.mubr.bf16.gmra.mxu0 %v2415
    %v3867 = vpop.f32.mrf.mxu0
    %v3868 = vadd.f32 %v626, %v3867
    %v3869 = vpop.f32.mrf.mxu0
    %v3870 = vpop.f32.mrf.mxu0
    %v3871 = vadd.f32 %v626, %v3870
    %v3872 = vpop.f32.mrf.mxu0
    %3873 = vmatprep.mubr.bf16.mxu0 0
    %3874 = vmatmul.mubr.bf16.gmra.mxu0 %v2418
    %v3875 = vpop.f32.mrf.mxu0
    %v3876 = vadd.f32 %v626, %v3875
    %v3877 = vpop.f32.mrf.mxu0
    %v3878 = vpop.f32.mrf.mxu0
    %v3879 = vadd.f32 %v626, %v3878
    %v3880 = vpop.f32.mrf.mxu0
    %3881 = vmatprep.mubr.bf16.mxu0 0
    %3882 = vmatmul.mubr.bf16.gmra.mxu0 %v2421
    %v3883 = vpop.f32.mrf.mxu0
    %v3884 = vadd.f32 %v626, %v3883
    %v3885 = vpop.f32.mrf.mxu0
    %v3886 = vpop.f32.mrf.mxu0
    %v3887 = vadd.f32 %v626, %v3886
    %v3888 = vpop.f32.mrf.mxu0
    %3889 = vmatprep.mubr.bf16.mxu0 0
    %3890 = vmatmul.mubr.bf16.gmra.mxu0 %v2424
    %v3891 = vpop.f32.mrf.mxu0
    %v3892 = vadd.f32 %v626, %v3891
    %v3893 = vpop.f32.mrf.mxu0
    %v3894 = vpop.f32.mrf.mxu0
    %v3895 = vadd.f32 %v626, %v3894
    %v3896 = vpop.f32.mrf.mxu0
    %3897 = vmatprep.mubr.bf16.mxu0 0
    %3898 = vmatmul.mubr.bf16.gmra.mxu0 %v2427
    %v3899 = vpop.f32.mrf.mxu0
    %v3900 = vadd.f32 %v626, %v3899
    %v3901 = vpop.f32.mrf.mxu0
    %v3902 = vpop.f32.mrf.mxu0
    %v3903 = vadd.f32 %v626, %v3902
    %v3904 = vpop.f32.mrf.mxu0
    %3905 = vmatprep.mubr.bf16.mxu0 0
    %3906 = vmatmul.mubr.bf16.gmra.mxu0 %v2430
    %v3907 = vpop.f32.mrf.mxu0
    %v3908 = vadd.f32 %v626, %v3907
    %v3909 = vpop.f32.mrf.mxu0
    %v3910 = vpop.f32.mrf.mxu0
    %v3911 = vadd.f32 %v626, %v3910
    %v3912 = vpop.f32.mrf.mxu0
    %3913 = vmatprep.mubr.bf16.mxu0 0
    %3914 = vmatmul.mubr.bf16.gmra.mxu0 %v2433
    %v3915 = vpop.f32.mrf.mxu0
    %v3916 = vadd.f32 %v626, %v3915
    %v3917 = vpop.f32.mrf.mxu0
    %v3918 = vpop.f32.mrf.mxu0
    %v3919 = vadd.f32 %v626, %v3918
    %v3920 = vpop.f32.mrf.mxu0
    %3921 = vmatprep.mubr.bf16.mxu0 0
    %3922 = vmatmul.mubr.bf16.gmra.mxu0 %v2436
    %v3923 = vpop.f32.mrf.mxu0
    %v3924 = vadd.f32 %v626, %v3923
    %v3925 = vpop.f32.mrf.mxu0
    %v3926 = vpop.f32.mrf.mxu0
    %v3927 = vadd.f32 %v626, %v3926
    %v3928 = vpop.f32.mrf.mxu0
    %3929 = vmatprep.mubr.bf16.mxu0 0
    %3930 = vmatmul.mubr.bf16.gmra.mxu0 %v2439
    %v3931 = vpop.f32.mrf.mxu0
    %v3932 = vadd.f32 %v626, %v3931
    %v3933 = vpop.f32.mrf.mxu0
    %v3934 = vpop.f32.mrf.mxu0
    %v3935 = vadd.f32 %v626, %v3934
    %v3936 = vpop.f32.mrf.mxu0
    %3937 = vmatprep.mubr.bf16.mxu0 0
    %3938 = vmatmul.mubr.bf16.gmra.mxu0 %v2442
    %v3939 = vpop.f32.mrf.mxu0
    %v3940 = vadd.f32 %v626, %v3939
    %v3941 = vpop.f32.mrf.mxu0
    %v3942 = vpop.f32.mrf.mxu0
    %v3943 = vadd.f32 %v626, %v3942
    %v3944 = vpop.f32.mrf.mxu0
    %3945 = vmatprep.mubr.bf16.mxu0 0
    %3946 = vmatmul.mubr.bf16.gmra.mxu0 %v2445
    %v3947 = vpop.f32.mrf.mxu0
    %v3948 = vadd.f32 %v626, %v3947
    %v3949 = vpop.f32.mrf.mxu0
    %v3950 = vpop.f32.mrf.mxu0
    %v3951 = vadd.f32 %v626, %v3950
    %v3952 = vpop.f32.mrf.mxu0
    %3953 = vmatprep.mubr.bf16.mxu0 0
    %3954 = vmatmul.mubr.bf16.gmra.mxu0 %v2448
    %v3955 = vpop.f32.mrf.mxu0
    %v3956 = vadd.f32 %v626, %v3955
    %v3957 = vpop.f32.mrf.mxu0
    %v3958 = vpop.f32.mrf.mxu0
    %v3959 = vadd.f32 %v626, %v3958
    %v3960 = vpop.f32.mrf.mxu0
    %3961 = vmatprep.mubr.bf16.mxu0 0
    %3962 = vmatmul.mubr.bf16.gmra.mxu0 %v2451
    %v3963 = vpop.f32.mrf.mxu0
    %v3964 = vadd.f32 %v626, %v3963
    %v3965 = vpop.f32.mrf.mxu0
    %v3966 = vpop.f32.mrf.mxu0
    %v3967 = vadd.f32 %v626, %v3966
    %v3968 = vpop.f32.mrf.mxu0
    %3969 = vmatprep.mubr.bf16.mxu0 0
    %3970 = vmatmul.mubr.bf16.gmra.mxu0 %v2454
    %v3971 = vpop.f32.mrf.mxu0
    %v3972 = vadd.f32 %v626, %v3971
    %v3973 = vpop.f32.mrf.mxu0
    %v3974 = vpop.f32.mrf.mxu0
    %v3975 = vadd.f32 %v626, %v3974
    %v3976 = vpop.f32.mrf.mxu0
    %3977 = vmatprep.mubr.bf16.mxu0 0
    %3978 = vmatmul.mubr.bf16.gmra.mxu0 %v2457
    %v3979 = vpop.f32.mrf.mxu0
    %v3980 = vadd.f32 %v626, %v3979
    %v3981 = vpop.f32.mrf.mxu0
    %v3982 = vpop.f32.mrf.mxu0
    %v3983 = vadd.f32 %v626, %v3982
    %v3984 = vpop.f32.mrf.mxu0
    %3985 = vmatprep.mubr.bf16.mxu0 0
    %3986 = vmatmul.mubr.bf16.gmra.mxu0 %v2460
    %v3987 = vpop.f32.mrf.mxu0
    %v3988 = vadd.f32 %v626, %v3987
    %v3989 = vpop.f32.mrf.mxu0
    %v3990 = vpop.f32.mrf.mxu0
    %v3991 = vadd.f32 %v626, %v3990
    %v3992 = vpop.f32.mrf.mxu0
    %3993 = vmatprep.mubr.bf16.mxu0 0
    %3994 = vmatmul.mubr.bf16.gmra.mxu0 %v2463
    %v3995 = vpop.f32.mrf.mxu0
    %v3996 = vadd.f32 %v626, %v3995
    %v3997 = vpop.f32.mrf.mxu0
    %v3998 = vpop.f32.mrf.mxu0
    %v3999 = vadd.f32 %v626, %v3998
    %v4000 = vpop.f32.mrf.mxu0
    %4001 = vmatprep.mubr.bf16.mxu0 0
    %4002 = vmatmul.mubr.bf16.gmra.mxu0 %v2466
    %v4003 = vpop.f32.mrf.mxu0
    %v4004 = vadd.f32 %v626, %v4003
    %v4005 = vpop.f32.mrf.mxu0
    %v4006 = vpop.f32.mrf.mxu0
    %v4007 = vadd.f32 %v626, %v4006
    %v4008 = vpop.f32.mrf.mxu0
    %4009 = vmatprep.mubr.bf16.mxu0 0
    %4010 = vmatmul.mubr.bf16.gmra.mxu0 %v2469
    %v4011 = vpop.f32.mrf.mxu0
    %v4012 = vadd.f32 %v626, %v4011
    %v4013 = vpop.f32.mrf.mxu0
    %v4014 = vpop.f32.mrf.mxu0
    %v4015 = vadd.f32 %v626, %v4014
    %v4016 = vpop.f32.mrf.mxu0
    %4017 = vmatprep.mubr.bf16.mxu0 0
    %4018 = vmatmul.mubr.bf16.gmra.mxu0 %v2472
    %v4019 = vpop.f32.mrf.mxu0
    %v4020 = vadd.f32 %v626, %v4019
    %v4021 = vpop.f32.mrf.mxu0
    %v4022 = vpop.f32.mrf.mxu0
    %v4023 = vadd.f32 %v626, %v4022
    %v4024 = vpop.f32.mrf.mxu0
    %4025 = vmatprep.mubr.bf16.mxu0 0
    %4026 = vmatmul.mubr.bf16.gmra.mxu0 %v2475
    %v4027 = vpop.f32.mrf.mxu0
    %v4028 = vadd.f32 %v626, %v4027
    %v4029 = vpop.f32.mrf.mxu0
    %v4030 = vpop.f32.mrf.mxu0
    %v4031 = vadd.f32 %v626, %v4030
    %v4032 = vpop.f32.mrf.mxu0
    %4033 = vmatprep.mubr.bf16.mxu0 0
    %4034 = vmatmul.mubr.bf16.gmra.mxu0 %v2478
    %v4035 = vpop.f32.mrf.mxu0
    %v4036 = vadd.f32 %v626, %v4035
    %v4037 = vpop.f32.mrf.mxu0
    %v4038 = vpop.f32.mrf.mxu0
    %v4039 = vadd.f32 %v626, %v4038
    %v4040 = vpop.f32.mrf.mxu0
    %4041 = vmatprep.mubr.bf16.mxu0 0
    %4042 = vmatmul.mubr.bf16.gmra.mxu0 %v2481
    %v4043 = vpop.f32.mrf.mxu0
    %v4044 = vadd.f32 %v626, %v4043
    %v4045 = vpop.f32.mrf.mxu0
    %v4046 = vpop.f32.mrf.mxu0
    %v4047 = vadd.f32 %v626, %v4046
    %v4048 = vpop.f32.mrf.mxu0
    %4049 = vmatprep.mubr.bf16.mxu0 0
    %4050 = vmatmul.mubr.bf16.gmra.mxu0 %v2484
    %v4051 = vpop.f32.mrf.mxu0
    %v4052 = vadd.f32 %v626, %v4051
    %v4053 = vpop.f32.mrf.mxu0
    %v4054 = vpop.f32.mrf.mxu0
    %v4055 = vadd.f32 %v626, %v4054
    %v4056 = vpop.f32.mrf.mxu0
    %4057 = vmatprep.mubr.bf16.mxu0 0
    %4058 = vmatmul.mubr.bf16.gmra.mxu0 %v2487
    %v4059 = vpop.f32.mrf.mxu0
    %v4060 = vadd.f32 %v626, %v4059
    %v4061 = vpop.f32.mrf.mxu0
    %v4062 = vpop.f32.mrf.mxu0
    %v4063 = vadd.f32 %v626, %v4062
    %v4064 = vpop.f32.mrf.mxu0
    %4065 = vmatprep.mubr.bf16.mxu0 0
    %4066 = vmatmul.mubr.bf16.gmra.mxu0 %v2490
    %v4067 = vpop.f32.mrf.mxu0
    %v4068 = vadd.f32 %v626, %v4067
    %v4069 = vpop.f32.mrf.mxu0
    %v4070 = vpop.f32.mrf.mxu0
    %v4071 = vadd.f32 %v626, %v4070
    %v4072 = vpop.f32.mrf.mxu0
    %4073 = vmatprep.mubr.bf16.mxu0 0
    %4074 = vmatmul.mubr.bf16.gmra.mxu0 %v2493
    %v4075 = vpop.f32.mrf.mxu0
    %v4076 = vadd.f32 %v626, %v4075
    %v4077 = vpop.f32.mrf.mxu0
    %v4078 = vpop.f32.mrf.mxu0
    %v4079 = vadd.f32 %v626, %v4078
    %v4080 = vpop.f32.mrf.mxu0
    %4081 = vmatprep.mubr.bf16.mxu0 0
    %4082 = vmatmul.mubr.bf16.gmra.mxu0 %v2496
    %v4083 = vpop.f32.mrf.mxu0
    %v4084 = vadd.f32 %v626, %v4083
    %v4085 = vpop.f32.mrf.mxu0
    %v4086 = vpop.f32.mrf.mxu0
    %v4087 = vadd.f32 %v626, %v4086
    %v4088 = vpop.f32.mrf.mxu0
    %4089 = vmatprep.mubr.bf16.mxu0 0
    %4090 = vmatmul.mubr.bf16.gmra.mxu0 %v2499
    %v4091 = vpop.f32.mrf.mxu0
    %v4092 = vadd.f32 %v626, %v4091
    %v4093 = vpop.f32.mrf.mxu0
    %v4094 = vpop.f32.mrf.mxu0
    %v4095 = vadd.f32 %v626, %v4094
    %v4096 = vpop.f32.mrf.mxu0
    %4097 = vmatprep.mubr.bf16.mxu0 0
    %4098 = vmatmul.mubr.bf16.gmra.mxu0 %v2502
    %v4099 = vpop.f32.mrf.mxu0
    %v4100 = vadd.f32 %v626, %v4099
    %v4101 = vpop.f32.mrf.mxu0
    %v4102 = vpop.f32.mrf.mxu0
    %v4103 = vadd.f32 %v626, %v4102
    %v4104 = vpop.f32.mrf.mxu0
    %4105 = vmatprep.mubr.bf16.mxu0 0
    %4106 = vmatmul.mubr.bf16.gmra.mxu0 %v2505
    %v4107 = vpop.f32.mrf.mxu0
    %v4108 = vadd.f32 %v626, %v4107
    %v4109 = vpop.f32.mrf.mxu0
    %v4110 = vpop.f32.mrf.mxu0
    %v4111 = vadd.f32 %v626, %v4110
    %v4112 = vpop.f32.mrf.mxu0
    %4113 = vmatprep.mubr.bf16.mxu0 0
    %4114 = vmatmul.mubr.bf16.gmra.mxu0 %v2508
    %v4115 = vpop.f32.mrf.mxu0
    %v4116 = vadd.f32 %v626, %v4115
    %v4117 = vpop.f32.mrf.mxu0
    %v4118 = vpop.f32.mrf.mxu0
    %v4119 = vadd.f32 %v626, %v4118
    %v4120 = vpop.f32.mrf.mxu0
    %4121 = vmatprep.mubr.bf16.mxu0 0
    %4122 = vmatmul.mubr.bf16.gmra.mxu0 %v2511
    %v4123 = vpop.f32.mrf.mxu0
    %v4124 = vadd.f32 %v626, %v4123
    %v4125 = vpop.f32.mrf.mxu0
    %v4126 = vpop.f32.mrf.mxu0
    %v4127 = vadd.f32 %v626, %v4126
    %v4128 = vpop.f32.mrf.mxu0
    %4129 = vmatprep.mubr.bf16.mxu0 0
    %4130 = vmatmul.mubr.bf16.gmra.mxu0 %v2514
    %v4131 = vpop.f32.mrf.mxu0
    %v4132 = vadd.f32 %v626, %v4131
    %v4133 = vpop.f32.mrf.mxu0
    %v4134 = vpop.f32.mrf.mxu0
    %v4135 = vadd.f32 %v626, %v4134
    %v4136 = vpop.f32.mrf.mxu0
    %4137 = vmatprep.mubr.bf16.mxu0 0
    %4138 = vmatmul.mubr.bf16.gmra.mxu0 %v2517
    %v4139 = vpop.f32.mrf.mxu0
    %v4140 = vadd.f32 %v626, %v4139
    %v4141 = vpop.f32.mrf.mxu0
    %v4142 = vpop.f32.mrf.mxu0
    %v4143 = vadd.f32 %v626, %v4142
    %v4144 = vpop.f32.mrf.mxu0
    %4145 = vmatprep.mubr.bf16.mxu0 0
    %4146 = vmatmul.mubr.bf16.gmra.mxu0 %v2520
    %v4147 = vpop.f32.mrf.mxu0
    %v4148 = vadd.f32 %v626, %v4147
    %v4149 = vpop.f32.mrf.mxu0
    %v4150 = vpop.f32.mrf.mxu0
    %v4151 = vadd.f32 %v626, %v4150
    %v4152 = vpop.f32.mrf.mxu0
    %4153 = vmatprep.mubr.bf16.mxu0 0
    %4154 = vmatmul.mubr.bf16.gmra.mxu0 %v2523
    %v4155 = vpop.f32.mrf.mxu0
    %v4156 = vadd.f32 %v626, %v4155
    %v4157 = vpop.f32.mrf.mxu0
    %v4158 = vpop.f32.mrf.mxu0
    %v4159 = vadd.f32 %v626, %v4158
    %v4160 = vpop.f32.mrf.mxu0
    %4161 = vmatprep.mubr.bf16.mxu0 0
    %4162 = vmatmul.mubr.bf16.gmra.mxu0 %v2526
    %v4163 = vpop.f32.mrf.mxu0
    %v4164 = vadd.f32 %v626, %v4163
    %v4165 = vpop.f32.mrf.mxu0
    %v4166 = vpop.f32.mrf.mxu0
    %v4167 = vadd.f32 %v626, %v4166
    %v4168 = vpop.f32.mrf.mxu0
    %4169 = vmatprep.mubr.bf16.mxu0 0
    %4170 = vmatmul.mubr.bf16.gmra.mxu0 %v2529
    %v4171 = vpop.f32.mrf.mxu0
    %v4172 = vadd.f32 %v626, %v4171
    %v4173 = vpop.f32.mrf.mxu0
    %v4174 = vpop.f32.mrf.mxu0
    %v4175 = vadd.f32 %v626, %v4174
    %v4176 = vpop.f32.mrf.mxu0
    %4177 = vmatprep.mubr.bf16.mxu0 0
    %4178 = vmatmul.mubr.bf16.gmra.mxu0 %v2532
    %v4179 = vpop.f32.mrf.mxu0
    %v4180 = vadd.f32 %v626, %v4179
    %v4181 = vpop.f32.mrf.mxu0
    %v4182 = vpop.f32.mrf.mxu0
    %v4183 = vadd.f32 %v626, %v4182
    %v4184 = vpop.f32.mrf.mxu0
    %4185 = vmatprep.mubr.bf16.mxu0 0
    %4186 = vmatmul.mubr.bf16.gmra.mxu0 %v2535
    %v4187 = vpop.f32.mrf.mxu0
    %v4188 = vadd.f32 %v626, %v4187
    %v4189 = vpop.f32.mrf.mxu0
    %v4190 = vpop.f32.mrf.mxu0
    %v4191 = vadd.f32 %v626, %v4190
    %v4192 = vpop.f32.mrf.mxu0
    %4193 = vmatprep.mubr.bf16.mxu0 0
    %4194 = vmatmul.mubr.bf16.gmra.mxu0 %v2538
    %v4195 = vpop.f32.mrf.mxu0
    %v4196 = vadd.f32 %v626, %v4195
    %v4197 = vpop.f32.mrf.mxu0
    %v4198 = vpop.f32.mrf.mxu0
    %v4199 = vadd.f32 %v626, %v4198
    %v4200 = vpop.f32.mrf.mxu0
    %4201 = vmatprep.mubr.bf16.mxu0 0
    %4202 = vmatmul.mubr.bf16.gmra.mxu0 %v2541
    %v4203 = vpop.f32.mrf.mxu0
    %v4204 = vadd.f32 %v626, %v4203
    %v4205 = vpop.f32.mrf.mxu0
    %v4206 = vpop.f32.mrf.mxu0
    %v4207 = vadd.f32 %v626, %v4206
    %v4208 = vpop.f32.mrf.mxu0
    %4209 = vmatprep.mubr.bf16.mxu0 0
    %4210 = vmatmul.mubr.bf16.gmra.mxu0 %v2544
    %v4211 = vpop.f32.mrf.mxu0
    %v4212 = vadd.f32 %v626, %v4211
    %v4213 = vpop.f32.mrf.mxu0
    %v4214 = vpop.f32.mrf.mxu0
    %v4215 = vadd.f32 %v626, %v4214
    %v4216 = vpop.f32.mrf.mxu0
    %4217 = vmatprep.mubr.bf16.mxu0 0
    %4218 = vmatmul.mubr.bf16.gmra.mxu0 %v2547
    %v4219 = vpop.f32.mrf.mxu0
    %v4220 = vadd.f32 %v626, %v4219
    %v4221 = vpop.f32.mrf.mxu0
    %v4222 = vpop.f32.mrf.mxu0
    %v4223 = vadd.f32 %v626, %v4222
    %v4224 = vpop.f32.mrf.mxu0
    %4225 = vmatprep.mubr.bf16.mxu0 0
    %4226 = vmatmul.mubr.bf16.gmra.mxu0 %v2550
    %v4227 = vpop.f32.mrf.mxu0
    %v4228 = vadd.f32 %v626, %v4227
    %v4229 = vpop.f32.mrf.mxu0
    %v4230 = vpop.f32.mrf.mxu0
    %v4231 = vadd.f32 %v626, %v4230
    %v4232 = vpop.f32.mrf.mxu0
    %4233 = vmatprep.mubr.bf16.mxu0 0
    %4234 = vmatmul.mubr.bf16.gmra.mxu0 %v2553
    %v4235 = vpop.f32.mrf.mxu0
    %v4236 = vadd.f32 %v626, %v4235
    %v4237 = vpop.f32.mrf.mxu0
    %v4238 = vpop.f32.mrf.mxu0
    %v4239 = vadd.f32 %v626, %v4238
    %v4240 = vpop.f32.mrf.mxu0
    %4241 = vmatprep.mubr.bf16.mxu0 0
    %4242 = vmatmul.mubr.bf16.gmra.mxu0 %v2556
    %v4243 = vpop.f32.mrf.mxu0
    %v4244 = vadd.f32 %v626, %v4243
    %v4245 = vpop.f32.mrf.mxu0
    %v4246 = vpop.f32.mrf.mxu0
    %v4247 = vadd.f32 %v626, %v4246
    %v4248 = vpop.f32.mrf.mxu0
    %4249 = vmatprep.mubr.bf16.mxu0 0
    %4250 = vmatmul.mubr.bf16.gmra.mxu0 %v2559
    %v4251 = vpop.f32.mrf.mxu0
    %v4252 = vadd.f32 %v626, %v4251
    %v4253 = vpop.f32.mrf.mxu0
    %v4254 = vpop.f32.mrf.mxu0
    %v4255 = vadd.f32 %v626, %v4254
    %v4256 = vpop.f32.mrf.mxu0
    %4257 = vmatprep.mubr.bf16.mxu0 0
    %4258 = vmatmul.mubr.bf16.gmra.mxu0 %v2562
    %v4259 = vpop.f32.mrf.mxu0
    %v4260 = vadd.f32 %v626, %v4259
    %v4261 = vpop.f32.mrf.mxu0
    %v4262 = vpop.f32.mrf.mxu0
    %v4263 = vadd.f32 %v626, %v4262
    %v4264 = vpop.f32.mrf.mxu0
    %4265 = vmatprep.mubr.bf16.mxu0 0
    %4266 = vmatmul.mubr.bf16.gmra.mxu0 %v2565
    %v4267 = vpop.f32.mrf.mxu0
    %v4268 = vadd.f32 %v626, %v4267
    %v4269 = vpop.f32.mrf.mxu0
    %v4270 = vpop.f32.mrf.mxu0
    %v4271 = vadd.f32 %v626, %v4270
    %v4272 = vpop.f32.mrf.mxu0
    %4273 = vmatprep.mubr.bf16.mxu0 0
    %4274 = vmatmul.mubr.bf16.gmra.mxu0 %v2568
    %v4275 = vpop.f32.mrf.mxu0
    %v4276 = vadd.f32 %v626, %v4275
    %v4277 = vpop.f32.mrf.mxu0
    %v4278 = vpop.f32.mrf.mxu0
    %v4279 = vadd.f32 %v626, %v4278
    %v4280 = vpop.f32.mrf.mxu0
    %4281 = vmatprep.mubr.bf16.mxu0 0
    %4282 = vmatmul.mubr.bf16.gmra.mxu0 %v2571
    %v4283 = vpop.f32.mrf.mxu0
    %v4284 = vadd.f32 %v626, %v4283
    %v4285 = vpop.f32.mrf.mxu0
    %v4286 = vpop.f32.mrf.mxu0
    %v4287 = vadd.f32 %v626, %v4286
    %v4288 = vpop.f32.mrf.mxu0
    %4289 = vmatprep.mubr.bf16.mxu0 0
    %4290 = vmatmul.mubr.bf16.gmra.mxu0 %v2574
    %v4291 = vpop.f32.mrf.mxu0
    %v4292 = vadd.f32 %v626, %v4291
    %v4293 = vpop.f32.mrf.mxu0
    %v4294 = vpop.f32.mrf.mxu0
    %v4295 = vadd.f32 %v626, %v4294
    %v4296 = vpop.f32.mrf.mxu0
    %4297 = vmatprep.mubr.bf16.mxu0 0
    %4298 = vmatmul.mubr.bf16.gmra.mxu0 %v2577
    %v4299 = vpop.f32.mrf.mxu0
    %v4300 = vadd.f32 %v626, %v4299
    %v4301 = vpop.f32.mrf.mxu0
    %v4302 = vpop.f32.mrf.mxu0
    %v4303 = vadd.f32 %v626, %v4302
    %v4304 = vpop.f32.mrf.mxu0
    %4305 = vmatprep.mubr.bf16.mxu0 0
    %4306 = vmatmul.mubr.bf16.gmra.mxu0 %v2580
    %v4307 = vpop.f32.mrf.mxu0
    %v4308 = vadd.f32 %v626, %v4307
    %v4309 = vpop.f32.mrf.mxu0
    %v4310 = vpop.f32.mrf.mxu0
    %v4311 = vadd.f32 %v626, %v4310
    %v4312 = vpop.f32.mrf.mxu0
    %4313 = vmatprep.mubr.bf16.mxu0 0
    %4314 = vmatmul.mubr.bf16.gmra.mxu0 %v2583
    %v4315 = vpop.f32.mrf.mxu0
    %v4316 = vadd.f32 %v626, %v4315
    %v4317 = vpop.f32.mrf.mxu0
    %v4318 = vpop.f32.mrf.mxu0
    %v4319 = vadd.f32 %v626, %v4318
    %v4320 = vpop.f32.mrf.mxu0
    %4321 = vmatprep.mubr.bf16.mxu0 0
    %4322 = vmatmul.mubr.bf16.gmra.mxu0 %v2586
    %v4323 = vpop.f32.mrf.mxu0
    %v4324 = vadd.f32 %v626, %v4323
    %v4325 = vpop.f32.mrf.mxu0
    %v4326 = vpop.f32.mrf.mxu0
    %v4327 = vadd.f32 %v626, %v4326
    %v4328 = vpop.f32.mrf.mxu0
    %4329 = vmatprep.mubr.bf16.mxu0 0
    %4330 = vmatmul.mubr.bf16.gmra.mxu0 %v2589
    %v4331 = vpop.f32.mrf.mxu0
    %v4332 = vadd.f32 %v626, %v4331
    %v4333 = vpop.f32.mrf.mxu0
    %v4334 = vpop.f32.mrf.mxu0
    %v4335 = vadd.f32 %v626, %v4334
    %v4336 = vpop.f32.mrf.mxu0
    %4337 = vmatprep.mubr.bf16.mxu0 0
    %4338 = vmatmul.mubr.bf16.gmra.mxu0 %v2592
    %v4339 = vpop.f32.mrf.mxu0
    %v4340 = vadd.f32 %v626, %v4339
    %v4341 = vpop.f32.mrf.mxu0
    %v4342 = vpop.f32.mrf.mxu0
    %v4343 = vadd.f32 %v626, %v4342
    %v4344 = vpop.f32.mrf.mxu0
    %4345 = vmatprep.mubr.bf16.mxu0 0
    %4346 = vmatmul.mubr.bf16.gmra.mxu0 %v2595
    %v4347 = vpop.f32.mrf.mxu0
    %v4348 = vadd.f32 %v626, %v4347
    %v4349 = vpop.f32.mrf.mxu0
    %v4350 = vpop.f32.mrf.mxu0
    %v4351 = vadd.f32 %v626, %v4350
    %v4352 = vpop.f32.mrf.mxu0
    %4353 = vmatprep.mubr.bf16.mxu0 0
    %4354 = vmatmul.mubr.bf16.gmra.mxu0 %v2598
    %v4355 = vpop.f32.mrf.mxu0
    %v4356 = vadd.f32 %v626, %v4355
    %v4357 = vpop.f32.mrf.mxu0
    %v4358 = vpop.f32.mrf.mxu0
    %v4359 = vadd.f32 %v626, %v4358
    %v4360 = vpop.f32.mrf.mxu0
    %4361 = vmatprep.mubr.bf16.mxu0 0
    %4362 = vmatmul.mubr.bf16.gmra.mxu0 %v2601
    %v4363 = vpop.f32.mrf.mxu0
    %v4364 = vadd.f32 %v626, %v4363
    %v4365 = vpop.f32.mrf.mxu0
    %v4366 = vpop.f32.mrf.mxu0
    %v4367 = vadd.f32 %v626, %v4366
    %v4368 = vpop.f32.mrf.mxu0
    %4369 = vmatprep.mubr.bf16.mxu0 0
    %4370 = vmatmul.mubr.bf16.gmra.mxu0 %v2604
    %v4371 = vpop.f32.mrf.mxu0
    %v4372 = vadd.f32 %v626, %v4371
    %v4373 = vpop.f32.mrf.mxu0
    %v4374 = vpop.f32.mrf.mxu0
    %v4375 = vadd.f32 %v626, %v4374
    %v4376 = vpop.f32.mrf.mxu0
    %4377 = vmatprep.mubr.bf16.mxu0 0
    %4378 = vmatmul.mubr.bf16.gmra.mxu0 %v2607
    %v4379 = vpop.f32.mrf.mxu0
    %v4380 = vadd.f32 %v626, %v4379
    %v4381 = vpop.f32.mrf.mxu0
    %v4382 = vpop.f32.mrf.mxu0
    %v4383 = vadd.f32 %v626, %v4382
    %v4384 = vpop.f32.mrf.mxu0
    %4385 = vmatprep.mubr.bf16.mxu0 0
    %4386 = vmatmul.mubr.bf16.gmra.mxu0 %v2610
    %v4387 = vpop.f32.mrf.mxu0
    %v4388 = vadd.f32 %v626, %v4387
    %v4389 = vpop.f32.mrf.mxu0
    %v4390 = vpop.f32.mrf.mxu0
    %v4391 = vadd.f32 %v626, %v4390
    %v4392 = vpop.f32.mrf.mxu0
    %4393 = vmatprep.mubr.bf16.mxu0 0
    %4394 = vmatmul.mubr.bf16.gmra.mxu0 %v2613
    %v4395 = vpop.f32.mrf.mxu0
    %v4396 = vadd.f32 %v626, %v4395
    %v4397 = vpop.f32.mrf.mxu0
    %v4398 = vpop.f32.mrf.mxu0
    %v4399 = vadd.f32 %v626, %v4398
    %v4400 = vpop.f32.mrf.mxu0
    %4401 = vmatprep.mubr.bf16.mxu0 0
    %4402 = vmatmul.mubr.bf16.gmra.mxu0 %v2616
    %v4403 = vpop.f32.mrf.mxu0
    %v4404 = vadd.f32 %v626, %v4403
    %v4405 = vpop.f32.mrf.mxu0
    %v4406 = vpop.f32.mrf.mxu0
    %v4407 = vadd.f32 %v626, %v4406
    %v4408 = vpop.f32.mrf.mxu0
    %4409 = vmatprep.mubr.bf16.mxu0 0
    %4410 = vmatmul.mubr.bf16.gmra.mxu0 %v2619
    %v4411 = vpop.f32.mrf.mxu0
    %v4412 = vadd.f32 %v626, %v4411
    %v4413 = vpop.f32.mrf.mxu0
    %v4414 = vpop.f32.mrf.mxu0
    %v4415 = vadd.f32 %v626, %v4414
    %v4416 = vpop.f32.mrf.mxu0
    %4417 = vmatprep.mubr.bf16.mxu0 0
    %4418 = vmatmul.mubr.bf16.gmra.mxu0 %v2622
    %v4419 = vpop.f32.mrf.mxu0
    %v4420 = vadd.f32 %v626, %v4419
    %v4421 = vpop.f32.mrf.mxu0
    %v4422 = vpop.f32.mrf.mxu0
    %v4423 = vadd.f32 %v626, %v4422
    %v4424 = vpop.f32.mrf.mxu0
    %4425 = vmatprep.mubr.bf16.mxu0 0
    %4426 = vmatmul.mubr.bf16.gmra.mxu0 %v2625
    %v4427 = vpop.f32.mrf.mxu0
    %v4428 = vadd.f32 %v626, %v4427
    %v4429 = vpop.f32.mrf.mxu0
    %v4430 = vpop.f32.mrf.mxu0
    %v4431 = vadd.f32 %v626, %v4430
    %v4432 = vpop.f32.mrf.mxu0
    %4433 = vmatprep.mubr.bf16.mxu0 0
    %4434 = vmatmul.mubr.bf16.gmra.mxu0 %v2628
    %v4435 = vpop.f32.mrf.mxu0
    %v4436 = vadd.f32 %v626, %v4435
    %v4437 = vpop.f32.mrf.mxu0
    %v4438 = vpop.f32.mrf.mxu0
    %v4439 = vadd.f32 %v626, %v4438
    %v4440 = vpop.f32.mrf.mxu0
    %4441 = vmatprep.mubr.bf16.mxu0 0
    %4442 = vmatmul.mubr.bf16.gmra.mxu0 %v2631
    %v4443 = vpop.f32.mrf.mxu0
    %v4444 = vadd.f32 %v626, %v4443
    %v4445 = vpop.f32.mrf.mxu0
    %v4446 = vpop.f32.mrf.mxu0
    %v4447 = vadd.f32 %v626, %v4446
    %v4448 = vpop.f32.mrf.mxu0
    %4449 = vmatprep.mubr.bf16.mxu0 0
    %4450 = vmatmul.mubr.bf16.gmra.mxu0 %v2634
    %v4451 = vpop.f32.mrf.mxu0
    %v4452 = vadd.f32 %v626, %v4451
    %v4453 = vpop.f32.mrf.mxu0
    %v4454 = vpop.f32.mrf.mxu0
    %v4455 = vadd.f32 %v626, %v4454
    %v4456 = vpop.f32.mrf.mxu0
    %4457 = vmatprep.mubr.bf16.mxu0 0
    %4458 = vmatmul.mubr.bf16.gmra.mxu0 %v2637
    %v4459 = vpop.f32.mrf.mxu0
    %v4460 = vadd.f32 %v626, %v4459
    %v4461 = vpop.f32.mrf.mxu0
    %v4462 = vpop.f32.mrf.mxu0
    %v4463 = vadd.f32 %v626, %v4462
    %v4464 = vpop.f32.mrf.mxu0
    %4465 = vmatprep.mubr.bf16.mxu0 0
    %4466 = vmatmul.mubr.bf16.gmra.mxu0 %v2640
    %v4467 = vpop.f32.mrf.mxu0
    %v4468 = vadd.f32 %v626, %v4467
    %v4469 = vpop.f32.mrf.mxu0
    %v4470 = vpop.f32.mrf.mxu0
    %v4471 = vadd.f32 %v626, %v4470
    %v4472 = vpop.f32.mrf.mxu0
    %4473 = vmatprep.mubr.bf16.mxu0 0
    %4474 = vmatmul.mubr.bf16.gmra.mxu0 %v2643
    %v4475 = vpop.f32.mrf.mxu0
    %v4476 = vadd.f32 %v626, %v4475
    %v4477 = vpop.f32.mrf.mxu0
    %v4478 = vpop.f32.mrf.mxu0
    %v4479 = vadd.f32 %v626, %v4478
    %v4480 = vpop.f32.mrf.mxu0
    %4481 = vmatprep.mubr.bf16.mxu0 0
    %4482 = vmatmul.mubr.bf16.gmra.mxu0 %v2646
    %v4483 = vpop.f32.mrf.mxu0
    %v4484 = vadd.f32 %v626, %v4483
    %v4485 = vpop.f32.mrf.mxu0
    %v4486 = vpop.f32.mrf.mxu0
    %v4487 = vadd.f32 %v626, %v4486
    %v4488 = vpop.f32.mrf.mxu0
    %4489 = vmatprep.mubr.bf16.mxu0 0
    %4490 = vmatmul.mubr.bf16.gmra.mxu0 %v2649
    %v4491 = vpop.f32.mrf.mxu0
    %v4492 = vadd.f32 %v626, %v4491
    %v4493 = vpop.f32.mrf.mxu0
    %v4494 = vpop.f32.mrf.mxu0
    %v4495 = vadd.f32 %v626, %v4494
    %v4496 = vpop.f32.mrf.mxu0
    %4497 = vmatprep.mubr.bf16.mxu0 0
    %4498 = vmatmul.mubr.bf16.gmra.mxu0 %v2652
    %v4499 = vpop.f32.mrf.mxu0
    %v4500 = vadd.f32 %v626, %v4499
    %v4501 = vpop.f32.mrf.mxu0
    %v4502 = vpop.f32.mrf.mxu0
    %v4503 = vadd.f32 %v626, %v4502
    %v4504 = vpop.f32.mrf.mxu0
    %4505 = vmatprep.mubr.bf16.mxu0 0
    %4506 = vmatmul.mubr.bf16.gmra.mxu0 %v2655
    %v4507 = vpop.f32.mrf.mxu0
    %v4508 = vadd.f32 %v626, %v4507
    %v4509 = vpop.f32.mrf.mxu0
    %v4510 = vpop.f32.mrf.mxu0
    %v4511 = vadd.f32 %v626, %v4510
    %v4512 = vpop.f32.mrf.mxu0
    %4513 = vmatprep.mubr.bf16.mxu0 0
    %4514 = vmatmul.mubr.bf16.gmra.mxu0 %v2658
    %v4515 = vpop.f32.mrf.mxu0
    %v4516 = vadd.f32 %v626, %v4515
    %v4517 = vpop.f32.mrf.mxu0
    %v4518 = vpop.f32.mrf.mxu0
    %v4519 = vadd.f32 %v626, %v4518
    %v4520 = vpop.f32.mrf.mxu0
    %4521 = vmatprep.mubr.bf16.mxu0 0
    %4522 = vmatmul.mubr.bf16.gmra.mxu0 %v2661
    %v4523 = vpop.f32.mrf.mxu0
    %v4524 = vadd.f32 %v626, %v4523
    %v4525 = vpop.f32.mrf.mxu0
    %v4526 = vpop.f32.mrf.mxu0
    %v4527 = vadd.f32 %v626, %v4526
    %v4528 = vpop.f32.mrf.mxu0
    %4529 = vmatprep.mubr.bf16.mxu0 0
    %4530 = vmatmul.mubr.bf16.gmra.mxu0 %v2664
    %v4531 = vpop.f32.mrf.mxu0
    %v4532 = vadd.f32 %v626, %v4531
    %v4533 = vpop.f32.mrf.mxu0
    %v4534 = vpop.f32.mrf.mxu0
    %v4535 = vadd.f32 %v626, %v4534
    %v4536 = vpop.f32.mrf.mxu0
    %4537 = vmatprep.mubr.bf16.mxu0 0
    %4538 = vmatmul.mubr.bf16.gmra.mxu0 %v2667
    %v4539 = vpop.f32.mrf.mxu0
    %v4540 = vadd.f32 %v626, %v4539
    %v4541 = vpop.f32.mrf.mxu0
    %v4542 = vpop.f32.mrf.mxu0
    %v4543 = vadd.f32 %v626, %v4542
    %v4544 = vpop.f32.mrf.mxu0
    %4545 = vmatprep.mubr.bf16.mxu0 0
    %4546 = vmatmul.mubr.bf16.gmra.mxu0 %v2670
    %v4547 = vpop.f32.mrf.mxu0
    %v4548 = vadd.f32 %v626, %v4547
    %v4549 = vpop.f32.mrf.mxu0
    %v4550 = vpop.f32.mrf.mxu0
    %v4551 = vadd.f32 %v626, %v4550
    %v4552 = vpop.f32.mrf.mxu0
    %4553 = vmatprep.mubr.bf16.mxu0 0
    %4554 = vmatmul.mubr.bf16.gmra.mxu0 %v2673
    %v4555 = vpop.f32.mrf.mxu0
    %v4556 = vadd.f32 %v626, %v4555
    %v4557 = vpop.f32.mrf.mxu0
    %v4558 = vpop.f32.mrf.mxu0
    %v4559 = vadd.f32 %v626, %v4558
    %v4560 = vpop.f32.mrf.mxu0
    %4561 = vmatprep.mubr.bf16.mxu0 0
    %4562 = vmatmul.mubr.bf16.gmra.mxu0 %v2676
    %v4563 = vpop.f32.mrf.mxu0
    %v4564 = vadd.f32 %v626, %v4563
    %v4565 = vpop.f32.mrf.mxu0
    %v4566 = vpop.f32.mrf.mxu0
    %v4567 = vadd.f32 %v626, %v4566
    %v4568 = vpop.f32.mrf.mxu0
    %4569 = vmatprep.mubr.bf16.mxu0 0
    %4570 = vmatmul.mubr.bf16.gmra.mxu0 %v2679
    %v4571 = vpop.f32.mrf.mxu0
    %v4572 = vadd.f32 %v626, %v4571
    %v4573 = vpop.f32.mrf.mxu0
    %v4574 = vpop.f32.mrf.mxu0
    %v4575 = vadd.f32 %v626, %v4574
    %v4576 = vpop.f32.mrf.mxu0
    %4577 = vmatprep.mubr.bf16.mxu0 0
    %4578 = vmatmul.mubr.bf16.gmra.mxu0 %v2682
    %v4579 = vpop.f32.mrf.mxu0
    %v4580 = vadd.f32 %v626, %v4579
    %v4581 = vpop.f32.mrf.mxu0
    %v4582 = vpop.f32.mrf.mxu0
    %v4583 = vadd.f32 %v626, %v4582
    %v4584 = vpop.f32.mrf.mxu0
    %4585 = vmatprep.mubr.bf16.mxu0 0
    %4586 = vmatmul.mubr.bf16.gmra.mxu0 %v2685
    %v4587 = vpop.f32.mrf.mxu0
    %v4588 = vadd.f32 %v626, %v4587
    %v4589 = vpop.f32.mrf.mxu0
    %v4590 = vpop.f32.mrf.mxu0
    %v4591 = vadd.f32 %v626, %v4590
    %v4592 = vpop.f32.mrf.mxu0
    %4593 = vmatprep.mubr.bf16.mxu0 0
    %4594 = vmatmul.mubr.bf16.gmra.mxu0 %v2688
    %v4595 = vpop.f32.mrf.mxu0
    %v4596 = vadd.f32 %v626, %v4595
    %v4597 = vpop.f32.mrf.mxu0
    %v4598 = vpop.f32.mrf.mxu0
    %v4599 = vadd.f32 %v626, %v4598
    %v4600 = vpop.f32.mrf.mxu0
    %4601 = vmatprep.mubr.bf16.mxu0 0
    %4602 = vmatmul.mubr.bf16.gmra.mxu0 %v2691
    %v4603 = vpop.f32.mrf.mxu0
    %v4604 = vadd.f32 %v626, %v4603
    %v4605 = vpop.f32.mrf.mxu0
    %v4606 = vpop.f32.mrf.mxu0
    %v4607 = vadd.f32 %v626, %v4606
    %v4608 = vpop.f32.mrf.mxu0
    %4609 = vmatprep.mubr.bf16.mxu0 0
    %4610 = vmatmul.mubr.bf16.gmra.mxu0 %v2694
    %v4611 = vpop.f32.mrf.mxu0
    %v4612 = vadd.f32 %v626, %v4611
    %v4613 = vpop.f32.mrf.mxu0
    %v4614 = vpop.f32.mrf.mxu0
    %v4615 = vadd.f32 %v626, %v4614
    %v4616 = vpop.f32.mrf.mxu0
    %4617 = vmatprep.mubr.bf16.mxu0 0
    %4618 = vmatmul.mubr.bf16.gmra.mxu0 %v2697
    %v4619 = vpop.f32.mrf.mxu0
    %v4620 = vadd.f32 %v626, %v4619
    %v4621 = vpop.f32.mrf.mxu0
    %v4622 = vpop.f32.mrf.mxu0
    %v4623 = vadd.f32 %v626, %v4622
    %v4624 = vpop.f32.mrf.mxu0
    %4625 = vmatprep.mubr.bf16.mxu0 0
    %4626 = vmatmul.mubr.bf16.gmra.mxu0 %v2700
    %v4627 = vpop.f32.mrf.mxu0
    %v4628 = vadd.f32 %v626, %v4627
    %v4629 = vpop.f32.mrf.mxu0
    %v4630 = vpop.f32.mrf.mxu0
    %v4631 = vadd.f32 %v626, %v4630
    %v4632 = vpop.f32.mrf.mxu0
    %4633 = vmatprep.mubr.bf16.mxu0 0
    %4634 = vmatmul.mubr.bf16.gmra.mxu0 %v2703
    %v4635 = vpop.f32.mrf.mxu0
    %v4636 = vadd.f32 %v626, %v4635
    %v4637 = vpop.f32.mrf.mxu0
    %v4638 = vpop.f32.mrf.mxu0
    %v4639 = vadd.f32 %v626, %v4638
    %v4640 = vpop.f32.mrf.mxu0
    %4641 = vmatprep.mubr.bf16.mxu0 0
    %4642 = vmatmul.mubr.bf16.gmra.mxu0 %v2706
    %v4643 = vpop.f32.mrf.mxu0
    %v4644 = vadd.f32 %v626, %v4643
    %v4645 = vpop.f32.mrf.mxu0
    %v4646 = vpop.f32.mrf.mxu0
    %v4647 = vadd.f32 %v626, %v4646
    %v4648 = vpop.f32.mrf.mxu0
    %4649 = vmatprep.mubr.bf16.mxu0 0
    %4650 = vmatmul.mubr.bf16.gmra.mxu0 %v2709
    %v4651 = vpop.f32.mrf.mxu0
    %v4652 = vadd.f32 %v626, %v4651
    %v4653 = vpop.f32.mrf.mxu0
    %v4654 = vpop.f32.mrf.mxu0
    %v4655 = vadd.f32 %v626, %v4654
    %v4656 = vpop.f32.mrf.mxu0
    %4657 = vmatprep.mubr.bf16.mxu0 0
    %4658 = vmatmul.mubr.bf16.gmra.mxu0 %v2712
    %v4659 = vpop.f32.mrf.mxu0
    %v4660 = vadd.f32 %v626, %v4659
    %v4661 = vpop.f32.mrf.mxu0
    %v4662 = vpop.f32.mrf.mxu0
    %v4663 = vadd.f32 %v626, %v4662
    %v4664 = vpop.f32.mrf.mxu0
    %4665 = vmatprep.mubr.bf16.mxu0 0
    %4666 = vmatmul.mubr.bf16.gmra.mxu0 %v2715
    %v4667 = vpop.f32.mrf.mxu0
    %v4668 = vadd.f32 %v626, %v4667
    %v4669 = vpop.f32.mrf.mxu0
    %v4670 = vpop.f32.mrf.mxu0
    %v4671 = vadd.f32 %v626, %v4670
    %v4672 = vpop.f32.mrf.mxu0
    %4673 = vmatprep.mubr.bf16.mxu0 0
    %4674 = vmatmul.mubr.bf16.gmra.mxu0 %v2718
    %v4675 = vpop.f32.mrf.mxu0
    %v4676 = vadd.f32 %v626, %v4675
    %v4677 = vpop.f32.mrf.mxu0
    %v4678 = vpop.f32.mrf.mxu0
    %v4679 = vadd.f32 %v626, %v4678
    %v4680 = vpop.f32.mrf.mxu0
    %4681 = vmatprep.mubr.bf16.mxu0 0
    %4682 = vmatmul.mubr.bf16.gmra.mxu0 %v2721
    %v4683 = vpop.f32.mrf.mxu0
    %v4684 = vadd.f32 %v626, %v4683
    %v4685 = vpop.f32.mrf.mxu0
    %v4686 = vpop.f32.mrf.mxu0
    %v4687 = vadd.f32 %v626, %v4686
    %v4688 = vpop.f32.mrf.mxu0
    %4689 = vmatprep.mubr.bf16.mxu0 0
    %4690 = vmatmul.mubr.bf16.gmra.mxu0 %v2724
    %v4691 = vpop.f32.mrf.mxu0
    %v4692 = vadd.f32 %v626, %v4691
    %v4693 = vpop.f32.mrf.mxu0
    %v4694 = vpop.f32.mrf.mxu0
    %v4695 = vadd.f32 %v626, %v4694
    %v4696 = vpop.f32.mrf.mxu0
    %4697 = vmatprep.mubr.bf16.mxu0 0
    %4698 = vmatmul.mubr.bf16.gmra.mxu0 %v2727
    %v4699 = vpop.f32.mrf.mxu0
    %v4700 = vadd.f32 %v626, %v4699
    %v4701 = vpop.f32.mrf.mxu0
    %v4702 = vpop.f32.mrf.mxu0
    %v4703 = vadd.f32 %v626, %v4702
    %v4704 = vpop.f32.mrf.mxu0
    %4705 = vmatprep.mubr.bf16.mxu0 0
    %4706 = vmatmul.mubr.bf16.gmra.mxu0 %v2730
    %v4707 = vpop.f32.mrf.mxu0
    %v4708 = vadd.f32 %v626, %v4707
    %v4709 = vpop.f32.mrf.mxu0
    %v4710 = vpop.f32.mrf.mxu0
    %v4711 = vadd.f32 %v626, %v4710
    %v4712 = vpop.f32.mrf.mxu0
    %4713 = vmatprep.mubr.bf16.mxu0 0
    %4714 = vmatmul.mubr.bf16.gmra.mxu0 %v2733
    %v4715 = vpop.f32.mrf.mxu0
    %v4716 = vadd.f32 %v626, %v4715
    %v4717 = vpop.f32.mrf.mxu0
    %v4718 = vpop.f32.mrf.mxu0
    %v4719 = vadd.f32 %v626, %v4718
    %v4720 = vpop.f32.mrf.mxu0
    %4721 = vmatprep.mubr.bf16.mxu0 0
    %4722 = vmatmul.mubr.bf16.gmra.mxu0 %v2736
    %v4723 = vpop.f32.mrf.mxu0
    %v4724 = vadd.f32 %v626, %v4723
    %v4725 = vpop.f32.mrf.mxu0
    %v4726 = vpop.f32.mrf.mxu0
    %v4727 = vadd.f32 %v626, %v4726
    %v4728 = vpop.f32.mrf.mxu0
    %4729 = vmatprep.mubr.bf16.mxu0 0
    %4730 = vmatmul.mubr.bf16.gmra.mxu0 %v2739
    %v4731 = vpop.f32.mrf.mxu0
    %v4732 = vadd.f32 %v626, %v4731
    %v4733 = vpop.f32.mrf.mxu0
    %v4734 = vpop.f32.mrf.mxu0
    %v4735 = vadd.f32 %v626, %v4734
    %v4736 = vpop.f32.mrf.mxu0
    %4737 = vmatprep.mubr.bf16.mxu0 0
    %4738 = vmatmul.mubr.bf16.gmra.mxu0 %v2742
    %v4739 = vpop.f32.mrf.mxu0
    %v4740 = vadd.f32 %v626, %v4739
    %v4741 = vpop.f32.mrf.mxu0
    %v4742 = vpop.f32.mrf.mxu0
    %v4743 = vadd.f32 %v626, %v4742
    %v4744 = vpop.f32.mrf.mxu0
    %4745 = vmatprep.mubr.bf16.mxu0 0
    %4746 = vmatmul.mubr.bf16.gmra.mxu0 %v2745
    %v4747 = vpop.f32.mrf.mxu0
    %v4748 = vadd.f32 %v626, %v4747
    %v4749 = vpop.f32.mrf.mxu0
    %v4750 = vpop.f32.mrf.mxu0
    %v4751 = vadd.f32 %v626, %v4750
    %v4752 = vpop.f32.mrf.mxu0
    %4753 = vmatprep.mubr.bf16.mxu0 0
    %4754 = vmatmul.mubr.bf16.gmra.mxu0 %v2748
    %v4755 = vpop.f32.mrf.mxu0
    %v4756 = vadd.f32 %v626, %v4755
    %v4757 = vpop.f32.mrf.mxu0
    %v4758 = vpop.f32.mrf.mxu0
    %v4759 = vadd.f32 %v626, %v4758
    %v4760 = vpop.f32.mrf.mxu0
    %4761 = vmatprep.mubr.bf16.mxu0 0
    %4762 = vmatmul.mubr.bf16.gmra.mxu0 %v2751
    %v4763 = vpop.f32.mrf.mxu0
    %v4764 = vadd.f32 %v626, %v4763
    %v4765 = vpop.f32.mrf.mxu0
    %v4766 = vpop.f32.mrf.mxu0
    %v4767 = vadd.f32 %v626, %v4766
    %v4768 = vpop.f32.mrf.mxu0
    %4769 = vmatprep.mubr.bf16.mxu0 0
    %4770 = vmatmul.mubr.bf16.gmra.mxu0 %v2754
    %v4771 = vpop.f32.mrf.mxu0
    %v4772 = vadd.f32 %v626, %v4771
    %v4773 = vpop.f32.mrf.mxu0
    %v4774 = vpop.f32.mrf.mxu0
    %v4775 = vadd.f32 %v626, %v4774
    %v4776 = vpop.f32.mrf.mxu0
    %4777 = vmatprep.mubr.bf16.mxu0 0
    %4778 = vmatmul.mubr.bf16.gmra.mxu0 %v2757
    %v4779 = vpop.f32.mrf.mxu0
    %v4780 = vadd.f32 %v626, %v4779
    %v4781 = vpop.f32.mrf.mxu0
    %v4782 = vpop.f32.mrf.mxu0
    %v4783 = vadd.f32 %v626, %v4782
    %v4784 = vpop.f32.mrf.mxu0
    %4785 = vmatprep.mubr.bf16.mxu0 0
    %4786 = vmatmul.mubr.bf16.gmra.mxu0 %v2760
    %v4787 = vpop.f32.mrf.mxu0
    %v4788 = vadd.f32 %v626, %v4787
    %v4789 = vpop.f32.mrf.mxu0
    %v4790 = vpop.f32.mrf.mxu0
    %v4791 = vadd.f32 %v626, %v4790
    %v4792 = vpop.f32.mrf.mxu0
    %4793 = vmatprep.mubr.bf16.mxu0 0
    %4794 = vmatmul.mubr.bf16.gmra.mxu0 %v2763
    %v4795 = vpop.f32.mrf.mxu0
    %v4796 = vadd.f32 %v626, %v4795
    %v4797 = vpop.f32.mrf.mxu0
    %v4798 = vpop.f32.mrf.mxu0
    %v4799 = vadd.f32 %v626, %v4798
    %v4800 = vpop.f32.mrf.mxu0
    %4801 = vmatprep.mubr.bf16.mxu0 0
    %4802 = vmatmul.mubr.bf16.gmra.mxu0 %v2766
    %v4803 = vpop.f32.mrf.mxu0
    %v4804 = vadd.f32 %v626, %v4803
    %v4805 = vpop.f32.mrf.mxu0
    %v4806 = vpop.f32.mrf.mxu0
    %v4807 = vadd.f32 %v626, %v4806
    %v4808 = vpop.f32.mrf.mxu0
    %4809 = vmatprep.mubr.bf16.mxu0 0
    %4810 = vmatmul.mubr.bf16.gmra.mxu0 %v2769
    %v4811 = vpop.f32.mrf.mxu0
    %v4812 = vadd.f32 %v626, %v4811
    %v4813 = vpop.f32.mrf.mxu0
    %v4814 = vpop.f32.mrf.mxu0
    %v4815 = vadd.f32 %v626, %v4814
    %v4816 = vpop.f32.mrf.mxu0
    %4817 = vmatprep.mubr.bf16.mxu0 0
    %4818 = vmatmul.mubr.bf16.gmra.mxu0 %v2772
    %v4819 = vpop.f32.mrf.mxu0
    %v4820 = vadd.f32 %v626, %v4819
    %v4821 = vpop.f32.mrf.mxu0
    %v4822 = vpop.f32.mrf.mxu0
    %v4823 = vadd.f32 %v626, %v4822
    %v4824 = vpop.f32.mrf.mxu0
    %4825 = vmatprep.mubr.bf16.mxu0 0
    %4826 = vmatmul.mubr.bf16.gmra.mxu0 %v2775
    %v4827 = vpop.f32.mrf.mxu0
    %v4828 = vadd.f32 %v626, %v4827
    %v4829 = vpop.f32.mrf.mxu0
    %v4830 = vpop.f32.mrf.mxu0
    %v4831 = vadd.f32 %v626, %v4830
    %v4832 = vpop.f32.mrf.mxu0
    %4833 = vmatprep.mubr.bf16.mxu0 0
    %4834 = vmatmul.mubr.bf16.gmra.mxu0 %v2778
    %v4835 = vpop.f32.mrf.mxu0
    %v4836 = vadd.f32 %v626, %v4835
    %v4837 = vpop.f32.mrf.mxu0
    %v4838 = vpop.f32.mrf.mxu0
    %v4839 = vadd.f32 %v626, %v4838
    %v4840 = vpop.f32.mrf.mxu0
    %4841 = vmatprep.mubr.bf16.mxu0 0
    %4842 = vmatmul.mubr.bf16.gmra.mxu0 %v2781
    %v4843 = vpop.f32.mrf.mxu0
    %v4844 = vadd.f32 %v626, %v4843
    %v4845 = vpop.f32.mrf.mxu0
    %v4846 = vpop.f32.mrf.mxu0
    %v4847 = vadd.f32 %v626, %v4846
    %v4848 = vpop.f32.mrf.mxu0
    %4849 = vmatprep.mubr.bf16.mxu0 0
    %4850 = vmatmul.mubr.bf16.gmra.mxu0 %v2784
    %v4851 = vpop.f32.mrf.mxu0
    %v4852 = vadd.f32 %v626, %v4851
    %v4853 = vpop.f32.mrf.mxu0
    %v4854 = vpop.f32.mrf.mxu0
    %v4855 = vadd.f32 %v626, %v4854
    %v4856 = vpop.f32.mrf.mxu0
    %4857 = vmatprep.mubr.bf16.mxu0 0
    %4858 = vmatmul.mubr.bf16.gmra.mxu0 %v2787
    %v4859 = vpop.f32.mrf.mxu0
    %v4860 = vadd.f32 %v626, %v4859
    %v4861 = vpop.f32.mrf.mxu0
    %v4862 = vpop.f32.mrf.mxu0
    %v4863 = vadd.f32 %v626, %v4862
    %v4864 = vpop.f32.mrf.mxu0
    %4865 = vmatprep.mubr.bf16.mxu0 0
    %4866 = vmatmul.mubr.bf16.gmra.mxu0 %v2790
    %v4867 = vpop.f32.mrf.mxu0
    %v4868 = vadd.f32 %v626, %v4867
    %v4869 = vpop.f32.mrf.mxu0
    %v4870 = vpop.f32.mrf.mxu0
    %v4871 = vadd.f32 %v626, %v4870
    %v4872 = vpop.f32.mrf.mxu0
    %4873 = vmatprep.mubr.bf16.mxu0 0
    %4874 = vmatmul.mubr.bf16.gmra.mxu0 %v2793
    %v4875 = vpop.f32.mrf.mxu0
    %v4876 = vadd.f32 %v626, %v4875
    %v4877 = vpop.f32.mrf.mxu0
    %v4878 = vpop.f32.mrf.mxu0
    %v4879 = vadd.f32 %v626, %v4878
    %v4880 = vpop.f32.mrf.mxu0
    %4881 = vmatprep.mubr.bf16.mxu0 0
    %4882 = vmatmul.mubr.bf16.gmra.mxu0 %v2796
    %v4883 = vpop.f32.mrf.mxu0
    %v4884 = vadd.f32 %v626, %v4883
    %v4885 = vpop.f32.mrf.mxu0
    %v4886 = vpop.f32.mrf.mxu0
    %v4887 = vadd.f32 %v626, %v4886
    %v4888 = vpop.f32.mrf.mxu0
    %4889 = vmatprep.mubr.bf16.mxu0 0
    %4890 = vmatmul.mubr.bf16.gmra.mxu0 %v2799
    %v4891 = vpop.f32.mrf.mxu0
    %v4892 = vadd.f32 %v626, %v4891
    %v4893 = vpop.f32.mrf.mxu0
    %v4894 = vpop.f32.mrf.mxu0
    %v4895 = vadd.f32 %v626, %v4894
    %v4896 = vpop.f32.mrf.mxu0
    %4897 = vmatprep.mubr.bf16.mxu0 0
    %4898 = vmatmul.mubr.bf16.gmra.mxu0 %v2802
    %v4899 = vpop.f32.mrf.mxu0
    %v4900 = vadd.f32 %v626, %v4899
    %v4901 = vpop.f32.mrf.mxu0
    %v4902 = vpop.f32.mrf.mxu0
    %v4903 = vadd.f32 %v626, %v4902
    %v4904 = vpop.f32.mrf.mxu0
    %4905 = vmatprep.mubr.bf16.mxu0 0
    %4906 = vmatmul.mubr.bf16.gmra.mxu0 %v2805
    %v4907 = vpop.f32.mrf.mxu0
    %v4908 = vadd.f32 %v626, %v4907
    %v4909 = vpop.f32.mrf.mxu0
    %v4910 = vpop.f32.mrf.mxu0
    %v4911 = vadd.f32 %v626, %v4910
    %v4912 = vpop.f32.mrf.mxu0
    %4913 = vmatprep.mubr.bf16.mxu0 0
    %4914 = vmatmul.mubr.bf16.gmra.mxu0 %v2808
    %v4915 = vpop.f32.mrf.mxu0
    %v4916 = vadd.f32 %v626, %v4915
    %v4917 = vpop.f32.mrf.mxu0
    %v4918 = vpop.f32.mrf.mxu0
    %v4919 = vadd.f32 %v626, %v4918
    %v4920 = vpop.f32.mrf.mxu0
    %4921 = vmatprep.mubr.bf16.mxu0 0
    %4922 = vmatmul.mubr.bf16.gmra.mxu0 %v2811
    %v4923 = vpop.f32.mrf.mxu0
    %v4924 = vadd.f32 %v626, %v4923
    %v4925 = vpop.f32.mrf.mxu0
    %v4926 = vpop.f32.mrf.mxu0
    %v4927 = vadd.f32 %v626, %v4926
    %v4928 = vpop.f32.mrf.mxu0
    %4929 = vmatprep.mubr.bf16.mxu0 0
    %4930 = vmatmul.mubr.bf16.gmra.mxu0 %v2814
    %v4931 = vpop.f32.mrf.mxu0
    %v4932 = vadd.f32 %v626, %v4931
    %v4933 = vpop.f32.mrf.mxu0
    %v4934 = vpop.f32.mrf.mxu0
    %v4935 = vadd.f32 %v626, %v4934
    %v4936 = vpop.f32.mrf.mxu0
    %4937 = vmatprep.mubr.bf16.mxu0 0
    %4938 = vmatmul.mubr.bf16.gmra.mxu0 %v2817
    %v4939 = vpop.f32.mrf.mxu0
    %v4940 = vadd.f32 %v626, %v4939
    %v4941 = vpop.f32.mrf.mxu0
    %v4942 = vpop.f32.mrf.mxu0
    %v4943 = vadd.f32 %v626, %v4942
    %v4944 = vpop.f32.mrf.mxu0
    %4945 = vmatprep.mubr.bf16.mxu0 0
    %4946 = vmatmul.mubr.bf16.gmra.mxu0 %v2820
    %v4947 = vpop.f32.mrf.mxu0
    %v4948 = vadd.f32 %v626, %v4947
    %v4949 = vpop.f32.mrf.mxu0
    %v4950 = vpop.f32.mrf.mxu0
    %v4951 = vadd.f32 %v626, %v4950
    %v4952 = vpop.f32.mrf.mxu0
    %4953 = vmatprep.mubr.bf16.mxu0 0
    %4954 = vmatmul.mubr.bf16.gmra.mxu0 %v2823
    %v4955 = vpop.f32.mrf.mxu0
    %v4956 = vadd.f32 %v626, %v4955
    %v4957 = vpop.f32.mrf.mxu0
    %v4958 = vpop.f32.mrf.mxu0
    %v4959 = vadd.f32 %v626, %v4958
    %v4960 = vpop.f32.mrf.mxu0
    %4961 = vmatprep.mubr.bf16.mxu0 0
    %4962 = vmatmul.mubr.bf16.gmra.mxu0 %v2826
    %v4963 = vpop.f32.mrf.mxu0
    %v4964 = vadd.f32 %v626, %v4963
    %v4965 = vpop.f32.mrf.mxu0
    %v4966 = vpop.f32.mrf.mxu0
    %v4967 = vadd.f32 %v626, %v4966
    %v4968 = vpop.f32.mrf.mxu0
    %4969 = vmatprep.mubr.bf16.mxu0 0
    %4970 = vmatmul.mubr.bf16.gmra.mxu0 %v2829
    %v4971 = vpop.f32.mrf.mxu0
    %v4972 = vadd.f32 %v626, %v4971
    %v4973 = vpop.f32.mrf.mxu0
    %v4974 = vpop.f32.mrf.mxu0
    %v4975 = vadd.f32 %v626, %v4974
    %v4976 = vpop.f32.mrf.mxu0
    %4977 = vmatprep.mubr.bf16.mxu0 0
    %4978 = vmatmul.mubr.bf16.gmra.mxu0 %v2832
    %v4979 = vpop.f32.mrf.mxu0
    %v4980 = vadd.f32 %v626, %v4979
    %v4981 = vpop.f32.mrf.mxu0
    %v4982 = vpop.f32.mrf.mxu0
    %v4983 = vadd.f32 %v626, %v4982
    %v4984 = vpop.f32.mrf.mxu0
    %4985 = vmatprep.mubr.bf16.mxu0 0
    %4986 = vmatmul.mubr.bf16.gmra.mxu0 %v2835
    %v4987 = vpop.f32.mrf.mxu0
    %v4988 = vadd.f32 %v626, %v4987
    %v4989 = vpop.f32.mrf.mxu0
    %v4990 = vpop.f32.mrf.mxu0
    %v4991 = vadd.f32 %v626, %v4990
    %v4992 = vpop.f32.mrf.mxu0
    %4993 = vmatprep.mubr.bf16.mxu0 0
    %4994 = vmatmul.mubr.bf16.gmra.mxu0 %v2838
    %v4995 = vpop.f32.mrf.mxu0
    %v4996 = vadd.f32 %v626, %v4995
    %v4997 = vpop.f32.mrf.mxu0
    %v4998 = vpop.f32.mrf.mxu0
    %v4999 = vadd.f32 %v626, %v4998
    %v5000 = vpop.f32.mrf.mxu0
    %5001 = vmatprep.mubr.bf16.mxu0 0
    %5002 = vmatmul.mubr.bf16.gmra.mxu0 %v2841
    %v5003 = vpop.f32.mrf.mxu0
    %v5004 = vadd.f32 %v626, %v5003
    %v5005 = vpop.f32.mrf.mxu0
    %v5006 = vpop.f32.mrf.mxu0
    %v5007 = vadd.f32 %v626, %v5006
    %v5008 = vpop.f32.mrf.mxu0
    %5009 = vmatprep.mubr.bf16.mxu0 0
    %5010 = vmatmul.mubr.bf16.gmra.mxu0 %v2844
    %v5011 = vpop.f32.mrf.mxu0
    %v5012 = vadd.f32 %v626, %v5011
    %v5013 = vpop.f32.mrf.mxu0
    %v5014 = vpop.f32.mrf.mxu0
    %v5015 = vadd.f32 %v626, %v5014
    %v5016 = vpop.f32.mrf.mxu0
    %5017 = vmatprep.mubr.bf16.mxu0 0
    %5018 = vmatmul.mubr.bf16.gmra.mxu0 %v2847
    %v5019 = vpop.f32.mrf.mxu0
    %v5020 = vadd.f32 %v626, %v5019
    %v5021 = vpop.f32.mrf.mxu0
    %v5022 = vpop.f32.mrf.mxu0
    %v5023 = vadd.f32 %v626, %v5022
    %v5024 = vpop.f32.mrf.mxu0
    %5025 = vmatprep.mubr.bf16.mxu0 0
    %5026 = vmatmul.mubr.bf16.gmra.mxu0 %v2850
    %v5027 = vpop.f32.mrf.mxu0
    %v5028 = vadd.f32 %v626, %v5027
    %v5029 = vpop.f32.mrf.mxu0
    %v5030 = vpop.f32.mrf.mxu0
    %v5031 = vadd.f32 %v626, %v5030
    %v5032 = vpop.f32.mrf.mxu0
    %5033 = vmatprep.mubr.bf16.mxu0 0
    %5034 = vmatmul.mubr.bf16.gmra.mxu0 %v2853
    %v5035 = vpop.f32.mrf.mxu0
    %v5036 = vadd.f32 %v626, %v5035
    %v5037 = vpop.f32.mrf.mxu0
    %v5038 = vpop.f32.mrf.mxu0
    %v5039 = vadd.f32 %v626, %v5038
    %v5040 = vpop.f32.mrf.mxu0
    %5041 = vmatprep.mubr.bf16.mxu0 0
    %5042 = vmatmul.mubr.bf16.gmra.mxu0 %v2856
    %v5043 = vpop.f32.mrf.mxu0
    %v5044 = vadd.f32 %v626, %v5043
    %v5045 = vpop.f32.mrf.mxu0
    %v5046 = vpop.f32.mrf.mxu0
    %v5047 = vadd.f32 %v626, %v5046
    %v5048 = vpop.f32.mrf.mxu0
    %5049 = vmatprep.mubr.bf16.mxu0 0
    %5050 = vmatmul.mubr.bf16.gmra.mxu0 %v2859
    %v5051 = vpop.f32.mrf.mxu0
    %v5052 = vadd.f32 %v626, %v5051
    %v5053 = vpop.f32.mrf.mxu0
    %v5054 = vpop.f32.mrf.mxu0
    %v5055 = vadd.f32 %v626, %v5054
    %v5056 = vpop.f32.mrf.mxu0
    %5057 = vmatprep.mubr.bf16.mxu0 0
    %5058 = vmatmul.mubr.bf16.gmra.mxu0 %v2862
    %v5059 = vpop.f32.mrf.mxu0
    %v5060 = vadd.f32 %v626, %v5059
    %v5061 = vpop.f32.mrf.mxu0
    %v5062 = vpop.f32.mrf.mxu0
    %v5063 = vadd.f32 %v626, %v5062
    %v5064 = vpop.f32.mrf.mxu0
    %5065 = vmatprep.mubr.bf16.mxu0 0
    %5066 = vmatmul.mubr.bf16.gmra.mxu0 %v2865
    %v5067 = vpop.f32.mrf.mxu0
    %v5068 = vadd.f32 %v626, %v5067
    %v5069 = vpop.f32.mrf.mxu0
    %v5070 = vpop.f32.mrf.mxu0
    %v5071 = vadd.f32 %v626, %v5070
    %v5072 = vpop.f32.mrf.mxu0
    %5073 = vmatprep.mubr.bf16.mxu0 0
    %5074 = vmatmul.mubr.bf16.gmra.mxu0 %v2868
    %v5075 = vpop.f32.mrf.mxu0
    %v5076 = vadd.f32 %v626, %v5075
    %v5077 = vpop.f32.mrf.mxu0
    %v5078 = vpop.f32.mrf.mxu0
    %v5079 = vadd.f32 %v626, %v5078
    %v5080 = vpop.f32.mrf.mxu0
    %5081 = vmatprep.mubr.bf16.mxu0 0
    %5082 = vmatmul.mubr.bf16.gmra.mxu0 %v2871
    %v5083 = vpop.f32.mrf.mxu0
    %v5084 = vadd.f32 %v626, %v5083
    %v5085 = vpop.f32.mrf.mxu0
    %v5086 = vpop.f32.mrf.mxu0
    %v5087 = vadd.f32 %v626, %v5086
    %v5088 = vpop.f32.mrf.mxu0
    %5089 = vmatprep.mubr.bf16.mxu0 0
    %5090 = vmatmul.mubr.bf16.gmra.mxu0 %v2874
    %v5091 = vpop.f32.mrf.mxu0
    %v5092 = vadd.f32 %v626, %v5091
    %v5093 = vpop.f32.mrf.mxu0
    %v5094 = vpop.f32.mrf.mxu0
    %v5095 = vadd.f32 %v626, %v5094
    %v5096 = vpop.f32.mrf.mxu0
    %5097 = vmatprep.mubr.bf16.mxu0 0
    %5098 = vmatmul.mubr.bf16.gmra.mxu0 %v2877
    %v5099 = vpop.f32.mrf.mxu0
    %v5100 = vadd.f32 %v626, %v5099
    %v5101 = vpop.f32.mrf.mxu0
    %v5102 = vpop.f32.mrf.mxu0
    %v5103 = vadd.f32 %v626, %v5102
    %v5104 = vpop.f32.mrf.mxu0
    %5105 = vmatprep.mubr.bf16.mxu0 0
    %5106 = vmatmul.mubr.bf16.gmra.mxu0 %v2880
    %v5107 = vpop.f32.mrf.mxu0
    %v5108 = vadd.f32 %v626, %v5107
    %v5109 = vpop.f32.mrf.mxu0
    %v5110 = vpop.f32.mrf.mxu0
    %v5111 = vadd.f32 %v626, %v5110
    %v5112 = vpop.f32.mrf.mxu0
    %5113 = vmatprep.mubr.bf16.mxu0 0
    %5114 = vmatmul.mubr.bf16.gmra.mxu0 %v2883
    %v5115 = vpop.f32.mrf.mxu0
    %v5116 = vadd.f32 %v626, %v5115
    %v5117 = vpop.f32.mrf.mxu0
    %v5118 = vpop.f32.mrf.mxu0
    %v5119 = vadd.f32 %v626, %v5118
    %v5120 = vpop.f32.mrf.mxu0
    %5121 = vmatprep.mubr.bf16.mxu0 0
    %5122 = vmatmul.mubr.bf16.gmra.mxu0 %v2886
    %v5123 = vpop.f32.mrf.mxu0
    %v5124 = vadd.f32 %v626, %v5123
    %v5125 = vpop.f32.mrf.mxu0
    %v5126 = vpop.f32.mrf.mxu0
    %v5127 = vadd.f32 %v626, %v5126
    %v5128 = vpop.f32.mrf.mxu0
    %5129 = vmatprep.mubr.bf16.mxu0 0
    %5130 = vmatmul.mubr.bf16.gmra.mxu0 %v2889
    %v5131 = vpop.f32.mrf.mxu0
    %v5132 = vadd.f32 %v626, %v5131
    %v5133 = vpop.f32.mrf.mxu0
    %v5134 = vpop.f32.mrf.mxu0
    %v5135 = vadd.f32 %v626, %v5134
    %v5136 = vpop.f32.mrf.mxu0
    %5137 = vmatprep.mubr.bf16.mxu0 0
    %5138 = vmatmul.mubr.bf16.gmra.mxu0 %v2892
    %v5139 = vpop.f32.mrf.mxu0
    %v5140 = vadd.f32 %v626, %v5139
    %v5141 = vpop.f32.mrf.mxu0
    %v5142 = vpop.f32.mrf.mxu0
    %v5143 = vadd.f32 %v626, %v5142
    %v5144 = vpop.f32.mrf.mxu0
    %5145 = vmatprep.mubr.bf16.mxu0 0
    %5146 = vmatmul.mubr.bf16.gmra.mxu0 %v2895
    %v5147 = vpop.f32.mrf.mxu0
    %v5148 = vadd.f32 %v626, %v5147
    %v5149 = vpop.f32.mrf.mxu0
    %v5150 = vpop.f32.mrf.mxu0
    %v5151 = vadd.f32 %v626, %v5150
    %v5152 = vpop.f32.mrf.mxu0
    %5153 = vmatprep.mubr.bf16.mxu0 0
    %5154 = vmatmul.mubr.bf16.gmra.mxu0 %v2898
    %v5155 = vpop.f32.mrf.mxu0
    %v5156 = vadd.f32 %v626, %v5155
    %v5157 = vpop.f32.mrf.mxu0
    %v5158 = vpop.f32.mrf.mxu0
    %v5159 = vadd.f32 %v626, %v5158
    %v5160 = vpop.f32.mrf.mxu0
    %5161 = vmatprep.mubr.bf16.mxu0 0
    %5162 = vmatmul.mubr.bf16.gmra.mxu0 %v2901
    %v5163 = vpop.f32.mrf.mxu0
    %v5164 = vadd.f32 %v626, %v5163
    %v5165 = vpop.f32.mrf.mxu0
    %v5166 = vpop.f32.mrf.mxu0
    %v5167 = vadd.f32 %v626, %v5166
    %v5168 = vpop.f32.mrf.mxu0
    %5169 = vmatprep.mubr.bf16.mxu0 0
    %5170 = vmatmul.mubr.bf16.gmra.mxu0 %v2904
    %v5171 = vpop.f32.mrf.mxu0
    %v5172 = vadd.f32 %v626, %v5171
    %v5173 = vpop.f32.mrf.mxu0
    %v5174 = vpop.f32.mrf.mxu0
    %v5175 = vadd.f32 %v626, %v5174
    %v5176 = vpop.f32.mrf.mxu0
    %5177 = vmatprep.mubr.bf16.mxu0 0
    %5178 = vmatmul.mubr.bf16.gmra.mxu0 %v2907
    %v5179 = vpop.f32.mrf.mxu0
    %v5180 = vadd.f32 %v626, %v5179
    %v5181 = vpop.f32.mrf.mxu0
    %v5182 = vpop.f32.mrf.mxu0
    %v5183 = vadd.f32 %v626, %v5182
    %v5184 = vpop.f32.mrf.mxu0
    %5185 = vmatprep.mubr.bf16.mxu0 0
    %5186 = vmatmul.mubr.bf16.gmra.mxu0 %v2910
    %v5187 = vpop.f32.mrf.mxu0
    %v5188 = vadd.f32 %v626, %v5187
    %v5189 = vpop.f32.mrf.mxu0
    %v5190 = vpop.f32.mrf.mxu0
    %v5191 = vadd.f32 %v626, %v5190
    %v5192 = vpop.f32.mrf.mxu0
    %5193 = vmatprep.mubr.bf16.mxu0 0
    %5194 = vmatmul.mubr.bf16.gmra.mxu0 %v2913
    %v5195 = vpop.f32.mrf.mxu0
    %v5196 = vadd.f32 %v626, %v5195
    %v5197 = vpop.f32.mrf.mxu0
    %v5198 = vpop.f32.mrf.mxu0
    %v5199 = vadd.f32 %v626, %v5198
    %v5200 = vpop.f32.mrf.mxu0
    %5201 = vmatprep.mubr.bf16.mxu0 0
    %5202 = vmatmul.mubr.bf16.gmra.mxu0 %v2916
    %v5203 = vpop.f32.mrf.mxu0
    %v5204 = vadd.f32 %v626, %v5203
    %v5205 = vpop.f32.mrf.mxu0
    %v5206 = vpop.f32.mrf.mxu0
    %v5207 = vadd.f32 %v626, %v5206
    %v5208 = vpop.f32.mrf.mxu0
    %5209 = vmatprep.mubr.bf16.mxu0 0
    %5210 = vmatmul.mubr.bf16.gmra.mxu0 %v2919
    %v5211 = vpop.f32.mrf.mxu0
    %v5212 = vadd.f32 %v626, %v5211
    %v5213 = vpop.f32.mrf.mxu0
    %v5214 = vpop.f32.mrf.mxu0
    %v5215 = vadd.f32 %v626, %v5214
    %v5216 = vpop.f32.mrf.mxu0
    %5217 = vmatprep.mubr.bf16.mxu0 0
    %5218 = vmatmul.mubr.bf16.gmra.mxu0 %v2922
    %v5219 = vpop.f32.mrf.mxu0
    %v5220 = vadd.f32 %v626, %v5219
    %v5221 = vpop.f32.mrf.mxu0
    %v5222 = vpop.f32.mrf.mxu0
    %v5223 = vadd.f32 %v626, %v5222
    %v5224 = vpop.f32.mrf.mxu0
    %5225 = vmatprep.mubr.bf16.mxu0 0
    %5226 = vmatmul.mubr.bf16.gmra.mxu0 %v2925
    %v5227 = vpop.f32.mrf.mxu0
    %v5228 = vadd.f32 %v626, %v5227
    %v5229 = vpop.f32.mrf.mxu0
    %v5230 = vpop.f32.mrf.mxu0
    %v5231 = vadd.f32 %v626, %v5230
    %v5232 = vpop.f32.mrf.mxu0
    %5233 = vmatprep.mubr.bf16.mxu0 0
    %5234 = vmatmul.mubr.bf16.gmra.mxu0 %v2928
    %v5235 = vpop.f32.mrf.mxu0
    %v5236 = vadd.f32 %v626, %v5235
    %v5237 = vpop.f32.mrf.mxu0
    %v5238 = vpop.f32.mrf.mxu0
    %v5239 = vadd.f32 %v626, %v5238
    %v5240 = vpop.f32.mrf.mxu0
    %5241 = vmatprep.mubr.bf16.mxu0 0
    %5242 = vmatmul.mubr.bf16.gmra.mxu0 %v2931
    %v5243 = vpop.f32.mrf.mxu0
    %v5244 = vadd.f32 %v626, %v5243
    %v5245 = vpop.f32.mrf.mxu0
    %v5246 = vpop.f32.mrf.mxu0
    %v5247 = vadd.f32 %v626, %v5246
    %v5248 = vpop.f32.mrf.mxu0
    %5249 = vmatprep.mubr.bf16.mxu0 0
    %5250 = vmatmul.mubr.bf16.gmra.mxu0 %v2934
    %v5251 = vpop.f32.mrf.mxu0
    %v5252 = vadd.f32 %v626, %v5251
    %v5253 = vpop.f32.mrf.mxu0
    %v5254 = vpop.f32.mrf.mxu0
    %v5255 = vadd.f32 %v626, %v5254
    %v5256 = vpop.f32.mrf.mxu0
    %5257 = vmatprep.mubr.bf16.mxu0 0
    %5258 = vmatmul.mubr.bf16.gmra.mxu0 %v2937
    %v5259 = vpop.f32.mrf.mxu0
    %v5260 = vadd.f32 %v626, %v5259
    %v5261 = vpop.f32.mrf.mxu0
    %v5262 = vpop.f32.mrf.mxu0
    %v5263 = vadd.f32 %v626, %v5262
    %v5264 = vpop.f32.mrf.mxu0
    %5265 = vmatprep.mubr.bf16.mxu0 0
    %5266 = vmatmul.mubr.bf16.gmra.mxu0 %v2940
    %v5267 = vpop.f32.mrf.mxu0
    %v5268 = vadd.f32 %v626, %v5267
    %v5269 = vpop.f32.mrf.mxu0
    %v5270 = vpop.f32.mrf.mxu0
    %v5271 = vadd.f32 %v626, %v5270
    %v5272 = vpop.f32.mrf.mxu0
    %5273 = vmatprep.mubr.bf16.mxu0 0
    %5274 = vmatmul.mubr.bf16.gmra.mxu0 %v2943
    %v5275 = vpop.f32.mrf.mxu0
    %v5276 = vadd.f32 %v626, %v5275
    %v5277 = vpop.f32.mrf.mxu0
    %v5278 = vpop.f32.mrf.mxu0
    %v5279 = vadd.f32 %v626, %v5278
    %v5280 = vpop.f32.mrf.mxu0
    %5281 = vdwg.mxu0
    %v5282 = vmax.f32 %v2980, 0.0
    %v5283 = vmax.f32 %v2983, 0.0
    %v5284 = vmax.f32 %v2988, 0.0
    %v5285 = vmax.f32 %v2991, 0.0
    %v5286 = vmax.f32 %v2996, 0.0
    %v5287 = vmax.f32 %v2999, 0.0
    %v5288 = vmax.f32 %v3004, 0.0
    %v5289 = vmax.f32 %v3007, 0.0
    %v5290 = vmax.f32 %v3012, 0.0
    %v5291 = vmax.f32 %v3015, 0.0
    %v5292 = vmax.f32 %v3020, 0.0
    %v5293 = vmax.f32 %v3023, 0.0
    %v5294 = vmax.f32 %v3028, 0.0
    %v5295 = vmax.f32 %v3031, 0.0
    %v5296 = vmax.f32 %v3036, 0.0
    %v5297 = vmax.f32 %v3039, 0.0
    %v5298 = vmax.f32 %v3044, 0.0
    %v5299 = vmax.f32 %v3047, 0.0
    %v5300 = vmax.f32 %v3052, 0.0
    %v5301 = vmax.f32 %v3055, 0.0
    %v5302 = vmax.f32 %v3060, 0.0
    %v5303 = vmax.f32 %v3063, 0.0
    %v5304 = vmax.f32 %v3068, 0.0
    %v5305 = vmax.f32 %v3071, 0.0
    %v5306 = vmax.f32 %v3076, 0.0
    %v5307 = vmax.f32 %v3079, 0.0
    %v5308 = vmax.f32 %v3084, 0.0
    %v5309 = vmax.f32 %v3087, 0.0
    %v5310 = vmax.f32 %v3092, 0.0
    %v5311 = vmax.f32 %v3095, 0.0
    %v5312 = vmax.f32 %v3100, 0.0
    %v5313 = vmax.f32 %v3103, 0.0
    %v5314 = vmax.f32 %v3108, 0.0
    %v5315 = vmax.f32 %v3111, 0.0
    %v5316 = vmax.f32 %v3116, 0.0
    %v5317 = vmax.f32 %v3119, 0.0
    %v5318 = vmax.f32 %v3124, 0.0
    %v5319 = vmax.f32 %v3127, 0.0
    %v5320 = vmax.f32 %v3132, 0.0
    %v5321 = vmax.f32 %v3135, 0.0
    %v5322 = vmax.f32 %v3140, 0.0
    %v5323 = vmax.f32 %v3143, 0.0
    %v5324 = vmax.f32 %v3148, 0.0
    %v5325 = vmax.f32 %v3151, 0.0
    %v5326 = vmax.f32 %v3156, 0.0
    %v5327 = vmax.f32 %v3159, 0.0
    %v5328 = vmax.f32 %v3164, 0.0
    %v5329 = vmax.f32 %v3167, 0.0
    %v5330 = vmax.f32 %v3172, 0.0
    %v5331 = vmax.f32 %v3175, 0.0
    %v5332 = vmax.f32 %v3180, 0.0
    %v5333 = vmax.f32 %v3183, 0.0
    %v5334 = vmax.f32 %v3188, 0.0
    %v5335 = vmax.f32 %v3191, 0.0
    %v5336 = vmax.f32 %v3196, 0.0
    %v5337 = vmax.f32 %v3199, 0.0
    %v5338 = vmax.f32 %v3204, 0.0
    %v5339 = vmax.f32 %v3207, 0.0
    %v5340 = vmax.f32 %v3212, 0.0
    %v5341 = vmax.f32 %v3215, 0.0
    %v5342 = vmax.f32 %v3220, 0.0
    %v5343 = vmax.f32 %v3223, 0.0
    %v5344 = vmax.f32 %v3228, 0.0
    %v5345 = vmax.f32 %v3231, 0.0
    %v5346 = vmax.f32 %v3236, 0.0
    %v5347 = vmax.f32 %v3239, 0.0
    %v5348 = vmax.f32 %v3244, 0.0
    %v5349 = vmax.f32 %v3247, 0.0
    %v5350 = vmax.f32 %v3252, 0.0
    %v5351 = vmax.f32 %v3255, 0.0
    %v5352 = vmax.f32 %v3260, 0.0
    %v5353 = vmax.f32 %v3263, 0.0
    %v5354 = vmax.f32 %v3268, 0.0
    %v5355 = vmax.f32 %v3271, 0.0
    %v5356 = vmax.f32 %v3276, 0.0
    %v5357 = vmax.f32 %v3279, 0.0
    %v5358 = vmax.f32 %v3284, 0.0
    %v5359 = vmax.f32 %v3287, 0.0
    %v5360 = vmax.f32 %v3292, 0.0
    %v5361 = vmax.f32 %v3295, 0.0
    %v5362 = vmax.f32 %v3300, 0.0
    %v5363 = vmax.f32 %v3303, 0.0
    %v5364 = vmax.f32 %v3308, 0.0
    %v5365 = vmax.f32 %v3311, 0.0
    %v5366 = vmax.f32 %v3316, 0.0
    %v5367 = vmax.f32 %v3319, 0.0
    %v5368 = vmax.f32 %v3324, 0.0
    %v5369 = vmax.f32 %v3327, 0.0
    %v5370 = vmax.f32 %v3332, 0.0
    %v5371 = vmax.f32 %v3335, 0.0
    %v5372 = vmax.f32 %v3340, 0.0
    %v5373 = vmax.f32 %v3343, 0.0
    %v5374 = vmax.f32 %v3348, 0.0
    %v5375 = vmax.f32 %v3351, 0.0
    %v5376 = vmax.f32 %v3356, 0.0
    %v5377 = vmax.f32 %v3359, 0.0
    %v5378 = vmax.f32 %v3364, 0.0
    %v5379 = vmax.f32 %v3367, 0.0
    %v5380 = vmax.f32 %v3372, 0.0
    %v5381 = vmax.f32 %v3375, 0.0
    %v5382 = vmax.f32 %v3380, 0.0
    %v5383 = vmax.f32 %v3383, 0.0
    %v5384 = vmax.f32 %v3388, 0.0
    %v5385 = vmax.f32 %v3391, 0.0
    %v5386 = vmax.f32 %v3396, 0.0
    %v5387 = vmax.f32 %v3399, 0.0
    %v5388 = vmax.f32 %v3404, 0.0
    %v5389 = vmax.f32 %v3407, 0.0
    %v5390 = vmax.f32 %v3412, 0.0
    %v5391 = vmax.f32 %v3415, 0.0
    %v5392 = vmax.f32 %v3420, 0.0
    %v5393 = vmax.f32 %v3423, 0.0
    %v5394 = vmax.f32 %v3428, 0.0
    %v5395 = vmax.f32 %v3431, 0.0
    %v5396 = vmax.f32 %v3436, 0.0
    %v5397 = vmax.f32 %v3439, 0.0
    %v5398 = vmax.f32 %v3444, 0.0
    %v5399 = vmax.f32 %v3447, 0.0
    %v5400 = vmax.f32 %v3452, 0.0
    %v5401 = vmax.f32 %v3455, 0.0
    %v5402 = vmax.f32 %v3460, 0.0
    %v5403 = vmax.f32 %v3463, 0.0
    %v5404 = vmax.f32 %v3468, 0.0
    %v5405 = vmax.f32 %v3471, 0.0
    %v5406 = vmax.f32 %v3476, 0.0
    %v5407 = vmax.f32 %v3479, 0.0
    %v5408 = vmax.f32 %v3484, 0.0
    %v5409 = vmax.f32 %v3487, 0.0
    %v5410 = vmax.f32 %v3492, 0.0
    %v5411 = vmax.f32 %v3495, 0.0
    %v5412 = vmax.f32 %v3500, 0.0
    %v5413 = vmax.f32 %v3503, 0.0
    %v5414 = vmax.f32 %v3508, 0.0
    %v5415 = vmax.f32 %v3511, 0.0
    %v5416 = vmax.f32 %v3516, 0.0
    %v5417 = vmax.f32 %v3519, 0.0
    %v5418 = vmax.f32 %v3524, 0.0
    %v5419 = vmax.f32 %v3527, 0.0
    %v5420 = vmax.f32 %v3532, 0.0
    %v5421 = vmax.f32 %v3535, 0.0
    %v5422 = vmax.f32 %v3540, 0.0
    %v5423 = vmax.f32 %v3543, 0.0
    %v5424 = vmax.f32 %v3548, 0.0
    %v5425 = vmax.f32 %v3551, 0.0
    %v5426 = vmax.f32 %v3556, 0.0
    %v5427 = vmax.f32 %v3559, 0.0
    %v5428 = vmax.f32 %v3564, 0.0
    %v5429 = vmax.f32 %v3567, 0.0
    %v5430 = vmax.f32 %v3572, 0.0
    %v5431 = vmax.f32 %v3575, 0.0
    %v5432 = vmax.f32 %v3580, 0.0
    %v5433 = vmax.f32 %v3583, 0.0
    %v5434 = vmax.f32 %v3588, 0.0
    %v5435 = vmax.f32 %v3591, 0.0
    %v5436 = vmax.f32 %v3596, 0.0
    %v5437 = vmax.f32 %v3599, 0.0
    %v5438 = vmax.f32 %v3604, 0.0
    %v5439 = vmax.f32 %v3607, 0.0
    %v5440 = vmax.f32 %v3612, 0.0
    %v5441 = vmax.f32 %v3615, 0.0
    %v5442 = vmax.f32 %v3620, 0.0
    %v5443 = vmax.f32 %v3623, 0.0
    %v5444 = vmax.f32 %v3628, 0.0
    %v5445 = vmax.f32 %v3631, 0.0
    %v5446 = vmax.f32 %v3636, 0.0
    %v5447 = vmax.f32 %v3639, 0.0
    %v5448 = vmax.f32 %v3644, 0.0
    %v5449 = vmax.f32 %v3647, 0.0
    %v5450 = vmax.f32 %v3652, 0.0
    %v5451 = vmax.f32 %v3655, 0.0
    %v5452 = vmax.f32 %v3660, 0.0
    %v5453 = vmax.f32 %v3663, 0.0
    %v5454 = vmax.f32 %v3668, 0.0
    %v5455 = vmax.f32 %v3671, 0.0
    %v5456 = vmax.f32 %v3676, 0.0
    %v5457 = vmax.f32 %v3679, 0.0
    %v5458 = vmax.f32 %v3684, 0.0
    %v5459 = vmax.f32 %v3687, 0.0
    %v5460 = vmax.f32 %v3692, 0.0
    %v5461 = vmax.f32 %v3695, 0.0
    %v5462 = vmax.f32 %v3700, 0.0
    %v5463 = vmax.f32 %v3703, 0.0
    %v5464 = vmax.f32 %v3708, 0.0
    %v5465 = vmax.f32 %v3711, 0.0
    %v5466 = vmax.f32 %v3716, 0.0
    %v5467 = vmax.f32 %v3719, 0.0
    %v5468 = vmax.f32 %v3724, 0.0
    %v5469 = vmax.f32 %v3727, 0.0
    %v5470 = vmax.f32 %v3732, 0.0
    %v5471 = vmax.f32 %v3735, 0.0
    %v5472 = vmax.f32 %v3740, 0.0
    %v5473 = vmax.f32 %v3743, 0.0
    %v5474 = vmax.f32 %v3748, 0.0
    %v5475 = vmax.f32 %v3751, 0.0
    %v5476 = vmax.f32 %v3756, 0.0
    %v5477 = vmax.f32 %v3759, 0.0
    %v5478 = vmax.f32 %v3764, 0.0
    %v5479 = vmax.f32 %v3767, 0.0
    %v5480 = vmax.f32 %v3772, 0.0
    %v5481 = vmax.f32 %v3775, 0.0
    %v5482 = vmax.f32 %v3780, 0.0
    %v5483 = vmax.f32 %v3783, 0.0
    %v5484 = vmax.f32 %v3788, 0.0
    %v5485 = vmax.f32 %v3791, 0.0
    %v5486 = vmax.f32 %v3796, 0.0
    %v5487 = vmax.f32 %v3799, 0.0
    %v5488 = vmax.f32 %v3804, 0.0
    %v5489 = vmax.f32 %v3807, 0.0
    %v5490 = vmax.f32 %v3812, 0.0
    %v5491 = vmax.f32 %v3815, 0.0
    %v5492 = vmax.f32 %v3820, 0.0
    %v5493 = vmax.f32 %v3823, 0.0
    %v5494 = vmax.f32 %v3828, 0.0
    %v5495 = vmax.f32 %v3831, 0.0
    %v5496 = vmax.f32 %v3836, 0.0
    %v5497 = vmax.f32 %v3839, 0.0
    %v5498 = vmax.f32 %v3844, 0.0
    %v5499 = vmax.f32 %v3847, 0.0
    %v5500 = vmax.f32 %v3852, 0.0
    %v5501 = vmax.f32 %v3855, 0.0
    %v5502 = vmax.f32 %v3860, 0.0
    %v5503 = vmax.f32 %v3863, 0.0
    %v5504 = vmax.f32 %v3868, 0.0
    %v5505 = vmax.f32 %v3871, 0.0
    %v5506 = vmax.f32 %v3876, 0.0
    %v5507 = vmax.f32 %v3879, 0.0
    %v5508 = vmax.f32 %v3884, 0.0
    %v5509 = vmax.f32 %v3887, 0.0
    %v5510 = vmax.f32 %v3892, 0.0
    %v5511 = vmax.f32 %v3895, 0.0
    %v5512 = vmax.f32 %v3900, 0.0
    %v5513 = vmax.f32 %v3903, 0.0
    %v5514 = vmax.f32 %v3908, 0.0
    %v5515 = vmax.f32 %v3911, 0.0
    %v5516 = vmax.f32 %v3916, 0.0
    %v5517 = vmax.f32 %v3919, 0.0
    %v5518 = vmax.f32 %v3924, 0.0
    %v5519 = vmax.f32 %v3927, 0.0
    %v5520 = vmax.f32 %v3932, 0.0
    %v5521 = vmax.f32 %v3935, 0.0
    %v5522 = vmax.f32 %v3940, 0.0
    %v5523 = vmax.f32 %v3943, 0.0
    %v5524 = vmax.f32 %v3948, 0.0
    %v5525 = vmax.f32 %v3951, 0.0
    %v5526 = vmax.f32 %v3956, 0.0
    %v5527 = vmax.f32 %v3959, 0.0
    %v5528 = vmax.f32 %v3964, 0.0
    %v5529 = vmax.f32 %v3967, 0.0
    %v5530 = vmax.f32 %v3972, 0.0
    %v5531 = vmax.f32 %v3975, 0.0
    %v5532 = vmax.f32 %v3980, 0.0
    %v5533 = vmax.f32 %v3983, 0.0
    %v5534 = vmax.f32 %v3988, 0.0
    %v5535 = vmax.f32 %v3991, 0.0
    %v5536 = vmax.f32 %v3996, 0.0
    %v5537 = vmax.f32 %v3999, 0.0
    %v5538 = vmax.f32 %v4004, 0.0
    %v5539 = vmax.f32 %v4007, 0.0
    %v5540 = vmax.f32 %v4012, 0.0
    %v5541 = vmax.f32 %v4015, 0.0
    %v5542 = vmax.f32 %v4020, 0.0
    %v5543 = vmax.f32 %v4023, 0.0
    %v5544 = vmax.f32 %v4028, 0.0
    %v5545 = vmax.f32 %v4031, 0.0
    %v5546 = vmax.f32 %v4036, 0.0
    %v5547 = vmax.f32 %v4039, 0.0
    %v5548 = vmax.f32 %v4044, 0.0
    %v5549 = vmax.f32 %v4047, 0.0
    %v5550 = vmax.f32 %v4052, 0.0
    %v5551 = vmax.f32 %v4055, 0.0
    %v5552 = vmax.f32 %v4060, 0.0
    %v5553 = vmax.f32 %v4063, 0.0
    %v5554 = vmax.f32 %v4068, 0.0
    %v5555 = vmax.f32 %v4071, 0.0
    %v5556 = vmax.f32 %v4076, 0.0
    %v5557 = vmax.f32 %v4079, 0.0
    %v5558 = vmax.f32 %v4084, 0.0
    %v5559 = vmax.f32 %v4087, 0.0
    %v5560 = vmax.f32 %v4092, 0.0
    %v5561 = vmax.f32 %v4095, 0.0
    %v5562 = vmax.f32 %v4100, 0.0
    %v5563 = vmax.f32 %v4103, 0.0
    %v5564 = vmax.f32 %v4108, 0.0
    %v5565 = vmax.f32 %v4111, 0.0
    %v5566 = vmax.f32 %v4116, 0.0
    %v5567 = vmax.f32 %v4119, 0.0
    %v5568 = vmax.f32 %v4124, 0.0
    %v5569 = vmax.f32 %v4127, 0.0
    %v5570 = vmax.f32 %v4132, 0.0
    %v5571 = vmax.f32 %v4135, 0.0
    %v5572 = vmax.f32 %v4140, 0.0
    %v5573 = vmax.f32 %v4143, 0.0
    %v5574 = vmax.f32 %v4148, 0.0
    %v5575 = vmax.f32 %v4151, 0.0
    %v5576 = vmax.f32 %v4156, 0.0
    %v5577 = vmax.f32 %v4159, 0.0
    %v5578 = vmax.f32 %v4164, 0.0
    %v5579 = vmax.f32 %v4167, 0.0
    %v5580 = vmax.f32 %v4172, 0.0
    %v5581 = vmax.f32 %v4175, 0.0
    %v5582 = vmax.f32 %v4180, 0.0
    %v5583 = vmax.f32 %v4183, 0.0
    %v5584 = vmax.f32 %v4188, 0.0
    %v5585 = vmax.f32 %v4191, 0.0
    %v5586 = vmax.f32 %v4196, 0.0
    %v5587 = vmax.f32 %v4199, 0.0
    %v5588 = vmax.f32 %v4204, 0.0
    %v5589 = vmax.f32 %v4207, 0.0
    %v5590 = vmax.f32 %v4212, 0.0
    %v5591 = vmax.f32 %v4215, 0.0
    %v5592 = vmax.f32 %v4220, 0.0
    %v5593 = vmax.f32 %v4223, 0.0
    %v5594 = vmax.f32 %v4228, 0.0
    %v5595 = vmax.f32 %v4231, 0.0
    %v5596 = vmax.f32 %v4236, 0.0
    %v5597 = vmax.f32 %v4239, 0.0
    %v5598 = vmax.f32 %v4244, 0.0
    %v5599 = vmax.f32 %v4247, 0.0
    %v5600 = vmax.f32 %v4252, 0.0
    %v5601 = vmax.f32 %v4255, 0.0
    %v5602 = vmax.f32 %v4260, 0.0
    %v5603 = vmax.f32 %v4263, 0.0
    %v5604 = vmax.f32 %v4268, 0.0
    %v5605 = vmax.f32 %v4271, 0.0
    %v5606 = vmax.f32 %v4276, 0.0
    %v5607 = vmax.f32 %v4279, 0.0
    %v5608 = vmax.f32 %v4284, 0.0
    %v5609 = vmax.f32 %v4287, 0.0
    %v5610 = vmax.f32 %v4292, 0.0
    %v5611 = vmax.f32 %v4295, 0.0
    %v5612 = vmax.f32 %v4300, 0.0
    %v5613 = vmax.f32 %v4303, 0.0
    %v5614 = vmax.f32 %v4308, 0.0
    %v5615 = vmax.f32 %v4311, 0.0
    %v5616 = vmax.f32 %v4316, 0.0
    %v5617 = vmax.f32 %v4319, 0.0
    %v5618 = vmax.f32 %v4324, 0.0
    %v5619 = vmax.f32 %v4327, 0.0
    %v5620 = vmax.f32 %v4332, 0.0
    %v5621 = vmax.f32 %v4335, 0.0
    %v5622 = vmax.f32 %v4340, 0.0
    %v5623 = vmax.f32 %v4343, 0.0
    %v5624 = vmax.f32 %v4348, 0.0
    %v5625 = vmax.f32 %v4351, 0.0
    %v5626 = vmax.f32 %v4356, 0.0
    %v5627 = vmax.f32 %v4359, 0.0
    %v5628 = vmax.f32 %v4364, 0.0
    %v5629 = vmax.f32 %v4367, 0.0
    %v5630 = vmax.f32 %v4372, 0.0
    %v5631 = vmax.f32 %v4375, 0.0
    %v5632 = vmax.f32 %v4380, 0.0
    %v5633 = vmax.f32 %v4383, 0.0
    %v5634 = vmax.f32 %v4388, 0.0
    %v5635 = vmax.f32 %v4391, 0.0
    %v5636 = vmax.f32 %v4396, 0.0
    %v5637 = vmax.f32 %v4399, 0.0
    %v5638 = vmax.f32 %v4404, 0.0
    %v5639 = vmax.f32 %v4407, 0.0
    %v5640 = vmax.f32 %v4412, 0.0
    %v5641 = vmax.f32 %v4415, 0.0
    %v5642 = vmax.f32 %v4420, 0.0
    %v5643 = vmax.f32 %v4423, 0.0
    %v5644 = vmax.f32 %v4428, 0.0
    %v5645 = vmax.f32 %v4431, 0.0
    %v5646 = vmax.f32 %v4436, 0.0
    %v5647 = vmax.f32 %v4439, 0.0
    %v5648 = vmax.f32 %v4444, 0.0
    %v5649 = vmax.f32 %v4447, 0.0
    %v5650 = vmax.f32 %v4452, 0.0
    %v5651 = vmax.f32 %v4455, 0.0
    %v5652 = vmax.f32 %v4460, 0.0
    %v5653 = vmax.f32 %v4463, 0.0
    %v5654 = vmax.f32 %v4468, 0.0
    %v5655 = vmax.f32 %v4471, 0.0
    %v5656 = vmax.f32 %v4476, 0.0
    %v5657 = vmax.f32 %v4479, 0.0
    %v5658 = vmax.f32 %v4484, 0.0
    %v5659 = vmax.f32 %v4487, 0.0
    %v5660 = vmax.f32 %v4492, 0.0
    %v5661 = vmax.f32 %v4495, 0.0
    %v5662 = vmax.f32 %v4500, 0.0
    %v5663 = vmax.f32 %v4503, 0.0
    %v5664 = vmax.f32 %v4508, 0.0
    %v5665 = vmax.f32 %v4511, 0.0
    %v5666 = vmax.f32 %v4516, 0.0
    %v5667 = vmax.f32 %v4519, 0.0
    %v5668 = vmax.f32 %v4524, 0.0
    %v5669 = vmax.f32 %v4527, 0.0
    %v5670 = vmax.f32 %v4532, 0.0
    %v5671 = vmax.f32 %v4535, 0.0
    %v5672 = vmax.f32 %v4540, 0.0
    %v5673 = vmax.f32 %v4543, 0.0
    %v5674 = vmax.f32 %v4548, 0.0
    %v5675 = vmax.f32 %v4551, 0.0
    %v5676 = vmax.f32 %v4556, 0.0
    %v5677 = vmax.f32 %v4559, 0.0
    %v5678 = vmax.f32 %v4564, 0.0
    %v5679 = vmax.f32 %v4567, 0.0
    %v5680 = vmax.f32 %v4572, 0.0
    %v5681 = vmax.f32 %v4575, 0.0
    %v5682 = vmax.f32 %v4580, 0.0
    %v5683 = vmax.f32 %v4583, 0.0
    %v5684 = vmax.f32 %v4588, 0.0
    %v5685 = vmax.f32 %v4591, 0.0
    %v5686 = vmax.f32 %v4596, 0.0
    %v5687 = vmax.f32 %v4599, 0.0
    %v5688 = vmax.f32 %v4604, 0.0
    %v5689 = vmax.f32 %v4607, 0.0
    %v5690 = vmax.f32 %v4612, 0.0
    %v5691 = vmax.f32 %v4615, 0.0
    %v5692 = vmax.f32 %v4620, 0.0
    %v5693 = vmax.f32 %v4623, 0.0
    %v5694 = vmax.f32 %v4628, 0.0
    %v5695 = vmax.f32 %v4631, 0.0
    %v5696 = vmax.f32 %v4636, 0.0
    %v5697 = vmax.f32 %v4639, 0.0
    %v5698 = vmax.f32 %v4644, 0.0
    %v5699 = vmax.f32 %v4647, 0.0
    %v5700 = vmax.f32 %v4652, 0.0
    %v5701 = vmax.f32 %v4655, 0.0
    %v5702 = vmax.f32 %v4660, 0.0
    %v5703 = vmax.f32 %v4663, 0.0
    %v5704 = vmax.f32 %v4668, 0.0
    %v5705 = vmax.f32 %v4671, 0.0
    %v5706 = vmax.f32 %v4676, 0.0
    %v5707 = vmax.f32 %v4679, 0.0
    %v5708 = vmax.f32 %v4684, 0.0
    %v5709 = vmax.f32 %v4687, 0.0
    %v5710 = vmax.f32 %v4692, 0.0
    %v5711 = vmax.f32 %v4695, 0.0
    %v5712 = vmax.f32 %v4700, 0.0
    %v5713 = vmax.f32 %v4703, 0.0
    %v5714 = vmax.f32 %v4708, 0.0
    %v5715 = vmax.f32 %v4711, 0.0
    %v5716 = vmax.f32 %v4716, 0.0
    %v5717 = vmax.f32 %v4719, 0.0
    %v5718 = vmax.f32 %v4724, 0.0
    %v5719 = vmax.f32 %v4727, 0.0
    %v5720 = vmax.f32 %v4732, 0.0
    %v5721 = vmax.f32 %v4735, 0.0
    %v5722 = vmax.f32 %v4740, 0.0
    %v5723 = vmax.f32 %v4743, 0.0
    %v5724 = vmax.f32 %v4748, 0.0
    %v5725 = vmax.f32 %v4751, 0.0
    %v5726 = vmax.f32 %v4756, 0.0
    %v5727 = vmax.f32 %v4759, 0.0
    %v5728 = vmax.f32 %v4764, 0.0
    %v5729 = vmax.f32 %v4767, 0.0
    %v5730 = vmax.f32 %v4772, 0.0
    %v5731 = vmax.f32 %v4775, 0.0
    %v5732 = vmax.f32 %v4780, 0.0
    %v5733 = vmax.f32 %v4783, 0.0
    %v5734 = vmax.f32 %v4788, 0.0
    %v5735 = vmax.f32 %v4791, 0.0
    %v5736 = vmax.f32 %v4796, 0.0
    %v5737 = vmax.f32 %v4799, 0.0
    %v5738 = vmax.f32 %v4804, 0.0
    %v5739 = vmax.f32 %v4807, 0.0
    %v5740 = vmax.f32 %v4812, 0.0
    %v5741 = vmax.f32 %v4815, 0.0
    %v5742 = vmax.f32 %v4820, 0.0
    %v5743 = vmax.f32 %v4823, 0.0
    %v5744 = vmax.f32 %v4828, 0.0
    %v5745 = vmax.f32 %v4831, 0.0
    %v5746 = vmax.f32 %v4836, 0.0
    %v5747 = vmax.f32 %v4839, 0.0
    %v5748 = vmax.f32 %v4844, 0.0
    %v5749 = vmax.f32 %v4847, 0.0
    %v5750 = vmax.f32 %v4852, 0.0
    %v5751 = vmax.f32 %v4855, 0.0
    %v5752 = vmax.f32 %v4860, 0.0
    %v5753 = vmax.f32 %v4863, 0.0
    %v5754 = vmax.f32 %v4868, 0.0
    %v5755 = vmax.f32 %v4871, 0.0
    %v5756 = vmax.f32 %v4876, 0.0
    %v5757 = vmax.f32 %v4879, 0.0
    %v5758 = vmax.f32 %v4884, 0.0
    %v5759 = vmax.f32 %v4887, 0.0
    %v5760 = vmax.f32 %v4892, 0.0
    %v5761 = vmax.f32 %v4895, 0.0
    %v5762 = vmax.f32 %v4900, 0.0
    %v5763 = vmax.f32 %v4903, 0.0
    %v5764 = vmax.f32 %v4908, 0.0
    %v5765 = vmax.f32 %v4911, 0.0
    %v5766 = vmax.f32 %v4916, 0.0
    %v5767 = vmax.f32 %v4919, 0.0
    %v5768 = vmax.f32 %v4924, 0.0
    %v5769 = vmax.f32 %v4927, 0.0
    %v5770 = vmax.f32 %v4932, 0.0
    %v5771 = vmax.f32 %v4935, 0.0
    %v5772 = vmax.f32 %v4940, 0.0
    %v5773 = vmax.f32 %v4943, 0.0
    %v5774 = vmax.f32 %v4948, 0.0
    %v5775 = vmax.f32 %v4951, 0.0
    %v5776 = vmax.f32 %v4956, 0.0
    %v5777 = vmax.f32 %v4959, 0.0
    %v5778 = vmax.f32 %v4964, 0.0
    %v5779 = vmax.f32 %v4967, 0.0
    %v5780 = vmax.f32 %v4972, 0.0
    %v5781 = vmax.f32 %v4975, 0.0
    %v5782 = vmax.f32 %v4980, 0.0
    %v5783 = vmax.f32 %v4983, 0.0
    %v5784 = vmax.f32 %v4988, 0.0
    %v5785 = vmax.f32 %v4991, 0.0
    %v5786 = vmax.f32 %v4996, 0.0
    %v5787 = vmax.f32 %v4999, 0.0
    %v5788 = vmax.f32 %v5004, 0.0
    %v5789 = vmax.f32 %v5007, 0.0
    %v5790 = vmax.f32 %v5012, 0.0
    %v5791 = vmax.f32 %v5015, 0.0
    %v5792 = vmax.f32 %v5020, 0.0
    %v5793 = vmax.f32 %v5023, 0.0
    %v5794 = vmax.f32 %v5028, 0.0
    %v5795 = vmax.f32 %v5031, 0.0
    %v5796 = vmax.f32 %v5036, 0.0
    %v5797 = vmax.f32 %v5039, 0.0
    %v5798 = vmax.f32 %v5044, 0.0
    %v5799 = vmax.f32 %v5047, 0.0
    %v5800 = vmax.f32 %v5052, 0.0
    %v5801 = vmax.f32 %v5055, 0.0
    %v5802 = vmax.f32 %v5060, 0.0
    %v5803 = vmax.f32 %v5063, 0.0
    %v5804 = vmax.f32 %v5068, 0.0
    %v5805 = vmax.f32 %v5071, 0.0
    %v5806 = vmax.f32 %v5076, 0.0
    %v5807 = vmax.f32 %v5079, 0.0
    %v5808 = vmax.f32 %v5084, 0.0
    %v5809 = vmax.f32 %v5087, 0.0
    %v5810 = vmax.f32 %v5092, 0.0
    %v5811 = vmax.f32 %v5095, 0.0
    %v5812 = vmax.f32 %v5100, 0.0
    %v5813 = vmax.f32 %v5103, 0.0
    %v5814 = vmax.f32 %v5108, 0.0
    %v5815 = vmax.f32 %v5111, 0.0
    %v5816 = vmax.f32 %v5116, 0.0
    %v5817 = vmax.f32 %v5119, 0.0
    %v5818 = vmax.f32 %v5124, 0.0
    %v5819 = vmax.f32 %v5127, 0.0
    %v5820 = vmax.f32 %v5132, 0.0
    %v5821 = vmax.f32 %v5135, 0.0
    %v5822 = vmax.f32 %v5140, 0.0
    %v5823 = vmax.f32 %v5143, 0.0
    %v5824 = vmax.f32 %v5148, 0.0
    %v5825 = vmax.f32 %v5151, 0.0
    %v5826 = vmax.f32 %v5156, 0.0
    %v5827 = vmax.f32 %v5159, 0.0
    %v5828 = vmax.f32 %v5164, 0.0
    %v5829 = vmax.f32 %v5167, 0.0
    %v5830 = vmax.f32 %v5172, 0.0
    %v5831 = vmax.f32 %v5175, 0.0
    %v5832 = vmax.f32 %v5180, 0.0
    %v5833 = vmax.f32 %v5183, 0.0
    %v5834 = vmax.f32 %v5188, 0.0
    %v5835 = vmax.f32 %v5191, 0.0
    %v5836 = vmax.f32 %v5196, 0.0
    %v5837 = vmax.f32 %v5199, 0.0
    %v5838 = vmax.f32 %v5204, 0.0
    %v5839 = vmax.f32 %v5207, 0.0
    %v5840 = vmax.f32 %v5212, 0.0
    %v5841 = vmax.f32 %v5215, 0.0
    %v5842 = vmax.f32 %v5220, 0.0
    %v5843 = vmax.f32 %v5223, 0.0
    %v5844 = vmax.f32 %v5228, 0.0
    %v5845 = vmax.f32 %v5231, 0.0
    %v5846 = vmax.f32 %v5236, 0.0
    %v5847 = vmax.f32 %v5239, 0.0
    %v5848 = vmax.f32 %v5244, 0.0
    %v5849 = vmax.f32 %v5247, 0.0
    %v5850 = vmax.f32 %v5252, 0.0
    %v5851 = vmax.f32 %v5255, 0.0
    %v5852 = vmax.f32 %v5260, 0.0
    %v5853 = vmax.f32 %v5263, 0.0
    %v5854 = vmax.f32 %v5268, 0.0
    %v5855 = vmax.f32 %v5271, 0.0
    %v5856 = vmax.f32 %v5276, 0.0
    %v5857 = vmax.f32 %v5279, 0.0
    %v5858 = vmax.f32 %v5282, %v5300
    %v5859 = vmax.f32 %v5283, %v5301
    %v5860 = vmax.f32 %v5284, %v5302
    %v5861 = vmax.f32 %v5285, %v5303
    %v5862 = vmax.f32 %v5286, %v5304
    %v5863 = vmax.f32 %v5287, %v5305
    %v5864 = vmax.f32 %v5288, %v5306
    %v5865 = vmax.f32 %v5289, %v5307
    %v5866 = vmax.f32 %v5290, %v5308
    %v5867 = vmax.f32 %v5291, %v5309
    %v5868 = vmax.f32 %v5292, %v5310
    %v5869 = vmax.f32 %v5293, %v5311
    %v5870 = vmax.f32 %v5294, %v5312
    %v5871 = vmax.f32 %v5295, %v5313
    %v5872 = vmax.f32 %v5296, %v5314
    %v5873 = vmax.f32 %v5297, %v5315
    %v5874 = vmax.f32 %v5298, %v5316
    %v5875 = vmax.f32 %v5299, %v5317
    %v5876 = vmax.f32 %v5354, %v5372
    %v5877 = vmax.f32 %v5355, %v5373
    %v5878 = vmax.f32 %v5356, %v5374
    %v5879 = vmax.f32 %v5357, %v5375
    %v5880 = vmax.f32 %v5358, %v5376
    %v5881 = vmax.f32 %v5359, %v5377
    %v5882 = vmax.f32 %v5360, %v5378
    %v5883 = vmax.f32 %v5361, %v5379
    %v5884 = vmax.f32 %v5362, %v5380
    %v5885 = vmax.f32 %v5363, %v5381
    %v5886 = vmax.f32 %v5364, %v5382
    %v5887 = vmax.f32 %v5365, %v5383
    %v5888 = vmax.f32 %v5366, %v5384
    %v5889 = vmax.f32 %v5367, %v5385
    %v5890 = vmax.f32 %v5368, %v5386
    %v5891 = vmax.f32 %v5369, %v5387
    %v5892 = vmax.f32 %v5370, %v5388
    %v5893 = vmax.f32 %v5371, %v5389
    %v5894 = vmax.f32 %v5426, %v5444
    %v5895 = vmax.f32 %v5427, %v5445
    %v5896 = vmax.f32 %v5428, %v5446
    %v5897 = vmax.f32 %v5429, %v5447
    %v5898 = vmax.f32 %v5430, %v5448
    %v5899 = vmax.f32 %v5431, %v5449
    %v5900 = vmax.f32 %v5432, %v5450
    %v5901 = vmax.f32 %v5433, %v5451
    %v5902 = vmax.f32 %v5434, %v5452
    %v5903 = vmax.f32 %v5435, %v5453
    %v5904 = vmax.f32 %v5436, %v5454
    %v5905 = vmax.f32 %v5437, %v5455
    %v5906 = vmax.f32 %v5438, %v5456
    %v5907 = vmax.f32 %v5439, %v5457
    %v5908 = vmax.f32 %v5440, %v5458
    %v5909 = vmax.f32 %v5441, %v5459
    %v5910 = vmax.f32 %v5442, %v5460
    %v5911 = vmax.f32 %v5443, %v5461
    %v5912 = vmax.f32 %v5498, %v5516
    %v5913 = vmax.f32 %v5499, %v5517
    %v5914 = vmax.f32 %v5500, %v5518
    %v5915 = vmax.f32 %v5501, %v5519
    %v5916 = vmax.f32 %v5502, %v5520
    %v5917 = vmax.f32 %v5503, %v5521
    %v5918 = vmax.f32 %v5504, %v5522
    %v5919 = vmax.f32 %v5505, %v5523
    %v5920 = vmax.f32 %v5506, %v5524
    %v5921 = vmax.f32 %v5507, %v5525
    %v5922 = vmax.f32 %v5508, %v5526
    %v5923 = vmax.f32 %v5509, %v5527
    %v5924 = vmax.f32 %v5510, %v5528
    %v5925 = vmax.f32 %v5511, %v5529
    %v5926 = vmax.f32 %v5512, %v5530
    %v5927 = vmax.f32 %v5513, %v5531
    %v5928 = vmax.f32 %v5514, %v5532
    %v5929 = vmax.f32 %v5515, %v5533
    %v5930 = vmax.f32 %v5570, %v5588
    %v5931 = vmax.f32 %v5571, %v5589
    %v5932 = vmax.f32 %v5572, %v5590
    %v5933 = vmax.f32 %v5573, %v5591
    %v5934 = vmax.f32 %v5574, %v5592
    %v5935 = vmax.f32 %v5575, %v5593
    %v5936 = vmax.f32 %v5576, %v5594
    %v5937 = vmax.f32 %v5577, %v5595
    %v5938 = vmax.f32 %v5578, %v5596
    %v5939 = vmax.f32 %v5579, %v5597
    %v5940 = vmax.f32 %v5580, %v5598
    %v5941 = vmax.f32 %v5581, %v5599
    %v5942 = vmax.f32 %v5582, %v5600
    %v5943 = vmax.f32 %v5583, %v5601
    %v5944 = vmax.f32 %v5584, %v5602
    %v5945 = vmax.f32 %v5585, %v5603
    %v5946 = vmax.f32 %v5586, %v5604
    %v5947 = vmax.f32 %v5587, %v5605
    %v5948 = vmax.f32 %v5642, %v5660
    %v5949 = vmax.f32 %v5643, %v5661
    %v5950 = vmax.f32 %v5644, %v5662
    %v5951 = vmax.f32 %v5645, %v5663
    %v5952 = vmax.f32 %v5646, %v5664
    %v5953 = vmax.f32 %v5647, %v5665
    %v5954 = vmax.f32 %v5648, %v5666
    %v5955 = vmax.f32 %v5649, %v5667
    %v5956 = vmax.f32 %v5650, %v5668
    %v5957 = vmax.f32 %v5651, %v5669
    %v5958 = vmax.f32 %v5652, %v5670
    %v5959 = vmax.f32 %v5653, %v5671
    %v5960 = vmax.f32 %v5654, %v5672
    %v5961 = vmax.f32 %v5655, %v5673
    %v5962 = vmax.f32 %v5656, %v5674
    %v5963 = vmax.f32 %v5657, %v5675
    %v5964 = vmax.f32 %v5658, %v5676
    %v5965 = vmax.f32 %v5659, %v5677
    %v5966 = vmax.f32 %v5714, %v5732
    %v5967 = vmax.f32 %v5715, %v5733
    %v5968 = vmax.f32 %v5716, %v5734
    %v5969 = vmax.f32 %v5717, %v5735
    %v5970 = vmax.f32 %v5718, %v5736
    %v5971 = vmax.f32 %v5719, %v5737
    %v5972 = vmax.f32 %v5720, %v5738
    %v5973 = vmax.f32 %v5721, %v5739
    %v5974 = vmax.f32 %v5722, %v5740
    %v5975 = vmax.f32 %v5723, %v5741
    %v5976 = vmax.f32 %v5724, %v5742
    %v5977 = vmax.f32 %v5725, %v5743
    %v5978 = vmax.f32 %v5726, %v5744
    %v5979 = vmax.f32 %v5727, %v5745
    %v5980 = vmax.f32 %v5728, %v5746
    %v5981 = vmax.f32 %v5729, %v5747
    %v5982 = vmax.f32 %v5730, %v5748
    %v5983 = vmax.f32 %v5731, %v5749
    %v5984 = vmax.f32 %v5786, %v5804
    %v5985 = vmax.f32 %v5787, %v5805
    %v5986 = vmax.f32 %v5788, %v5806
    %v5987 = vmax.f32 %v5789, %v5807
    %v5988 = vmax.f32 %v5790, %v5808
    %v5989 = vmax.f32 %v5791, %v5809
    %v5990 = vmax.f32 %v5792, %v5810
    %v5991 = vmax.f32 %v5793, %v5811
    %v5992 = vmax.f32 %v5794, %v5812
    %v5993 = vmax.f32 %v5795, %v5813
    %v5994 = vmax.f32 %v5796, %v5814
    %v5995 = vmax.f32 %v5797, %v5815
    %v5996 = vmax.f32 %v5798, %v5816
    %v5997 = vmax.f32 %v5799, %v5817
    %v5998 = vmax.f32 %v5800, %v5818
    %v5999 = vmax.f32 %v5801, %v5819
    %v6000 = vmax.f32 %v5802, %v5820
    %v6001 = vmax.f32 %v5803, %v5821
    %v6002 = vmax.f32 %v5318, %v5336
    %v6003 = vmax.f32 %v5319, %v5337
    %v6004 = vmax.f32 %v5320, %v5338
    %v6005 = vmax.f32 %v5321, %v5339
    %v6006 = vmax.f32 %v5322, %v5340
    %v6007 = vmax.f32 %v5323, %v5341
    %v6008 = vmax.f32 %v5324, %v5342
    %v6009 = vmax.f32 %v5325, %v5343
    %v6010 = vmax.f32 %v5326, %v5344
    %v6011 = vmax.f32 %v5327, %v5345
    %v6012 = vmax.f32 %v5328, %v5346
    %v6013 = vmax.f32 %v5329, %v5347
    %v6014 = vmax.f32 %v5330, %v5348
    %v6015 = vmax.f32 %v5331, %v5349
    %v6016 = vmax.f32 %v5332, %v5350
    %v6017 = vmax.f32 %v5333, %v5351
    %v6018 = vmax.f32 %v5334, %v5352
    %v6019 = vmax.f32 %v5335, %v5353
    %v6020 = vmax.f32 %v5390, %v5408
    %v6021 = vmax.f32 %v5391, %v5409
    %v6022 = vmax.f32 %v5392, %v5410
    %v6023 = vmax.f32 %v5393, %v5411
    %v6024 = vmax.f32 %v5394, %v5412
    %v6025 = vmax.f32 %v5395, %v5413
    %v6026 = vmax.f32 %v5396, %v5414
    %v6027 = vmax.f32 %v5397, %v5415
    %v6028 = vmax.f32 %v5398, %v5416
    %v6029 = vmax.f32 %v5399, %v5417
    %v6030 = vmax.f32 %v5400, %v5418
    %v6031 = vmax.f32 %v5401, %v5419
    %v6032 = vmax.f32 %v5402, %v5420
    %v6033 = vmax.f32 %v5403, %v5421
    %v6034 = vmax.f32 %v5404, %v5422
    %v6035 = vmax.f32 %v5405, %v5423
    %v6036 = vmax.f32 %v5406, %v5424
    %v6037 = vmax.f32 %v5407, %v5425
    %v6038 = vmax.f32 %v5462, %v5480
    %v6039 = vmax.f32 %v5463, %v5481
    %v6040 = vmax.f32 %v5464, %v5482
    %v6041 = vmax.f32 %v5465, %v5483
    %v6042 = vmax.f32 %v5466, %v5484
    %v6043 = vmax.f32 %v5467, %v5485
    %v6044 = vmax.f32 %v5468, %v5486
    %v6045 = vmax.f32 %v5469, %v5487
    %v6046 = vmax.f32 %v5470, %v5488
    %v6047 = vmax.f32 %v5471, %v5489
    %v6048 = vmax.f32 %v5472, %v5490
    %v6049 = vmax.f32 %v5473, %v5491
    %v6050 = vmax.f32 %v5474, %v5492
    %v6051 = vmax.f32 %v5475, %v5493
    %v6052 = vmax.f32 %v5476, %v5494
    %v6053 = vmax.f32 %v5477, %v5495
    %v6054 = vmax.f32 %v5478, %v5496
    %v6055 = vmax.f32 %v5479, %v5497
    %v6056 = vmax.f32 %v5534, %v5552
    %v6057 = vmax.f32 %v5535, %v5553
    %v6058 = vmax.f32 %v5536, %v5554
    %v6059 = vmax.f32 %v5537, %v5555
    %v6060 = vmax.f32 %v5538, %v5556
    %v6061 = vmax.f32 %v5539, %v5557
    %v6062 = vmax.f32 %v5540, %v5558
    %v6063 = vmax.f32 %v5541, %v5559
    %v6064 = vmax.f32 %v5542, %v5560
    %v6065 = vmax.f32 %v5543, %v5561
    %v6066 = vmax.f32 %v5544, %v5562
    %v6067 = vmax.f32 %v5545, %v5563
    %v6068 = vmax.f32 %v5546, %v5564
    %v6069 = vmax.f32 %v5547, %v5565
    %v6070 = vmax.f32 %v5548, %v5566
    %v6071 = vmax.f32 %v5549, %v5567
    %v6072 = vmax.f32 %v5550, %v5568
    %v6073 = vmax.f32 %v5551, %v5569
    %v6074 = vmax.f32 %v5606, %v5624
    %v6075 = vmax.f32 %v5607, %v5625
    %v6076 = vmax.f32 %v5608, %v5626
    %v6077 = vmax.f32 %v5609, %v5627
    %v6078 = vmax.f32 %v5610, %v5628
    %v6079 = vmax.f32 %v5611, %v5629
    %v6080 = vmax.f32 %v5612, %v5630
    %v6081 = vmax.f32 %v5613, %v5631
    %v6082 = vmax.f32 %v5614, %v5632
    %v6083 = vmax.f32 %v5615, %v5633
    %v6084 = vmax.f32 %v5616, %v5634
    %v6085 = vmax.f32 %v5617, %v5635
    %v6086 = vmax.f32 %v5618, %v5636
    %v6087 = vmax.f32 %v5619, %v5637
    %v6088 = vmax.f32 %v5620, %v5638
    %v6089 = vmax.f32 %v5621, %v5639
    %v6090 = vmax.f32 %v5622, %v5640
    %v6091 = vmax.f32 %v5623, %v5641
    %v6092 = vmax.f32 %v5678, %v5696
    %v6093 = vmax.f32 %v5679, %v5697
    %v6094 = vmax.f32 %v5680, %v5698
    %v6095 = vmax.f32 %v5681, %v5699
    %v6096 = vmax.f32 %v5682, %v5700
    %v6097 = vmax.f32 %v5683, %v5701
    %v6098 = vmax.f32 %v5684, %v5702
    %v6099 = vmax.f32 %v5685, %v5703
    %v6100 = vmax.f32 %v5686, %v5704
    %v6101 = vmax.f32 %v5687, %v5705
    %v6102 = vmax.f32 %v5688, %v5706
    %v6103 = vmax.f32 %v5689, %v5707
    %v6104 = vmax.f32 %v5690, %v5708
    %v6105 = vmax.f32 %v5691, %v5709
    %v6106 = vmax.f32 %v5692, %v5710
    %v6107 = vmax.f32 %v5693, %v5711
    %v6108 = vmax.f32 %v5694, %v5712
    %v6109 = vmax.f32 %v5695, %v5713
    %v6110 = vmax.f32 %v5750, %v5768
    %v6111 = vmax.f32 %v5751, %v5769
    %v6112 = vmax.f32 %v5752, %v5770
    %v6113 = vmax.f32 %v5753, %v5771
    %v6114 = vmax.f32 %v5754, %v5772
    %v6115 = vmax.f32 %v5755, %v5773
    %v6116 = vmax.f32 %v5756, %v5774
    %v6117 = vmax.f32 %v5757, %v5775
    %v6118 = vmax.f32 %v5758, %v5776
    %v6119 = vmax.f32 %v5759, %v5777
    %v6120 = vmax.f32 %v5760, %v5778
    %v6121 = vmax.f32 %v5761, %v5779
    %v6122 = vmax.f32 %v5762, %v5780
    %v6123 = vmax.f32 %v5763, %v5781
    %v6124 = vmax.f32 %v5764, %v5782
    %v6125 = vmax.f32 %v5765, %v5783
    %v6126 = vmax.f32 %v5766, %v5784
    %v6127 = vmax.f32 %v5767, %v5785
    %v6128 = vmax.f32 %v5822, %v5840
    %v6129 = vmax.f32 %v5823, %v5841
    %v6130 = vmax.f32 %v5824, %v5842
    %v6131 = vmax.f32 %v5825, %v5843
    %v6132 = vmax.f32 %v5826, %v5844
    %v6133 = vmax.f32 %v5827, %v5845
    %v6134 = vmax.f32 %v5828, %v5846
    %v6135 = vmax.f32 %v5829, %v5847
    %v6136 = vmax.f32 %v5830, %v5848
    %v6137 = vmax.f32 %v5831, %v5849
    %v6138 = vmax.f32 %v5832, %v5850
    %v6139 = vmax.f32 %v5833, %v5851
    %v6140 = vmax.f32 %v5834, %v5852
    %v6141 = vmax.f32 %v5835, %v5853
    %v6142 = vmax.f32 %v5836, %v5854
    %v6143 = vmax.f32 %v5837, %v5855
    %v6144 = vmax.f32 %v5838, %v5856
    %v6145 = vmax.f32 %v5839, %v5857
    %v6146 = vmax.f32 %v5858, %v6002
    %v6147 = vmax.f32 %v5859, %v6003
    %v6148 = vmax.f32 %v5860, %v6004
    %v6149 = vmax.f32 %v5861, %v6005
    %v6150 = vmax.f32 %v5862, %v6006
    %v6151 = vmax.f32 %v5863, %v6007
    %v6152 = vmax.f32 %v5864, %v6008
    %v6153 = vmax.f32 %v5865, %v6009
    %v6154 = vmax.f32 %v5866, %v6010
    %v6155 = vmax.f32 %v5867, %v6011
    %v6156 = vmax.f32 %v5868, %v6012
    %v6157 = vmax.f32 %v5869, %v6013
    %v6158 = vmax.f32 %v5870, %v6014
    %v6159 = vmax.f32 %v5871, %v6015
    %v6160 = vmax.f32 %v5872, %v6016
    %v6161 = vmax.f32 %v5873, %v6017
    %v6162 = vmax.f32 %v5874, %v6018
    %v6163 = vmax.f32 %v5875, %v6019
    %v6164 = vmax.f32 %v5876, %v6020
    %v6165 = vmax.f32 %v5877, %v6021
    %v6166 = vmax.f32 %v5878, %v6022
    %v6167 = vmax.f32 %v5879, %v6023
    %v6168 = vmax.f32 %v5880, %v6024
    %v6169 = vmax.f32 %v5881, %v6025
    %v6170 = vmax.f32 %v5882, %v6026
    %v6171 = vmax.f32 %v5883, %v6027
    %v6172 = vmax.f32 %v5884, %v6028
    %v6173 = vmax.f32 %v5885, %v6029
    %v6174 = vmax.f32 %v5886, %v6030
    %v6175 = vmax.f32 %v5887, %v6031
    %v6176 = vmax.f32 %v5888, %v6032
    %v6177 = vmax.f32 %v5889, %v6033
    %v6178 = vmax.f32 %v5890, %v6034
    %v6179 = vmax.f32 %v5891, %v6035
    %v6180 = vmax.f32 %v5892, %v6036
    %v6181 = vmax.f32 %v5893, %v6037
    %v6182 = vmax.f32 %v5894, %v6038
    %v6183 = vmax.f32 %v5895, %v6039
    %v6184 = vmax.f32 %v5896, %v6040
    %v6185 = vmax.f32 %v5897, %v6041
    %v6186 = vmax.f32 %v5898, %v6042
    %v6187 = vmax.f32 %v5899, %v6043
    %v6188 = vmax.f32 %v5900, %v6044
    %v6189 = vmax.f32 %v5901, %v6045
    %v6190 = vmax.f32 %v5902, %v6046
    %v6191 = vmax.f32 %v5903, %v6047
    %v6192 = vmax.f32 %v5904, %v6048
    %v6193 = vmax.f32 %v5905, %v6049
    %v6194 = vmax.f32 %v5906, %v6050
    %v6195 = vmax.f32 %v5907, %v6051
    %v6196 = vmax.f32 %v5908, %v6052
    %v6197 = vmax.f32 %v5909, %v6053
    %v6198 = vmax.f32 %v5910, %v6054
    %v6199 = vmax.f32 %v5911, %v6055
    %v6200 = vmax.f32 %v5912, %v6056
    %v6201 = vmax.f32 %v5913, %v6057
    %v6202 = vmax.f32 %v5914, %v6058
    %v6203 = vmax.f32 %v5915, %v6059
    %v6204 = vmax.f32 %v5916, %v6060
    %v6205 = vmax.f32 %v5917, %v6061
    %v6206 = vmax.f32 %v5918, %v6062
    %v6207 = vmax.f32 %v5919, %v6063
    %v6208 = vmax.f32 %v5920, %v6064
    %v6209 = vmax.f32 %v5921, %v6065
    %v6210 = vmax.f32 %v5922, %v6066
    %v6211 = vmax.f32 %v5923, %v6067
    %v6212 = vmax.f32 %v5924, %v6068
    %v6213 = vmax.f32 %v5925, %v6069
    %v6214 = vmax.f32 %v5926, %v6070
    %v6215 = vmax.f32 %v5927, %v6071
    %v6216 = vmax.f32 %v5928, %v6072
    %v6217 = vmax.f32 %v5929, %v6073
    %v6218 = vmax.f32 %v5930, %v6074
    %v6219 = vmax.f32 %v5931, %v6075
    %v6220 = vmax.f32 %v5932, %v6076
    %v6221 = vmax.f32 %v5933, %v6077
    %v6222 = vmax.f32 %v5934, %v6078
    %v6223 = vmax.f32 %v5935, %v6079
    %v6224 = vmax.f32 %v5936, %v6080
    %v6225 = vmax.f32 %v5937, %v6081
    %v6226 = vmax.f32 %v5938, %v6082
    %v6227 = vmax.f32 %v5939, %v6083
    %v6228 = vmax.f32 %v5940, %v6084
    %v6229 = vmax.f32 %v5941, %v6085
    %v6230 = vmax.f32 %v5942, %v6086
    %v6231 = vmax.f32 %v5943, %v6087
    %v6232 = vmax.f32 %v5944, %v6088
    %v6233 = vmax.f32 %v5945, %v6089
    %v6234 = vmax.f32 %v5946, %v6090
    %v6235 = vmax.f32 %v5947, %v6091
    %v6236 = vmax.f32 %v5948, %v6092
    %v6237 = vmax.f32 %v5949, %v6093
    %v6238 = vmax.f32 %v5950, %v6094
    %v6239 = vmax.f32 %v5951, %v6095
    %v6240 = vmax.f32 %v5952, %v6096
    %v6241 = vmax.f32 %v5953, %v6097
    %v6242 = vmax.f32 %v5954, %v6098
    %v6243 = vmax.f32 %v5955, %v6099
    %v6244 = vmax.f32 %v5956, %v6100
    %v6245 = vmax.f32 %v5957, %v6101
    %v6246 = vmax.f32 %v5958, %v6102
    %v6247 = vmax.f32 %v5959, %v6103
    %v6248 = vmax.f32 %v5960, %v6104
    %v6249 = vmax.f32 %v5961, %v6105
    %v6250 = vmax.f32 %v5962, %v6106
    %v6251 = vmax.f32 %v5963, %v6107
    %v6252 = vmax.f32 %v5964, %v6108
    %v6253 = vmax.f32 %v5965, %v6109
    %v6254 = vmax.f32 %v5966, %v6110
    %v6255 = vmax.f32 %v5967, %v6111
    %v6256 = vmax.f32 %v5968, %v6112
    %v6257 = vmax.f32 %v5969, %v6113
    %v6258 = vmax.f32 %v5970, %v6114
    %v6259 = vmax.f32 %v5971, %v6115
    %v6260 = vmax.f32 %v5972, %v6116
    %v6261 = vmax.f32 %v5973, %v6117
    %v6262 = vmax.f32 %v5974, %v6118
    %v6263 = vmax.f32 %v5975, %v6119
    %v6264 = vmax.f32 %v5976, %v6120
    %v6265 = vmax.f32 %v5977, %v6121
    %v6266 = vmax.f32 %v5978, %v6122
    %v6267 = vmax.f32 %v5979, %v6123
    %v6268 = vmax.f32 %v5980, %v6124
    %v6269 = vmax.f32 %v5981, %v6125
    %v6270 = vmax.f32 %v5982, %v6126
    %v6271 = vmax.f32 %v5983, %v6127
    %v6272 = vmax.f32 %v5984, %v6128
    %v6273 = vmax.f32 %v5985, %v6129
    %v6274 = vmax.f32 %v5986, %v6130
    %v6275 = vmax.f32 %v5987, %v6131
    %v6276 = vmax.f32 %v5988, %v6132
    %v6277 = vmax.f32 %v5989, %v6133
    %v6278 = vmax.f32 %v5990, %v6134
    %v6279 = vmax.f32 %v5991, %v6135
    %v6280 = vmax.f32 %v5992, %v6136
    %v6281 = vmax.f32 %v5993, %v6137
    %v6282 = vmax.f32 %v5994, %v6138
    %v6283 = vmax.f32 %v5995, %v6139
    %v6284 = vmax.f32 %v5996, %v6140
    %v6285 = vmax.f32 %v5997, %v6141
    %v6286 = vmax.f32 %v5998, %v6142
    %v6287 = vmax.f32 %v5999, %v6143
    %v6288 = vmax.f32 %v6000, %v6144
    %v6289 = vmax.f32 %v6001, %v6145
    %v6290 = vpack.c.bf16 %v6147, %v6146
    %v6291 = vpack.c.bf16 %v6149, %v6148
    %v6292 = vpack.c.bf16 %v6151, %v6150
    %v6293 = vpack.c.bf16 %v6153, %v6152
    %v6294 = vpack.c.bf16 %v6155, %v6154
    %v6295 = vpack.c.bf16 %v6157, %v6156
    %v6296 = vpack.c.bf16 %v6159, %v6158
    %v6297 = vpack.c.bf16 %v6161, %v6160
    %v6298 = vpack.c.bf16 %v6163, %v6162
    %v6299 = vpack.c.bf16 %v6165, %v6164
    %v6300 = vpack.c.bf16 %v6167, %v6166
    %v6301 = vpack.c.bf16 %v6169, %v6168
    %v6302 = vpack.c.bf16 %v6171, %v6170
    %v6303 = vpack.c.bf16 %v6173, %v6172
    %v6304 = vpack.c.bf16 %v6175, %v6174
    %v6305 = vpack.c.bf16 %v6177, %v6176
    %v6306 = vpack.c.bf16 %v6179, %v6178
    %v6307 = vpack.c.bf16 %v6181, %v6180
    %v6308 = vpack.c.bf16 %v6183, %v6182
    %v6309 = vpack.c.bf16 %v6185, %v6184
    %v6310 = vpack.c.bf16 %v6187, %v6186
    %v6311 = vpack.c.bf16 %v6189, %v6188
    %v6312 = vpack.c.bf16 %v6191, %v6190
    %v6313 = vpack.c.bf16 %v6193, %v6192
    %v6314 = vpack.c.bf16 %v6195, %v6194
    %v6315 = vpack.c.bf16 %v6197, %v6196
    %v6316 = vpack.c.bf16 %v6199, %v6198
    %v6317 = vpack.c.bf16 %v6201, %v6200
    %v6318 = vpack.c.bf16 %v6203, %v6202
    %v6319 = vpack.c.bf16 %v6205, %v6204
    %v6320 = vpack.c.bf16 %v6207, %v6206
    %v6321 = vpack.c.bf16 %v6209, %v6208
    %v6322 = vpack.c.bf16 %v6211, %v6210
    %v6323 = vpack.c.bf16 %v6213, %v6212
    %v6324 = vpack.c.bf16 %v6215, %v6214
    %v6325 = vpack.c.bf16 %v6217, %v6216
    %v6326 = vpack.c.bf16 %v6219, %v6218
    %v6327 = vpack.c.bf16 %v6221, %v6220
    %v6328 = vpack.c.bf16 %v6223, %v6222
    %v6329 = vpack.c.bf16 %v6225, %v6224
    %v6330 = vpack.c.bf16 %v6227, %v6226
    %v6331 = vpack.c.bf16 %v6229, %v6228
    %v6332 = vpack.c.bf16 %v6231, %v6230
    %v6333 = vpack.c.bf16 %v6233, %v6232
    %v6334 = vpack.c.bf16 %v6235, %v6234
    %v6335 = vpack.c.bf16 %v6237, %v6236
    %v6336 = vpack.c.bf16 %v6239, %v6238
    %v6337 = vpack.c.bf16 %v6241, %v6240
    %v6338 = vpack.c.bf16 %v6243, %v6242
    %v6339 = vpack.c.bf16 %v6245, %v6244
    %v6340 = vpack.c.bf16 %v6247, %v6246
    %v6341 = vpack.c.bf16 %v6249, %v6248
    %v6342 = vpack.c.bf16 %v6251, %v6250
    %v6343 = vpack.c.bf16 %v6253, %v6252
    %v6344 = vpack.c.bf16 %v6255, %v6254
    %v6345 = vpack.c.bf16 %v6257, %v6256
    %v6346 = vpack.c.bf16 %v6259, %v6258
    %v6347 = vpack.c.bf16 %v6261, %v6260
    %v6348 = vpack.c.bf16 %v6263, %v6262
    %v6349 = vpack.c.bf16 %v6265, %v6264
    %v6350 = vpack.c.bf16 %v6267, %v6266
    %v6351 = vpack.c.bf16 %v6269, %v6268
    %v6352 = vpack.c.bf16 %v6271, %v6270
    %v6353 = vpack.c.bf16 %v6273, %v6272
    %v6354 = vpack.c.bf16 %v6275, %v6274
    %v6355 = vpack.c.bf16 %v6277, %v6276
    %v6356 = vpack.c.bf16 %v6279, %v6278
    %v6357 = vpack.c.bf16 %v6281, %v6280
    %v6358 = vpack.c.bf16 %v6283, %v6282
    %v6359 = vpack.c.bf16 %v6285, %v6284
    %v6360 = vpack.c.bf16 %v6287, %v6286
    %v6361 = vpack.c.bf16 %v6289, %v6288
    %v6434 = vunpack.c.l.b16 %v6290
    %v6435 = vunpack.c.h.b16 %v6290
    %v6436 = vunpack.c.l.b16 %v6291
    %v6437 = vunpack.c.h.b16 %v6291
    %v6438 = vunpack.c.l.b16 %v6292
    %v6439 = vunpack.c.h.b16 %v6292
    %v6440 = vunpack.c.l.b16 %v6293
    %v6441 = vunpack.c.h.b16 %v6293
    %v6442 = vunpack.c.l.b16 %v6294
    %v6443 = vunpack.c.h.b16 %v6294
    %v6444 = vunpack.c.l.b16 %v6295
    %v6445 = vunpack.c.h.b16 %v6295
    %v6446 = vunpack.c.l.b16 %v6296
    %v6447 = vunpack.c.h.b16 %v6296
    %v6448 = vunpack.c.l.b16 %v6297
    %v6449 = vunpack.c.h.b16 %v6297
    %v6450 = vunpack.c.l.b16 %v6298
    %v6451 = vunpack.c.h.b16 %v6298
    %v6452 = vunpack.c.l.b16 %v6299
    %v6453 = vunpack.c.h.b16 %v6299
    %v6454 = vunpack.c.l.b16 %v6300
    %v6455 = vunpack.c.h.b16 %v6300
    %v6456 = vunpack.c.l.b16 %v6301
    %v6457 = vunpack.c.h.b16 %v6301
    %v6458 = vunpack.c.l.b16 %v6302
    %v6459 = vunpack.c.h.b16 %v6302
    %v6460 = vunpack.c.l.b16 %v6303
    %v6461 = vunpack.c.h.b16 %v6303
    %v6462 = vunpack.c.l.b16 %v6304
    %v6463 = vunpack.c.h.b16 %v6304
    %v6464 = vunpack.c.l.b16 %v6305
    %v6465 = vunpack.c.h.b16 %v6305
    %v6466 = vunpack.c.l.b16 %v6306
    %v6467 = vunpack.c.h.b16 %v6306
    %v6468 = vunpack.c.l.b16 %v6307
    %v6469 = vunpack.c.h.b16 %v6307
    %v6470 = vunpack.c.l.b16 %v6308
    %v6471 = vunpack.c.h.b16 %v6308
    %v6472 = vunpack.c.l.b16 %v6309
    %v6473 = vunpack.c.h.b16 %v6309
    %v6474 = vunpack.c.l.b16 %v6310
    %v6475 = vunpack.c.h.b16 %v6310
    %v6476 = vunpack.c.l.b16 %v6311
    %v6477 = vunpack.c.h.b16 %v6311
    %v6478 = vunpack.c.l.b16 %v6312
    %v6479 = vunpack.c.h.b16 %v6312
    %v6480 = vunpack.c.l.b16 %v6313
    %v6481 = vunpack.c.h.b16 %v6313
    %v6482 = vunpack.c.l.b16 %v6314
    %v6483 = vunpack.c.h.b16 %v6314
    %v6484 = vunpack.c.l.b16 %v6315
    %v6485 = vunpack.c.h.b16 %v6315
    %v6486 = vunpack.c.l.b16 %v6316
    %v6487 = vunpack.c.h.b16 %v6316
    %v6488 = vunpack.c.l.b16 %v6317
    %v6489 = vunpack.c.h.b16 %v6317
    %v6490 = vunpack.c.l.b16 %v6318
    %v6491 = vunpack.c.h.b16 %v6318
    %v6492 = vunpack.c.l.b16 %v6319
    %v6493 = vunpack.c.h.b16 %v6319
    %v6494 = vunpack.c.l.b16 %v6320
    %v6495 = vunpack.c.h.b16 %v6320
    %v6496 = vunpack.c.l.b16 %v6321
    %v6497 = vunpack.c.h.b16 %v6321
    %v6498 = vunpack.c.l.b16 %v6322
    %v6499 = vunpack.c.h.b16 %v6322
    %v6500 = vunpack.c.l.b16 %v6323
    %v6501 = vunpack.c.h.b16 %v6323
    %v6502 = vunpack.c.l.b16 %v6324
    %v6503 = vunpack.c.h.b16 %v6324
    %v6504 = vunpack.c.l.b16 %v6325
    %v6505 = vunpack.c.h.b16 %v6325
    %v6506 = vunpack.c.l.b16 %v6326
    %v6507 = vunpack.c.h.b16 %v6326
    %v6508 = vunpack.c.l.b16 %v6327
    %v6509 = vunpack.c.h.b16 %v6327
    %v6510 = vunpack.c.l.b16 %v6328
    %v6511 = vunpack.c.h.b16 %v6328
    %v6512 = vunpack.c.l.b16 %v6329
    %v6513 = vunpack.c.h.b16 %v6329
    %v6514 = vunpack.c.l.b16 %v6330
    %v6515 = vunpack.c.h.b16 %v6330
    %v6516 = vunpack.c.l.b16 %v6331
    %v6517 = vunpack.c.h.b16 %v6331
    %v6518 = vunpack.c.l.b16 %v6332
    %v6519 = vunpack.c.h.b16 %v6332
    %v6520 = vunpack.c.l.b16 %v6333
    %v6521 = vunpack.c.h.b16 %v6333
    %v6522 = vunpack.c.l.b16 %v6334
    %v6523 = vunpack.c.h.b16 %v6334
    %v6524 = vunpack.c.l.b16 %v6335
    %v6525 = vunpack.c.h.b16 %v6335
    %v6526 = vunpack.c.l.b16 %v6336
    %v6527 = vunpack.c.h.b16 %v6336
    %v6528 = vunpack.c.l.b16 %v6337
    %v6529 = vunpack.c.h.b16 %v6337
    %v6530 = vunpack.c.l.b16 %v6338
    %v6531 = vunpack.c.h.b16 %v6338
    %v6532 = vunpack.c.l.b16 %v6339
    %v6533 = vunpack.c.h.b16 %v6339
    %v6534 = vunpack.c.l.b16 %v6340
    %v6535 = vunpack.c.h.b16 %v6340
    %v6536 = vunpack.c.l.b16 %v6341
    %v6537 = vunpack.c.h.b16 %v6341
    %v6538 = vunpack.c.l.b16 %v6342
    %v6539 = vunpack.c.h.b16 %v6342
    %v6540 = vunpack.c.l.b16 %v6343
    %v6541 = vunpack.c.h.b16 %v6343
    %v6542 = vunpack.c.l.b16 %v6344
    %v6543 = vunpack.c.h.b16 %v6344
    %v6544 = vunpack.c.l.b16 %v6345
    %v6545 = vunpack.c.h.b16 %v6345
    %v6546 = vunpack.c.l.b16 %v6346
    %v6547 = vunpack.c.h.b16 %v6346
    %v6548 = vunpack.c.l.b16 %v6347
    %v6549 = vunpack.c.h.b16 %v6347
    %v6550 = vunpack.c.l.b16 %v6348
    %v6551 = vunpack.c.h.b16 %v6348
    %v6552 = vunpack.c.l.b16 %v6349
    %v6553 = vunpack.c.h.b16 %v6349
    %v6554 = vunpack.c.l.b16 %v6350
    %v6555 = vunpack.c.h.b16 %v6350
    %v6556 = vunpack.c.l.b16 %v6351
    %v6557 = vunpack.c.h.b16 %v6351
    %v6558 = vunpack.c.l.b16 %v6352
    %v6559 = vunpack.c.h.b16 %v6352
    %v6560 = vunpack.c.l.b16 %v6353
    %v6561 = vunpack.c.h.b16 %v6353
    %v6562 = vunpack.c.l.b16 %v6354
    %v6563 = vunpack.c.h.b16 %v6354
    %v6564 = vunpack.c.l.b16 %v6355
    %v6565 = vunpack.c.h.b16 %v6355
    %v6566 = vunpack.c.l.b16 %v6356
    %v6567 = vunpack.c.h.b16 %v6356
    %v6568 = vunpack.c.l.b16 %v6357
    %v6569 = vunpack.c.h.b16 %v6357
    %v6570 = vunpack.c.l.b16 %v6358
    %v6571 = vunpack.c.h.b16 %v6358
    %v6572 = vunpack.c.l.b16 %v6359
    %v6573 = vunpack.c.h.b16 %v6359
    %v6574 = vunpack.c.l.b16 %v6360
    %v6575 = vunpack.c.h.b16 %v6360
    %v6576 = vunpack.c.l.b16 %v6361
    %v6577 = vunpack.c.h.b16 %v6361
    %v6578 = vpack.c.b16 %v6434, %v6434
    %v6579 = vpack.c.b16 %v6435, %v6435
    %v6580 = vpack.c.b16 %v6436, %v6436
    %v6581 = vpack.c.b16 %v6437, %v6437
    %v6582 = vpack.c.b16 %v6438, %v6438
    %v6583 = vpack.c.b16 %v6439, %v6439
    %v6584 = vpack.c.b16 %v6440, %v6440
    %v6585 = vpack.c.b16 %v6441, %v6441
    %v6586 = vpack.c.b16 %v6442, %v6442
    %v6587 = vpack.c.b16 %v6443, %v6443
    %v6588 = vpack.c.b16 %v6444, %v6444
    %v6589 = vpack.c.b16 %v6445, %v6445
    %v6590 = vpack.c.b16 %v6446, %v6446
    %v6591 = vpack.c.b16 %v6447, %v6447
    %v6592 = vpack.c.b16 %v6448, %v6448
    %v6593 = vpack.c.b16 %v6449, %v6449
    %v6594 = vpack.c.b16 %v6450, %v6450
    %v6595 = vpack.c.b16 %v6451, %v6451
    %v6596 = vpack.c.b16 %v6452, %v6452
    %v6597 = vpack.c.b16 %v6453, %v6453
    %v6598 = vpack.c.b16 %v6454, %v6454
    %v6599 = vpack.c.b16 %v6455, %v6455
    %v6600 = vpack.c.b16 %v6456, %v6456
    %v6601 = vpack.c.b16 %v6457, %v6457
    %v6602 = vpack.c.b16 %v6458, %v6458
    %v6603 = vpack.c.b16 %v6459, %v6459
    %v6604 = vpack.c.b16 %v6460, %v6460
    %v6605 = vpack.c.b16 %v6461, %v6461
    %v6606 = vpack.c.b16 %v6462, %v6462
    %v6607 = vpack.c.b16 %v6463, %v6463
    %v6608 = vpack.c.b16 %v6464, %v6464
    %v6609 = vpack.c.b16 %v6465, %v6465
    %v6610 = vpack.c.b16 %v6466, %v6466
    %v6611 = vpack.c.b16 %v6467, %v6467
    %v6612 = vpack.c.b16 %v6468, %v6468
    %v6613 = vpack.c.b16 %v6469, %v6469
    %v6614 = vpack.c.b16 %v6470, %v6470
    %v6615 = vpack.c.b16 %v6471, %v6471
    %v6616 = vpack.c.b16 %v6472, %v6472
    %v6617 = vpack.c.b16 %v6473, %v6473
    %v6618 = vpack.c.b16 %v6474, %v6474
    %v6619 = vpack.c.b16 %v6475, %v6475
    %v6620 = vpack.c.b16 %v6476, %v6476
    %v6621 = vpack.c.b16 %v6477, %v6477
    %v6622 = vpack.c.b16 %v6478, %v6478
    %v6623 = vpack.c.b16 %v6479, %v6479
    %v6624 = vpack.c.b16 %v6480, %v6480
    %v6625 = vpack.c.b16 %v6481, %v6481
    %v6626 = vpack.c.b16 %v6482, %v6482
    %v6627 = vpack.c.b16 %v6483, %v6483
    %v6628 = vpack.c.b16 %v6484, %v6484
    %v6629 = vpack.c.b16 %v6485, %v6485
    %v6630 = vpack.c.b16 %v6486, %v6486
    %v6631 = vpack.c.b16 %v6487, %v6487
    %v6632 = vpack.c.b16 %v6488, %v6488
    %v6633 = vpack.c.b16 %v6489, %v6489
    %v6634 = vpack.c.b16 %v6490, %v6490
    %v6635 = vpack.c.b16 %v6491, %v6491
    %v6636 = vpack.c.b16 %v6492, %v6492
    %v6637 = vpack.c.b16 %v6493, %v6493
    %v6638 = vpack.c.b16 %v6494, %v6494
    %v6639 = vpack.c.b16 %v6495, %v6495
    %v6640 = vpack.c.b16 %v6496, %v6496
    %v6641 = vpack.c.b16 %v6497, %v6497
    %v6642 = vpack.c.b16 %v6498, %v6498
    %v6643 = vpack.c.b16 %v6499, %v6499
    %v6644 = vpack.c.b16 %v6500, %v6500
    %v6645 = vpack.c.b16 %v6501, %v6501
    %v6646 = vpack.c.b16 %v6502, %v6502
    %v6647 = vpack.c.b16 %v6503, %v6503
    %v6648 = vpack.c.b16 %v6504, %v6504
    %v6649 = vpack.c.b16 %v6505, %v6505
    %v6650 = vpack.c.b16 %v6506, %v6506
    %v6651 = vpack.c.b16 %v6507, %v6507
    %v6652 = vpack.c.b16 %v6508, %v6508
    %v6653 = vpack.c.b16 %v6509, %v6509
    %v6654 = vpack.c.b16 %v6510, %v6510
    %v6655 = vpack.c.b16 %v6511, %v6511
    %v6656 = vpack.c.b16 %v6512, %v6512
    %v6657 = vpack.c.b16 %v6513, %v6513
    %v6658 = vpack.c.b16 %v6514, %v6514
    %v6659 = vpack.c.b16 %v6515, %v6515
    %v6660 = vpack.c.b16 %v6516, %v6516
    %v6661 = vpack.c.b16 %v6517, %v6517
    %v6662 = vpack.c.b16 %v6518, %v6518
    %v6663 = vpack.c.b16 %v6519, %v6519
    %v6664 = vpack.c.b16 %v6520, %v6520
    %v6665 = vpack.c.b16 %v6521, %v6521
    %v6666 = vpack.c.b16 %v6522, %v6522
    %v6667 = vpack.c.b16 %v6523, %v6523
    %v6668 = vpack.c.b16 %v6524, %v6524
    %v6669 = vpack.c.b16 %v6525, %v6525
    %v6670 = vpack.c.b16 %v6526, %v6526
    %v6671 = vpack.c.b16 %v6527, %v6527
    %v6672 = vpack.c.b16 %v6528, %v6528
    %v6673 = vpack.c.b16 %v6529, %v6529
    %v6674 = vpack.c.b16 %v6530, %v6530
    %v6675 = vpack.c.b16 %v6531, %v6531
    %v6676 = vpack.c.b16 %v6532, %v6532
    %v6677 = vpack.c.b16 %v6533, %v6533
    %v6678 = vpack.c.b16 %v6534, %v6534
    %v6679 = vpack.c.b16 %v6535, %v6535
    %v6680 = vpack.c.b16 %v6536, %v6536
    %v6681 = vpack.c.b16 %v6537, %v6537
    %v6682 = vpack.c.b16 %v6538, %v6538
    %v6683 = vpack.c.b16 %v6539, %v6539
    %v6684 = vpack.c.b16 %v6540, %v6540
    %v6685 = vpack.c.b16 %v6541, %v6541
    %v6686 = vpack.c.b16 %v6542, %v6542
    %v6687 = vpack.c.b16 %v6543, %v6543
    %v6688 = vpack.c.b16 %v6544, %v6544
    %v6689 = vpack.c.b16 %v6545, %v6545
    %v6690 = vpack.c.b16 %v6546, %v6546
    %v6691 = vpack.c.b16 %v6547, %v6547
    %v6692 = vpack.c.b16 %v6548, %v6548
    %v6693 = vpack.c.b16 %v6549, %v6549
    %v6694 = vpack.c.b16 %v6550, %v6550
    %v6695 = vpack.c.b16 %v6551, %v6551
    %v6696 = vpack.c.b16 %v6552, %v6552
    %v6697 = vpack.c.b16 %v6553, %v6553
    %v6698 = vpack.c.b16 %v6554, %v6554
    %v6699 = vpack.c.b16 %v6555, %v6555
    %v6700 = vpack.c.b16 %v6556, %v6556
    %v6701 = vpack.c.b16 %v6557, %v6557
    %v6702 = vpack.c.b16 %v6558, %v6558
    %v6703 = vpack.c.b16 %v6559, %v6559
    %v6704 = vpack.c.b16 %v6560, %v6560
    %v6705 = vpack.c.b16 %v6561, %v6561
    %v6706 = vpack.c.b16 %v6562, %v6562
    %v6707 = vpack.c.b16 %v6563, %v6563
    %v6708 = vpack.c.b16 %v6564, %v6564
    %v6709 = vpack.c.b16 %v6565, %v6565
    %v6710 = vpack.c.b16 %v6566, %v6566
    %v6711 = vpack.c.b16 %v6567, %v6567
    %v6712 = vpack.c.b16 %v6568, %v6568
    %v6713 = vpack.c.b16 %v6569, %v6569
    %v6714 = vpack.c.b16 %v6570, %v6570
    %v6715 = vpack.c.b16 %v6571, %v6571
    %v6716 = vpack.c.b16 %v6572, %v6572
    %v6717 = vpack.c.b16 %v6573, %v6573
    %v6718 = vpack.c.b16 %v6574, %v6574
    %v6719 = vpack.c.b16 %v6575, %v6575
    %v6720 = vpack.c.b16 %v6576, %v6576
    %v6721 = vpack.c.b16 %v6577, %v6577
    %vm6866 = vcmask 257024
    %6867 = vst.msk [vmem:[%s3] sm:$0xf] %vm6866, %v6578
    %6868 = vst.msk [vmem:[%s3 + $0x4] sm:$0xf] %vm6866, %v6579
    %6869 = vst.msk [vmem:[%s3 + $0x8] sm:$0xf] %vm6866, %v6580
    %6870 = vst.msk [vmem:[%s3 + $0xc] sm:$0xf] %vm6866, %v6581
    %6871 = vst.msk [vmem:[%s3 + $0x10] sm:$0xf] %vm6866, %v6582
    %6872 = vst.msk [vmem:[%s3 + $0x14] sm:$0xf] %vm6866, %v6583
    %6873 = vst.msk [vmem:[%s3 + $0x18] sm:$0xf] %vm6866, %v6584
    %6874 = vst.msk [vmem:[%s3 + $0x1c] sm:$0xf] %vm6866, %v6585
    %6875 = vst.msk [vmem:[%s3 + $0x20] sm:$0xf] %vm6866, %v6586
    %6876 = vst.msk [vmem:[%s3 + $0x24] sm:$0xf] %vm6866, %v6587
    %6877 = vst.msk [vmem:[%s3 + $0x28] sm:$0xf] %vm6866, %v6588
    %6878 = vst.msk [vmem:[%s3 + $0x2c] sm:$0xf] %vm6866, %v6589
    %6879 = vst.msk [vmem:[%s3 + $0x30] sm:$0xf] %vm6866, %v6590
    %6880 = vst.msk [vmem:[%s3 + $0x34] sm:$0xf] %vm6866, %v6591
    %6881 = vst.msk [vmem:[%s3 + $0x38] sm:$0xf] %vm6866, %v6592
    %6882 = vst.msk [vmem:[%s3 + $0x3c] sm:$0xf] %vm6866, %v6593
    %6883 = vst.msk [vmem:[%s3 + $0x40] sm:$0xf] %vm6866, %v6594
    %6884 = vst.msk [vmem:[%s3 + $0x44] sm:$0xf] %vm6866, %v6595
    %6885 = vst.msk [vmem:[%s3 + $0x48] sm:$0xf] %vm6866, %v6596
    %6886 = vst.msk [vmem:[%s3 + $0x4c] sm:$0xf] %vm6866, %v6597
    %6887 = vst.msk [vmem:[%s3 + $0x50] sm:$0xf] %vm6866, %v6598
    %6888 = vst.msk [vmem:[%s3 + $0x54] sm:$0xf] %vm6866, %v6599
    %6889 = vst.msk [vmem:[%s3 + $0x58] sm:$0xf] %vm6866, %v6600
    %6890 = vst.msk [vmem:[%s3 + $0x5c] sm:$0xf] %vm6866, %v6601
    %6891 = vst.msk [vmem:[%s3 + $0x60] sm:$0xf] %vm6866, %v6602
    %6892 = vst.msk [vmem:[%s3 + $0x64] sm:$0xf] %vm6866, %v6603
    %6893 = vst.msk [vmem:[%s3 + $0x68] sm:$0xf] %vm6866, %v6604
    %6894 = vst.msk [vmem:[%s3 + $0x6c] sm:$0xf] %vm6866, %v6605
    %6895 = vst.msk [vmem:[%s3 + $0x70] sm:$0xf] %vm6866, %v6606
    %6896 = vst.msk [vmem:[%s3 + $0x74] sm:$0xf] %vm6866, %v6607
    %6897 = vst.msk [vmem:[%s3 + $0x78] sm:$0xf] %vm6866, %v6608
    %6898 = vst.msk [vmem:[%s3 + $0x7c] sm:$0xf] %vm6866, %v6609
    %6899 = vst.msk [vmem:[%s3 + $0x80] sm:$0xf] %vm6866, %v6610
    %6900 = vst.msk [vmem:[%s3 + $0x84] sm:$0xf] %vm6866, %v6611
    %6901 = vst.msk [vmem:[%s3 + $0x88] sm:$0xf] %vm6866, %v6612
    %6902 = vst.msk [vmem:[%s3 + $0x8c] sm:$0xf] %vm6866, %v6613
    %6903 = vst.msk [vmem:[%s3 + $0x90] sm:$0xf] %vm6866, %v6614
    %6904 = vst.msk [vmem:[%s3 + $0x94] sm:$0xf] %vm6866, %v6615
    %6905 = vst.msk [vmem:[%s3 + $0x98] sm:$0xf] %vm6866, %v6616
    %6906 = vst.msk [vmem:[%s3 + $0x9c] sm:$0xf] %vm6866, %v6617
    %6907 = vst.msk [vmem:[%s3 + $0xa0] sm:$0xf] %vm6866, %v6618
    %6908 = vst.msk [vmem:[%s3 + $0xa4] sm:$0xf] %vm6866, %v6619
    %6909 = vst.msk [vmem:[%s3 + $0xa8] sm:$0xf] %vm6866, %v6620
    %6910 = vst.msk [vmem:[%s3 + $0xac] sm:$0xf] %vm6866, %v6621
    %6911 = vst.msk [vmem:[%s3 + $0xb0] sm:$0xf] %vm6866, %v6622
    %6912 = vst.msk [vmem:[%s3 + $0xb4] sm:$0xf] %vm6866, %v6623
    %6913 = vst.msk [vmem:[%s3 + $0xb8] sm:$0xf] %vm6866, %v6624
    %6914 = vst.msk [vmem:[%s3 + $0xbc] sm:$0xf] %vm6866, %v6625
    %6915 = vst.msk [vmem:[%s3 + $0xc0] sm:$0xf] %vm6866, %v6626
    %6916 = vst.msk [vmem:[%s3 + $0xc4] sm:$0xf] %vm6866, %v6627
    %6917 = vst.msk [vmem:[%s3 + $0xc8] sm:$0xf] %vm6866, %v6628
    %6918 = vst.msk [vmem:[%s3 + $0xcc] sm:$0xf] %vm6866, %v6629
    %6919 = vst.msk [vmem:[%s3 + $0xd0] sm:$0xf] %vm6866, %v6630
    %6920 = vst.msk [vmem:[%s3 + $0xd4] sm:$0xf] %vm6866, %v6631
    %6921 = vst.msk [vmem:[%s3 + $0xd8] sm:$0xf] %vm6866, %v6632
    %6922 = vst.msk [vmem:[%s3 + $0xdc] sm:$0xf] %vm6866, %v6633
    %6923 = vst.msk [vmem:[%s3 + $0xe0] sm:$0xf] %vm6866, %v6634
    %6924 = vst.msk [vmem:[%s3 + $0xe4] sm:$0xf] %vm6866, %v6635
    %6925 = vst.msk [vmem:[%s3 + $0xe8] sm:$0xf] %vm6866, %v6636
    %6926 = vst.msk [vmem:[%s3 + $0xec] sm:$0xf] %vm6866, %v6637
    %6927 = vst.msk [vmem:[%s3 + $0xf0] sm:$0xf] %vm6866, %v6638
    %6928 = vst.msk [vmem:[%s3 + $0xf4] sm:$0xf] %vm6866, %v6639
    %6929 = vst.msk [vmem:[%s3 + $0xf8] sm:$0xf] %vm6866, %v6640
    %6930 = vst.msk [vmem:[%s3 + $0xfc] sm:$0xf] %vm6866, %v6641
    %6931 = vst.msk [vmem:[%s3 + $0x100] sm:$0xf] %vm6866, %v6642
    %6932 = vst.msk [vmem:[%s3 + $0x104] sm:$0xf] %vm6866, %v6643
    %6933 = vst.msk [vmem:[%s3 + $0x108] sm:$0xf] %vm6866, %v6644
    %6934 = vst.msk [vmem:[%s3 + $0x10c] sm:$0xf] %vm6866, %v6645
    %6935 = vst.msk [vmem:[%s3 + $0x110] sm:$0xf] %vm6866, %v6646
    %6936 = vst.msk [vmem:[%s3 + $0x114] sm:$0xf] %vm6866, %v6647
    %6937 = vst.msk [vmem:[%s3 + $0x118] sm:$0xf] %vm6866, %v6648
    %6938 = vst.msk [vmem:[%s3 + $0x11c] sm:$0xf] %vm6866, %v6649
    %6939 = vst.msk [vmem:[%s3 + $0x120] sm:$0xf] %vm6866, %v6650
    %6940 = vst.msk [vmem:[%s3 + $0x124] sm:$0xf] %vm6866, %v6651
    %6941 = vst.msk [vmem:[%s3 + $0x128] sm:$0xf] %vm6866, %v6652
    %6942 = vst.msk [vmem:[%s3 + $0x12c] sm:$0xf] %vm6866, %v6653
    %6943 = vst.msk [vmem:[%s3 + $0x130] sm:$0xf] %vm6866, %v6654
    %6944 = vst.msk [vmem:[%s3 + $0x134] sm:$0xf] %vm6866, %v6655
    %6945 = vst.msk [vmem:[%s3 + $0x138] sm:$0xf] %vm6866, %v6656
    %6946 = vst.msk [vmem:[%s3 + $0x13c] sm:$0xf] %vm6866, %v6657
    %6947 = vst.msk [vmem:[%s3 + $0x140] sm:$0xf] %vm6866, %v6658
    %6948 = vst.msk [vmem:[%s3 + $0x144] sm:$0xf] %vm6866, %v6659
    %6949 = vst.msk [vmem:[%s3 + $0x148] sm:$0xf] %vm6866, %v6660
    %6950 = vst.msk [vmem:[%s3 + $0x14c] sm:$0xf] %vm6866, %v6661
    %6951 = vst.msk [vmem:[%s3 + $0x150] sm:$0xf] %vm6866, %v6662
    %6952 = vst.msk [vmem:[%s3 + $0x154] sm:$0xf] %vm6866, %v6663
    %6953 = vst.msk [vmem:[%s3 + $0x158] sm:$0xf] %vm6866, %v6664
    %6954 = vst.msk [vmem:[%s3 + $0x15c] sm:$0xf] %vm6866, %v6665
    %6955 = vst.msk [vmem:[%s3 + $0x160] sm:$0xf] %vm6866, %v6666
    %6956 = vst.msk [vmem:[%s3 + $0x164] sm:$0xf] %vm6866, %v6667
    %6957 = vst.msk [vmem:[%s3 + $0x168] sm:$0xf] %vm6866, %v6668
    %6958 = vst.msk [vmem:[%s3 + $0x16c] sm:$0xf] %vm6866, %v6669
    %6959 = vst.msk [vmem:[%s3 + $0x170] sm:$0xf] %vm6866, %v6670
    %6960 = vst.msk [vmem:[%s3 + $0x174] sm:$0xf] %vm6866, %v6671
    %6961 = vst.msk [vmem:[%s3 + $0x178] sm:$0xf] %vm6866, %v6672
    %6962 = vst.msk [vmem:[%s3 + $0x17c] sm:$0xf] %vm6866, %v6673
    %6963 = vst.msk [vmem:[%s3 + $0x180] sm:$0xf] %vm6866, %v6674
    %6964 = vst.msk [vmem:[%s3 + $0x184] sm:$0xf] %vm6866, %v6675
    %6965 = vst.msk [vmem:[%s3 + $0x188] sm:$0xf] %vm6866, %v6676
    %6966 = vst.msk [vmem:[%s3 + $0x18c] sm:$0xf] %vm6866, %v6677
    %6967 = vst.msk [vmem:[%s3 + $0x190] sm:$0xf] %vm6866, %v6678
    %6968 = vst.msk [vmem:[%s3 + $0x194] sm:$0xf] %vm6866, %v6679
    %6969 = vst.msk [vmem:[%s3 + $0x198] sm:$0xf] %vm6866, %v6680
    %6970 = vst.msk [vmem:[%s3 + $0x19c] sm:$0xf] %vm6866, %v6681
    %6971 = vst.msk [vmem:[%s3 + $0x1a0] sm:$0xf] %vm6866, %v6682
    %6972 = vst.msk [vmem:[%s3 + $0x1a4] sm:$0xf] %vm6866, %v6683
    %6973 = vst.msk [vmem:[%s3 + $0x1a8] sm:$0xf] %vm6866, %v6684
    %6974 = vst.msk [vmem:[%s3 + $0x1ac] sm:$0xf] %vm6866, %v6685
    %6975 = vst.msk [vmem:[%s3 + $0x1b0] sm:$0xf] %vm6866, %v6686
    %6976 = vst.msk [vmem:[%s3 + $0x1b4] sm:$0xf] %vm6866, %v6687
    %6977 = vst.msk [vmem:[%s3 + $0x1b8] sm:$0xf] %vm6866, %v6688
    %6978 = vst.msk [vmem:[%s3 + $0x1bc] sm:$0xf] %vm6866, %v6689
    %6979 = vst.msk [vmem:[%s3 + $0x1c0] sm:$0xf] %vm6866, %v6690
    %6980 = vst.msk [vmem:[%s3 + $0x1c4] sm:$0xf] %vm6866, %v6691
    %6981 = vst.msk [vmem:[%s3 + $0x1c8] sm:$0xf] %vm6866, %v6692
    %6982 = vst.msk [vmem:[%s3 + $0x1cc] sm:$0xf] %vm6866, %v6693
    %6983 = vst.msk [vmem:[%s3 + $0x1d0] sm:$0xf] %vm6866, %v6694
    %6984 = vst.msk [vmem:[%s3 + $0x1d4] sm:$0xf] %vm6866, %v6695
    %6985 = vst.msk [vmem:[%s3 + $0x1d8] sm:$0xf] %vm6866, %v6696
    %6986 = vst.msk [vmem:[%s3 + $0x1dc] sm:$0xf] %vm6866, %v6697
    %6987 = vst.msk [vmem:[%s3 + $0x1e0] sm:$0xf] %vm6866, %v6698
    %6988 = vst.msk [vmem:[%s3 + $0x1e4] sm:$0xf] %vm6866, %v6699
    %6989 = vst.msk [vmem:[%s3 + $0x1e8] sm:$0xf] %vm6866, %v6700
    %6990 = vst.msk [vmem:[%s3 + $0x1ec] sm:$0xf] %vm6866, %v6701
    %6991 = vst.msk [vmem:[%s3 + $0x1f0] sm:$0xf] %vm6866, %v6702
    %6992 = vst.msk [vmem:[%s3 + $0x1f4] sm:$0xf] %vm6866, %v6703
    %6993 = vst.msk [vmem:[%s3 + $0x1f8] sm:$0xf] %vm6866, %v6704
    %6994 = vst.msk [vmem:[%s3 + $0x1fc] sm:$0xf] %vm6866, %v6705
    %6995 = vst.msk [vmem:[%s3 + $0x200] sm:$0xf] %vm6866, %v6706
    %6996 = vst.msk [vmem:[%s3 + $0x204] sm:$0xf] %vm6866, %v6707
    %6997 = vst.msk [vmem:[%s3 + $0x208] sm:$0xf] %vm6866, %v6708
    %6998 = vst.msk [vmem:[%s3 + $0x20c] sm:$0xf] %vm6866, %v6709
    %6999 = vst.msk [vmem:[%s3 + $0x210] sm:$0xf] %vm6866, %v6710
    %7000 = vst.msk [vmem:[%s3 + $0x214] sm:$0xf] %vm6866, %v6711
    %7001 = vst.msk [vmem:[%s3 + $0x218] sm:$0xf] %vm6866, %v6712
    %7002 = vst.msk [vmem:[%s3 + $0x21c] sm:$0xf] %vm6866, %v6713
    %7003 = vst.msk [vmem:[%s3 + $0x220] sm:$0xf] %vm6866, %v6714
    %7004 = vst.msk [vmem:[%s3 + $0x224] sm:$0xf] %vm6866, %v6715
    %7005 = vst.msk [vmem:[%s3 + $0x228] sm:$0xf] %vm6866, %v6716
    %7006 = vst.msk [vmem:[%s3 + $0x22c] sm:$0xf] %vm6866, %v6717
    %7007 = vst.msk [vmem:[%s3 + $0x230] sm:$0xf] %vm6866, %v6718
    %7008 = vst.msk [vmem:[%s3 + $0x234] sm:$0xf] %vm6866, %v6719
    %7009 = vst.msk [vmem:[%s3 + $0x238] sm:$0xf] %vm6866, %v6720
    %7010 = vst.msk [vmem:[%s3 + $0x23c] sm:$0xf] %vm6866, %v6721
    // Predicated region
    $region22: #{neural_network_forward.2} parent=1 // pred_check
      _
    $region23: #{neural_network_forward.2} parent=1 // pred_check_branch
      %7012 = sbr.rel (0) target = $region25
    $region24: #{neural_network_forward.2} parent=1 // pred_region
      _
    $region25: #{neural_network_forward.2} parent=1 // pred_fallthru
      _
    // Predicated region
    $region26: #{neural_network_forward.2} parent=1 // pred_check
      _
    $region27: #{neural_network_forward.2} parent=1 // pred_check_branch
      %7014 = sbr.rel (0) target = $region29
    $region28: #{neural_network_forward.2} parent=1 // pred_region
      _
    $region29: #{neural_network_forward.2} parent=1 // pred_fallthru
      _
    %7015 = vsyncpa [#allocation3], 1
    %7016 = vsyncpa [#allocation5], 1

// kernel: neural_network_forward.3
$region0: #{neural_network_forward.3}
  #allocation0 [shape = 'u32[]', space=smem, size = 0x4, offset = 0x4, fixed_abs, tag = 'smem constant byte address 0x4 - core index']
  #allocation1 [shape = 'u32[144,128]{1,0:T(1,128)}', space=vmem, size = 0x12000, scoped, tag = 'internal scratch']
  %s0 = inlined_call_operand.vmem [shape: bf16[8,4608], index: 0, kind: input, shape index: {}]
  %s1 = inlined_call_operand.vmem [shape: bf16[4608,512], index: 1, kind: input, shape index: {}]
  %s2 = inlined_call_operand.vmem [shape: f32[1,512], index: 2, kind: input, shape index: {}]
  %s3 = inlined_call_operand.vmem [shape: bf16[512,128], index: 3, kind: input, shape index: {}]
  %s4 = inlined_call_operand.vmem [shape: f32[1,128], index: 4, kind: input, shape index: {}]
  %s5 = inlined_call_operand.vmem [shape: f32[8,128], index: 5, kind: output, shape index: {}]
  %s6 = sld [smem:[#allocation0]]
  $region30: #{neural_network_forward.3} parent=0
    _
  %s8 = ssub.s32 1, %s6
  %s9 = scalar_select 0, %s8, %s6
  // Predicated region
  $region2: #{neural_network_forward.3} parent=0 // pred_check
    _
  $region3: #{neural_network_forward.3} parent=0 // pred_check_branch
    %11 = sbr.rel (0) target = $region5
  $region4: #{neural_network_forward.3} parent=0 // pred_region
    _
  $region5: #{neural_network_forward.3} parent=0 // pred_fallthru
    _
  // Predicated region
  $region6: #{neural_network_forward.3} parent=0 // pred_check
    _
  $region7: #{neural_network_forward.3} parent=0 // pred_check_branch
    %13 = sbr.rel (0) target = $region9
  $region8: #{neural_network_forward.3} parent=0 // pred_region
    _
  $region9: #{neural_network_forward.3} parent=0 // pred_fallthru
    _
  // Predicated region
  $region10: #{neural_network_forward.3} parent=0 // pred_check
    _
  $region11: #{neural_network_forward.3} parent=0 // pred_check_branch
    %15 = sbr.rel (0) target = $region13
  $region12: #{neural_network_forward.3} parent=0 // pred_region
    _
  $region13: #{neural_network_forward.3} parent=0 // pred_fallthru
    _
  // Predicated region
  $region14: #{neural_network_forward.3} parent=0 // pred_check
    _
  $region15: #{neural_network_forward.3} parent=0 // pred_check_branch
    %17 = sbr.rel (0) target = $region17
  $region16: #{neural_network_forward.3} parent=0 // pred_region
    _
  $region17: #{neural_network_forward.3} parent=0 // pred_fallthru
    _
  // Predicated region
  $region18: #{neural_network_forward.3} parent=0 // pred_check
    _
  $region19: #{neural_network_forward.3} parent=0 // pred_check_branch
    %19 = sbr.rel (0) target = $region21
  $region20: #{neural_network_forward.3} parent=0 // pred_region
    _
  $region21: #{neural_network_forward.3} parent=0 // pred_fallthru
    _
  %v21 = vld [vmem:[%s0] sm:$0xff]
  %v22 = vld [vmem:[%s0 + $0x8] sm:$0xff]
  %v23 = vld [vmem:[%s0 + $0x10] sm:$0xff]
  %v24 = vld [vmem:[%s0 + $0x18] sm:$0xff]
  %v25 = vld [vmem:[%s0 + $0x20] sm:$0xff]
  %v26 = vld [vmem:[%s0 + $0x28] sm:$0xff]
  %v27 = vld [vmem:[%s0 + $0x30] sm:$0xff]
  %v28 = vld [vmem:[%s0 + $0x38] sm:$0xff]
  %v29 = vld [vmem:[%s0 + $0x40] sm:$0xff]
  %v30 = vld [vmem:[%s0 + $0x48] sm:$0xff]
  %v31 = vld [vmem:[%s0 + $0x50] sm:$0xff]
  %v32 = vld [vmem:[%s0 + $0x58] sm:$0xff]
  %v33 = vld [vmem:[%s0 + $0x60] sm:$0xff]
  %v34 = vld [vmem:[%s0 + $0x68] sm:$0xff]
  %v35 = vld [vmem:[%s0 + $0x70] sm:$0xff]
  %v36 = vld [vmem:[%s0 + $0x78] sm:$0xff]
  %v37 = vld [vmem:[%s0 + $0x80] sm:$0xff]
  %v38 = vld [vmem:[%s0 + $0x88] sm:$0xff]
  %v39 = vld [vmem:[%s1] sm:$0xff]
  %v40 = vld [vmem:[%s1 + $0x8] sm:$0xff]
  %v41 = vld [vmem:[%s1 + $0x10] sm:$0xff]
  %v42 = vld [vmem:[%s1 + $0x18] sm:$0xff]
  %v43 = vld [vmem:[%s1 + $0x20] sm:$0xff]
  %v44 = vld [vmem:[%s1 + $0x28] sm:$0xff]
  %v45 = vld [vmem:[%s1 + $0x30] sm:$0xff]
  %v46 = vld [vmem:[%s1 + $0x38] sm:$0xff]
  %v47 = vld [vmem:[%s1 + $0x40] sm:$0xff]
  %v48 = vld [vmem:[%s1 + $0x48] sm:$0xff]
  %v49 = vld [vmem:[%s1 + $0x50] sm:$0xff]
  %v50 = vld [vmem:[%s1 + $0x58] sm:$0xff]
  %v51 = vld [vmem:[%s1 + $0x60] sm:$0xff]
  %v52 = vld [vmem:[%s1 + $0x68] sm:$0xff]
  %v53 = vld [vmem:[%s1 + $0x70] sm:$0xff]
  %v54 = vld [vmem:[%s1 + $0x78] sm:$0xff]
  %v55 = vld [vmem:[%s1 + $0x80] sm:$0xff]
  %v56 = vld [vmem:[%s1 + $0x88] sm:$0xff]
  %v57 = vld [vmem:[%s1 + $0x90] sm:$0xff]
  %v58 = vld [vmem:[%s1 + $0x98] sm:$0xff]
  %v59 = vld [vmem:[%s1 + $0xa0] sm:$0xff]
  %v60 = vld [vmem:[%s1 + $0xa8] sm:$0xff]
  %v61 = vld [vmem:[%s1 + $0xb0] sm:$0xff]
  %v62 = vld [vmem:[%s1 + $0xb8] sm:$0xff]
  %v63 = vld [vmem:[%s1 + $0xc0] sm:$0xff]
  %v64 = vld [vmem:[%s1 + $0xc8] sm:$0xff]
  %v65 = vld [vmem:[%s1 + $0xd0] sm:$0xff]
  %v66 = vld [vmem:[%s1 + $0xd8] sm:$0xff]
  %v67 = vld [vmem:[%s1 + $0xe0] sm:$0xff]
  %v68 = vld [vmem:[%s1 + $0xe8] sm:$0xff]
  %v69 = vld [vmem:[%s1 + $0xf0] sm:$0xff]
  %v70 = vld [vmem:[%s1 + $0xf8] sm:$0xff]
  %v71 = vld [vmem:[%s1 + $0x100] sm:$0xff]
  %v72 = vld [vmem:[%s1 + $0x108] sm:$0xff]
  %v73 = vld [vmem:[%s1 + $0x110] sm:$0xff]
  %v74 = vld [vmem:[%s1 + $0x118] sm:$0xff]
  %v75 = vld [vmem:[%s1 + $0x120] sm:$0xff]
  %v76 = vld [vmem:[%s1 + $0x128] sm:$0xff]
  %v77 = vld [vmem:[%s1 + $0x130] sm:$0xff]
  %v78 = vld [vmem:[%s1 + $0x138] sm:$0xff]
  %v79 = vld [vmem:[%s1 + $0x140] sm:$0xff]
  %v80 = vld [vmem:[%s1 + $0x148] sm:$0xff]
  %v81 = vld [vmem:[%s1 + $0x150] sm:$0xff]
  %v82 = vld [vmem:[%s1 + $0x158] sm:$0xff]
  %v83 = vld [vmem:[%s1 + $0x160] sm:$0xff]
  %v84 = vld [vmem:[%s1 + $0x168] sm:$0xff]
  %v85 = vld [vmem:[%s1 + $0x170] sm:$0xff]
  %v86 = vld [vmem:[%s1 + $0x178] sm:$0xff]
  %v87 = vld [vmem:[%s1 + $0x180] sm:$0xff]
  %v88 = vld [vmem:[%s1 + $0x188] sm:$0xff]
  %v89 = vld [vmem:[%s1 + $0x190] sm:$0xff]
  %v90 = vld [vmem:[%s1 + $0x198] sm:$0xff]
  %v91 = vld [vmem:[%s1 + $0x1a0] sm:$0xff]
  %v92 = vld [vmem:[%s1 + $0x1a8] sm:$0xff]
  %v93 = vld [vmem:[%s1 + $0x1b0] sm:$0xff]
  %v94 = vld [vmem:[%s1 + $0x1b8] sm:$0xff]
  %v95 = vld [vmem:[%s1 + $0x1c0] sm:$0xff]
  %v96 = vld [vmem:[%s1 + $0x1c8] sm:$0xff]
  %v97 = vld [vmem:[%s1 + $0x1d0] sm:$0xff]
  %v98 = vld [vmem:[%s1 + $0x1d8] sm:$0xff]
  %v99 = vld [vmem:[%s1 + $0x1e0] sm:$0xff]
  %v100 = vld [vmem:[%s1 + $0x1e8] sm:$0xff]
  %v101 = vld [vmem:[%s1 + $0x1f0] sm:$0xff]
  %v102 = vld [vmem:[%s1 + $0x1f8] sm:$0xff]
  %v103 = vld [vmem:[%s1 + $0x200] sm:$0xff]
  %v104 = vld [vmem:[%s1 + $0x208] sm:$0xff]
  %v105 = vld [vmem:[%s1 + $0x210] sm:$0xff]
  %v106 = vld [vmem:[%s1 + $0x218] sm:$0xff]
  %v107 = vld [vmem:[%s1 + $0x220] sm:$0xff]
  %v108 = vld [vmem:[%s1 + $0x228] sm:$0xff]
  %v109 = vld [vmem:[%s1 + $0x230] sm:$0xff]
  %v110 = vld [vmem:[%s1 + $0x238] sm:$0xff]
  %v111 = vld [vmem:[%s1 + $0x240] sm:$0xff]
  %v112 = vld [vmem:[%s1 + $0x248] sm:$0xff]
  %v113 = vld [vmem:[%s1 + $0x250] sm:$0xff]
  %v114 = vld [vmem:[%s1 + $0x258] sm:$0xff]
  %v115 = vld [vmem:[%s1 + $0x260] sm:$0xff]
  %v116 = vld [vmem:[%s1 + $0x268] sm:$0xff]
  %v117 = vld [vmem:[%s1 + $0x270] sm:$0xff]
  %v118 = vld [vmem:[%s1 + $0x278] sm:$0xff]
  %v119 = vld [vmem:[%s1 + $0x280] sm:$0xff]
  %v120 = vld [vmem:[%s1 + $0x288] sm:$0xff]
  %v121 = vld [vmem:[%s1 + $0x290] sm:$0xff]
  %v122 = vld [vmem:[%s1 + $0x298] sm:$0xff]
  %v123 = vld [vmem:[%s1 + $0x2a0] sm:$0xff]
  %v124 = vld [vmem:[%s1 + $0x2a8] sm:$0xff]
  %v125 = vld [vmem:[%s1 + $0x2b0] sm:$0xff]
  %v126 = vld [vmem:[%s1 + $0x2b8] sm:$0xff]
  %v127 = vld [vmem:[%s1 + $0x2c0] sm:$0xff]
  %v128 = vld [vmem:[%s1 + $0x2c8] sm:$0xff]
  %v129 = vld [vmem:[%s1 + $0x2d0] sm:$0xff]
  %v130 = vld [vmem:[%s1 + $0x2d8] sm:$0xff]
  %v131 = vld [vmem:[%s1 + $0x2e0] sm:$0xff]
  %v132 = vld [vmem:[%s1 + $0x2e8] sm:$0xff]
  %v133 = vld [vmem:[%s1 + $0x2f0] sm:$0xff]
  %v134 = vld [vmem:[%s1 + $0x2f8] sm:$0xff]
  %v135 = vld [vmem:[%s1 + $0x300] sm:$0xff]
  %v136 = vld [vmem:[%s1 + $0x308] sm:$0xff]
  %v137 = vld [vmem:[%s1 + $0x310] sm:$0xff]
  %v138 = vld [vmem:[%s1 + $0x318] sm:$0xff]
  %v139 = vld [vmem:[%s1 + $0x320] sm:$0xff]
  %v140 = vld [vmem:[%s1 + $0x328] sm:$0xff]
  %v141 = vld [vmem:[%s1 + $0x330] sm:$0xff]
  %v142 = vld [vmem:[%s1 + $0x338] sm:$0xff]
  %v143 = vld [vmem:[%s1 + $0x340] sm:$0xff]
  %v144 = vld [vmem:[%s1 + $0x348] sm:$0xff]
  %v145 = vld [vmem:[%s1 + $0x350] sm:$0xff]
  %v146 = vld [vmem:[%s1 + $0x358] sm:$0xff]
  %v147 = vld [vmem:[%s1 + $0x360] sm:$0xff]
  %v148 = vld [vmem:[%s1 + $0x368] sm:$0xff]
  %v149 = vld [vmem:[%s1 + $0x370] sm:$0xff]
  %v150 = vld [vmem:[%s1 + $0x378] sm:$0xff]
  %v151 = vld [vmem:[%s1 + $0x380] sm:$0xff]
  %v152 = vld [vmem:[%s1 + $0x388] sm:$0xff]
  %v153 = vld [vmem:[%s1 + $0x390] sm:$0xff]
  %v154 = vld [vmem:[%s1 + $0x398] sm:$0xff]
  %v155 = vld [vmem:[%s1 + $0x3a0] sm:$0xff]
  %v156 = vld [vmem:[%s1 + $0x3a8] sm:$0xff]
  %v157 = vld [vmem:[%s1 + $0x3b0] sm:$0xff]
  %v158 = vld [vmem:[%s1 + $0x3b8] sm:$0xff]
  %v159 = vld [vmem:[%s1 + $0x3c0] sm:$0xff]
  %v160 = vld [vmem:[%s1 + $0x3c8] sm:$0xff]
  %v161 = vld [vmem:[%s1 + $0x3d0] sm:$0xff]
  %v162 = vld [vmem:[%s1 + $0x3d8] sm:$0xff]
  %v163 = vld [vmem:[%s1 + $0x3e0] sm:$0xff]
  %v164 = vld [vmem:[%s1 + $0x3e8] sm:$0xff]
  %v165 = vld [vmem:[%s1 + $0x3f0] sm:$0xff]
  %v166 = vld [vmem:[%s1 + $0x3f8] sm:$0xff]
  %v167 = vld [vmem:[%s1 + $0x400] sm:$0xff]
  %v168 = vld [vmem:[%s1 + $0x408] sm:$0xff]
  %v169 = vld [vmem:[%s1 + $0x410] sm:$0xff]
  %v170 = vld [vmem:[%s1 + $0x418] sm:$0xff]
  %v171 = vld [vmem:[%s1 + $0x420] sm:$0xff]
  %v172 = vld [vmem:[%s1 + $0x428] sm:$0xff]
  %v173 = vld [vmem:[%s1 + $0x430] sm:$0xff]
  %v174 = vld [vmem:[%s1 + $0x438] sm:$0xff]
  %v175 = vld [vmem:[%s1 + $0x440] sm:$0xff]
  %v176 = vld [vmem:[%s1 + $0x448] sm:$0xff]
  %v177 = vld [vmem:[%s1 + $0x450] sm:$0xff]
  %v178 = vld [vmem:[%s1 + $0x458] sm:$0xff]
  %v179 = vld [vmem:[%s1 + $0x460] sm:$0xff]
  %v180 = vld [vmem:[%s1 + $0x468] sm:$0xff]
  %v181 = vld [vmem:[%s1 + $0x470] sm:$0xff]
  %v182 = vld [vmem:[%s1 + $0x478] sm:$0xff]
  %v183 = vld [vmem:[%s1 + $0x480] sm:$0xff]
  %v184 = vld [vmem:[%s1 + $0x488] sm:$0xff]
  %v185 = vld [vmem:[%s1 + $0x490] sm:$0xff]
  %v186 = vld [vmem:[%s1 + $0x498] sm:$0xff]
  %v187 = vld [vmem:[%s1 + $0x4a0] sm:$0xff]
  %v188 = vld [vmem:[%s1 + $0x4a8] sm:$0xff]
  %v189 = vld [vmem:[%s1 + $0x4b0] sm:$0xff]
  %v190 = vld [vmem:[%s1 + $0x4b8] sm:$0xff]
  %v191 = vld [vmem:[%s1 + $0x4c0] sm:$0xff]
  %v192 = vld [vmem:[%s1 + $0x4c8] sm:$0xff]
  %v193 = vld [vmem:[%s1 + $0x4d0] sm:$0xff]
  %v194 = vld [vmem:[%s1 + $0x4d8] sm:$0xff]
  %v195 = vld [vmem:[%s1 + $0x4e0] sm:$0xff]
  %v196 = vld [vmem:[%s1 + $0x4e8] sm:$0xff]
  %v197 = vld [vmem:[%s1 + $0x4f0] sm:$0xff]
  %v198 = vld [vmem:[%s1 + $0x4f8] sm:$0xff]
  %v199 = vld [vmem:[%s1 + $0x500] sm:$0xff]
  %v200 = vld [vmem:[%s1 + $0x508] sm:$0xff]
  %v201 = vld [vmem:[%s1 + $0x510] sm:$0xff]
  %v202 = vld [vmem:[%s1 + $0x518] sm:$0xff]
  %v203 = vld [vmem:[%s1 + $0x520] sm:$0xff]
  %v204 = vld [vmem:[%s1 + $0x528] sm:$0xff]
  %v205 = vld [vmem:[%s1 + $0x530] sm:$0xff]
  %v206 = vld [vmem:[%s1 + $0x538] sm:$0xff]
  %v207 = vld [vmem:[%s1 + $0x540] sm:$0xff]
  %v208 = vld [vmem:[%s1 + $0x548] sm:$0xff]
  %v209 = vld [vmem:[%s1 + $0x550] sm:$0xff]
  %v210 = vld [vmem:[%s1 + $0x558] sm:$0xff]
  %v211 = vld [vmem:[%s1 + $0x560] sm:$0xff]
  %v212 = vld [vmem:[%s1 + $0x568] sm:$0xff]
  %v213 = vld [vmem:[%s1 + $0x570] sm:$0xff]
  %v214 = vld [vmem:[%s1 + $0x578] sm:$0xff]
  %v215 = vld [vmem:[%s1 + $0x580] sm:$0xff]
  %v216 = vld [vmem:[%s1 + $0x588] sm:$0xff]
  %v217 = vld [vmem:[%s1 + $0x590] sm:$0xff]
  %v218 = vld [vmem:[%s1 + $0x598] sm:$0xff]
  %v219 = vld [vmem:[%s1 + $0x5a0] sm:$0xff]
  %v220 = vld [vmem:[%s1 + $0x5a8] sm:$0xff]
  %v221 = vld [vmem:[%s1 + $0x5b0] sm:$0xff]
  %v222 = vld [vmem:[%s1 + $0x5b8] sm:$0xff]
  %v223 = vld [vmem:[%s1 + $0x5c0] sm:$0xff]
  %v224 = vld [vmem:[%s1 + $0x5c8] sm:$0xff]
  %v225 = vld [vmem:[%s1 + $0x5d0] sm:$0xff]
  %v226 = vld [vmem:[%s1 + $0x5d8] sm:$0xff]
  %v227 = vld [vmem:[%s1 + $0x5e0] sm:$0xff]
  %v228 = vld [vmem:[%s1 + $0x5e8] sm:$0xff]
  %v229 = vld [vmem:[%s1 + $0x5f0] sm:$0xff]
  %v230 = vld [vmem:[%s1 + $0x5f8] sm:$0xff]
  %v231 = vld [vmem:[%s1 + $0x600] sm:$0xff]
  %v232 = vld [vmem:[%s1 + $0x608] sm:$0xff]
  %v233 = vld [vmem:[%s1 + $0x610] sm:$0xff]
  %v234 = vld [vmem:[%s1 + $0x618] sm:$0xff]
  %v235 = vld [vmem:[%s1 + $0x620] sm:$0xff]
  %v236 = vld [vmem:[%s1 + $0x628] sm:$0xff]
  %v237 = vld [vmem:[%s1 + $0x630] sm:$0xff]
  %v238 = vld [vmem:[%s1 + $0x638] sm:$0xff]
  %v239 = vld [vmem:[%s1 + $0x640] sm:$0xff]
  %v240 = vld [vmem:[%s1 + $0x648] sm:$0xff]
  %v241 = vld [vmem:[%s1 + $0x650] sm:$0xff]
  %v242 = vld [vmem:[%s1 + $0x658] sm:$0xff]
  %v243 = vld [vmem:[%s1 + $0x660] sm:$0xff]
  %v244 = vld [vmem:[%s1 + $0x668] sm:$0xff]
  %v245 = vld [vmem:[%s1 + $0x670] sm:$0xff]
  %v246 = vld [vmem:[%s1 + $0x678] sm:$0xff]
  %v247 = vld [vmem:[%s1 + $0x680] sm:$0xff]
  %v248 = vld [vmem:[%s1 + $0x688] sm:$0xff]
  %v249 = vld [vmem:[%s1 + $0x690] sm:$0xff]
  %v250 = vld [vmem:[%s1 + $0x698] sm:$0xff]
  %v251 = vld [vmem:[%s1 + $0x6a0] sm:$0xff]
  %v252 = vld [vmem:[%s1 + $0x6a8] sm:$0xff]
  %v253 = vld [vmem:[%s1 + $0x6b0] sm:$0xff]
  %v254 = vld [vmem:[%s1 + $0x6b8] sm:$0xff]
  %v255 = vld [vmem:[%s1 + $0x6c0] sm:$0xff]
  %v256 = vld [vmem:[%s1 + $0x6c8] sm:$0xff]
  %v257 = vld [vmem:[%s1 + $0x6d0] sm:$0xff]
  %v258 = vld [vmem:[%s1 + $0x6d8] sm:$0xff]
  %v259 = vld [vmem:[%s1 + $0x6e0] sm:$0xff]
  %v260 = vld [vmem:[%s1 + $0x6e8] sm:$0xff]
  %v261 = vld [vmem:[%s1 + $0x6f0] sm:$0xff]
  %v262 = vld [vmem:[%s1 + $0x6f8] sm:$0xff]
  %v263 = vld [vmem:[%s1 + $0x700] sm:$0xff]
  %v264 = vld [vmem:[%s1 + $0x708] sm:$0xff]
  %v265 = vld [vmem:[%s1 + $0x710] sm:$0xff]
  %v266 = vld [vmem:[%s1 + $0x718] sm:$0xff]
  %v267 = vld [vmem:[%s1 + $0x720] sm:$0xff]
  %v268 = vld [vmem:[%s1 + $0x728] sm:$0xff]
  %v269 = vld [vmem:[%s1 + $0x730] sm:$0xff]
  %v270 = vld [vmem:[%s1 + $0x738] sm:$0xff]
  %v271 = vld [vmem:[%s1 + $0x740] sm:$0xff]
  %v272 = vld [vmem:[%s1 + $0x748] sm:$0xff]
  %v273 = vld [vmem:[%s1 + $0x750] sm:$0xff]
  %v274 = vld [vmem:[%s1 + $0x758] sm:$0xff]
  %v275 = vld [vmem:[%s1 + $0x760] sm:$0xff]
  %v276 = vld [vmem:[%s1 + $0x768] sm:$0xff]
  %v277 = vld [vmem:[%s1 + $0x770] sm:$0xff]
  %v278 = vld [vmem:[%s1 + $0x778] sm:$0xff]
  %v279 = vld [vmem:[%s1 + $0x780] sm:$0xff]
  %v280 = vld [vmem:[%s1 + $0x788] sm:$0xff]
  %v281 = vld [vmem:[%s1 + $0x790] sm:$0xff]
  %v282 = vld [vmem:[%s1 + $0x798] sm:$0xff]
  %v283 = vld [vmem:[%s1 + $0x7a0] sm:$0xff]
  %v284 = vld [vmem:[%s1 + $0x7a8] sm:$0xff]
  %v285 = vld [vmem:[%s1 + $0x7b0] sm:$0xff]
  %v286 = vld [vmem:[%s1 + $0x7b8] sm:$0xff]
  %v287 = vld [vmem:[%s1 + $0x7c0] sm:$0xff]
  %v288 = vld [vmem:[%s1 + $0x7c8] sm:$0xff]
  %v289 = vld [vmem:[%s1 + $0x7d0] sm:$0xff]
  %v290 = vld [vmem:[%s1 + $0x7d8] sm:$0xff]
  %v291 = vld [vmem:[%s1 + $0x7e0] sm:$0xff]
  %v292 = vld [vmem:[%s1 + $0x7e8] sm:$0xff]
  %v293 = vld [vmem:[%s1 + $0x7f0] sm:$0xff]
  %v294 = vld [vmem:[%s1 + $0x7f8] sm:$0xff]
  %v295 = vld [vmem:[%s1 + $0x800] sm:$0xff]
  %v296 = vld [vmem:[%s1 + $0x808] sm:$0xff]
  %v297 = vld [vmem:[%s1 + $0x810] sm:$0xff]
  %v298 = vld [vmem:[%s1 + $0x818] sm:$0xff]
  %v299 = vld [vmem:[%s1 + $0x820] sm:$0xff]
  %v300 = vld [vmem:[%s1 + $0x828] sm:$0xff]
  %v301 = vld [vmem:[%s1 + $0x830] sm:$0xff]
  %v302 = vld [vmem:[%s1 + $0x838] sm:$0xff]
  %v303 = vld [vmem:[%s1 + $0x840] sm:$0xff]
  %v304 = vld [vmem:[%s1 + $0x848] sm:$0xff]
  %v305 = vld [vmem:[%s1 + $0x850] sm:$0xff]
  %v306 = vld [vmem:[%s1 + $0x858] sm:$0xff]
  %v307 = vld [vmem:[%s1 + $0x860] sm:$0xff]
  %v308 = vld [vmem:[%s1 + $0x868] sm:$0xff]
  %v309 = vld [vmem:[%s1 + $0x870] sm:$0xff]
  %v310 = vld [vmem:[%s1 + $0x878] sm:$0xff]
  %v311 = vld [vmem:[%s1 + $0x880] sm:$0xff]
  %v312 = vld [vmem:[%s1 + $0x888] sm:$0xff]
  %v313 = vld [vmem:[%s1 + $0x890] sm:$0xff]
  %v314 = vld [vmem:[%s1 + $0x898] sm:$0xff]
  %v315 = vld [vmem:[%s1 + $0x8a0] sm:$0xff]
  %v316 = vld [vmem:[%s1 + $0x8a8] sm:$0xff]
  %v317 = vld [vmem:[%s1 + $0x8b0] sm:$0xff]
  %v318 = vld [vmem:[%s1 + $0x8b8] sm:$0xff]
  %v319 = vld [vmem:[%s1 + $0x8c0] sm:$0xff]
  %v320 = vld [vmem:[%s1 + $0x8c8] sm:$0xff]
  %v321 = vld [vmem:[%s1 + $0x8d0] sm:$0xff]
  %v322 = vld [vmem:[%s1 + $0x8d8] sm:$0xff]
  %v323 = vld [vmem:[%s1 + $0x8e0] sm:$0xff]
  %v324 = vld [vmem:[%s1 + $0x8e8] sm:$0xff]
  %v325 = vld [vmem:[%s1 + $0x8f0] sm:$0xff]
  %v326 = vld [vmem:[%s1 + $0x8f8] sm:$0xff]
  %v327 = vld [vmem:[%s1 + $0x900] sm:$0xff]
  %v328 = vld [vmem:[%s1 + $0x908] sm:$0xff]
  %v329 = vld [vmem:[%s1 + $0x910] sm:$0xff]
  %v330 = vld [vmem:[%s1 + $0x918] sm:$0xff]
  %v331 = vld [vmem:[%s1 + $0x920] sm:$0xff]
  %v332 = vld [vmem:[%s1 + $0x928] sm:$0xff]
  %v333 = vld [vmem:[%s1 + $0x930] sm:$0xff]
  %v334 = vld [vmem:[%s1 + $0x938] sm:$0xff]
  %v335 = vld [vmem:[%s1 + $0x940] sm:$0xff]
  %v336 = vld [vmem:[%s1 + $0x948] sm:$0xff]
  %v337 = vld [vmem:[%s1 + $0x950] sm:$0xff]
  %v338 = vld [vmem:[%s1 + $0x958] sm:$0xff]
  %v339 = vld [vmem:[%s1 + $0x960] sm:$0xff]
  %v340 = vld [vmem:[%s1 + $0x968] sm:$0xff]
  %v341 = vld [vmem:[%s1 + $0x970] sm:$0xff]
  %v342 = vld [vmem:[%s1 + $0x978] sm:$0xff]
  %v343 = vld [vmem:[%s1 + $0x980] sm:$0xff]
  %v344 = vld [vmem:[%s1 + $0x988] sm:$0xff]
  %v345 = vld [vmem:[%s1 + $0x990] sm:$0xff]
  %v346 = vld [vmem:[%s1 + $0x998] sm:$0xff]
  %v347 = vld [vmem:[%s1 + $0x9a0] sm:$0xff]
  %v348 = vld [vmem:[%s1 + $0x9a8] sm:$0xff]
  %v349 = vld [vmem:[%s1 + $0x9b0] sm:$0xff]
  %v350 = vld [vmem:[%s1 + $0x9b8] sm:$0xff]
  %v351 = vld [vmem:[%s1 + $0x9c0] sm:$0xff]
  %v352 = vld [vmem:[%s1 + $0x9c8] sm:$0xff]
  %v353 = vld [vmem:[%s1 + $0x9d0] sm:$0xff]
  %v354 = vld [vmem:[%s1 + $0x9d8] sm:$0xff]
  %v355 = vld [vmem:[%s1 + $0x9e0] sm:$0xff]
  %v356 = vld [vmem:[%s1 + $0x9e8] sm:$0xff]
  %v357 = vld [vmem:[%s1 + $0x9f0] sm:$0xff]
  %v358 = vld [vmem:[%s1 + $0x9f8] sm:$0xff]
  %v359 = vld [vmem:[%s1 + $0xa00] sm:$0xff]
  %v360 = vld [vmem:[%s1 + $0xa08] sm:$0xff]
  %v361 = vld [vmem:[%s1 + $0xa10] sm:$0xff]
  %v362 = vld [vmem:[%s1 + $0xa18] sm:$0xff]
  %v363 = vld [vmem:[%s1 + $0xa20] sm:$0xff]
  %v364 = vld [vmem:[%s1 + $0xa28] sm:$0xff]
  %v365 = vld [vmem:[%s1 + $0xa30] sm:$0xff]
  %v366 = vld [vmem:[%s1 + $0xa38] sm:$0xff]
  %v367 = vld [vmem:[%s1 + $0xa40] sm:$0xff]
  %v368 = vld [vmem:[%s1 + $0xa48] sm:$0xff]
  %v369 = vld [vmem:[%s1 + $0xa50] sm:$0xff]
  %v370 = vld [vmem:[%s1 + $0xa58] sm:$0xff]
  %v371 = vld [vmem:[%s1 + $0xa60] sm:$0xff]
  %v372 = vld [vmem:[%s1 + $0xa68] sm:$0xff]
  %v373 = vld [vmem:[%s1 + $0xa70] sm:$0xff]
  %v374 = vld [vmem:[%s1 + $0xa78] sm:$0xff]
  %v375 = vld [vmem:[%s1 + $0xa80] sm:$0xff]
  %v376 = vld [vmem:[%s1 + $0xa88] sm:$0xff]
  %v377 = vld [vmem:[%s1 + $0xa90] sm:$0xff]
  %v378 = vld [vmem:[%s1 + $0xa98] sm:$0xff]
  %v379 = vld [vmem:[%s1 + $0xaa0] sm:$0xff]
  %v380 = vld [vmem:[%s1 + $0xaa8] sm:$0xff]
  %v381 = vld [vmem:[%s1 + $0xab0] sm:$0xff]
  %v382 = vld [vmem:[%s1 + $0xab8] sm:$0xff]
  %v383 = vld [vmem:[%s1 + $0xac0] sm:$0xff]
  %v384 = vld [vmem:[%s1 + $0xac8] sm:$0xff]
  %v385 = vld [vmem:[%s1 + $0xad0] sm:$0xff]
  %v386 = vld [vmem:[%s1 + $0xad8] sm:$0xff]
  %v387 = vld [vmem:[%s1 + $0xae0] sm:$0xff]
  %v388 = vld [vmem:[%s1 + $0xae8] sm:$0xff]
  %v389 = vld [vmem:[%s1 + $0xaf0] sm:$0xff]
  %v390 = vld [vmem:[%s1 + $0xaf8] sm:$0xff]
  %v391 = vld [vmem:[%s1 + $0xb00] sm:$0xff]
  %v392 = vld [vmem:[%s1 + $0xb08] sm:$0xff]
  %v393 = vld [vmem:[%s1 + $0xb10] sm:$0xff]
  %v394 = vld [vmem:[%s1 + $0xb18] sm:$0xff]
  %v395 = vld [vmem:[%s1 + $0xb20] sm:$0xff]
  %v396 = vld [vmem:[%s1 + $0xb28] sm:$0xff]
  %v397 = vld [vmem:[%s1 + $0xb30] sm:$0xff]
  %v398 = vld [vmem:[%s1 + $0xb38] sm:$0xff]
  %v399 = vld [vmem:[%s1 + $0xb40] sm:$0xff]
  %v400 = vld [vmem:[%s1 + $0xb48] sm:$0xff]
  %v401 = vld [vmem:[%s1 + $0xb50] sm:$0xff]
  %v402 = vld [vmem:[%s1 + $0xb58] sm:$0xff]
  %v403 = vld [vmem:[%s1 + $0xb60] sm:$0xff]
  %v404 = vld [vmem:[%s1 + $0xb68] sm:$0xff]
  %v405 = vld [vmem:[%s1 + $0xb70] sm:$0xff]
  %v406 = vld [vmem:[%s1 + $0xb78] sm:$0xff]
  %v407 = vld [vmem:[%s1 + $0xb80] sm:$0xff]
  %v408 = vld [vmem:[%s1 + $0xb88] sm:$0xff]
  %v409 = vld [vmem:[%s1 + $0xb90] sm:$0xff]
  %v410 = vld [vmem:[%s1 + $0xb98] sm:$0xff]
  %v411 = vld [vmem:[%s1 + $0xba0] sm:$0xff]
  %v412 = vld [vmem:[%s1 + $0xba8] sm:$0xff]
  %v413 = vld [vmem:[%s1 + $0xbb0] sm:$0xff]
  %v414 = vld [vmem:[%s1 + $0xbb8] sm:$0xff]
  %v415 = vld [vmem:[%s1 + $0xbc0] sm:$0xff]
  %v416 = vld [vmem:[%s1 + $0xbc8] sm:$0xff]
  %v417 = vld [vmem:[%s1 + $0xbd0] sm:$0xff]
  %v418 = vld [vmem:[%s1 + $0xbd8] sm:$0xff]
  %v419 = vld [vmem:[%s1 + $0xbe0] sm:$0xff]
  %v420 = vld [vmem:[%s1 + $0xbe8] sm:$0xff]
  %v421 = vld [vmem:[%s1 + $0xbf0] sm:$0xff]
  %v422 = vld [vmem:[%s1 + $0xbf8] sm:$0xff]
  %v423 = vld [vmem:[%s1 + $0xc00] sm:$0xff]
  %v424 = vld [vmem:[%s1 + $0xc08] sm:$0xff]
  %v425 = vld [vmem:[%s1 + $0xc10] sm:$0xff]
  %v426 = vld [vmem:[%s1 + $0xc18] sm:$0xff]
  %v427 = vld [vmem:[%s1 + $0xc20] sm:$0xff]
  %v428 = vld [vmem:[%s1 + $0xc28] sm:$0xff]
  %v429 = vld [vmem:[%s1 + $0xc30] sm:$0xff]
  %v430 = vld [vmem:[%s1 + $0xc38] sm:$0xff]
  %v431 = vld [vmem:[%s1 + $0xc40] sm:$0xff]
  %v432 = vld [vmem:[%s1 + $0xc48] sm:$0xff]
  %v433 = vld [vmem:[%s1 + $0xc50] sm:$0xff]
  %v434 = vld [vmem:[%s1 + $0xc58] sm:$0xff]
  %v435 = vld [vmem:[%s1 + $0xc60] sm:$0xff]
  %v436 = vld [vmem:[%s1 + $0xc68] sm:$0xff]
  %v437 = vld [vmem:[%s1 + $0xc70] sm:$0xff]
  %v438 = vld [vmem:[%s1 + $0xc78] sm:$0xff]
  %v439 = vld [vmem:[%s1 + $0xc80] sm:$0xff]
  %v440 = vld [vmem:[%s1 + $0xc88] sm:$0xff]
  %v441 = vld [vmem:[%s1 + $0xc90] sm:$0xff]
  %v442 = vld [vmem:[%s1 + $0xc98] sm:$0xff]
  %v443 = vld [vmem:[%s1 + $0xca0] sm:$0xff]
  %v444 = vld [vmem:[%s1 + $0xca8] sm:$0xff]
  %v445 = vld [vmem:[%s1 + $0xcb0] sm:$0xff]
  %v446 = vld [vmem:[%s1 + $0xcb8] sm:$0xff]
  %v447 = vld [vmem:[%s1 + $0xcc0] sm:$0xff]
  %v448 = vld [vmem:[%s1 + $0xcc8] sm:$0xff]
  %v449 = vld [vmem:[%s1 + $0xcd0] sm:$0xff]
  %v450 = vld [vmem:[%s1 + $0xcd8] sm:$0xff]
  %v451 = vld [vmem:[%s1 + $0xce0] sm:$0xff]
  %v452 = vld [vmem:[%s1 + $0xce8] sm:$0xff]
  %v453 = vld [vmem:[%s1 + $0xcf0] sm:$0xff]
  %v454 = vld [vmem:[%s1 + $0xcf8] sm:$0xff]
  %v455 = vld [vmem:[%s1 + $0xd00] sm:$0xff]
  %v456 = vld [vmem:[%s1 + $0xd08] sm:$0xff]
  %v457 = vld [vmem:[%s1 + $0xd10] sm:$0xff]
  %v458 = vld [vmem:[%s1 + $0xd18] sm:$0xff]
  %v459 = vld [vmem:[%s1 + $0xd20] sm:$0xff]
  %v460 = vld [vmem:[%s1 + $0xd28] sm:$0xff]
  %v461 = vld [vmem:[%s1 + $0xd30] sm:$0xff]
  %v462 = vld [vmem:[%s1 + $0xd38] sm:$0xff]
  %v463 = vld [vmem:[%s1 + $0xd40] sm:$0xff]
  %v464 = vld [vmem:[%s1 + $0xd48] sm:$0xff]
  %v465 = vld [vmem:[%s1 + $0xd50] sm:$0xff]
  %v466 = vld [vmem:[%s1 + $0xd58] sm:$0xff]
  %v467 = vld [vmem:[%s1 + $0xd60] sm:$0xff]
  %v468 = vld [vmem:[%s1 + $0xd68] sm:$0xff]
  %v469 = vld [vmem:[%s1 + $0xd70] sm:$0xff]
  %v470 = vld [vmem:[%s1 + $0xd78] sm:$0xff]
  %v471 = vld [vmem:[%s1 + $0xd80] sm:$0xff]
  %v472 = vld [vmem:[%s1 + $0xd88] sm:$0xff]
  %v473 = vld [vmem:[%s1 + $0xd90] sm:$0xff]
  %v474 = vld [vmem:[%s1 + $0xd98] sm:$0xff]
  %v475 = vld [vmem:[%s1 + $0xda0] sm:$0xff]
  %v476 = vld [vmem:[%s1 + $0xda8] sm:$0xff]
  %v477 = vld [vmem:[%s1 + $0xdb0] sm:$0xff]
  %v478 = vld [vmem:[%s1 + $0xdb8] sm:$0xff]
  %v479 = vld [vmem:[%s1 + $0xdc0] sm:$0xff]
  %v480 = vld [vmem:[%s1 + $0xdc8] sm:$0xff]
  %v481 = vld [vmem:[%s1 + $0xdd0] sm:$0xff]
  %v482 = vld [vmem:[%s1 + $0xdd8] sm:$0xff]
  %v483 = vld [vmem:[%s1 + $0xde0] sm:$0xff]
  %v484 = vld [vmem:[%s1 + $0xde8] sm:$0xff]
  %v485 = vld [vmem:[%s1 + $0xdf0] sm:$0xff]
  %v486 = vld [vmem:[%s1 + $0xdf8] sm:$0xff]
  %v487 = vld [vmem:[%s1 + $0xe00] sm:$0xff]
  %v488 = vld [vmem:[%s1 + $0xe08] sm:$0xff]
  %v489 = vld [vmem:[%s1 + $0xe10] sm:$0xff]
  %v490 = vld [vmem:[%s1 + $0xe18] sm:$0xff]
  %v491 = vld [vmem:[%s1 + $0xe20] sm:$0xff]
  %v492 = vld [vmem:[%s1 + $0xe28] sm:$0xff]
  %v493 = vld [vmem:[%s1 + $0xe30] sm:$0xff]
  %v494 = vld [vmem:[%s1 + $0xe38] sm:$0xff]
  %v495 = vld [vmem:[%s1 + $0xe40] sm:$0xff]
  %v496 = vld [vmem:[%s1 + $0xe48] sm:$0xff]
  %v497 = vld [vmem:[%s1 + $0xe50] sm:$0xff]
  %v498 = vld [vmem:[%s1 + $0xe58] sm:$0xff]
  %v499 = vld [vmem:[%s1 + $0xe60] sm:$0xff]
  %v500 = vld [vmem:[%s1 + $0xe68] sm:$0xff]
  %v501 = vld [vmem:[%s1 + $0xe70] sm:$0xff]
  %v502 = vld [vmem:[%s1 + $0xe78] sm:$0xff]
  %v503 = vld [vmem:[%s1 + $0xe80] sm:$0xff]
  %v504 = vld [vmem:[%s1 + $0xe88] sm:$0xff]
  %v505 = vld [vmem:[%s1 + $0xe90] sm:$0xff]
  %v506 = vld [vmem:[%s1 + $0xe98] sm:$0xff]
  %v507 = vld [vmem:[%s1 + $0xea0] sm:$0xff]
  %v508 = vld [vmem:[%s1 + $0xea8] sm:$0xff]
  %v509 = vld [vmem:[%s1 + $0xeb0] sm:$0xff]
  %v510 = vld [vmem:[%s1 + $0xeb8] sm:$0xff]
  %v511 = vld [vmem:[%s1 + $0xec0] sm:$0xff]
  %v512 = vld [vmem:[%s1 + $0xec8] sm:$0xff]
  %v513 = vld [vmem:[%s1 + $0xed0] sm:$0xff]
  %v514 = vld [vmem:[%s1 + $0xed8] sm:$0xff]
  %v515 = vld [vmem:[%s1 + $0xee0] sm:$0xff]
  %v516 = vld [vmem:[%s1 + $0xee8] sm:$0xff]
  %v517 = vld [vmem:[%s1 + $0xef0] sm:$0xff]
  %v518 = vld [vmem:[%s1 + $0xef8] sm:$0xff]
  %v519 = vld [vmem:[%s1 + $0xf00] sm:$0xff]
  %v520 = vld [vmem:[%s1 + $0xf08] sm:$0xff]
  %v521 = vld [vmem:[%s1 + $0xf10] sm:$0xff]
  %v522 = vld [vmem:[%s1 + $0xf18] sm:$0xff]
  %v523 = vld [vmem:[%s1 + $0xf20] sm:$0xff]
  %v524 = vld [vmem:[%s1 + $0xf28] sm:$0xff]
  %v525 = vld [vmem:[%s1 + $0xf30] sm:$0xff]
  %v526 = vld [vmem:[%s1 + $0xf38] sm:$0xff]
  %v527 = vld [vmem:[%s1 + $0xf40] sm:$0xff]
  %v528 = vld [vmem:[%s1 + $0xf48] sm:$0xff]
  %v529 = vld [vmem:[%s1 + $0xf50] sm:$0xff]
  %v530 = vld [vmem:[%s1 + $0xf58] sm:$0xff]
  %v531 = vld [vmem:[%s1 + $0xf60] sm:$0xff]
  %v532 = vld [vmem:[%s1 + $0xf68] sm:$0xff]
  %v533 = vld [vmem:[%s1 + $0xf70] sm:$0xff]
  %v534 = vld [vmem:[%s1 + $0xf78] sm:$0xff]
  %v535 = vld [vmem:[%s1 + $0xf80] sm:$0xff]
  %v536 = vld [vmem:[%s1 + $0xf88] sm:$0xff]
  %v537 = vld [vmem:[%s1 + $0xf90] sm:$0xff]
  %v538 = vld [vmem:[%s1 + $0xf98] sm:$0xff]
  %v539 = vld [vmem:[%s1 + $0xfa0] sm:$0xff]
  %v540 = vld [vmem:[%s1 + $0xfa8] sm:$0xff]
  %v541 = vld [vmem:[%s1 + $0xfb0] sm:$0xff]
  %v542 = vld [vmem:[%s1 + $0xfb8] sm:$0xff]
  %v543 = vld [vmem:[%s1 + $0xfc0] sm:$0xff]
  %v544 = vld [vmem:[%s1 + $0xfc8] sm:$0xff]
  %v545 = vld [vmem:[%s1 + $0xfd0] sm:$0xff]
  %v546 = vld [vmem:[%s1 + $0xfd8] sm:$0xff]
  %v547 = vld [vmem:[%s1 + $0xfe0] sm:$0xff]
  %v548 = vld [vmem:[%s1 + $0xfe8] sm:$0xff]
  %v549 = vld [vmem:[%s1 + $0xff0] sm:$0xff]
  %v550 = vld [vmem:[%s1 + $0xff8] sm:$0xff]
  %v551 = vld [vmem:[%s1 + $0x1000] sm:$0xff]
  %v552 = vld [vmem:[%s1 + $0x1008] sm:$0xff]
  %v553 = vld [vmem:[%s1 + $0x1010] sm:$0xff]
  %v554 = vld [vmem:[%s1 + $0x1018] sm:$0xff]
  %v555 = vld [vmem:[%s1 + $0x1020] sm:$0xff]
  %v556 = vld [vmem:[%s1 + $0x1028] sm:$0xff]
  %v557 = vld [vmem:[%s1 + $0x1030] sm:$0xff]
  %v558 = vld [vmem:[%s1 + $0x1038] sm:$0xff]
  %v559 = vld [vmem:[%s1 + $0x1040] sm:$0xff]
  %v560 = vld [vmem:[%s1 + $0x1048] sm:$0xff]
  %v561 = vld [vmem:[%s1 + $0x1050] sm:$0xff]
  %v562 = vld [vmem:[%s1 + $0x1058] sm:$0xff]
  %v563 = vld [vmem:[%s1 + $0x1060] sm:$0xff]
  %v564 = vld [vmem:[%s1 + $0x1068] sm:$0xff]
  %v565 = vld [vmem:[%s1 + $0x1070] sm:$0xff]
  %v566 = vld [vmem:[%s1 + $0x1078] sm:$0xff]
  %v567 = vld [vmem:[%s1 + $0x1080] sm:$0xff]
  %v568 = vld [vmem:[%s1 + $0x1088] sm:$0xff]
  %v569 = vld [vmem:[%s1 + $0x1090] sm:$0xff]
  %v570 = vld [vmem:[%s1 + $0x1098] sm:$0xff]
  %v571 = vld [vmem:[%s1 + $0x10a0] sm:$0xff]
  %v572 = vld [vmem:[%s1 + $0x10a8] sm:$0xff]
  %v573 = vld [vmem:[%s1 + $0x10b0] sm:$0xff]
  %v574 = vld [vmem:[%s1 + $0x10b8] sm:$0xff]
  %v575 = vld [vmem:[%s1 + $0x10c0] sm:$0xff]
  %v576 = vld [vmem:[%s1 + $0x10c8] sm:$0xff]
  %v577 = vld [vmem:[%s1 + $0x10d0] sm:$0xff]
  %v578 = vld [vmem:[%s1 + $0x10d8] sm:$0xff]
  %v579 = vld [vmem:[%s1 + $0x10e0] sm:$0xff]
  %v580 = vld [vmem:[%s1 + $0x10e8] sm:$0xff]
  %v581 = vld [vmem:[%s1 + $0x10f0] sm:$0xff]
  %v582 = vld [vmem:[%s1 + $0x10f8] sm:$0xff]
  %v583 = vld [vmem:[%s1 + $0x1100] sm:$0xff]
  %v584 = vld [vmem:[%s1 + $0x1108] sm:$0xff]
  %v585 = vld [vmem:[%s1 + $0x1110] sm:$0xff]
  %v586 = vld [vmem:[%s1 + $0x1118] sm:$0xff]
  %v587 = vld [vmem:[%s1 + $0x1120] sm:$0xff]
  %v588 = vld [vmem:[%s1 + $0x1128] sm:$0xff]
  %v589 = vld [vmem:[%s1 + $0x1130] sm:$0xff]
  %v590 = vld [vmem:[%s1 + $0x1138] sm:$0xff]
  %v591 = vld [vmem:[%s1 + $0x1140] sm:$0xff]
  %v592 = vld [vmem:[%s1 + $0x1148] sm:$0xff]
  %v593 = vld [vmem:[%s1 + $0x1150] sm:$0xff]
  %v594 = vld [vmem:[%s1 + $0x1158] sm:$0xff]
  %v595 = vld [vmem:[%s1 + $0x1160] sm:$0xff]
  %v596 = vld [vmem:[%s1 + $0x1168] sm:$0xff]
  %v597 = vld [vmem:[%s1 + $0x1170] sm:$0xff]
  %v598 = vld [vmem:[%s1 + $0x1178] sm:$0xff]
  %v599 = vld [vmem:[%s1 + $0x1180] sm:$0xff]
  %v600 = vld [vmem:[%s1 + $0x1188] sm:$0xff]
  %v601 = vld [vmem:[%s1 + $0x1190] sm:$0xff]
  %v602 = vld [vmem:[%s1 + $0x1198] sm:$0xff]
  %v603 = vld [vmem:[%s1 + $0x11a0] sm:$0xff]
  %v604 = vld [vmem:[%s1 + $0x11a8] sm:$0xff]
  %v605 = vld [vmem:[%s1 + $0x11b0] sm:$0xff]
  %v606 = vld [vmem:[%s1 + $0x11b8] sm:$0xff]
  %v607 = vld [vmem:[%s1 + $0x11c0] sm:$0xff]
  %v608 = vld [vmem:[%s1 + $0x11c8] sm:$0xff]
  %v609 = vld [vmem:[%s1 + $0x11d0] sm:$0xff]
  %v610 = vld [vmem:[%s1 + $0x11d8] sm:$0xff]
  %v611 = vld [vmem:[%s1 + $0x11e0] sm:$0xff]
  %v612 = vld [vmem:[%s1 + $0x11e8] sm:$0xff]
  %v613 = vld [vmem:[%s1 + $0x11f0] sm:$0xff]
  %v614 = vld [vmem:[%s1 + $0x11f8] sm:$0xff]
  %v615 = vld [vmem:[%s1 + $0x1200] sm:$0xff]
  %v616 = vld [vmem:[%s1 + $0x1208] sm:$0xff]
  %v617 = vld [vmem:[%s1 + $0x1210] sm:$0xff]
  %v618 = vld [vmem:[%s1 + $0x1218] sm:$0xff]
  %v619 = vld [vmem:[%s1 + $0x1220] sm:$0xff]
  %v620 = vld [vmem:[%s1 + $0x1228] sm:$0xff]
  %v621 = vld [vmem:[%s1 + $0x1230] sm:$0xff]
  %v622 = vld [vmem:[%s1 + $0x1238] sm:$0xff]
  %v623 = vld [vmem:[%s1 + $0x1240] sm:$0xff]
  %v624 = vld [vmem:[%s1 + $0x1248] sm:$0xff]
  %v625 = vld [vmem:[%s1 + $0x1250] sm:$0xff]
  %v626 = vld [vmem:[%s1 + $0x1258] sm:$0xff]
  %v627 = vld [vmem:[%s1 + $0x1260] sm:$0xff]
  %v628 = vld [vmem:[%s1 + $0x1268] sm:$0xff]
  %v629 = vld [vmem:[%s1 + $0x1270] sm:$0xff]
  %v630 = vld [vmem:[%s1 + $0x1278] sm:$0xff]
  %v631 = vld [vmem:[%s1 + $0x1280] sm:$0xff]
  %v632 = vld [vmem:[%s1 + $0x1288] sm:$0xff]
  %v633 = vld [vmem:[%s1 + $0x1290] sm:$0xff]
  %v634 = vld [vmem:[%s1 + $0x1298] sm:$0xff]
  %v635 = vld [vmem:[%s1 + $0x12a0] sm:$0xff]
  %v636 = vld [vmem:[%s1 + $0x12a8] sm:$0xff]
  %v637 = vld [vmem:[%s1 + $0x12b0] sm:$0xff]
  %v638 = vld [vmem:[%s1 + $0x12b8] sm:$0xff]
  %v639 = vld [vmem:[%s1 + $0x12c0] sm:$0xff]
  %v640 = vld [vmem:[%s1 + $0x12c8] sm:$0xff]
  %v641 = vld [vmem:[%s1 + $0x12d0] sm:$0xff]
  %v642 = vld [vmem:[%s1 + $0x12d8] sm:$0xff]
  %v643 = vld [vmem:[%s1 + $0x12e0] sm:$0xff]
  %v644 = vld [vmem:[%s1 + $0x12e8] sm:$0xff]
  %v645 = vld [vmem:[%s1 + $0x12f0] sm:$0xff]
  %v646 = vld [vmem:[%s1 + $0x12f8] sm:$0xff]
  %v647 = vld [vmem:[%s1 + $0x1300] sm:$0xff]
  %v648 = vld [vmem:[%s1 + $0x1308] sm:$0xff]
  %v649 = vld [vmem:[%s1 + $0x1310] sm:$0xff]
  %v650 = vld [vmem:[%s1 + $0x1318] sm:$0xff]
  %v651 = vld [vmem:[%s1 + $0x1320] sm:$0xff]
  %v652 = vld [vmem:[%s1 + $0x1328] sm:$0xff]
  %v653 = vld [vmem:[%s1 + $0x1330] sm:$0xff]
  %v654 = vld [vmem:[%s1 + $0x1338] sm:$0xff]
  %v655 = vld [vmem:[%s1 + $0x1340] sm:$0xff]
  %v656 = vld [vmem:[%s1 + $0x1348] sm:$0xff]
  %v657 = vld [vmem:[%s1 + $0x1350] sm:$0xff]
  %v658 = vld [vmem:[%s1 + $0x1358] sm:$0xff]
  %v659 = vld [vmem:[%s1 + $0x1360] sm:$0xff]
  %v660 = vld [vmem:[%s1 + $0x1368] sm:$0xff]
  %v661 = vld [vmem:[%s1 + $0x1370] sm:$0xff]
  %v662 = vld [vmem:[%s1 + $0x1378] sm:$0xff]
  %v663 = vld [vmem:[%s1 + $0x1380] sm:$0xff]
  %v664 = vld [vmem:[%s1 + $0x1388] sm:$0xff]
  %v665 = vld [vmem:[%s1 + $0x1390] sm:$0xff]
  %v666 = vld [vmem:[%s1 + $0x1398] sm:$0xff]
  %v667 = vld [vmem:[%s1 + $0x13a0] sm:$0xff]
  %v668 = vld [vmem:[%s1 + $0x13a8] sm:$0xff]
  %v669 = vld [vmem:[%s1 + $0x13b0] sm:$0xff]
  %v670 = vld [vmem:[%s1 + $0x13b8] sm:$0xff]
  %v671 = vld [vmem:[%s1 + $0x13c0] sm:$0xff]
  %v672 = vld [vmem:[%s1 + $0x13c8] sm:$0xff]
  %v673 = vld [vmem:[%s1 + $0x13d0] sm:$0xff]
  %v674 = vld [vmem:[%s1 + $0x13d8] sm:$0xff]
  %v675 = vld [vmem:[%s1 + $0x13e0] sm:$0xff]
  %v676 = vld [vmem:[%s1 + $0x13e8] sm:$0xff]
  %v677 = vld [vmem:[%s1 + $0x13f0] sm:$0xff]
  %v678 = vld [vmem:[%s1 + $0x13f8] sm:$0xff]
  %v679 = vld [vmem:[%s1 + $0x1400] sm:$0xff]
  %v680 = vld [vmem:[%s1 + $0x1408] sm:$0xff]
  %v681 = vld [vmem:[%s1 + $0x1410] sm:$0xff]
  %v682 = vld [vmem:[%s1 + $0x1418] sm:$0xff]
  %v683 = vld [vmem:[%s1 + $0x1420] sm:$0xff]
  %v684 = vld [vmem:[%s1 + $0x1428] sm:$0xff]
  %v685 = vld [vmem:[%s1 + $0x1430] sm:$0xff]
  %v686 = vld [vmem:[%s1 + $0x1438] sm:$0xff]
  %v687 = vld [vmem:[%s1 + $0x1440] sm:$0xff]
  %v688 = vld [vmem:[%s1 + $0x1448] sm:$0xff]
  %v689 = vld [vmem:[%s1 + $0x1450] sm:$0xff]
  %v690 = vld [vmem:[%s1 + $0x1458] sm:$0xff]
  %v691 = vld [vmem:[%s1 + $0x1460] sm:$0xff]
  %v692 = vld [vmem:[%s1 + $0x1468] sm:$0xff]
  %v693 = vld [vmem:[%s1 + $0x1470] sm:$0xff]
  %v694 = vld [vmem:[%s1 + $0x1478] sm:$0xff]
  %v695 = vld [vmem:[%s1 + $0x1480] sm:$0xff]
  %v696 = vld [vmem:[%s1 + $0x1488] sm:$0xff]
  %v697 = vld [vmem:[%s1 + $0x1490] sm:$0xff]
  %v698 = vld [vmem:[%s1 + $0x1498] sm:$0xff]
  %v699 = vld [vmem:[%s1 + $0x14a0] sm:$0xff]
  %v700 = vld [vmem:[%s1 + $0x14a8] sm:$0xff]
  %v701 = vld [vmem:[%s1 + $0x14b0] sm:$0xff]
  %v702 = vld [vmem:[%s1 + $0x14b8] sm:$0xff]
  %v703 = vld [vmem:[%s1 + $0x14c0] sm:$0xff]
  %v704 = vld [vmem:[%s1 + $0x14c8] sm:$0xff]
  %v705 = vld [vmem:[%s1 + $0x14d0] sm:$0xff]
  %v706 = vld [vmem:[%s1 + $0x14d8] sm:$0xff]
  %v707 = vld [vmem:[%s1 + $0x14e0] sm:$0xff]
  %v708 = vld [vmem:[%s1 + $0x14e8] sm:$0xff]
  %v709 = vld [vmem:[%s1 + $0x14f0] sm:$0xff]
  %v710 = vld [vmem:[%s1 + $0x14f8] sm:$0xff]
  %v711 = vld [vmem:[%s1 + $0x1500] sm:$0xff]
  %v712 = vld [vmem:[%s1 + $0x1508] sm:$0xff]
  %v713 = vld [vmem:[%s1 + $0x1510] sm:$0xff]
  %v714 = vld [vmem:[%s1 + $0x1518] sm:$0xff]
  %v715 = vld [vmem:[%s1 + $0x1520] sm:$0xff]
  %v716 = vld [vmem:[%s1 + $0x1528] sm:$0xff]
  %v717 = vld [vmem:[%s1 + $0x1530] sm:$0xff]
  %v718 = vld [vmem:[%s1 + $0x1538] sm:$0xff]
  %v719 = vld [vmem:[%s1 + $0x1540] sm:$0xff]
  %v720 = vld [vmem:[%s1 + $0x1548] sm:$0xff]
  %v721 = vld [vmem:[%s1 + $0x1550] sm:$0xff]
  %v722 = vld [vmem:[%s1 + $0x1558] sm:$0xff]
  %v723 = vld [vmem:[%s1 + $0x1560] sm:$0xff]
  %v724 = vld [vmem:[%s1 + $0x1568] sm:$0xff]
  %v725 = vld [vmem:[%s1 + $0x1570] sm:$0xff]
  %v726 = vld [vmem:[%s1 + $0x1578] sm:$0xff]
  %v727 = vld [vmem:[%s1 + $0x1580] sm:$0xff]
  %v728 = vld [vmem:[%s1 + $0x1588] sm:$0xff]
  %v729 = vld [vmem:[%s1 + $0x1590] sm:$0xff]
  %v730 = vld [vmem:[%s1 + $0x1598] sm:$0xff]
  %v731 = vld [vmem:[%s1 + $0x15a0] sm:$0xff]
  %v732 = vld [vmem:[%s1 + $0x15a8] sm:$0xff]
  %v733 = vld [vmem:[%s1 + $0x15b0] sm:$0xff]
  %v734 = vld [vmem:[%s1 + $0x15b8] sm:$0xff]
  %v735 = vld [vmem:[%s1 + $0x15c0] sm:$0xff]
  %v736 = vld [vmem:[%s1 + $0x15c8] sm:$0xff]
  %v737 = vld [vmem:[%s1 + $0x15d0] sm:$0xff]
  %v738 = vld [vmem:[%s1 + $0x15d8] sm:$0xff]
  %v739 = vld [vmem:[%s1 + $0x15e0] sm:$0xff]
  %v740 = vld [vmem:[%s1 + $0x15e8] sm:$0xff]
  %v741 = vld [vmem:[%s1 + $0x15f0] sm:$0xff]
  %v742 = vld [vmem:[%s1 + $0x15f8] sm:$0xff]
  %v743 = vld [vmem:[%s1 + $0x1600] sm:$0xff]
  %v744 = vld [vmem:[%s1 + $0x1608] sm:$0xff]
  %v745 = vld [vmem:[%s1 + $0x1610] sm:$0xff]
  %v746 = vld [vmem:[%s1 + $0x1618] sm:$0xff]
  %v747 = vld [vmem:[%s1 + $0x1620] sm:$0xff]
  %v748 = vld [vmem:[%s1 + $0x1628] sm:$0xff]
  %v749 = vld [vmem:[%s1 + $0x1630] sm:$0xff]
  %v750 = vld [vmem:[%s1 + $0x1638] sm:$0xff]
  %v751 = vld [vmem:[%s1 + $0x1640] sm:$0xff]
  %v752 = vld [vmem:[%s1 + $0x1648] sm:$0xff]
  %v753 = vld [vmem:[%s1 + $0x1650] sm:$0xff]
  %v754 = vld [vmem:[%s1 + $0x1658] sm:$0xff]
  %v755 = vld [vmem:[%s1 + $0x1660] sm:$0xff]
  %v756 = vld [vmem:[%s1 + $0x1668] sm:$0xff]
  %v757 = vld [vmem:[%s1 + $0x1670] sm:$0xff]
  %v758 = vld [vmem:[%s1 + $0x1678] sm:$0xff]
  %v759 = vld [vmem:[%s1 + $0x1680] sm:$0xff]
  %v760 = vld [vmem:[%s1 + $0x1688] sm:$0xff]
  %v761 = vld [vmem:[%s1 + $0x1690] sm:$0xff]
  %v762 = vld [vmem:[%s1 + $0x1698] sm:$0xff]
  %v763 = vld [vmem:[%s1 + $0x16a0] sm:$0xff]
  %v764 = vld [vmem:[%s1 + $0x16a8] sm:$0xff]
  %v765 = vld [vmem:[%s1 + $0x16b0] sm:$0xff]
  %v766 = vld [vmem:[%s1 + $0x16b8] sm:$0xff]
  %v767 = vld [vmem:[%s1 + $0x16c0] sm:$0xff]
  %v768 = vld [vmem:[%s1 + $0x16c8] sm:$0xff]
  %v769 = vld [vmem:[%s1 + $0x16d0] sm:$0xff]
  %v770 = vld [vmem:[%s1 + $0x16d8] sm:$0xff]
  %v771 = vld [vmem:[%s1 + $0x16e0] sm:$0xff]
  %v772 = vld [vmem:[%s1 + $0x16e8] sm:$0xff]
  %v773 = vld [vmem:[%s1 + $0x16f0] sm:$0xff]
  %v774 = vld [vmem:[%s1 + $0x16f8] sm:$0xff]
  %v775 = vld [vmem:[%s1 + $0x1700] sm:$0xff]
  %v776 = vld [vmem:[%s1 + $0x1708] sm:$0xff]
  %v777 = vld [vmem:[%s1 + $0x1710] sm:$0xff]
  %v778 = vld [vmem:[%s1 + $0x1718] sm:$0xff]
  %v779 = vld [vmem:[%s1 + $0x1720] sm:$0xff]
  %v780 = vld [vmem:[%s1 + $0x1728] sm:$0xff]
  %v781 = vld [vmem:[%s1 + $0x1730] sm:$0xff]
  %v782 = vld [vmem:[%s1 + $0x1738] sm:$0xff]
  %v783 = vld [vmem:[%s1 + $0x1740] sm:$0xff]
  %v784 = vld [vmem:[%s1 + $0x1748] sm:$0xff]
  %v785 = vld [vmem:[%s1 + $0x1750] sm:$0xff]
  %v786 = vld [vmem:[%s1 + $0x1758] sm:$0xff]
  %v787 = vld [vmem:[%s1 + $0x1760] sm:$0xff]
  %v788 = vld [vmem:[%s1 + $0x1768] sm:$0xff]
  %v789 = vld [vmem:[%s1 + $0x1770] sm:$0xff]
  %v790 = vld [vmem:[%s1 + $0x1778] sm:$0xff]
  %v791 = vld [vmem:[%s1 + $0x1780] sm:$0xff]
  %v792 = vld [vmem:[%s1 + $0x1788] sm:$0xff]
  %v793 = vld [vmem:[%s1 + $0x1790] sm:$0xff]
  %v794 = vld [vmem:[%s1 + $0x1798] sm:$0xff]
  %v795 = vld [vmem:[%s1 + $0x17a0] sm:$0xff]
  %v796 = vld [vmem:[%s1 + $0x17a8] sm:$0xff]
  %v797 = vld [vmem:[%s1 + $0x17b0] sm:$0xff]
  %v798 = vld [vmem:[%s1 + $0x17b8] sm:$0xff]
  %v799 = vld [vmem:[%s1 + $0x17c0] sm:$0xff]
  %v800 = vld [vmem:[%s1 + $0x17c8] sm:$0xff]
  %v801 = vld [vmem:[%s1 + $0x17d0] sm:$0xff]
  %v802 = vld [vmem:[%s1 + $0x17d8] sm:$0xff]
  %v803 = vld [vmem:[%s1 + $0x17e0] sm:$0xff]
  %v804 = vld [vmem:[%s1 + $0x17e8] sm:$0xff]
  %v805 = vld [vmem:[%s1 + $0x17f0] sm:$0xff]
  %v806 = vld [vmem:[%s1 + $0x17f8] sm:$0xff]
  %v807 = vld [vmem:[%s1 + $0x1800] sm:$0xff]
  %v808 = vld [vmem:[%s1 + $0x1808] sm:$0xff]
  %v809 = vld [vmem:[%s1 + $0x1810] sm:$0xff]
  %v810 = vld [vmem:[%s1 + $0x1818] sm:$0xff]
  %v811 = vld [vmem:[%s1 + $0x1820] sm:$0xff]
  %v812 = vld [vmem:[%s1 + $0x1828] sm:$0xff]
  %v813 = vld [vmem:[%s1 + $0x1830] sm:$0xff]
  %v814 = vld [vmem:[%s1 + $0x1838] sm:$0xff]
  %v815 = vld [vmem:[%s1 + $0x1840] sm:$0xff]
  %v816 = vld [vmem:[%s1 + $0x1848] sm:$0xff]
  %v817 = vld [vmem:[%s1 + $0x1850] sm:$0xff]
  %v818 = vld [vmem:[%s1 + $0x1858] sm:$0xff]
  %v819 = vld [vmem:[%s1 + $0x1860] sm:$0xff]
  %v820 = vld [vmem:[%s1 + $0x1868] sm:$0xff]
  %v821 = vld [vmem:[%s1 + $0x1870] sm:$0xff]
  %v822 = vld [vmem:[%s1 + $0x1878] sm:$0xff]
  %v823 = vld [vmem:[%s1 + $0x1880] sm:$0xff]
  %v824 = vld [vmem:[%s1 + $0x1888] sm:$0xff]
  %v825 = vld [vmem:[%s1 + $0x1890] sm:$0xff]
  %v826 = vld [vmem:[%s1 + $0x1898] sm:$0xff]
  %v827 = vld [vmem:[%s1 + $0x18a0] sm:$0xff]
  %v828 = vld [vmem:[%s1 + $0x18a8] sm:$0xff]
  %v829 = vld [vmem:[%s1 + $0x18b0] sm:$0xff]
  %v830 = vld [vmem:[%s1 + $0x18b8] sm:$0xff]
  %v831 = vld [vmem:[%s1 + $0x18c0] sm:$0xff]
  %v832 = vld [vmem:[%s1 + $0x18c8] sm:$0xff]
  %v833 = vld [vmem:[%s1 + $0x18d0] sm:$0xff]
  %v834 = vld [vmem:[%s1 + $0x18d8] sm:$0xff]
  %v835 = vld [vmem:[%s1 + $0x18e0] sm:$0xff]
  %v836 = vld [vmem:[%s1 + $0x18e8] sm:$0xff]
  %v837 = vld [vmem:[%s1 + $0x18f0] sm:$0xff]
  %v838 = vld [vmem:[%s1 + $0x18f8] sm:$0xff]
  %v839 = vld [vmem:[%s1 + $0x1900] sm:$0xff]
  %v840 = vld [vmem:[%s1 + $0x1908] sm:$0xff]
  %v841 = vld [vmem:[%s1 + $0x1910] sm:$0xff]
  %v842 = vld [vmem:[%s1 + $0x1918] sm:$0xff]
  %v843 = vld [vmem:[%s1 + $0x1920] sm:$0xff]
  %v844 = vld [vmem:[%s1 + $0x1928] sm:$0xff]
  %v845 = vld [vmem:[%s1 + $0x1930] sm:$0xff]
  %v846 = vld [vmem:[%s1 + $0x1938] sm:$0xff]
  %v847 = vld [vmem:[%s1 + $0x1940] sm:$0xff]
  %v848 = vld [vmem:[%s1 + $0x1948] sm:$0xff]
  %v849 = vld [vmem:[%s1 + $0x1950] sm:$0xff]
  %v850 = vld [vmem:[%s1 + $0x1958] sm:$0xff]
  %v851 = vld [vmem:[%s1 + $0x1960] sm:$0xff]
  %v852 = vld [vmem:[%s1 + $0x1968] sm:$0xff]
  %v853 = vld [vmem:[%s1 + $0x1970] sm:$0xff]
  %v854 = vld [vmem:[%s1 + $0x1978] sm:$0xff]
  %v855 = vld [vmem:[%s1 + $0x1980] sm:$0xff]
  %v856 = vld [vmem:[%s1 + $0x1988] sm:$0xff]
  %v857 = vld [vmem:[%s1 + $0x1990] sm:$0xff]
  %v858 = vld [vmem:[%s1 + $0x1998] sm:$0xff]
  %v859 = vld [vmem:[%s1 + $0x19a0] sm:$0xff]
  %v860 = vld [vmem:[%s1 + $0x19a8] sm:$0xff]
  %v861 = vld [vmem:[%s1 + $0x19b0] sm:$0xff]
  %v862 = vld [vmem:[%s1 + $0x19b8] sm:$0xff]
  %v863 = vld [vmem:[%s1 + $0x19c0] sm:$0xff]
  %v864 = vld [vmem:[%s1 + $0x19c8] sm:$0xff]
  %v865 = vld [vmem:[%s1 + $0x19d0] sm:$0xff]
  %v866 = vld [vmem:[%s1 + $0x19d8] sm:$0xff]
  %v867 = vld [vmem:[%s1 + $0x19e0] sm:$0xff]
  %v868 = vld [vmem:[%s1 + $0x19e8] sm:$0xff]
  %v869 = vld [vmem:[%s1 + $0x19f0] sm:$0xff]
  %v870 = vld [vmem:[%s1 + $0x19f8] sm:$0xff]
  %v871 = vld [vmem:[%s1 + $0x1a00] sm:$0xff]
  %v872 = vld [vmem:[%s1 + $0x1a08] sm:$0xff]
  %v873 = vld [vmem:[%s1 + $0x1a10] sm:$0xff]
  %v874 = vld [vmem:[%s1 + $0x1a18] sm:$0xff]
  %v875 = vld [vmem:[%s1 + $0x1a20] sm:$0xff]
  %v876 = vld [vmem:[%s1 + $0x1a28] sm:$0xff]
  %v877 = vld [vmem:[%s1 + $0x1a30] sm:$0xff]
  %v878 = vld [vmem:[%s1 + $0x1a38] sm:$0xff]
  %v879 = vld [vmem:[%s1 + $0x1a40] sm:$0xff]
  %v880 = vld [vmem:[%s1 + $0x1a48] sm:$0xff]
  %v881 = vld [vmem:[%s1 + $0x1a50] sm:$0xff]
  %v882 = vld [vmem:[%s1 + $0x1a58] sm:$0xff]
  %v883 = vld [vmem:[%s1 + $0x1a60] sm:$0xff]
  %v884 = vld [vmem:[%s1 + $0x1a68] sm:$0xff]
  %v885 = vld [vmem:[%s1 + $0x1a70] sm:$0xff]
  %v886 = vld [vmem:[%s1 + $0x1a78] sm:$0xff]
  %v887 = vld [vmem:[%s1 + $0x1a80] sm:$0xff]
  %v888 = vld [vmem:[%s1 + $0x1a88] sm:$0xff]
  %v889 = vld [vmem:[%s1 + $0x1a90] sm:$0xff]
  %v890 = vld [vmem:[%s1 + $0x1a98] sm:$0xff]
  %v891 = vld [vmem:[%s1 + $0x1aa0] sm:$0xff]
  %v892 = vld [vmem:[%s1 + $0x1aa8] sm:$0xff]
  %v893 = vld [vmem:[%s1 + $0x1ab0] sm:$0xff]
  %v894 = vld [vmem:[%s1 + $0x1ab8] sm:$0xff]
  %v895 = vld [vmem:[%s1 + $0x1ac0] sm:$0xff]
  %v896 = vld [vmem:[%s1 + $0x1ac8] sm:$0xff]
  %v897 = vld [vmem:[%s1 + $0x1ad0] sm:$0xff]
  %v898 = vld [vmem:[%s1 + $0x1ad8] sm:$0xff]
  %v899 = vld [vmem:[%s1 + $0x1ae0] sm:$0xff]
  %v900 = vld [vmem:[%s1 + $0x1ae8] sm:$0xff]
  %v901 = vld [vmem:[%s1 + $0x1af0] sm:$0xff]
  %v902 = vld [vmem:[%s1 + $0x1af8] sm:$0xff]
  %v903 = vld [vmem:[%s1 + $0x1b00] sm:$0xff]
  %v904 = vld [vmem:[%s1 + $0x1b08] sm:$0xff]
  %v905 = vld [vmem:[%s1 + $0x1b10] sm:$0xff]
  %v906 = vld [vmem:[%s1 + $0x1b18] sm:$0xff]
  %v907 = vld [vmem:[%s1 + $0x1b20] sm:$0xff]
  %v908 = vld [vmem:[%s1 + $0x1b28] sm:$0xff]
  %v909 = vld [vmem:[%s1 + $0x1b30] sm:$0xff]
  %v910 = vld [vmem:[%s1 + $0x1b38] sm:$0xff]
  %v911 = vld [vmem:[%s1 + $0x1b40] sm:$0xff]
  %v912 = vld [vmem:[%s1 + $0x1b48] sm:$0xff]
  %v913 = vld [vmem:[%s1 + $0x1b50] sm:$0xff]
  %v914 = vld [vmem:[%s1 + $0x1b58] sm:$0xff]
  %v915 = vld [vmem:[%s1 + $0x1b60] sm:$0xff]
  %v916 = vld [vmem:[%s1 + $0x1b68] sm:$0xff]
  %v917 = vld [vmem:[%s1 + $0x1b70] sm:$0xff]
  %v918 = vld [vmem:[%s1 + $0x1b78] sm:$0xff]
  %v919 = vld [vmem:[%s1 + $0x1b80] sm:$0xff]
  %v920 = vld [vmem:[%s1 + $0x1b88] sm:$0xff]
  %v921 = vld [vmem:[%s1 + $0x1b90] sm:$0xff]
  %v922 = vld [vmem:[%s1 + $0x1b98] sm:$0xff]
  %v923 = vld [vmem:[%s1 + $0x1ba0] sm:$0xff]
  %v924 = vld [vmem:[%s1 + $0x1ba8] sm:$0xff]
  %v925 = vld [vmem:[%s1 + $0x1bb0] sm:$0xff]
  %v926 = vld [vmem:[%s1 + $0x1bb8] sm:$0xff]
  %v927 = vld [vmem:[%s1 + $0x1bc0] sm:$0xff]
  %v928 = vld [vmem:[%s1 + $0x1bc8] sm:$0xff]
  %v929 = vld [vmem:[%s1 + $0x1bd0] sm:$0xff]
  %v930 = vld [vmem:[%s1 + $0x1bd8] sm:$0xff]
  %v931 = vld [vmem:[%s1 + $0x1be0] sm:$0xff]
  %v932 = vld [vmem:[%s1 + $0x1be8] sm:$0xff]
  %v933 = vld [vmem:[%s1 + $0x1bf0] sm:$0xff]
  %v934 = vld [vmem:[%s1 + $0x1bf8] sm:$0xff]
  %v935 = vld [vmem:[%s1 + $0x1c00] sm:$0xff]
  %v936 = vld [vmem:[%s1 + $0x1c08] sm:$0xff]
  %v937 = vld [vmem:[%s1 + $0x1c10] sm:$0xff]
  %v938 = vld [vmem:[%s1 + $0x1c18] sm:$0xff]
  %v939 = vld [vmem:[%s1 + $0x1c20] sm:$0xff]
  %v940 = vld [vmem:[%s1 + $0x1c28] sm:$0xff]
  %v941 = vld [vmem:[%s1 + $0x1c30] sm:$0xff]
  %v942 = vld [vmem:[%s1 + $0x1c38] sm:$0xff]
  %v943 = vld [vmem:[%s1 + $0x1c40] sm:$0xff]
  %v944 = vld [vmem:[%s1 + $0x1c48] sm:$0xff]
  %v945 = vld [vmem:[%s1 + $0x1c50] sm:$0xff]
  %v946 = vld [vmem:[%s1 + $0x1c58] sm:$0xff]
  %v947 = vld [vmem:[%s1 + $0x1c60] sm:$0xff]
  %v948 = vld [vmem:[%s1 + $0x1c68] sm:$0xff]
  %v949 = vld [vmem:[%s1 + $0x1c70] sm:$0xff]
  %v950 = vld [vmem:[%s1 + $0x1c78] sm:$0xff]
  %v951 = vld [vmem:[%s1 + $0x1c80] sm:$0xff]
  %v952 = vld [vmem:[%s1 + $0x1c88] sm:$0xff]
  %v953 = vld [vmem:[%s1 + $0x1c90] sm:$0xff]
  %v954 = vld [vmem:[%s1 + $0x1c98] sm:$0xff]
  %v955 = vld [vmem:[%s1 + $0x1ca0] sm:$0xff]
  %v956 = vld [vmem:[%s1 + $0x1ca8] sm:$0xff]
  %v957 = vld [vmem:[%s1 + $0x1cb0] sm:$0xff]
  %v958 = vld [vmem:[%s1 + $0x1cb8] sm:$0xff]
  %v959 = vld [vmem:[%s1 + $0x1cc0] sm:$0xff]
  %v960 = vld [vmem:[%s1 + $0x1cc8] sm:$0xff]
  %v961 = vld [vmem:[%s1 + $0x1cd0] sm:$0xff]
  %v962 = vld [vmem:[%s1 + $0x1cd8] sm:$0xff]
  %v963 = vld [vmem:[%s1 + $0x1ce0] sm:$0xff]
  %v964 = vld [vmem:[%s1 + $0x1ce8] sm:$0xff]
  %v965 = vld [vmem:[%s1 + $0x1cf0] sm:$0xff]
  %v966 = vld [vmem:[%s1 + $0x1cf8] sm:$0xff]
  %v967 = vld [vmem:[%s1 + $0x1d00] sm:$0xff]
  %v968 = vld [vmem:[%s1 + $0x1d08] sm:$0xff]
  %v969 = vld [vmem:[%s1 + $0x1d10] sm:$0xff]
  %v970 = vld [vmem:[%s1 + $0x1d18] sm:$0xff]
  %v971 = vld [vmem:[%s1 + $0x1d20] sm:$0xff]
  %v972 = vld [vmem:[%s1 + $0x1d28] sm:$0xff]
  %v973 = vld [vmem:[%s1 + $0x1d30] sm:$0xff]
  %v974 = vld [vmem:[%s1 + $0x1d38] sm:$0xff]
  %v975 = vld [vmem:[%s1 + $0x1d40] sm:$0xff]
  %v976 = vld [vmem:[%s1 + $0x1d48] sm:$0xff]
  %v977 = vld [vmem:[%s1 + $0x1d50] sm:$0xff]
  %v978 = vld [vmem:[%s1 + $0x1d58] sm:$0xff]
  %v979 = vld [vmem:[%s1 + $0x1d60] sm:$0xff]
  %v980 = vld [vmem:[%s1 + $0x1d68] sm:$0xff]
  %v981 = vld [vmem:[%s1 + $0x1d70] sm:$0xff]
  %v982 = vld [vmem:[%s1 + $0x1d78] sm:$0xff]
  %v983 = vld [vmem:[%s1 + $0x1d80] sm:$0xff]
  %v984 = vld [vmem:[%s1 + $0x1d88] sm:$0xff]
  %v985 = vld [vmem:[%s1 + $0x1d90] sm:$0xff]
  %v986 = vld [vmem:[%s1 + $0x1d98] sm:$0xff]
  %v987 = vld [vmem:[%s1 + $0x1da0] sm:$0xff]
  %v988 = vld [vmem:[%s1 + $0x1da8] sm:$0xff]
  %v989 = vld [vmem:[%s1 + $0x1db0] sm:$0xff]
  %v990 = vld [vmem:[%s1 + $0x1db8] sm:$0xff]
  %v991 = vld [vmem:[%s1 + $0x1dc0] sm:$0xff]
  %v992 = vld [vmem:[%s1 + $0x1dc8] sm:$0xff]
  %v993 = vld [vmem:[%s1 + $0x1dd0] sm:$0xff]
  %v994 = vld [vmem:[%s1 + $0x1dd8] sm:$0xff]
  %v995 = vld [vmem:[%s1 + $0x1de0] sm:$0xff]
  %v996 = vld [vmem:[%s1 + $0x1de8] sm:$0xff]
  %v997 = vld [vmem:[%s1 + $0x1df0] sm:$0xff]
  %v998 = vld [vmem:[%s1 + $0x1df8] sm:$0xff]
  %v999 = vld [vmem:[%s1 + $0x1e00] sm:$0xff]
  %v1000 = vld [vmem:[%s1 + $0x1e08] sm:$0xff]
  %v1001 = vld [vmem:[%s1 + $0x1e10] sm:$0xff]
  %v1002 = vld [vmem:[%s1 + $0x1e18] sm:$0xff]
  %v1003 = vld [vmem:[%s1 + $0x1e20] sm:$0xff]
  %v1004 = vld [vmem:[%s1 + $0x1e28] sm:$0xff]
  %v1005 = vld [vmem:[%s1 + $0x1e30] sm:$0xff]
  %v1006 = vld [vmem:[%s1 + $0x1e38] sm:$0xff]
  %v1007 = vld [vmem:[%s1 + $0x1e40] sm:$0xff]
  %v1008 = vld [vmem:[%s1 + $0x1e48] sm:$0xff]
  %v1009 = vld [vmem:[%s1 + $0x1e50] sm:$0xff]
  %v1010 = vld [vmem:[%s1 + $0x1e58] sm:$0xff]
  %v1011 = vld [vmem:[%s1 + $0x1e60] sm:$0xff]
  %v1012 = vld [vmem:[%s1 + $0x1e68] sm:$0xff]
  %v1013 = vld [vmem:[%s1 + $0x1e70] sm:$0xff]
  %v1014 = vld [vmem:[%s1 + $0x1e78] sm:$0xff]
  %v1015 = vld [vmem:[%s1 + $0x1e80] sm:$0xff]
  %v1016 = vld [vmem:[%s1 + $0x1e88] sm:$0xff]
  %v1017 = vld [vmem:[%s1 + $0x1e90] sm:$0xff]
  %v1018 = vld [vmem:[%s1 + $0x1e98] sm:$0xff]
  %v1019 = vld [vmem:[%s1 + $0x1ea0] sm:$0xff]
  %v1020 = vld [vmem:[%s1 + $0x1ea8] sm:$0xff]
  %v1021 = vld [vmem:[%s1 + $0x1eb0] sm:$0xff]
  %v1022 = vld [vmem:[%s1 + $0x1eb8] sm:$0xff]
  %v1023 = vld [vmem:[%s1 + $0x1ec0] sm:$0xff]
  %v1024 = vld [vmem:[%s1 + $0x1ec8] sm:$0xff]
  %v1025 = vld [vmem:[%s1 + $0x1ed0] sm:$0xff]
  %v1026 = vld [vmem:[%s1 + $0x1ed8] sm:$0xff]
  %v1027 = vld [vmem:[%s1 + $0x1ee0] sm:$0xff]
  %v1028 = vld [vmem:[%s1 + $0x1ee8] sm:$0xff]
  %v1029 = vld [vmem:[%s1 + $0x1ef0] sm:$0xff]
  %v1030 = vld [vmem:[%s1 + $0x1ef8] sm:$0xff]
  %v1031 = vld [vmem:[%s1 + $0x1f00] sm:$0xff]
  %v1032 = vld [vmem:[%s1 + $0x1f08] sm:$0xff]
  %v1033 = vld [vmem:[%s1 + $0x1f10] sm:$0xff]
  %v1034 = vld [vmem:[%s1 + $0x1f18] sm:$0xff]
  %v1035 = vld [vmem:[%s1 + $0x1f20] sm:$0xff]
  %v1036 = vld [vmem:[%s1 + $0x1f28] sm:$0xff]
  %v1037 = vld [vmem:[%s1 + $0x1f30] sm:$0xff]
  %v1038 = vld [vmem:[%s1 + $0x1f38] sm:$0xff]
  %v1039 = vld [vmem:[%s1 + $0x1f40] sm:$0xff]
  %v1040 = vld [vmem:[%s1 + $0x1f48] sm:$0xff]
  %v1041 = vld [vmem:[%s1 + $0x1f50] sm:$0xff]
  %v1042 = vld [vmem:[%s1 + $0x1f58] sm:$0xff]
  %v1043 = vld [vmem:[%s1 + $0x1f60] sm:$0xff]
  %v1044 = vld [vmem:[%s1 + $0x1f68] sm:$0xff]
  %v1045 = vld [vmem:[%s1 + $0x1f70] sm:$0xff]
  %v1046 = vld [vmem:[%s1 + $0x1f78] sm:$0xff]
  %v1047 = vld [vmem:[%s1 + $0x1f80] sm:$0xff]
  %v1048 = vld [vmem:[%s1 + $0x1f88] sm:$0xff]
  %v1049 = vld [vmem:[%s1 + $0x1f90] sm:$0xff]
  %v1050 = vld [vmem:[%s1 + $0x1f98] sm:$0xff]
  %v1051 = vld [vmem:[%s1 + $0x1fa0] sm:$0xff]
  %v1052 = vld [vmem:[%s1 + $0x1fa8] sm:$0xff]
  %v1053 = vld [vmem:[%s1 + $0x1fb0] sm:$0xff]
  %v1054 = vld [vmem:[%s1 + $0x1fb8] sm:$0xff]
  %v1055 = vld [vmem:[%s1 + $0x1fc0] sm:$0xff]
  %v1056 = vld [vmem:[%s1 + $0x1fc8] sm:$0xff]
  %v1057 = vld [vmem:[%s1 + $0x1fd0] sm:$0xff]
  %v1058 = vld [vmem:[%s1 + $0x1fd8] sm:$0xff]
  %v1059 = vld [vmem:[%s1 + $0x1fe0] sm:$0xff]
  %v1060 = vld [vmem:[%s1 + $0x1fe8] sm:$0xff]
  %v1061 = vld [vmem:[%s1 + $0x1ff0] sm:$0xff]
  %v1062 = vld [vmem:[%s1 + $0x1ff8] sm:$0xff]
  %v1063 = vld [vmem:[%s1 + $0x2000] sm:$0xff]
  %v1064 = vld [vmem:[%s1 + $0x2008] sm:$0xff]
  %v1065 = vld [vmem:[%s1 + $0x2010] sm:$0xff]
  %v1066 = vld [vmem:[%s1 + $0x2018] sm:$0xff]
  %v1067 = vld [vmem:[%s1 + $0x2020] sm:$0xff]
  %v1068 = vld [vmem:[%s1 + $0x2028] sm:$0xff]
  %v1069 = vld [vmem:[%s1 + $0x2030] sm:$0xff]
  %v1070 = vld [vmem:[%s1 + $0x2038] sm:$0xff]
  %v1071 = vld [vmem:[%s1 + $0x2040] sm:$0xff]
  %v1072 = vld [vmem:[%s1 + $0x2048] sm:$0xff]
  %v1073 = vld [vmem:[%s1 + $0x2050] sm:$0xff]
  %v1074 = vld [vmem:[%s1 + $0x2058] sm:$0xff]
  %v1075 = vld [vmem:[%s1 + $0x2060] sm:$0xff]
  %v1076 = vld [vmem:[%s1 + $0x2068] sm:$0xff]
  %v1077 = vld [vmem:[%s1 + $0x2070] sm:$0xff]
  %v1078 = vld [vmem:[%s1 + $0x2078] sm:$0xff]
  %v1079 = vld [vmem:[%s1 + $0x2080] sm:$0xff]
  %v1080 = vld [vmem:[%s1 + $0x2088] sm:$0xff]
  %v1081 = vld [vmem:[%s1 + $0x2090] sm:$0xff]
  %v1082 = vld [vmem:[%s1 + $0x2098] sm:$0xff]
  %v1083 = vld [vmem:[%s1 + $0x20a0] sm:$0xff]
  %v1084 = vld [vmem:[%s1 + $0x20a8] sm:$0xff]
  %v1085 = vld [vmem:[%s1 + $0x20b0] sm:$0xff]
  %v1086 = vld [vmem:[%s1 + $0x20b8] sm:$0xff]
  %v1087 = vld [vmem:[%s1 + $0x20c0] sm:$0xff]
  %v1088 = vld [vmem:[%s1 + $0x20c8] sm:$0xff]
  %v1089 = vld [vmem:[%s1 + $0x20d0] sm:$0xff]
  %v1090 = vld [vmem:[%s1 + $0x20d8] sm:$0xff]
  %v1091 = vld [vmem:[%s1 + $0x20e0] sm:$0xff]
  %v1092 = vld [vmem:[%s1 + $0x20e8] sm:$0xff]
  %v1093 = vld [vmem:[%s1 + $0x20f0] sm:$0xff]
  %v1094 = vld [vmem:[%s1 + $0x20f8] sm:$0xff]
  %v1095 = vld [vmem:[%s1 + $0x2100] sm:$0xff]
  %v1096 = vld [vmem:[%s1 + $0x2108] sm:$0xff]
  %v1097 = vld [vmem:[%s1 + $0x2110] sm:$0xff]
  %v1098 = vld [vmem:[%s1 + $0x2118] sm:$0xff]
  %v1099 = vld [vmem:[%s1 + $0x2120] sm:$0xff]
  %v1100 = vld [vmem:[%s1 + $0x2128] sm:$0xff]
  %v1101 = vld [vmem:[%s1 + $0x2130] sm:$0xff]
  %v1102 = vld [vmem:[%s1 + $0x2138] sm:$0xff]
  %v1103 = vld [vmem:[%s1 + $0x2140] sm:$0xff]
  %v1104 = vld [vmem:[%s1 + $0x2148] sm:$0xff]
  %v1105 = vld [vmem:[%s1 + $0x2150] sm:$0xff]
  %v1106 = vld [vmem:[%s1 + $0x2158] sm:$0xff]
  %v1107 = vld [vmem:[%s1 + $0x2160] sm:$0xff]
  %v1108 = vld [vmem:[%s1 + $0x2168] sm:$0xff]
  %v1109 = vld [vmem:[%s1 + $0x2170] sm:$0xff]
  %v1110 = vld [vmem:[%s1 + $0x2178] sm:$0xff]
  %v1111 = vld [vmem:[%s1 + $0x2180] sm:$0xff]
  %v1112 = vld [vmem:[%s1 + $0x2188] sm:$0xff]
  %v1113 = vld [vmem:[%s1 + $0x2190] sm:$0xff]
  %v1114 = vld [vmem:[%s1 + $0x2198] sm:$0xff]
  %v1115 = vld [vmem:[%s1 + $0x21a0] sm:$0xff]
  %v1116 = vld [vmem:[%s1 + $0x21a8] sm:$0xff]
  %v1117 = vld [vmem:[%s1 + $0x21b0] sm:$0xff]
  %v1118 = vld [vmem:[%s1 + $0x21b8] sm:$0xff]
  %v1119 = vld [vmem:[%s1 + $0x21c0] sm:$0xff]
  %v1120 = vld [vmem:[%s1 + $0x21c8] sm:$0xff]
  %v1121 = vld [vmem:[%s1 + $0x21d0] sm:$0xff]
  %v1122 = vld [vmem:[%s1 + $0x21d8] sm:$0xff]
  %v1123 = vld [vmem:[%s1 + $0x21e0] sm:$0xff]
  %v1124 = vld [vmem:[%s1 + $0x21e8] sm:$0xff]
  %v1125 = vld [vmem:[%s1 + $0x21f0] sm:$0xff]
  %v1126 = vld [vmem:[%s1 + $0x21f8] sm:$0xff]
  %v1127 = vld [vmem:[%s1 + $0x2200] sm:$0xff]
  %v1128 = vld [vmem:[%s1 + $0x2208] sm:$0xff]
  %v1129 = vld [vmem:[%s1 + $0x2210] sm:$0xff]
  %v1130 = vld [vmem:[%s1 + $0x2218] sm:$0xff]
  %v1131 = vld [vmem:[%s1 + $0x2220] sm:$0xff]
  %v1132 = vld [vmem:[%s1 + $0x2228] sm:$0xff]
  %v1133 = vld [vmem:[%s1 + $0x2230] sm:$0xff]
  %v1134 = vld [vmem:[%s1 + $0x2238] sm:$0xff]
  %v1135 = vld [vmem:[%s1 + $0x2240] sm:$0xff]
  %v1136 = vld [vmem:[%s1 + $0x2248] sm:$0xff]
  %v1137 = vld [vmem:[%s1 + $0x2250] sm:$0xff]
  %v1138 = vld [vmem:[%s1 + $0x2258] sm:$0xff]
  %v1139 = vld [vmem:[%s1 + $0x2260] sm:$0xff]
  %v1140 = vld [vmem:[%s1 + $0x2268] sm:$0xff]
  %v1141 = vld [vmem:[%s1 + $0x2270] sm:$0xff]
  %v1142 = vld [vmem:[%s1 + $0x2278] sm:$0xff]
  %v1143 = vld [vmem:[%s1 + $0x2280] sm:$0xff]
  %v1144 = vld [vmem:[%s1 + $0x2288] sm:$0xff]
  %v1145 = vld [vmem:[%s1 + $0x2290] sm:$0xff]
  %v1146 = vld [vmem:[%s1 + $0x2298] sm:$0xff]
  %v1147 = vld [vmem:[%s1 + $0x22a0] sm:$0xff]
  %v1148 = vld [vmem:[%s1 + $0x22a8] sm:$0xff]
  %v1149 = vld [vmem:[%s1 + $0x22b0] sm:$0xff]
  %v1150 = vld [vmem:[%s1 + $0x22b8] sm:$0xff]
  %v1151 = vld [vmem:[%s1 + $0x22c0] sm:$0xff]
  %v1152 = vld [vmem:[%s1 + $0x22c8] sm:$0xff]
  %v1153 = vld [vmem:[%s1 + $0x22d0] sm:$0xff]
  %v1154 = vld [vmem:[%s1 + $0x22d8] sm:$0xff]
  %v1155 = vld [vmem:[%s1 + $0x22e0] sm:$0xff]
  %v1156 = vld [vmem:[%s1 + $0x22e8] sm:$0xff]
  %v1157 = vld [vmem:[%s1 + $0x22f0] sm:$0xff]
  %v1158 = vld [vmem:[%s1 + $0x22f8] sm:$0xff]
  %v1159 = vld [vmem:[%s1 + $0x2300] sm:$0xff]
  %v1160 = vld [vmem:[%s1 + $0x2308] sm:$0xff]
  %v1161 = vld [vmem:[%s1 + $0x2310] sm:$0xff]
  %v1162 = vld [vmem:[%s1 + $0x2318] sm:$0xff]
  %v1163 = vld [vmem:[%s1 + $0x2320] sm:$0xff]
  %v1164 = vld [vmem:[%s1 + $0x2328] sm:$0xff]
  %v1165 = vld [vmem:[%s1 + $0x2330] sm:$0xff]
  %v1166 = vld [vmem:[%s1 + $0x2338] sm:$0xff]
  %v1167 = vld [vmem:[%s1 + $0x2340] sm:$0xff]
  %v1168 = vld [vmem:[%s1 + $0x2348] sm:$0xff]
  %v1169 = vld [vmem:[%s1 + $0x2350] sm:$0xff]
  %v1170 = vld [vmem:[%s1 + $0x2358] sm:$0xff]
  %v1171 = vld [vmem:[%s1 + $0x2360] sm:$0xff]
  %v1172 = vld [vmem:[%s1 + $0x2368] sm:$0xff]
  %v1173 = vld [vmem:[%s1 + $0x2370] sm:$0xff]
  %v1174 = vld [vmem:[%s1 + $0x2378] sm:$0xff]
  %v1175 = vld [vmem:[%s1 + $0x2380] sm:$0xff]
  %v1176 = vld [vmem:[%s1 + $0x2388] sm:$0xff]
  %v1177 = vld [vmem:[%s1 + $0x2390] sm:$0xff]
  %v1178 = vld [vmem:[%s1 + $0x2398] sm:$0xff]
  %v1179 = vld [vmem:[%s1 + $0x23a0] sm:$0xff]
  %v1180 = vld [vmem:[%s1 + $0x23a8] sm:$0xff]
  %v1181 = vld [vmem:[%s1 + $0x23b0] sm:$0xff]
  %v1182 = vld [vmem:[%s1 + $0x23b8] sm:$0xff]
  %v1183 = vld [vmem:[%s1 + $0x23c0] sm:$0xff]
  %v1184 = vld [vmem:[%s1 + $0x23c8] sm:$0xff]
  %v1185 = vld [vmem:[%s1 + $0x23d0] sm:$0xff]
  %v1186 = vld [vmem:[%s1 + $0x23d8] sm:$0xff]
  %v1187 = vld [vmem:[%s1 + $0x23e0] sm:$0xff]
  %v1188 = vld [vmem:[%s1 + $0x23e8] sm:$0xff]
  %v1189 = vld [vmem:[%s1 + $0x23f0] sm:$0xff]
  %v1190 = vld [vmem:[%s1 + $0x23f8] sm:$0xff]
  %v1191 = vld [vmem:[%s2] sm:$0xf]
  %v1193 = vlaneseq
  %v1194 = vshrl.u32 %v1193, 7
  %v1195 = vsub.s32 0, %v1194
  %v1196 = vrot.slane %v1191, %v1195
  %v1197 = vlaneseq
  %v1198 = vshrl.u32 %v1197, 7
  %v1199 = vsub.s32 1, %v1198
  %v1200 = vrot.slane %v1191, %v1199
  %v1201 = vlaneseq
  %v1202 = vshrl.u32 %v1201, 7
  %v1203 = vsub.s32 2, %v1202
  %v1204 = vrot.slane %v1191, %v1203
  %v1205 = vlaneseq
  %v1206 = vshrl.u32 %v1205, 7
  %v1207 = vsub.s32 3, %v1206
  %v1208 = vrot.slane %v1191, %v1207
  %v1231 = vunpack.c.l.b16 %v21
  %v1232 = vunpack.c.h.b16 %v21
  %v1233 = vunpack.c.l.b16 %v22
  %v1234 = vunpack.c.h.b16 %v22
  %v1235 = vunpack.c.l.b16 %v23
  %v1236 = vunpack.c.h.b16 %v23
  %v1237 = vunpack.c.l.b16 %v24
  %v1238 = vunpack.c.h.b16 %v24
  %v1239 = vunpack.c.l.b16 %v25
  %v1240 = vunpack.c.h.b16 %v25
  %v1241 = vunpack.c.l.b16 %v26
  %v1242 = vunpack.c.h.b16 %v26
  %v1243 = vunpack.c.l.b16 %v27
  %v1244 = vunpack.c.h.b16 %v27
  %v1245 = vunpack.c.l.b16 %v28
  %v1246 = vunpack.c.h.b16 %v28
  %v1247 = vunpack.c.l.b16 %v29
  %v1248 = vunpack.c.h.b16 %v29
  %v1249 = vunpack.c.l.b16 %v30
  %v1250 = vunpack.c.h.b16 %v30
  %v1251 = vunpack.c.l.b16 %v31
  %v1252 = vunpack.c.h.b16 %v31
  %v1253 = vunpack.c.l.b16 %v32
  %v1254 = vunpack.c.h.b16 %v32
  %v1255 = vunpack.c.l.b16 %v33
  %v1256 = vunpack.c.h.b16 %v33
  %v1257 = vunpack.c.l.b16 %v34
  %v1258 = vunpack.c.h.b16 %v34
  %v1259 = vunpack.c.l.b16 %v35
  %v1260 = vunpack.c.h.b16 %v35
  %v1261 = vunpack.c.l.b16 %v36
  %v1262 = vunpack.c.h.b16 %v36
  %v1263 = vunpack.c.l.b16 %v37
  %v1264 = vunpack.c.h.b16 %v37
  %v1265 = vunpack.c.l.b16 %v38
  %v1266 = vunpack.c.h.b16 %v38
  %v1267 = vpack.c.b16 %v1231, %v1231
  %v1268 = vpack.c.b16 %v1232, %v1232
  %v1269 = vpack.c.b16 %v1233, %v1233
  %v1270 = vpack.c.b16 %v1234, %v1234
  %v1271 = vpack.c.b16 %v1235, %v1235
  %v1272 = vpack.c.b16 %v1236, %v1236
  %v1273 = vpack.c.b16 %v1237, %v1237
  %v1274 = vpack.c.b16 %v1238, %v1238
  %v1275 = vpack.c.b16 %v1239, %v1239
  %v1276 = vpack.c.b16 %v1240, %v1240
  %v1277 = vpack.c.b16 %v1241, %v1241
  %v1278 = vpack.c.b16 %v1242, %v1242
  %v1279 = vpack.c.b16 %v1243, %v1243
  %v1280 = vpack.c.b16 %v1244, %v1244
  %v1281 = vpack.c.b16 %v1245, %v1245
  %v1282 = vpack.c.b16 %v1246, %v1246
  %v1283 = vpack.c.b16 %v1247, %v1247
  %v1284 = vpack.c.b16 %v1248, %v1248
  %v1285 = vpack.c.b16 %v1249, %v1249
  %v1286 = vpack.c.b16 %v1250, %v1250
  %v1287 = vpack.c.b16 %v1251, %v1251
  %v1288 = vpack.c.b16 %v1252, %v1252
  %v1289 = vpack.c.b16 %v1253, %v1253
  %v1290 = vpack.c.b16 %v1254, %v1254
  %v1291 = vpack.c.b16 %v1255, %v1255
  %v1292 = vpack.c.b16 %v1256, %v1256
  %v1293 = vpack.c.b16 %v1257, %v1257
  %v1294 = vpack.c.b16 %v1258, %v1258
  %v1295 = vpack.c.b16 %v1259, %v1259
  %v1296 = vpack.c.b16 %v1260, %v1260
  %v1297 = vpack.c.b16 %v1261, %v1261
  %v1298 = vpack.c.b16 %v1262, %v1262
  %v1299 = vpack.c.b16 %v1263, %v1263
  %v1300 = vpack.c.b16 %v1264, %v1264
  %v1301 = vpack.c.b16 %v1265, %v1265
  %v1302 = vpack.c.b16 %v1266, %v1266
  %v2491 = vunpack.c.l.b16 %v39
  %v2492 = vunpack.c.h.b16 %v39
  %v2493 = vunpack.c.l.b16 %v40
  %v2494 = vunpack.c.h.b16 %v40
  %v2495 = vunpack.c.l.b16 %v41
  %v2496 = vunpack.c.h.b16 %v41
  %v2497 = vunpack.c.l.b16 %v42
  %v2498 = vunpack.c.h.b16 %v42
  %v2499 = vunpack.c.l.b16 %v43
  %v2500 = vunpack.c.h.b16 %v43
  %v2501 = vunpack.c.l.b16 %v44
  %v2502 = vunpack.c.h.b16 %v44
  %v2503 = vunpack.c.l.b16 %v45
  %v2504 = vunpack.c.h.b16 %v45
  %v2505 = vunpack.c.l.b16 %v46
  %v2506 = vunpack.c.h.b16 %v46
  %v2507 = vunpack.c.l.b16 %v47
  %v2508 = vunpack.c.h.b16 %v47
  %v2509 = vunpack.c.l.b16 %v48
  %v2510 = vunpack.c.h.b16 %v48
  %v2511 = vunpack.c.l.b16 %v49
  %v2512 = vunpack.c.h.b16 %v49
  %v2513 = vunpack.c.l.b16 %v50
  %v2514 = vunpack.c.h.b16 %v50
  %v2515 = vunpack.c.l.b16 %v51
  %v2516 = vunpack.c.h.b16 %v51
  %v2517 = vunpack.c.l.b16 %v52
  %v2518 = vunpack.c.h.b16 %v52
  %v2519 = vunpack.c.l.b16 %v53
  %v2520 = vunpack.c.h.b16 %v53
  %v2521 = vunpack.c.l.b16 %v54
  %v2522 = vunpack.c.h.b16 %v54
  %v2523 = vunpack.c.l.b16 %v55
  %v2524 = vunpack.c.h.b16 %v55
  %v2525 = vunpack.c.l.b16 %v56
  %v2526 = vunpack.c.h.b16 %v56
  %v2527 = vunpack.c.l.b16 %v57
  %v2528 = vunpack.c.h.b16 %v57
  %v2529 = vunpack.c.l.b16 %v58
  %v2530 = vunpack.c.h.b16 %v58
  %v2531 = vunpack.c.l.b16 %v59
  %v2532 = vunpack.c.h.b16 %v59
  %v2533 = vunpack.c.l.b16 %v60
  %v2534 = vunpack.c.h.b16 %v60
  %v2535 = vunpack.c.l.b16 %v61
  %v2536 = vunpack.c.h.b16 %v61
  %v2537 = vunpack.c.l.b16 %v62
  %v2538 = vunpack.c.h.b16 %v62
  %v2539 = vunpack.c.l.b16 %v63
  %v2540 = vunpack.c.h.b16 %v63
  %v2541 = vunpack.c.l.b16 %v64
  %v2542 = vunpack.c.h.b16 %v64
  %v2543 = vunpack.c.l.b16 %v65
  %v2544 = vunpack.c.h.b16 %v65
  %v2545 = vunpack.c.l.b16 %v66
  %v2546 = vunpack.c.h.b16 %v66
  %v2547 = vunpack.c.l.b16 %v67
  %v2548 = vunpack.c.h.b16 %v67
  %v2549 = vunpack.c.l.b16 %v68
  %v2550 = vunpack.c.h.b16 %v68
  %v2551 = vunpack.c.l.b16 %v69
  %v2552 = vunpack.c.h.b16 %v69
  %v2553 = vunpack.c.l.b16 %v70
  %v2554 = vunpack.c.h.b16 %v70
  %v2555 = vunpack.c.l.b16 %v71
  %v2556 = vunpack.c.h.b16 %v71
  %v2557 = vunpack.c.l.b16 %v72
  %v2558 = vunpack.c.h.b16 %v72
  %v2559 = vunpack.c.l.b16 %v73
  %v2560 = vunpack.c.h.b16 %v73
  %v2561 = vunpack.c.l.b16 %v74
  %v2562 = vunpack.c.h.b16 %v74
  %v2563 = vunpack.c.l.b16 %v75
  %v2564 = vunpack.c.h.b16 %v75
  %v2565 = vunpack.c.l.b16 %v76
  %v2566 = vunpack.c.h.b16 %v76
  %v2567 = vunpack.c.l.b16 %v77
  %v2568 = vunpack.c.h.b16 %v77
  %v2569 = vunpack.c.l.b16 %v78
  %v2570 = vunpack.c.h.b16 %v78
  %v2571 = vunpack.c.l.b16 %v79
  %v2572 = vunpack.c.h.b16 %v79
  %v2573 = vunpack.c.l.b16 %v80
  %v2574 = vunpack.c.h.b16 %v80
  %v2575 = vunpack.c.l.b16 %v81
  %v2576 = vunpack.c.h.b16 %v81
  %v2577 = vunpack.c.l.b16 %v82
  %v2578 = vunpack.c.h.b16 %v82
  %v2579 = vunpack.c.l.b16 %v83
  %v2580 = vunpack.c.h.b16 %v83
  %v2581 = vunpack.c.l.b16 %v84
  %v2582 = vunpack.c.h.b16 %v84
  %v2583 = vunpack.c.l.b16 %v85
  %v2584 = vunpack.c.h.b16 %v85
  %v2585 = vunpack.c.l.b16 %v86
  %v2586 = vunpack.c.h.b16 %v86
  %v2587 = vunpack.c.l.b16 %v87
  %v2588 = vunpack.c.h.b16 %v87
  %v2589 = vunpack.c.l.b16 %v88
  %v2590 = vunpack.c.h.b16 %v88
  %v2591 = vunpack.c.l.b16 %v89
  %v2592 = vunpack.c.h.b16 %v89
  %v2593 = vunpack.c.l.b16 %v90
  %v2594 = vunpack.c.h.b16 %v90
  %v2595 = vunpack.c.l.b16 %v91
  %v2596 = vunpack.c.h.b16 %v91
  %v2597 = vunpack.c.l.b16 %v92
  %v2598 = vunpack.c.h.b16 %v92
  %v2599 = vunpack.c.l.b16 %v93
  %v2600 = vunpack.c.h.b16 %v93
  %v2601 = vunpack.c.l.b16 %v94
  %v2602 = vunpack.c.h.b16 %v94
  %v2603 = vunpack.c.l.b16 %v95
  %v2604 = vunpack.c.h.b16 %v95
  %v2605 = vunpack.c.l.b16 %v96
  %v2606 = vunpack.c.h.b16 %v96
  %v2607 = vunpack.c.l.b16 %v97
  %v2608 = vunpack.c.h.b16 %v97
  %v2609 = vunpack.c.l.b16 %v98
  %v2610 = vunpack.c.h.b16 %v98
  %v2611 = vunpack.c.l.b16 %v99
  %v2612 = vunpack.c.h.b16 %v99
  %v2613 = vunpack.c.l.b16 %v100
  %v2614 = vunpack.c.h.b16 %v100
  %v2615 = vunpack.c.l.b16 %v101
  %v2616 = vunpack.c.h.b16 %v101
  %v2617 = vunpack.c.l.b16 %v102
  %v2618 = vunpack.c.h.b16 %v102
  %v2619 = vunpack.c.l.b16 %v103
  %v2620 = vunpack.c.h.b16 %v103
  %v2621 = vunpack.c.l.b16 %v104
  %v2622 = vunpack.c.h.b16 %v104
  %v2623 = vunpack.c.l.b16 %v105
  %v2624 = vunpack.c.h.b16 %v105
  %v2625 = vunpack.c.l.b16 %v106
  %v2626 = vunpack.c.h.b16 %v106
  %v2627 = vunpack.c.l.b16 %v107
  %v2628 = vunpack.c.h.b16 %v107
  %v2629 = vunpack.c.l.b16 %v108
  %v2630 = vunpack.c.h.b16 %v108
  %v2631 = vunpack.c.l.b16 %v109
  %v2632 = vunpack.c.h.b16 %v109
  %v2633 = vunpack.c.l.b16 %v110
  %v2634 = vunpack.c.h.b16 %v110
  %v2635 = vunpack.c.l.b16 %v111
  %v2636 = vunpack.c.h.b16 %v111
  %v2637 = vunpack.c.l.b16 %v112
  %v2638 = vunpack.c.h.b16 %v112
  %v2639 = vunpack.c.l.b16 %v113
  %v2640 = vunpack.c.h.b16 %v113
  %v2641 = vunpack.c.l.b16 %v114
  %v2642 = vunpack.c.h.b16 %v114
  %v2643 = vunpack.c.l.b16 %v115
  %v2644 = vunpack.c.h.b16 %v115
  %v2645 = vunpack.c.l.b16 %v116
  %v2646 = vunpack.c.h.b16 %v116
  %v2647 = vunpack.c.l.b16 %v117
  %v2648 = vunpack.c.h.b16 %v117
  %v2649 = vunpack.c.l.b16 %v118
  %v2650 = vunpack.c.h.b16 %v118
  %v2651 = vunpack.c.l.b16 %v119
  %v2652 = vunpack.c.h.b16 %v119
  %v2653 = vunpack.c.l.b16 %v120
  %v2654 = vunpack.c.h.b16 %v120
  %v2655 = vunpack.c.l.b16 %v121
  %v2656 = vunpack.c.h.b16 %v121
  %v2657 = vunpack.c.l.b16 %v122
  %v2658 = vunpack.c.h.b16 %v122
  %v2659 = vunpack.c.l.b16 %v123
  %v2660 = vunpack.c.h.b16 %v123
  %v2661 = vunpack.c.l.b16 %v124
  %v2662 = vunpack.c.h.b16 %v124
  %v2663 = vunpack.c.l.b16 %v125
  %v2664 = vunpack.c.h.b16 %v125
  %v2665 = vunpack.c.l.b16 %v126
  %v2666 = vunpack.c.h.b16 %v126
  %v2667 = vunpack.c.l.b16 %v127
  %v2668 = vunpack.c.h.b16 %v127
  %v2669 = vunpack.c.l.b16 %v128
  %v2670 = vunpack.c.h.b16 %v128
  %v2671 = vunpack.c.l.b16 %v129
  %v2672 = vunpack.c.h.b16 %v129
  %v2673 = vunpack.c.l.b16 %v130
  %v2674 = vunpack.c.h.b16 %v130
  %v2675 = vunpack.c.l.b16 %v131
  %v2676 = vunpack.c.h.b16 %v131
  %v2677 = vunpack.c.l.b16 %v132
  %v2678 = vunpack.c.h.b16 %v132
  %v2679 = vunpack.c.l.b16 %v133
  %v2680 = vunpack.c.h.b16 %v133
  %v2681 = vunpack.c.l.b16 %v134
  %v2682 = vunpack.c.h.b16 %v134
  %v2683 = vunpack.c.l.b16 %v135
  %v2684 = vunpack.c.h.b16 %v135
  %v2685 = vunpack.c.l.b16 %v136
  %v2686 = vunpack.c.h.b16 %v136
  %v2687 = vunpack.c.l.b16 %v137
  %v2688 = vunpack.c.h.b16 %v137
  %v2689 = vunpack.c.l.b16 %v138
  %v2690 = vunpack.c.h.b16 %v138
  %v2691 = vunpack.c.l.b16 %v139
  %v2692 = vunpack.c.h.b16 %v139
  %v2693 = vunpack.c.l.b16 %v140
  %v2694 = vunpack.c.h.b16 %v140
  %v2695 = vunpack.c.l.b16 %v141
  %v2696 = vunpack.c.h.b16 %v141
  %v2697 = vunpack.c.l.b16 %v142
  %v2698 = vunpack.c.h.b16 %v142
  %v2699 = vunpack.c.l.b16 %v143
  %v2700 = vunpack.c.h.b16 %v143
  %v2701 = vunpack.c.l.b16 %v144
  %v2702 = vunpack.c.h.b16 %v144
  %v2703 = vunpack.c.l.b16 %v145
  %v2704 = vunpack.c.h.b16 %v145
  %v2705 = vunpack.c.l.b16 %v146
  %v2706 = vunpack.c.h.b16 %v146
  %v2707 = vunpack.c.l.b16 %v147
  %v2708 = vunpack.c.h.b16 %v147
  %v2709 = vunpack.c.l.b16 %v148
  %v2710 = vunpack.c.h.b16 %v148
  %v2711 = vunpack.c.l.b16 %v149
  %v2712 = vunpack.c.h.b16 %v149
  %v2713 = vunpack.c.l.b16 %v150
  %v2714 = vunpack.c.h.b16 %v150
  %v2715 = vunpack.c.l.b16 %v151
  %v2716 = vunpack.c.h.b16 %v151
  %v2717 = vunpack.c.l.b16 %v152
  %v2718 = vunpack.c.h.b16 %v152
  %v2719 = vunpack.c.l.b16 %v153
  %v2720 = vunpack.c.h.b16 %v153
  %v2721 = vunpack.c.l.b16 %v154
  %v2722 = vunpack.c.h.b16 %v154
  %v2723 = vunpack.c.l.b16 %v155
  %v2724 = vunpack.c.h.b16 %v155
  %v2725 = vunpack.c.l.b16 %v156
  %v2726 = vunpack.c.h.b16 %v156
  %v2727 = vunpack.c.l.b16 %v157
  %v2728 = vunpack.c.h.b16 %v157
  %v2729 = vunpack.c.l.b16 %v158
  %v2730 = vunpack.c.h.b16 %v158
  %v2731 = vunpack.c.l.b16 %v159
  %v2732 = vunpack.c.h.b16 %v159
  %v2733 = vunpack.c.l.b16 %v160
  %v2734 = vunpack.c.h.b16 %v160
  %v2735 = vunpack.c.l.b16 %v161
  %v2736 = vunpack.c.h.b16 %v161
  %v2737 = vunpack.c.l.b16 %v162
  %v2738 = vunpack.c.h.b16 %v162
  %v2739 = vunpack.c.l.b16 %v163
  %v2740 = vunpack.c.h.b16 %v163
  %v2741 = vunpack.c.l.b16 %v164
  %v2742 = vunpack.c.h.b16 %v164
  %v2743 = vunpack.c.l.b16 %v165
  %v2744 = vunpack.c.h.b16 %v165
  %v2745 = vunpack.c.l.b16 %v166
  %v2746 = vunpack.c.h.b16 %v166
  %v2747 = vunpack.c.l.b16 %v167
  %v2748 = vunpack.c.h.b16 %v167
  %v2749 = vunpack.c.l.b16 %v168
  %v2750 = vunpack.c.h.b16 %v168
  %v2751 = vunpack.c.l.b16 %v169
  %v2752 = vunpack.c.h.b16 %v169
  %v2753 = vunpack.c.l.b16 %v170
  %v2754 = vunpack.c.h.b16 %v170
  %v2755 = vunpack.c.l.b16 %v171
  %v2756 = vunpack.c.h.b16 %v171
  %v2757 = vunpack.c.l.b16 %v172
  %v2758 = vunpack.c.h.b16 %v172
  %v2759 = vunpack.c.l.b16 %v173
  %v2760 = vunpack.c.h.b16 %v173
  %v2761 = vunpack.c.l.b16 %v174
  %v2762 = vunpack.c.h.b16 %v174
  %v2763 = vunpack.c.l.b16 %v175
  %v2764 = vunpack.c.h.b16 %v175
  %v2765 = vunpack.c.l.b16 %v176
  %v2766 = vunpack.c.h.b16 %v176
  %v2767 = vunpack.c.l.b16 %v177
  %v2768 = vunpack.c.h.b16 %v177
  %v2769 = vunpack.c.l.b16 %v178
  %v2770 = vunpack.c.h.b16 %v178
  %v2771 = vunpack.c.l.b16 %v179
  %v2772 = vunpack.c.h.b16 %v179
  %v2773 = vunpack.c.l.b16 %v180
  %v2774 = vunpack.c.h.b16 %v180
  %v2775 = vunpack.c.l.b16 %v181
  %v2776 = vunpack.c.h.b16 %v181
  %v2777 = vunpack.c.l.b16 %v182
  %v2778 = vunpack.c.h.b16 %v182
  %v2779 = vunpack.c.l.b16 %v183
  %v2780 = vunpack.c.h.b16 %v183
  %v2781 = vunpack.c.l.b16 %v184
  %v2782 = vunpack.c.h.b16 %v184
  %v2783 = vunpack.c.l.b16 %v185
  %v2784 = vunpack.c.h.b16 %v185
  %v2785 = vunpack.c.l.b16 %v186
  %v2786 = vunpack.c.h.b16 %v186
  %v2787 = vunpack.c.l.b16 %v187
  %v2788 = vunpack.c.h.b16 %v187
  %v2789 = vunpack.c.l.b16 %v188
  %v2790 = vunpack.c.h.b16 %v188
  %v2791 = vunpack.c.l.b16 %v189
  %v2792 = vunpack.c.h.b16 %v189
  %v2793 = vunpack.c.l.b16 %v190
  %v2794 = vunpack.c.h.b16 %v190
  %v2795 = vunpack.c.l.b16 %v191
  %v2796 = vunpack.c.h.b16 %v191
  %v2797 = vunpack.c.l.b16 %v192
  %v2798 = vunpack.c.h.b16 %v192
  %v2799 = vunpack.c.l.b16 %v193
  %v2800 = vunpack.c.h.b16 %v193
  %v2801 = vunpack.c.l.b16 %v194
  %v2802 = vunpack.c.h.b16 %v194
  %v2803 = vunpack.c.l.b16 %v195
  %v2804 = vunpack.c.h.b16 %v195
  %v2805 = vunpack.c.l.b16 %v196
  %v2806 = vunpack.c.h.b16 %v196
  %v2807 = vunpack.c.l.b16 %v197
  %v2808 = vunpack.c.h.b16 %v197
  %v2809 = vunpack.c.l.b16 %v198
  %v2810 = vunpack.c.h.b16 %v198
  %v2811 = vunpack.c.l.b16 %v199
  %v2812 = vunpack.c.h.b16 %v199
  %v2813 = vunpack.c.l.b16 %v200
  %v2814 = vunpack.c.h.b16 %v200
  %v2815 = vunpack.c.l.b16 %v201
  %v2816 = vunpack.c.h.b16 %v201
  %v2817 = vunpack.c.l.b16 %v202
  %v2818 = vunpack.c.h.b16 %v202
  %v2819 = vunpack.c.l.b16 %v203
  %v2820 = vunpack.c.h.b16 %v203
  %v2821 = vunpack.c.l.b16 %v204
  %v2822 = vunpack.c.h.b16 %v204
  %v2823 = vunpack.c.l.b16 %v205
  %v2824 = vunpack.c.h.b16 %v205
  %v2825 = vunpack.c.l.b16 %v206
  %v2826 = vunpack.c.h.b16 %v206
  %v2827 = vunpack.c.l.b16 %v207
  %v2828 = vunpack.c.h.b16 %v207
  %v2829 = vunpack.c.l.b16 %v208
  %v2830 = vunpack.c.h.b16 %v208
  %v2831 = vunpack.c.l.b16 %v209
  %v2832 = vunpack.c.h.b16 %v209
  %v2833 = vunpack.c.l.b16 %v210
  %v2834 = vunpack.c.h.b16 %v210
  %v2835 = vunpack.c.l.b16 %v211
  %v2836 = vunpack.c.h.b16 %v211
  %v2837 = vunpack.c.l.b16 %v212
  %v2838 = vunpack.c.h.b16 %v212
  %v2839 = vunpack.c.l.b16 %v213
  %v2840 = vunpack.c.h.b16 %v213
  %v2841 = vunpack.c.l.b16 %v214
  %v2842 = vunpack.c.h.b16 %v214
  %v2843 = vunpack.c.l.b16 %v215
  %v2844 = vunpack.c.h.b16 %v215
  %v2845 = vunpack.c.l.b16 %v216
  %v2846 = vunpack.c.h.b16 %v216
  %v2847 = vunpack.c.l.b16 %v217
  %v2848 = vunpack.c.h.b16 %v217
  %v2849 = vunpack.c.l.b16 %v218
  %v2850 = vunpack.c.h.b16 %v218
  %v2851 = vunpack.c.l.b16 %v219
  %v2852 = vunpack.c.h.b16 %v219
  %v2853 = vunpack.c.l.b16 %v220
  %v2854 = vunpack.c.h.b16 %v220
  %v2855 = vunpack.c.l.b16 %v221
  %v2856 = vunpack.c.h.b16 %v221
  %v2857 = vunpack.c.l.b16 %v222
  %v2858 = vunpack.c.h.b16 %v222
  %v2859 = vunpack.c.l.b16 %v223
  %v2860 = vunpack.c.h.b16 %v223
  %v2861 = vunpack.c.l.b16 %v224
  %v2862 = vunpack.c.h.b16 %v224
  %v2863 = vunpack.c.l.b16 %v225
  %v2864 = vunpack.c.h.b16 %v225
  %v2865 = vunpack.c.l.b16 %v226
  %v2866 = vunpack.c.h.b16 %v226
  %v2867 = vunpack.c.l.b16 %v227
  %v2868 = vunpack.c.h.b16 %v227
  %v2869 = vunpack.c.l.b16 %v228
  %v2870 = vunpack.c.h.b16 %v228
  %v2871 = vunpack.c.l.b16 %v229
  %v2872 = vunpack.c.h.b16 %v229
  %v2873 = vunpack.c.l.b16 %v230
  %v2874 = vunpack.c.h.b16 %v230
  %v2875 = vunpack.c.l.b16 %v231
  %v2876 = vunpack.c.h.b16 %v231
  %v2877 = vunpack.c.l.b16 %v232
  %v2878 = vunpack.c.h.b16 %v232
  %v2879 = vunpack.c.l.b16 %v233
  %v2880 = vunpack.c.h.b16 %v233
  %v2881 = vunpack.c.l.b16 %v234
  %v2882 = vunpack.c.h.b16 %v234
  %v2883 = vunpack.c.l.b16 %v235
  %v2884 = vunpack.c.h.b16 %v235
  %v2885 = vunpack.c.l.b16 %v236
  %v2886 = vunpack.c.h.b16 %v236
  %v2887 = vunpack.c.l.b16 %v237
  %v2888 = vunpack.c.h.b16 %v237
  %v2889 = vunpack.c.l.b16 %v238
  %v2890 = vunpack.c.h.b16 %v238
  %v2891 = vunpack.c.l.b16 %v239
  %v2892 = vunpack.c.h.b16 %v239
  %v2893 = vunpack.c.l.b16 %v240
  %v2894 = vunpack.c.h.b16 %v240
  %v2895 = vunpack.c.l.b16 %v241
  %v2896 = vunpack.c.h.b16 %v241
  %v2897 = vunpack.c.l.b16 %v242
  %v2898 = vunpack.c.h.b16 %v242
  %v2899 = vunpack.c.l.b16 %v243
  %v2900 = vunpack.c.h.b16 %v243
  %v2901 = vunpack.c.l.b16 %v244
  %v2902 = vunpack.c.h.b16 %v244
  %v2903 = vunpack.c.l.b16 %v245
  %v2904 = vunpack.c.h.b16 %v245
  %v2905 = vunpack.c.l.b16 %v246
  %v2906 = vunpack.c.h.b16 %v246
  %v2907 = vunpack.c.l.b16 %v247
  %v2908 = vunpack.c.h.b16 %v247
  %v2909 = vunpack.c.l.b16 %v248
  %v2910 = vunpack.c.h.b16 %v248
  %v2911 = vunpack.c.l.b16 %v249
  %v2912 = vunpack.c.h.b16 %v249
  %v2913 = vunpack.c.l.b16 %v250
  %v2914 = vunpack.c.h.b16 %v250
  %v2915 = vunpack.c.l.b16 %v251
  %v2916 = vunpack.c.h.b16 %v251
  %v2917 = vunpack.c.l.b16 %v252
  %v2918 = vunpack.c.h.b16 %v252
  %v2919 = vunpack.c.l.b16 %v253
  %v2920 = vunpack.c.h.b16 %v253
  %v2921 = vunpack.c.l.b16 %v254
  %v2922 = vunpack.c.h.b16 %v254
  %v2923 = vunpack.c.l.b16 %v255
  %v2924 = vunpack.c.h.b16 %v255
  %v2925 = vunpack.c.l.b16 %v256
  %v2926 = vunpack.c.h.b16 %v256
  %v2927 = vunpack.c.l.b16 %v257
  %v2928 = vunpack.c.h.b16 %v257
  %v2929 = vunpack.c.l.b16 %v258
  %v2930 = vunpack.c.h.b16 %v258
  %v2931 = vunpack.c.l.b16 %v259
  %v2932 = vunpack.c.h.b16 %v259
  %v2933 = vunpack.c.l.b16 %v260
  %v2934 = vunpack.c.h.b16 %v260
  %v2935 = vunpack.c.l.b16 %v261
  %v2936 = vunpack.c.h.b16 %v261
  %v2937 = vunpack.c.l.b16 %v262
  %v2938 = vunpack.c.h.b16 %v262
  %v2939 = vunpack.c.l.b16 %v263
  %v2940 = vunpack.c.h.b16 %v263
  %v2941 = vunpack.c.l.b16 %v264
  %v2942 = vunpack.c.h.b16 %v264
  %v2943 = vunpack.c.l.b16 %v265
  %v2944 = vunpack.c.h.b16 %v265
  %v2945 = vunpack.c.l.b16 %v266
  %v2946 = vunpack.c.h.b16 %v266
  %v2947 = vunpack.c.l.b16 %v267
  %v2948 = vunpack.c.h.b16 %v267
  %v2949 = vunpack.c.l.b16 %v268
  %v2950 = vunpack.c.h.b16 %v268
  %v2951 = vunpack.c.l.b16 %v269
  %v2952 = vunpack.c.h.b16 %v269
  %v2953 = vunpack.c.l.b16 %v270
  %v2954 = vunpack.c.h.b16 %v270
  %v2955 = vunpack.c.l.b16 %v271
  %v2956 = vunpack.c.h.b16 %v271
  %v2957 = vunpack.c.l.b16 %v272
  %v2958 = vunpack.c.h.b16 %v272
  %v2959 = vunpack.c.l.b16 %v273
  %v2960 = vunpack.c.h.b16 %v273
  %v2961 = vunpack.c.l.b16 %v274
  %v2962 = vunpack.c.h.b16 %v274
  %v2963 = vunpack.c.l.b16 %v275
  %v2964 = vunpack.c.h.b16 %v275
  %v2965 = vunpack.c.l.b16 %v276
  %v2966 = vunpack.c.h.b16 %v276
  %v2967 = vunpack.c.l.b16 %v277
  %v2968 = vunpack.c.h.b16 %v277
  %v2969 = vunpack.c.l.b16 %v278
  %v2970 = vunpack.c.h.b16 %v278
  %v2971 = vunpack.c.l.b16 %v279
  %v2972 = vunpack.c.h.b16 %v279
  %v2973 = vunpack.c.l.b16 %v280
  %v2974 = vunpack.c.h.b16 %v280
  %v2975 = vunpack.c.l.b16 %v281
  %v2976 = vunpack.c.h.b16 %v281
  %v2977 = vunpack.c.l.b16 %v282
  %v2978 = vunpack.c.h.b16 %v282
  %v2979 = vunpack.c.l.b16 %v283
  %v2980 = vunpack.c.h.b16 %v283
  %v2981 = vunpack.c.l.b16 %v284
  %v2982 = vunpack.c.h.b16 %v284
  %v2983 = vunpack.c.l.b16 %v285
  %v2984 = vunpack.c.h.b16 %v285
  %v2985 = vunpack.c.l.b16 %v286
  %v2986 = vunpack.c.h.b16 %v286
  %v2987 = vunpack.c.l.b16 %v287
  %v2988 = vunpack.c.h.b16 %v287
  %v2989 = vunpack.c.l.b16 %v288
  %v2990 = vunpack.c.h.b16 %v288
  %v2991 = vunpack.c.l.b16 %v289
  %v2992 = vunpack.c.h.b16 %v289
  %v2993 = vunpack.c.l.b16 %v290
  %v2994 = vunpack.c.h.b16 %v290
  %v2995 = vunpack.c.l.b16 %v291
  %v2996 = vunpack.c.h.b16 %v291
  %v2997 = vunpack.c.l.b16 %v292
  %v2998 = vunpack.c.h.b16 %v292
  %v2999 = vunpack.c.l.b16 %v293
  %v3000 = vunpack.c.h.b16 %v293
  %v3001 = vunpack.c.l.b16 %v294
  %v3002 = vunpack.c.h.b16 %v294
  %v3003 = vunpack.c.l.b16 %v295
  %v3004 = vunpack.c.h.b16 %v295
  %v3005 = vunpack.c.l.b16 %v296
  %v3006 = vunpack.c.h.b16 %v296
  %v3007 = vunpack.c.l.b16 %v297
  %v3008 = vunpack.c.h.b16 %v297
  %v3009 = vunpack.c.l.b16 %v298
  %v3010 = vunpack.c.h.b16 %v298
  %v3011 = vunpack.c.l.b16 %v299
  %v3012 = vunpack.c.h.b16 %v299
  %v3013 = vunpack.c.l.b16 %v300
  %v3014 = vunpack.c.h.b16 %v300
  %v3015 = vunpack.c.l.b16 %v301
  %v3016 = vunpack.c.h.b16 %v301
  %v3017 = vunpack.c.l.b16 %v302
  %v3018 = vunpack.c.h.b16 %v302
  %v3019 = vunpack.c.l.b16 %v303
  %v3020 = vunpack.c.h.b16 %v303
  %v3021 = vunpack.c.l.b16 %v304
  %v3022 = vunpack.c.h.b16 %v304
  %v3023 = vunpack.c.l.b16 %v305
  %v3024 = vunpack.c.h.b16 %v305
  %v3025 = vunpack.c.l.b16 %v306
  %v3026 = vunpack.c.h.b16 %v306
  %v3027 = vunpack.c.l.b16 %v307
  %v3028 = vunpack.c.h.b16 %v307
  %v3029 = vunpack.c.l.b16 %v308
  %v3030 = vunpack.c.h.b16 %v308
  %v3031 = vunpack.c.l.b16 %v309
  %v3032 = vunpack.c.h.b16 %v309
  %v3033 = vunpack.c.l.b16 %v310
  %v3034 = vunpack.c.h.b16 %v310
  %v3035 = vunpack.c.l.b16 %v311
  %v3036 = vunpack.c.h.b16 %v311
  %v3037 = vunpack.c.l.b16 %v312
  %v3038 = vunpack.c.h.b16 %v312
  %v3039 = vunpack.c.l.b16 %v313
  %v3040 = vunpack.c.h.b16 %v313
  %v3041 = vunpack.c.l.b16 %v314
  %v3042 = vunpack.c.h.b16 %v314
  %v3043 = vunpack.c.l.b16 %v315
  %v3044 = vunpack.c.h.b16 %v315
  %v3045 = vunpack.c.l.b16 %v316
  %v3046 = vunpack.c.h.b16 %v316
  %v3047 = vunpack.c.l.b16 %v317
  %v3048 = vunpack.c.h.b16 %v317
  %v3049 = vunpack.c.l.b16 %v318
  %v3050 = vunpack.c.h.b16 %v318
  %v3051 = vunpack.c.l.b16 %v319
  %v3052 = vunpack.c.h.b16 %v319
  %v3053 = vunpack.c.l.b16 %v320
  %v3054 = vunpack.c.h.b16 %v320
  %v3055 = vunpack.c.l.b16 %v321
  %v3056 = vunpack.c.h.b16 %v321
  %v3057 = vunpack.c.l.b16 %v322
  %v3058 = vunpack.c.h.b16 %v322
  %v3059 = vunpack.c.l.b16 %v323
  %v3060 = vunpack.c.h.b16 %v323
  %v3061 = vunpack.c.l.b16 %v324
  %v3062 = vunpack.c.h.b16 %v324
  %v3063 = vunpack.c.l.b16 %v325
  %v3064 = vunpack.c.h.b16 %v325
  %v3065 = vunpack.c.l.b16 %v326
  %v3066 = vunpack.c.h.b16 %v326
  %v3067 = vunpack.c.l.b16 %v327
  %v3068 = vunpack.c.h.b16 %v327
  %v3069 = vunpack.c.l.b16 %v328
  %v3070 = vunpack.c.h.b16 %v328
  %v3071 = vunpack.c.l.b16 %v329
  %v3072 = vunpack.c.h.b16 %v329
  %v3073 = vunpack.c.l.b16 %v330
  %v3074 = vunpack.c.h.b16 %v330
  %v3075 = vunpack.c.l.b16 %v331
  %v3076 = vunpack.c.h.b16 %v331
  %v3077 = vunpack.c.l.b16 %v332
  %v3078 = vunpack.c.h.b16 %v332
  %v3079 = vunpack.c.l.b16 %v333
  %v3080 = vunpack.c.h.b16 %v333
  %v3081 = vunpack.c.l.b16 %v334
  %v3082 = vunpack.c.h.b16 %v334
  %v3083 = vunpack.c.l.b16 %v335
  %v3084 = vunpack.c.h.b16 %v335
  %v3085 = vunpack.c.l.b16 %v336
  %v3086 = vunpack.c.h.b16 %v336
  %v3087 = vunpack.c.l.b16 %v337
  %v3088 = vunpack.c.h.b16 %v337
  %v3089 = vunpack.c.l.b16 %v338
  %v3090 = vunpack.c.h.b16 %v338
  %v3091 = vunpack.c.l.b16 %v339
  %v3092 = vunpack.c.h.b16 %v339
  %v3093 = vunpack.c.l.b16 %v340
  %v3094 = vunpack.c.h.b16 %v340
  %v3095 = vunpack.c.l.b16 %v341
  %v3096 = vunpack.c.h.b16 %v341
  %v3097 = vunpack.c.l.b16 %v342
  %v3098 = vunpack.c.h.b16 %v342
  %v3099 = vunpack.c.l.b16 %v343
  %v3100 = vunpack.c.h.b16 %v343
  %v3101 = vunpack.c.l.b16 %v344
  %v3102 = vunpack.c.h.b16 %v344
  %v3103 = vunpack.c.l.b16 %v345
  %v3104 = vunpack.c.h.b16 %v345
  %v3105 = vunpack.c.l.b16 %v346
  %v3106 = vunpack.c.h.b16 %v346
  %v3107 = vunpack.c.l.b16 %v347
  %v3108 = vunpack.c.h.b16 %v347
  %v3109 = vunpack.c.l.b16 %v348
  %v3110 = vunpack.c.h.b16 %v348
  %v3111 = vunpack.c.l.b16 %v349
  %v3112 = vunpack.c.h.b16 %v349
  %v3113 = vunpack.c.l.b16 %v350
  %v3114 = vunpack.c.h.b16 %v350
  %v3115 = vunpack.c.l.b16 %v351
  %v3116 = vunpack.c.h.b16 %v351
  %v3117 = vunpack.c.l.b16 %v352
  %v3118 = vunpack.c.h.b16 %v352
  %v3119 = vunpack.c.l.b16 %v353
  %v3120 = vunpack.c.h.b16 %v353
  %v3121 = vunpack.c.l.b16 %v354
  %v3122 = vunpack.c.h.b16 %v354
  %v3123 = vunpack.c.l.b16 %v355
  %v3124 = vunpack.c.h.b16 %v355
  %v3125 = vunpack.c.l.b16 %v356
  %v3126 = vunpack.c.h.b16 %v356
  %v3127 = vunpack.c.l.b16 %v357
  %v3128 = vunpack.c.h.b16 %v357
  %v3129 = vunpack.c.l.b16 %v358
  %v3130 = vunpack.c.h.b16 %v358
  %v3131 = vunpack.c.l.b16 %v359
  %v3132 = vunpack.c.h.b16 %v359
  %v3133 = vunpack.c.l.b16 %v360
  %v3134 = vunpack.c.h.b16 %v360
  %v3135 = vunpack.c.l.b16 %v361
  %v3136 = vunpack.c.h.b16 %v361
  %v3137 = vunpack.c.l.b16 %v362
  %v3138 = vunpack.c.h.b16 %v362
  %v3139 = vunpack.c.l.b16 %v363
  %v3140 = vunpack.c.h.b16 %v363
  %v3141 = vunpack.c.l.b16 %v364
  %v3142 = vunpack.c.h.b16 %v364
  %v3143 = vunpack.c.l.b16 %v365
  %v3144 = vunpack.c.h.b16 %v365
  %v3145 = vunpack.c.l.b16 %v366
  %v3146 = vunpack.c.h.b16 %v366
  %v3147 = vunpack.c.l.b16 %v367
  %v3148 = vunpack.c.h.b16 %v367
  %v3149 = vunpack.c.l.b16 %v368
  %v3150 = vunpack.c.h.b16 %v368
  %v3151 = vunpack.c.l.b16 %v369
  %v3152 = vunpack.c.h.b16 %v369
  %v3153 = vunpack.c.l.b16 %v370
  %v3154 = vunpack.c.h.b16 %v370
  %v3155 = vunpack.c.l.b16 %v371
  %v3156 = vunpack.c.h.b16 %v371
  %v3157 = vunpack.c.l.b16 %v372
  %v3158 = vunpack.c.h.b16 %v372
  %v3159 = vunpack.c.l.b16 %v373
  %v3160 = vunpack.c.h.b16 %v373
  %v3161 = vunpack.c.l.b16 %v374
  %v3162 = vunpack.c.h.b16 %v374
  %v3163 = vunpack.c.l.b16 %v375
  %v3164 = vunpack.c.h.b16 %v375
  %v3165 = vunpack.c.l.b16 %v376
  %v3166 = vunpack.c.h.b16 %v376
  %v3167 = vunpack.c.l.b16 %v377
  %v3168 = vunpack.c.h.b16 %v377
  %v3169 = vunpack.c.l.b16 %v378
  %v3170 = vunpack.c.h.b16 %v378
  %v3171 = vunpack.c.l.b16 %v379
  %v3172 = vunpack.c.h.b16 %v379
  %v3173 = vunpack.c.l.b16 %v380
  %v3174 = vunpack.c.h.b16 %v380
  %v3175 = vunpack.c.l.b16 %v381
  %v3176 = vunpack.c.h.b16 %v381
  %v3177 = vunpack.c.l.b16 %v382
  %v3178 = vunpack.c.h.b16 %v382
  %v3179 = vunpack.c.l.b16 %v383
  %v3180 = vunpack.c.h.b16 %v383
  %v3181 = vunpack.c.l.b16 %v384
  %v3182 = vunpack.c.h.b16 %v384
  %v3183 = vunpack.c.l.b16 %v385
  %v3184 = vunpack.c.h.b16 %v385
  %v3185 = vunpack.c.l.b16 %v386
  %v3186 = vunpack.c.h.b16 %v386
  %v3187 = vunpack.c.l.b16 %v387
  %v3188 = vunpack.c.h.b16 %v387
  %v3189 = vunpack.c.l.b16 %v388
  %v3190 = vunpack.c.h.b16 %v388
  %v3191 = vunpack.c.l.b16 %v389
  %v3192 = vunpack.c.h.b16 %v389
  %v3193 = vunpack.c.l.b16 %v390
  %v3194 = vunpack.c.h.b16 %v390
  %v3195 = vunpack.c.l.b16 %v391
  %v3196 = vunpack.c.h.b16 %v391
  %v3197 = vunpack.c.l.b16 %v392
  %v3198 = vunpack.c.h.b16 %v392
  %v3199 = vunpack.c.l.b16 %v393
  %v3200 = vunpack.c.h.b16 %v393
  %v3201 = vunpack.c.l.b16 %v394
  %v3202 = vunpack.c.h.b16 %v394
  %v3203 = vunpack.c.l.b16 %v395
  %v3204 = vunpack.c.h.b16 %v395
  %v3205 = vunpack.c.l.b16 %v396
  %v3206 = vunpack.c.h.b16 %v396
  %v3207 = vunpack.c.l.b16 %v397
  %v3208 = vunpack.c.h.b16 %v397
  %v3209 = vunpack.c.l.b16 %v398
  %v3210 = vunpack.c.h.b16 %v398
  %v3211 = vunpack.c.l.b16 %v399
  %v3212 = vunpack.c.h.b16 %v399
  %v3213 = vunpack.c.l.b16 %v400
  %v3214 = vunpack.c.h.b16 %v400
  %v3215 = vunpack.c.l.b16 %v401
  %v3216 = vunpack.c.h.b16 %v401
  %v3217 = vunpack.c.l.b16 %v402
  %v3218 = vunpack.c.h.b16 %v402
  %v3219 = vunpack.c.l.b16 %v403
  %v3220 = vunpack.c.h.b16 %v403
  %v3221 = vunpack.c.l.b16 %v404
  %v3222 = vunpack.c.h.b16 %v404
  %v3223 = vunpack.c.l.b16 %v405
  %v3224 = vunpack.c.h.b16 %v405
  %v3225 = vunpack.c.l.b16 %v406
  %v3226 = vunpack.c.h.b16 %v406
  %v3227 = vunpack.c.l.b16 %v407
  %v3228 = vunpack.c.h.b16 %v407
  %v3229 = vunpack.c.l.b16 %v408
  %v3230 = vunpack.c.h.b16 %v408
  %v3231 = vunpack.c.l.b16 %v409
  %v3232 = vunpack.c.h.b16 %v409
  %v3233 = vunpack.c.l.b16 %v410
  %v3234 = vunpack.c.h.b16 %v410
  %v3235 = vunpack.c.l.b16 %v411
  %v3236 = vunpack.c.h.b16 %v411
  %v3237 = vunpack.c.l.b16 %v412
  %v3238 = vunpack.c.h.b16 %v412
  %v3239 = vunpack.c.l.b16 %v413
  %v3240 = vunpack.c.h.b16 %v413
  %v3241 = vunpack.c.l.b16 %v414
  %v3242 = vunpack.c.h.b16 %v414
  %v3243 = vunpack.c.l.b16 %v415
  %v3244 = vunpack.c.h.b16 %v415
  %v3245 = vunpack.c.l.b16 %v416
  %v3246 = vunpack.c.h.b16 %v416
  %v3247 = vunpack.c.l.b16 %v417
  %v3248 = vunpack.c.h.b16 %v417
  %v3249 = vunpack.c.l.b16 %v418
  %v3250 = vunpack.c.h.b16 %v418
  %v3251 = vunpack.c.l.b16 %v419
  %v3252 = vunpack.c.h.b16 %v419
  %v3253 = vunpack.c.l.b16 %v420
  %v3254 = vunpack.c.h.b16 %v420
  %v3255 = vunpack.c.l.b16 %v421
  %v3256 = vunpack.c.h.b16 %v421
  %v3257 = vunpack.c.l.b16 %v422
  %v3258 = vunpack.c.h.b16 %v422
  %v3259 = vunpack.c.l.b16 %v423
  %v3260 = vunpack.c.h.b16 %v423
  %v3261 = vunpack.c.l.b16 %v424
  %v3262 = vunpack.c.h.b16 %v424
  %v3263 = vunpack.c.l.b16 %v425
  %v3264 = vunpack.c.h.b16 %v425
  %v3265 = vunpack.c.l.b16 %v426
  %v3266 = vunpack.c.h.b16 %v426
  %v3267 = vunpack.c.l.b16 %v427
  %v3268 = vunpack.c.h.b16 %v427
  %v3269 = vunpack.c.l.b16 %v428
  %v3270 = vunpack.c.h.b16 %v428
  %v3271 = vunpack.c.l.b16 %v429
  %v3272 = vunpack.c.h.b16 %v429
  %v3273 = vunpack.c.l.b16 %v430
  %v3274 = vunpack.c.h.b16 %v430
  %v3275 = vunpack.c.l.b16 %v431
  %v3276 = vunpack.c.h.b16 %v431
  %v3277 = vunpack.c.l.b16 %v432
  %v3278 = vunpack.c.h.b16 %v432
  %v3279 = vunpack.c.l.b16 %v433
  %v3280 = vunpack.c.h.b16 %v433
  %v3281 = vunpack.c.l.b16 %v434
  %v3282 = vunpack.c.h.b16 %v434
  %v3283 = vunpack.c.l.b16 %v435
  %v3284 = vunpack.c.h.b16 %v435
  %v3285 = vunpack.c.l.b16 %v436
  %v3286 = vunpack.c.h.b16 %v436
  %v3287 = vunpack.c.l.b16 %v437
  %v3288 = vunpack.c.h.b16 %v437
  %v3289 = vunpack.c.l.b16 %v438
  %v3290 = vunpack.c.h.b16 %v438
  %v3291 = vunpack.c.l.b16 %v439
  %v3292 = vunpack.c.h.b16 %v439
  %v3293 = vunpack.c.l.b16 %v440
  %v3294 = vunpack.c.h.b16 %v440
  %v3295 = vunpack.c.l.b16 %v441
  %v3296 = vunpack.c.h.b16 %v441
  %v3297 = vunpack.c.l.b16 %v442
  %v3298 = vunpack.c.h.b16 %v442
  %v3299 = vunpack.c.l.b16 %v443
  %v3300 = vunpack.c.h.b16 %v443
  %v3301 = vunpack.c.l.b16 %v444
  %v3302 = vunpack.c.h.b16 %v444
  %v3303 = vunpack.c.l.b16 %v445
  %v3304 = vunpack.c.h.b16 %v445
  %v3305 = vunpack.c.l.b16 %v446
  %v3306 = vunpack.c.h.b16 %v446
  %v3307 = vunpack.c.l.b16 %v447
  %v3308 = vunpack.c.h.b16 %v447
  %v3309 = vunpack.c.l.b16 %v448
  %v3310 = vunpack.c.h.b16 %v448
  %v3311 = vunpack.c.l.b16 %v449
  %v3312 = vunpack.c.h.b16 %v449
  %v3313 = vunpack.c.l.b16 %v450
  %v3314 = vunpack.c.h.b16 %v450
  %v3315 = vunpack.c.l.b16 %v451
  %v3316 = vunpack.c.h.b16 %v451
  %v3317 = vunpack.c.l.b16 %v452
  %v3318 = vunpack.c.h.b16 %v452
  %v3319 = vunpack.c.l.b16 %v453
  %v3320 = vunpack.c.h.b16 %v453
  %v3321 = vunpack.c.l.b16 %v454
  %v3322 = vunpack.c.h.b16 %v454
  %v3323 = vunpack.c.l.b16 %v455
  %v3324 = vunpack.c.h.b16 %v455
  %v3325 = vunpack.c.l.b16 %v456
  %v3326 = vunpack.c.h.b16 %v456
  %v3327 = vunpack.c.l.b16 %v457
  %v3328 = vunpack.c.h.b16 %v457
  %v3329 = vunpack.c.l.b16 %v458
  %v3330 = vunpack.c.h.b16 %v458
  %v3331 = vunpack.c.l.b16 %v459
  %v3332 = vunpack.c.h.b16 %v459
  %v3333 = vunpack.c.l.b16 %v460
  %v3334 = vunpack.c.h.b16 %v460
  %v3335 = vunpack.c.l.b16 %v461
  %v3336 = vunpack.c.h.b16 %v461
  %v3337 = vunpack.c.l.b16 %v462
  %v3338 = vunpack.c.h.b16 %v462
  %v3339 = vunpack.c.l.b16 %v463
  %v3340 = vunpack.c.h.b16 %v463
  %v3341 = vunpack.c.l.b16 %v464
  %v3342 = vunpack.c.h.b16 %v464
  %v3343 = vunpack.c.l.b16 %v465
  %v3344 = vunpack.c.h.b16 %v465
  %v3345 = vunpack.c.l.b16 %v466
  %v3346 = vunpack.c.h.b16 %v466
  %v3347 = vunpack.c.l.b16 %v467
  %v3348 = vunpack.c.h.b16 %v467
  %v3349 = vunpack.c.l.b16 %v468
  %v3350 = vunpack.c.h.b16 %v468
  %v3351 = vunpack.c.l.b16 %v469
  %v3352 = vunpack.c.h.b16 %v469
  %v3353 = vunpack.c.l.b16 %v470
  %v3354 = vunpack.c.h.b16 %v470
  %v3355 = vunpack.c.l.b16 %v471
  %v3356 = vunpack.c.h.b16 %v471
  %v3357 = vunpack.c.l.b16 %v472
  %v3358 = vunpack.c.h.b16 %v472
  %v3359 = vunpack.c.l.b16 %v473
  %v3360 = vunpack.c.h.b16 %v473
  %v3361 = vunpack.c.l.b16 %v474
  %v3362 = vunpack.c.h.b16 %v474
  %v3363 = vunpack.c.l.b16 %v475
  %v3364 = vunpack.c.h.b16 %v475
  %v3365 = vunpack.c.l.b16 %v476
  %v3366 = vunpack.c.h.b16 %v476
  %v3367 = vunpack.c.l.b16 %v477
  %v3368 = vunpack.c.h.b16 %v477
  %v3369 = vunpack.c.l.b16 %v478
  %v3370 = vunpack.c.h.b16 %v478
  %v3371 = vunpack.c.l.b16 %v479
  %v3372 = vunpack.c.h.b16 %v479
  %v3373 = vunpack.c.l.b16 %v480
  %v3374 = vunpack.c.h.b16 %v480
  %v3375 = vunpack.c.l.b16 %v481
  %v3376 = vunpack.c.h.b16 %v481
  %v3377 = vunpack.c.l.b16 %v482
  %v3378 = vunpack.c.h.b16 %v482
  %v3379 = vunpack.c.l.b16 %v483
  %v3380 = vunpack.c.h.b16 %v483
  %v3381 = vunpack.c.l.b16 %v484
  %v3382 = vunpack.c.h.b16 %v484
  %v3383 = vunpack.c.l.b16 %v485
  %v3384 = vunpack.c.h.b16 %v485
  %v3385 = vunpack.c.l.b16 %v486
  %v3386 = vunpack.c.h.b16 %v486
  %v3387 = vunpack.c.l.b16 %v487
  %v3388 = vunpack.c.h.b16 %v487
  %v3389 = vunpack.c.l.b16 %v488
  %v3390 = vunpack.c.h.b16 %v488
  %v3391 = vunpack.c.l.b16 %v489
  %v3392 = vunpack.c.h.b16 %v489
  %v3393 = vunpack.c.l.b16 %v490
  %v3394 = vunpack.c.h.b16 %v490
  %v3395 = vunpack.c.l.b16 %v491
  %v3396 = vunpack.c.h.b16 %v491
  %v3397 = vunpack.c.l.b16 %v492
  %v3398 = vunpack.c.h.b16 %v492
  %v3399 = vunpack.c.l.b16 %v493
  %v3400 = vunpack.c.h.b16 %v493
  %v3401 = vunpack.c.l.b16 %v494
  %v3402 = vunpack.c.h.b16 %v494
  %v3403 = vunpack.c.l.b16 %v495
  %v3404 = vunpack.c.h.b16 %v495
  %v3405 = vunpack.c.l.b16 %v496
  %v3406 = vunpack.c.h.b16 %v496
  %v3407 = vunpack.c.l.b16 %v497
  %v3408 = vunpack.c.h.b16 %v497
  %v3409 = vunpack.c.l.b16 %v498
  %v3410 = vunpack.c.h.b16 %v498
  %v3411 = vunpack.c.l.b16 %v499
  %v3412 = vunpack.c.h.b16 %v499
  %v3413 = vunpack.c.l.b16 %v500
  %v3414 = vunpack.c.h.b16 %v500
  %v3415 = vunpack.c.l.b16 %v501
  %v3416 = vunpack.c.h.b16 %v501
  %v3417 = vunpack.c.l.b16 %v502
  %v3418 = vunpack.c.h.b16 %v502
  %v3419 = vunpack.c.l.b16 %v503
  %v3420 = vunpack.c.h.b16 %v503
  %v3421 = vunpack.c.l.b16 %v504
  %v3422 = vunpack.c.h.b16 %v504
  %v3423 = vunpack.c.l.b16 %v505
  %v3424 = vunpack.c.h.b16 %v505
  %v3425 = vunpack.c.l.b16 %v506
  %v3426 = vunpack.c.h.b16 %v506
  %v3427 = vunpack.c.l.b16 %v507
  %v3428 = vunpack.c.h.b16 %v507
  %v3429 = vunpack.c.l.b16 %v508
  %v3430 = vunpack.c.h.b16 %v508
  %v3431 = vunpack.c.l.b16 %v509
  %v3432 = vunpack.c.h.b16 %v509
  %v3433 = vunpack.c.l.b16 %v510
  %v3434 = vunpack.c.h.b16 %v510
  %v3435 = vunpack.c.l.b16 %v511
  %v3436 = vunpack.c.h.b16 %v511
  %v3437 = vunpack.c.l.b16 %v512
  %v3438 = vunpack.c.h.b16 %v512
  %v3439 = vunpack.c.l.b16 %v513
  %v3440 = vunpack.c.h.b16 %v513
  %v3441 = vunpack.c.l.b16 %v514
  %v3442 = vunpack.c.h.b16 %v514
  %v3443 = vunpack.c.l.b16 %v515
  %v3444 = vunpack.c.h.b16 %v515
  %v3445 = vunpack.c.l.b16 %v516
  %v3446 = vunpack.c.h.b16 %v516
  %v3447 = vunpack.c.l.b16 %v517
  %v3448 = vunpack.c.h.b16 %v517
  %v3449 = vunpack.c.l.b16 %v518
  %v3450 = vunpack.c.h.b16 %v518
  %v3451 = vunpack.c.l.b16 %v519
  %v3452 = vunpack.c.h.b16 %v519
  %v3453 = vunpack.c.l.b16 %v520
  %v3454 = vunpack.c.h.b16 %v520
  %v3455 = vunpack.c.l.b16 %v521
  %v3456 = vunpack.c.h.b16 %v521
  %v3457 = vunpack.c.l.b16 %v522
  %v3458 = vunpack.c.h.b16 %v522
  %v3459 = vunpack.c.l.b16 %v523
  %v3460 = vunpack.c.h.b16 %v523
  %v3461 = vunpack.c.l.b16 %v524
  %v3462 = vunpack.c.h.b16 %v524
  %v3463 = vunpack.c.l.b16 %v525
  %v3464 = vunpack.c.h.b16 %v525
  %v3465 = vunpack.c.l.b16 %v526
  %v3466 = vunpack.c.h.b16 %v526
  %v3467 = vunpack.c.l.b16 %v527
  %v3468 = vunpack.c.h.b16 %v527
  %v3469 = vunpack.c.l.b16 %v528
  %v3470 = vunpack.c.h.b16 %v528
  %v3471 = vunpack.c.l.b16 %v529
  %v3472 = vunpack.c.h.b16 %v529
  %v3473 = vunpack.c.l.b16 %v530
  %v3474 = vunpack.c.h.b16 %v530
  %v3475 = vunpack.c.l.b16 %v531
  %v3476 = vunpack.c.h.b16 %v531
  %v3477 = vunpack.c.l.b16 %v532
  %v3478 = vunpack.c.h.b16 %v532
  %v3479 = vunpack.c.l.b16 %v533
  %v3480 = vunpack.c.h.b16 %v533
  %v3481 = vunpack.c.l.b16 %v534
  %v3482 = vunpack.c.h.b16 %v534
  %v3483 = vunpack.c.l.b16 %v535
  %v3484 = vunpack.c.h.b16 %v535
  %v3485 = vunpack.c.l.b16 %v536
  %v3486 = vunpack.c.h.b16 %v536
  %v3487 = vunpack.c.l.b16 %v537
  %v3488 = vunpack.c.h.b16 %v537
  %v3489 = vunpack.c.l.b16 %v538
  %v3490 = vunpack.c.h.b16 %v538
  %v3491 = vunpack.c.l.b16 %v539
  %v3492 = vunpack.c.h.b16 %v539
  %v3493 = vunpack.c.l.b16 %v540
  %v3494 = vunpack.c.h.b16 %v540
  %v3495 = vunpack.c.l.b16 %v541
  %v3496 = vunpack.c.h.b16 %v541
  %v3497 = vunpack.c.l.b16 %v542
  %v3498 = vunpack.c.h.b16 %v542
  %v3499 = vunpack.c.l.b16 %v543
  %v3500 = vunpack.c.h.b16 %v543
  %v3501 = vunpack.c.l.b16 %v544
  %v3502 = vunpack.c.h.b16 %v544
  %v3503 = vunpack.c.l.b16 %v545
  %v3504 = vunpack.c.h.b16 %v545
  %v3505 = vunpack.c.l.b16 %v546
  %v3506 = vunpack.c.h.b16 %v546
  %v3507 = vunpack.c.l.b16 %v547
  %v3508 = vunpack.c.h.b16 %v547
  %v3509 = vunpack.c.l.b16 %v548
  %v3510 = vunpack.c.h.b16 %v548
  %v3511 = vunpack.c.l.b16 %v549
  %v3512 = vunpack.c.h.b16 %v549
  %v3513 = vunpack.c.l.b16 %v550
  %v3514 = vunpack.c.h.b16 %v550
  %v3515 = vunpack.c.l.b16 %v551
  %v3516 = vunpack.c.h.b16 %v551
  %v3517 = vunpack.c.l.b16 %v552
  %v3518 = vunpack.c.h.b16 %v552
  %v3519 = vunpack.c.l.b16 %v553
  %v3520 = vunpack.c.h.b16 %v553
  %v3521 = vunpack.c.l.b16 %v554
  %v3522 = vunpack.c.h.b16 %v554
  %v3523 = vunpack.c.l.b16 %v555
  %v3524 = vunpack.c.h.b16 %v555
  %v3525 = vunpack.c.l.b16 %v556
  %v3526 = vunpack.c.h.b16 %v556
  %v3527 = vunpack.c.l.b16 %v557
  %v3528 = vunpack.c.h.b16 %v557
  %v3529 = vunpack.c.l.b16 %v558
  %v3530 = vunpack.c.h.b16 %v558
  %v3531 = vunpack.c.l.b16 %v559
  %v3532 = vunpack.c.h.b16 %v559
  %v3533 = vunpack.c.l.b16 %v560
  %v3534 = vunpack.c.h.b16 %v560
  %v3535 = vunpack.c.l.b16 %v561
  %v3536 = vunpack.c.h.b16 %v561
  %v3537 = vunpack.c.l.b16 %v562
  %v3538 = vunpack.c.h.b16 %v562
  %v3539 = vunpack.c.l.b16 %v563
  %v3540 = vunpack.c.h.b16 %v563
  %v3541 = vunpack.c.l.b16 %v564
  %v3542 = vunpack.c.h.b16 %v564
  %v3543 = vunpack.c.l.b16 %v565
  %v3544 = vunpack.c.h.b16 %v565
  %v3545 = vunpack.c.l.b16 %v566
  %v3546 = vunpack.c.h.b16 %v566
  %v3547 = vunpack.c.l.b16 %v567
  %v3548 = vunpack.c.h.b16 %v567
  %v3549 = vunpack.c.l.b16 %v568
  %v3550 = vunpack.c.h.b16 %v568
  %v3551 = vunpack.c.l.b16 %v569
  %v3552 = vunpack.c.h.b16 %v569
  %v3553 = vunpack.c.l.b16 %v570
  %v3554 = vunpack.c.h.b16 %v570
  %v3555 = vunpack.c.l.b16 %v571
  %v3556 = vunpack.c.h.b16 %v571
  %v3557 = vunpack.c.l.b16 %v572
  %v3558 = vunpack.c.h.b16 %v572
  %v3559 = vunpack.c.l.b16 %v573
  %v3560 = vunpack.c.h.b16 %v573
  %v3561 = vunpack.c.l.b16 %v574
  %v3562 = vunpack.c.h.b16 %v574
  %v3563 = vunpack.c.l.b16 %v575
  %v3564 = vunpack.c.h.b16 %v575
  %v3565 = vunpack.c.l.b16 %v576
  %v3566 = vunpack.c.h.b16 %v576
  %v3567 = vunpack.c.l.b16 %v577
  %v3568 = vunpack.c.h.b16 %v577
  %v3569 = vunpack.c.l.b16 %v578
  %v3570 = vunpack.c.h.b16 %v578
  %v3571 = vunpack.c.l.b16 %v579
  %v3572 = vunpack.c.h.b16 %v579
  %v3573 = vunpack.c.l.b16 %v580
  %v3574 = vunpack.c.h.b16 %v580
  %v3575 = vunpack.c.l.b16 %v581
  %v3576 = vunpack.c.h.b16 %v581
  %v3577 = vunpack.c.l.b16 %v582
  %v3578 = vunpack.c.h.b16 %v582
  %v3579 = vunpack.c.l.b16 %v583
  %v3580 = vunpack.c.h.b16 %v583
  %v3581 = vunpack.c.l.b16 %v584
  %v3582 = vunpack.c.h.b16 %v584
  %v3583 = vunpack.c.l.b16 %v585
  %v3584 = vunpack.c.h.b16 %v585
  %v3585 = vunpack.c.l.b16 %v586
  %v3586 = vunpack.c.h.b16 %v586
  %v3587 = vunpack.c.l.b16 %v587
  %v3588 = vunpack.c.h.b16 %v587
  %v3589 = vunpack.c.l.b16 %v588
  %v3590 = vunpack.c.h.b16 %v588
  %v3591 = vunpack.c.l.b16 %v589
  %v3592 = vunpack.c.h.b16 %v589
  %v3593 = vunpack.c.l.b16 %v590
  %v3594 = vunpack.c.h.b16 %v590
  %v3595 = vunpack.c.l.b16 %v591
  %v3596 = vunpack.c.h.b16 %v591
  %v3597 = vunpack.c.l.b16 %v592
  %v3598 = vunpack.c.h.b16 %v592
  %v3599 = vunpack.c.l.b16 %v593
  %v3600 = vunpack.c.h.b16 %v593
  %v3601 = vunpack.c.l.b16 %v594
  %v3602 = vunpack.c.h.b16 %v594
  %v3603 = vunpack.c.l.b16 %v595
  %v3604 = vunpack.c.h.b16 %v595
  %v3605 = vunpack.c.l.b16 %v596
  %v3606 = vunpack.c.h.b16 %v596
  %v3607 = vunpack.c.l.b16 %v597
  %v3608 = vunpack.c.h.b16 %v597
  %v3609 = vunpack.c.l.b16 %v598
  %v3610 = vunpack.c.h.b16 %v598
  %v3611 = vunpack.c.l.b16 %v599
  %v3612 = vunpack.c.h.b16 %v599
  %v3613 = vunpack.c.l.b16 %v600
  %v3614 = vunpack.c.h.b16 %v600
  %v3615 = vunpack.c.l.b16 %v601
  %v3616 = vunpack.c.h.b16 %v601
  %v3617 = vunpack.c.l.b16 %v602
  %v3618 = vunpack.c.h.b16 %v602
  %v3619 = vunpack.c.l.b16 %v603
  %v3620 = vunpack.c.h.b16 %v603
  %v3621 = vunpack.c.l.b16 %v604
  %v3622 = vunpack.c.h.b16 %v604
  %v3623 = vunpack.c.l.b16 %v605
  %v3624 = vunpack.c.h.b16 %v605
  %v3625 = vunpack.c.l.b16 %v606
  %v3626 = vunpack.c.h.b16 %v606
  %v3627 = vunpack.c.l.b16 %v607
  %v3628 = vunpack.c.h.b16 %v607
  %v3629 = vunpack.c.l.b16 %v608
  %v3630 = vunpack.c.h.b16 %v608
  %v3631 = vunpack.c.l.b16 %v609
  %v3632 = vunpack.c.h.b16 %v609
  %v3633 = vunpack.c.l.b16 %v610
  %v3634 = vunpack.c.h.b16 %v610
  %v3635 = vunpack.c.l.b16 %v611
  %v3636 = vunpack.c.h.b16 %v611
  %v3637 = vunpack.c.l.b16 %v612
  %v3638 = vunpack.c.h.b16 %v612
  %v3639 = vunpack.c.l.b16 %v613
  %v3640 = vunpack.c.h.b16 %v613
  %v3641 = vunpack.c.l.b16 %v614
  %v3642 = vunpack.c.h.b16 %v614
  %v3643 = vunpack.c.l.b16 %v615
  %v3644 = vunpack.c.h.b16 %v615
  %v3645 = vunpack.c.l.b16 %v616
  %v3646 = vunpack.c.h.b16 %v616
  %v3647 = vunpack.c.l.b16 %v617
  %v3648 = vunpack.c.h.b16 %v617
  %v3649 = vunpack.c.l.b16 %v618
  %v3650 = vunpack.c.h.b16 %v618
  %v3651 = vunpack.c.l.b16 %v619
  %v3652 = vunpack.c.h.b16 %v619
  %v3653 = vunpack.c.l.b16 %v620
  %v3654 = vunpack.c.h.b16 %v620
  %v3655 = vunpack.c.l.b16 %v621
  %v3656 = vunpack.c.h.b16 %v621
  %v3657 = vunpack.c.l.b16 %v622
  %v3658 = vunpack.c.h.b16 %v622
  %v3659 = vunpack.c.l.b16 %v623
  %v3660 = vunpack.c.h.b16 %v623
  %v3661 = vunpack.c.l.b16 %v624
  %v3662 = vunpack.c.h.b16 %v624
  %v3663 = vunpack.c.l.b16 %v625
  %v3664 = vunpack.c.h.b16 %v625
  %v3665 = vunpack.c.l.b16 %v626
  %v3666 = vunpack.c.h.b16 %v626
  %v3667 = vunpack.c.l.b16 %v627
  %v3668 = vunpack.c.h.b16 %v627
  %v3669 = vunpack.c.l.b16 %v628
  %v3670 = vunpack.c.h.b16 %v628
  %v3671 = vunpack.c.l.b16 %v629
  %v3672 = vunpack.c.h.b16 %v629
  %v3673 = vunpack.c.l.b16 %v630
  %v3674 = vunpack.c.h.b16 %v630
  %v3675 = vunpack.c.l.b16 %v631
  %v3676 = vunpack.c.h.b16 %v631
  %v3677 = vunpack.c.l.b16 %v632
  %v3678 = vunpack.c.h.b16 %v632
  %v3679 = vunpack.c.l.b16 %v633
  %v3680 = vunpack.c.h.b16 %v633
  %v3681 = vunpack.c.l.b16 %v634
  %v3682 = vunpack.c.h.b16 %v634
  %v3683 = vunpack.c.l.b16 %v635
  %v3684 = vunpack.c.h.b16 %v635
  %v3685 = vunpack.c.l.b16 %v636
  %v3686 = vunpack.c.h.b16 %v636
  %v3687 = vunpack.c.l.b16 %v637
  %v3688 = vunpack.c.h.b16 %v637
  %v3689 = vunpack.c.l.b16 %v638
  %v3690 = vunpack.c.h.b16 %v638
  %v3691 = vunpack.c.l.b16 %v639
  %v3692 = vunpack.c.h.b16 %v639
  %v3693 = vunpack.c.l.b16 %v640
  %v3694 = vunpack.c.h.b16 %v640
  %v3695 = vunpack.c.l.b16 %v641
  %v3696 = vunpack.c.h.b16 %v641
  %v3697 = vunpack.c.l.b16 %v642
  %v3698 = vunpack.c.h.b16 %v642
  %v3699 = vunpack.c.l.b16 %v643
  %v3700 = vunpack.c.h.b16 %v643
  %v3701 = vunpack.c.l.b16 %v644
  %v3702 = vunpack.c.h.b16 %v644
  %v3703 = vunpack.c.l.b16 %v645
  %v3704 = vunpack.c.h.b16 %v645
  %v3705 = vunpack.c.l.b16 %v646
  %v3706 = vunpack.c.h.b16 %v646
  %v3707 = vunpack.c.l.b16 %v647
  %v3708 = vunpack.c.h.b16 %v647
  %v3709 = vunpack.c.l.b16 %v648
  %v3710 = vunpack.c.h.b16 %v648
  %v3711 = vunpack.c.l.b16 %v649
  %v3712 = vunpack.c.h.b16 %v649
  %v3713 = vunpack.c.l.b16 %v650
  %v3714 = vunpack.c.h.b16 %v650
  %v3715 = vunpack.c.l.b16 %v651
  %v3716 = vunpack.c.h.b16 %v651
  %v3717 = vunpack.c.l.b16 %v652
  %v3718 = vunpack.c.h.b16 %v652
  %v3719 = vunpack.c.l.b16 %v653
  %v3720 = vunpack.c.h.b16 %v653
  %v3721 = vunpack.c.l.b16 %v654
  %v3722 = vunpack.c.h.b16 %v654
  %v3723 = vunpack.c.l.b16 %v655
  %v3724 = vunpack.c.h.b16 %v655
  %v3725 = vunpack.c.l.b16 %v656
  %v3726 = vunpack.c.h.b16 %v656
  %v3727 = vunpack.c.l.b16 %v657
  %v3728 = vunpack.c.h.b16 %v657
  %v3729 = vunpack.c.l.b16 %v658
  %v3730 = vunpack.c.h.b16 %v658
  %v3731 = vunpack.c.l.b16 %v659
  %v3732 = vunpack.c.h.b16 %v659
  %v3733 = vunpack.c.l.b16 %v660
  %v3734 = vunpack.c.h.b16 %v660
  %v3735 = vunpack.c.l.b16 %v661
  %v3736 = vunpack.c.h.b16 %v661
  %v3737 = vunpack.c.l.b16 %v662
  %v3738 = vunpack.c.h.b16 %v662
  %v3739 = vunpack.c.l.b16 %v663
  %v3740 = vunpack.c.h.b16 %v663
  %v3741 = vunpack.c.l.b16 %v664
  %v3742 = vunpack.c.h.b16 %v664
  %v3743 = vunpack.c.l.b16 %v665
  %v3744 = vunpack.c.h.b16 %v665
  %v3745 = vunpack.c.l.b16 %v666
  %v3746 = vunpack.c.h.b16 %v666
  %v3747 = vunpack.c.l.b16 %v667
  %v3748 = vunpack.c.h.b16 %v667
  %v3749 = vunpack.c.l.b16 %v668
  %v3750 = vunpack.c.h.b16 %v668
  %v3751 = vunpack.c.l.b16 %v669
  %v3752 = vunpack.c.h.b16 %v669
  %v3753 = vunpack.c.l.b16 %v670
  %v3754 = vunpack.c.h.b16 %v670
  %v3755 = vunpack.c.l.b16 %v671
  %v3756 = vunpack.c.h.b16 %v671
  %v3757 = vunpack.c.l.b16 %v672
  %v3758 = vunpack.c.h.b16 %v672
  %v3759 = vunpack.c.l.b16 %v673
  %v3760 = vunpack.c.h.b16 %v673
  %v3761 = vunpack.c.l.b16 %v674
  %v3762 = vunpack.c.h.b16 %v674
  %v3763 = vunpack.c.l.b16 %v675
  %v3764 = vunpack.c.h.b16 %v675
  %v3765 = vunpack.c.l.b16 %v676
  %v3766 = vunpack.c.h.b16 %v676
  %v3767 = vunpack.c.l.b16 %v677
  %v3768 = vunpack.c.h.b16 %v677
  %v3769 = vunpack.c.l.b16 %v678
  %v3770 = vunpack.c.h.b16 %v678
  %v3771 = vunpack.c.l.b16 %v679
  %v3772 = vunpack.c.h.b16 %v679
  %v3773 = vunpack.c.l.b16 %v680
  %v3774 = vunpack.c.h.b16 %v680
  %v3775 = vunpack.c.l.b16 %v681
  %v3776 = vunpack.c.h.b16 %v681
  %v3777 = vunpack.c.l.b16 %v682
  %v3778 = vunpack.c.h.b16 %v682
  %v3779 = vunpack.c.l.b16 %v683
  %v3780 = vunpack.c.h.b16 %v683
  %v3781 = vunpack.c.l.b16 %v684
  %v3782 = vunpack.c.h.b16 %v684
  %v3783 = vunpack.c.l.b16 %v685
  %v3784 = vunpack.c.h.b16 %v685
  %v3785 = vunpack.c.l.b16 %v686
  %v3786 = vunpack.c.h.b16 %v686
  %v3787 = vunpack.c.l.b16 %v687
  %v3788 = vunpack.c.h.b16 %v687
  %v3789 = vunpack.c.l.b16 %v688
  %v3790 = vunpack.c.h.b16 %v688
  %v3791 = vunpack.c.l.b16 %v689
  %v3792 = vunpack.c.h.b16 %v689
  %v3793 = vunpack.c.l.b16 %v690
  %v3794 = vunpack.c.h.b16 %v690
  %v3795 = vunpack.c.l.b16 %v691
  %v3796 = vunpack.c.h.b16 %v691
  %v3797 = vunpack.c.l.b16 %v692
  %v3798 = vunpack.c.h.b16 %v692
  %v3799 = vunpack.c.l.b16 %v693
  %v3800 = vunpack.c.h.b16 %v693
  %v3801 = vunpack.c.l.b16 %v694
  %v3802 = vunpack.c.h.b16 %v694
  %v3803 = vunpack.c.l.b16 %v695
  %v3804 = vunpack.c.h.b16 %v695
  %v3805 = vunpack.c.l.b16 %v696
  %v3806 = vunpack.c.h.b16 %v696
  %v3807 = vunpack.c.l.b16 %v697
  %v3808 = vunpack.c.h.b16 %v697
  %v3809 = vunpack.c.l.b16 %v698
  %v3810 = vunpack.c.h.b16 %v698
  %v3811 = vunpack.c.l.b16 %v699
  %v3812 = vunpack.c.h.b16 %v699
  %v3813 = vunpack.c.l.b16 %v700
  %v3814 = vunpack.c.h.b16 %v700
  %v3815 = vunpack.c.l.b16 %v701
  %v3816 = vunpack.c.h.b16 %v701
  %v3817 = vunpack.c.l.b16 %v702
  %v3818 = vunpack.c.h.b16 %v702
  %v3819 = vunpack.c.l.b16 %v703
  %v3820 = vunpack.c.h.b16 %v703
  %v3821 = vunpack.c.l.b16 %v704
  %v3822 = vunpack.c.h.b16 %v704
  %v3823 = vunpack.c.l.b16 %v705
  %v3824 = vunpack.c.h.b16 %v705
  %v3825 = vunpack.c.l.b16 %v706
  %v3826 = vunpack.c.h.b16 %v706
  %v3827 = vunpack.c.l.b16 %v707
  %v3828 = vunpack.c.h.b16 %v707
  %v3829 = vunpack.c.l.b16 %v708
  %v3830 = vunpack.c.h.b16 %v708
  %v3831 = vunpack.c.l.b16 %v709
  %v3832 = vunpack.c.h.b16 %v709
  %v3833 = vunpack.c.l.b16 %v710
  %v3834 = vunpack.c.h.b16 %v710
  %v3835 = vunpack.c.l.b16 %v711
  %v3836 = vunpack.c.h.b16 %v711
  %v3837 = vunpack.c.l.b16 %v712
  %v3838 = vunpack.c.h.b16 %v712
  %v3839 = vunpack.c.l.b16 %v713
  %v3840 = vunpack.c.h.b16 %v713
  %v3841 = vunpack.c.l.b16 %v714
  %v3842 = vunpack.c.h.b16 %v714
  %v3843 = vunpack.c.l.b16 %v715
  %v3844 = vunpack.c.h.b16 %v715
  %v3845 = vunpack.c.l.b16 %v716
  %v3846 = vunpack.c.h.b16 %v716
  %v3847 = vunpack.c.l.b16 %v717
  %v3848 = vunpack.c.h.b16 %v717
  %v3849 = vunpack.c.l.b16 %v718
  %v3850 = vunpack.c.h.b16 %v718
  %v3851 = vunpack.c.l.b16 %v719
  %v3852 = vunpack.c.h.b16 %v719
  %v3853 = vunpack.c.l.b16 %v720
  %v3854 = vunpack.c.h.b16 %v720
  %v3855 = vunpack.c.l.b16 %v721
  %v3856 = vunpack.c.h.b16 %v721
  %v3857 = vunpack.c.l.b16 %v722
  %v3858 = vunpack.c.h.b16 %v722
  %v3859 = vunpack.c.l.b16 %v723
  %v3860 = vunpack.c.h.b16 %v723
  %v3861 = vunpack.c.l.b16 %v724
  %v3862 = vunpack.c.h.b16 %v724
  %v3863 = vunpack.c.l.b16 %v725
  %v3864 = vunpack.c.h.b16 %v725
  %v3865 = vunpack.c.l.b16 %v726
  %v3866 = vunpack.c.h.b16 %v726
  %v3867 = vunpack.c.l.b16 %v727
  %v3868 = vunpack.c.h.b16 %v727
  %v3869 = vunpack.c.l.b16 %v728
  %v3870 = vunpack.c.h.b16 %v728
  %v3871 = vunpack.c.l.b16 %v729
  %v3872 = vunpack.c.h.b16 %v729
  %v3873 = vunpack.c.l.b16 %v730
  %v3874 = vunpack.c.h.b16 %v730
  %v3875 = vunpack.c.l.b16 %v731
  %v3876 = vunpack.c.h.b16 %v731
  %v3877 = vunpack.c.l.b16 %v732
  %v3878 = vunpack.c.h.b16 %v732
  %v3879 = vunpack.c.l.b16 %v733
  %v3880 = vunpack.c.h.b16 %v733
  %v3881 = vunpack.c.l.b16 %v734
  %v3882 = vunpack.c.h.b16 %v734
  %v3883 = vunpack.c.l.b16 %v735
  %v3884 = vunpack.c.h.b16 %v735
  %v3885 = vunpack.c.l.b16 %v736
  %v3886 = vunpack.c.h.b16 %v736
  %v3887 = vunpack.c.l.b16 %v737
  %v3888 = vunpack.c.h.b16 %v737
  %v3889 = vunpack.c.l.b16 %v738
  %v3890 = vunpack.c.h.b16 %v738
  %v3891 = vunpack.c.l.b16 %v739
  %v3892 = vunpack.c.h.b16 %v739
  %v3893 = vunpack.c.l.b16 %v740
  %v3894 = vunpack.c.h.b16 %v740
  %v3895 = vunpack.c.l.b16 %v741
  %v3896 = vunpack.c.h.b16 %v741
  %v3897 = vunpack.c.l.b16 %v742
  %v3898 = vunpack.c.h.b16 %v742
  %v3899 = vunpack.c.l.b16 %v743
  %v3900 = vunpack.c.h.b16 %v743
  %v3901 = vunpack.c.l.b16 %v744
  %v3902 = vunpack.c.h.b16 %v744
  %v3903 = vunpack.c.l.b16 %v745
  %v3904 = vunpack.c.h.b16 %v745
  %v3905 = vunpack.c.l.b16 %v746
  %v3906 = vunpack.c.h.b16 %v746
  %v3907 = vunpack.c.l.b16 %v747
  %v3908 = vunpack.c.h.b16 %v747
  %v3909 = vunpack.c.l.b16 %v748
  %v3910 = vunpack.c.h.b16 %v748
  %v3911 = vunpack.c.l.b16 %v749
  %v3912 = vunpack.c.h.b16 %v749
  %v3913 = vunpack.c.l.b16 %v750
  %v3914 = vunpack.c.h.b16 %v750
  %v3915 = vunpack.c.l.b16 %v751
  %v3916 = vunpack.c.h.b16 %v751
  %v3917 = vunpack.c.l.b16 %v752
  %v3918 = vunpack.c.h.b16 %v752
  %v3919 = vunpack.c.l.b16 %v753
  %v3920 = vunpack.c.h.b16 %v753
  %v3921 = vunpack.c.l.b16 %v754
  %v3922 = vunpack.c.h.b16 %v754
  %v3923 = vunpack.c.l.b16 %v755
  %v3924 = vunpack.c.h.b16 %v755
  %v3925 = vunpack.c.l.b16 %v756
  %v3926 = vunpack.c.h.b16 %v756
  %v3927 = vunpack.c.l.b16 %v757
  %v3928 = vunpack.c.h.b16 %v757
  %v3929 = vunpack.c.l.b16 %v758
  %v3930 = vunpack.c.h.b16 %v758
  %v3931 = vunpack.c.l.b16 %v759
  %v3932 = vunpack.c.h.b16 %v759
  %v3933 = vunpack.c.l.b16 %v760
  %v3934 = vunpack.c.h.b16 %v760
  %v3935 = vunpack.c.l.b16 %v761
  %v3936 = vunpack.c.h.b16 %v761
  %v3937 = vunpack.c.l.b16 %v762
  %v3938 = vunpack.c.h.b16 %v762
  %v3939 = vunpack.c.l.b16 %v763
  %v3940 = vunpack.c.h.b16 %v763
  %v3941 = vunpack.c.l.b16 %v764
  %v3942 = vunpack.c.h.b16 %v764
  %v3943 = vunpack.c.l.b16 %v765
  %v3944 = vunpack.c.h.b16 %v765
  %v3945 = vunpack.c.l.b16 %v766
  %v3946 = vunpack.c.h.b16 %v766
  %v3947 = vunpack.c.l.b16 %v767
  %v3948 = vunpack.c.h.b16 %v767
  %v3949 = vunpack.c.l.b16 %v768
  %v3950 = vunpack.c.h.b16 %v768
  %v3951 = vunpack.c.l.b16 %v769
  %v3952 = vunpack.c.h.b16 %v769
  %v3953 = vunpack.c.l.b16 %v770
  %v3954 = vunpack.c.h.b16 %v770
  %v3955 = vunpack.c.l.b16 %v771
  %v3956 = vunpack.c.h.b16 %v771
  %v3957 = vunpack.c.l.b16 %v772
  %v3958 = vunpack.c.h.b16 %v772
  %v3959 = vunpack.c.l.b16 %v773
  %v3960 = vunpack.c.h.b16 %v773
  %v3961 = vunpack.c.l.b16 %v774
  %v3962 = vunpack.c.h.b16 %v774
  %v3963 = vunpack.c.l.b16 %v775
  %v3964 = vunpack.c.h.b16 %v775
  %v3965 = vunpack.c.l.b16 %v776
  %v3966 = vunpack.c.h.b16 %v776
  %v3967 = vunpack.c.l.b16 %v777
  %v3968 = vunpack.c.h.b16 %v777
  %v3969 = vunpack.c.l.b16 %v778
  %v3970 = vunpack.c.h.b16 %v778
  %v3971 = vunpack.c.l.b16 %v779
  %v3972 = vunpack.c.h.b16 %v779
  %v3973 = vunpack.c.l.b16 %v780
  %v3974 = vunpack.c.h.b16 %v780
  %v3975 = vunpack.c.l.b16 %v781
  %v3976 = vunpack.c.h.b16 %v781
  %v3977 = vunpack.c.l.b16 %v782
  %v3978 = vunpack.c.h.b16 %v782
  %v3979 = vunpack.c.l.b16 %v783
  %v3980 = vunpack.c.h.b16 %v783
  %v3981 = vunpack.c.l.b16 %v784
  %v3982 = vunpack.c.h.b16 %v784
  %v3983 = vunpack.c.l.b16 %v785
  %v3984 = vunpack.c.h.b16 %v785
  %v3985 = vunpack.c.l.b16 %v786
  %v3986 = vunpack.c.h.b16 %v786
  %v3987 = vunpack.c.l.b16 %v787
  %v3988 = vunpack.c.h.b16 %v787
  %v3989 = vunpack.c.l.b16 %v788
  %v3990 = vunpack.c.h.b16 %v788
  %v3991 = vunpack.c.l.b16 %v789
  %v3992 = vunpack.c.h.b16 %v789
  %v3993 = vunpack.c.l.b16 %v790
  %v3994 = vunpack.c.h.b16 %v790
  %v3995 = vunpack.c.l.b16 %v791
  %v3996 = vunpack.c.h.b16 %v791
  %v3997 = vunpack.c.l.b16 %v792
  %v3998 = vunpack.c.h.b16 %v792
  %v3999 = vunpack.c.l.b16 %v793
  %v4000 = vunpack.c.h.b16 %v793
  %v4001 = vunpack.c.l.b16 %v794
  %v4002 = vunpack.c.h.b16 %v794
  %v4003 = vunpack.c.l.b16 %v795
  %v4004 = vunpack.c.h.b16 %v795
  %v4005 = vunpack.c.l.b16 %v796
  %v4006 = vunpack.c.h.b16 %v796
  %v4007 = vunpack.c.l.b16 %v797
  %v4008 = vunpack.c.h.b16 %v797
  %v4009 = vunpack.c.l.b16 %v798
  %v4010 = vunpack.c.h.b16 %v798
  %v4011 = vunpack.c.l.b16 %v799
  %v4012 = vunpack.c.h.b16 %v799
  %v4013 = vunpack.c.l.b16 %v800
  %v4014 = vunpack.c.h.b16 %v800
  %v4015 = vunpack.c.l.b16 %v801
  %v4016 = vunpack.c.h.b16 %v801
  %v4017 = vunpack.c.l.b16 %v802
  %v4018 = vunpack.c.h.b16 %v802
  %v4019 = vunpack.c.l.b16 %v803
  %v4020 = vunpack.c.h.b16 %v803
  %v4021 = vunpack.c.l.b16 %v804
  %v4022 = vunpack.c.h.b16 %v804
  %v4023 = vunpack.c.l.b16 %v805
  %v4024 = vunpack.c.h.b16 %v805
  %v4025 = vunpack.c.l.b16 %v806
  %v4026 = vunpack.c.h.b16 %v806
  %v4027 = vunpack.c.l.b16 %v807
  %v4028 = vunpack.c.h.b16 %v807
  %v4029 = vunpack.c.l.b16 %v808
  %v4030 = vunpack.c.h.b16 %v808
  %v4031 = vunpack.c.l.b16 %v809
  %v4032 = vunpack.c.h.b16 %v809
  %v4033 = vunpack.c.l.b16 %v810
  %v4034 = vunpack.c.h.b16 %v810
  %v4035 = vunpack.c.l.b16 %v811
  %v4036 = vunpack.c.h.b16 %v811
  %v4037 = vunpack.c.l.b16 %v812
  %v4038 = vunpack.c.h.b16 %v812
  %v4039 = vunpack.c.l.b16 %v813
  %v4040 = vunpack.c.h.b16 %v813
  %v4041 = vunpack.c.l.b16 %v814
  %v4042 = vunpack.c.h.b16 %v814
  %v4043 = vunpack.c.l.b16 %v815
  %v4044 = vunpack.c.h.b16 %v815
  %v4045 = vunpack.c.l.b16 %v816
  %v4046 = vunpack.c.h.b16 %v816
  %v4047 = vunpack.c.l.b16 %v817
  %v4048 = vunpack.c.h.b16 %v817
  %v4049 = vunpack.c.l.b16 %v818
  %v4050 = vunpack.c.h.b16 %v818
  %v4051 = vunpack.c.l.b16 %v819
  %v4052 = vunpack.c.h.b16 %v819
  %v4053 = vunpack.c.l.b16 %v820
  %v4054 = vunpack.c.h.b16 %v820
  %v4055 = vunpack.c.l.b16 %v821
  %v4056 = vunpack.c.h.b16 %v821
  %v4057 = vunpack.c.l.b16 %v822
  %v4058 = vunpack.c.h.b16 %v822
  %v4059 = vunpack.c.l.b16 %v823
  %v4060 = vunpack.c.h.b16 %v823
  %v4061 = vunpack.c.l.b16 %v824
  %v4062 = vunpack.c.h.b16 %v824
  %v4063 = vunpack.c.l.b16 %v825
  %v4064 = vunpack.c.h.b16 %v825
  %v4065 = vunpack.c.l.b16 %v826
  %v4066 = vunpack.c.h.b16 %v826
  %v4067 = vunpack.c.l.b16 %v827
  %v4068 = vunpack.c.h.b16 %v827
  %v4069 = vunpack.c.l.b16 %v828
  %v4070 = vunpack.c.h.b16 %v828
  %v4071 = vunpack.c.l.b16 %v829
  %v4072 = vunpack.c.h.b16 %v829
  %v4073 = vunpack.c.l.b16 %v830
  %v4074 = vunpack.c.h.b16 %v830
  %v4075 = vunpack.c.l.b16 %v831
  %v4076 = vunpack.c.h.b16 %v831
  %v4077 = vunpack.c.l.b16 %v832
  %v4078 = vunpack.c.h.b16 %v832
  %v4079 = vunpack.c.l.b16 %v833
  %v4080 = vunpack.c.h.b16 %v833
  %v4081 = vunpack.c.l.b16 %v834
  %v4082 = vunpack.c.h.b16 %v834
  %v4083 = vunpack.c.l.b16 %v835
  %v4084 = vunpack.c.h.b16 %v835
  %v4085 = vunpack.c.l.b16 %v836
  %v4086 = vunpack.c.h.b16 %v836
  %v4087 = vunpack.c.l.b16 %v837
  %v4088 = vunpack.c.h.b16 %v837
  %v4089 = vunpack.c.l.b16 %v838
  %v4090 = vunpack.c.h.b16 %v838
  %v4091 = vunpack.c.l.b16 %v839
  %v4092 = vunpack.c.h.b16 %v839
  %v4093 = vunpack.c.l.b16 %v840
  %v4094 = vunpack.c.h.b16 %v840
  %v4095 = vunpack.c.l.b16 %v841
  %v4096 = vunpack.c.h.b16 %v841
  %v4097 = vunpack.c.l.b16 %v842
  %v4098 = vunpack.c.h.b16 %v842
  %v4099 = vunpack.c.l.b16 %v843
  %v4100 = vunpack.c.h.b16 %v843
  %v4101 = vunpack.c.l.b16 %v844
  %v4102 = vunpack.c.h.b16 %v844
  %v4103 = vunpack.c.l.b16 %v845
  %v4104 = vunpack.c.h.b16 %v845
  %v4105 = vunpack.c.l.b16 %v846
  %v4106 = vunpack.c.h.b16 %v846
  %v4107 = vunpack.c.l.b16 %v847
  %v4108 = vunpack.c.h.b16 %v847
  %v4109 = vunpack.c.l.b16 %v848
  %v4110 = vunpack.c.h.b16 %v848
  %v4111 = vunpack.c.l.b16 %v849
  %v4112 = vunpack.c.h.b16 %v849
  %v4113 = vunpack.c.l.b16 %v850
  %v4114 = vunpack.c.h.b16 %v850
  %v4115 = vunpack.c.l.b16 %v851
  %v4116 = vunpack.c.h.b16 %v851
  %v4117 = vunpack.c.l.b16 %v852
  %v4118 = vunpack.c.h.b16 %v852
  %v4119 = vunpack.c.l.b16 %v853
  %v4120 = vunpack.c.h.b16 %v853
  %v4121 = vunpack.c.l.b16 %v854
  %v4122 = vunpack.c.h.b16 %v854
  %v4123 = vunpack.c.l.b16 %v855
  %v4124 = vunpack.c.h.b16 %v855
  %v4125 = vunpack.c.l.b16 %v856
  %v4126 = vunpack.c.h.b16 %v856
  %v4127 = vunpack.c.l.b16 %v857
  %v4128 = vunpack.c.h.b16 %v857
  %v4129 = vunpack.c.l.b16 %v858
  %v4130 = vunpack.c.h.b16 %v858
  %v4131 = vunpack.c.l.b16 %v859
  %v4132 = vunpack.c.h.b16 %v859
  %v4133 = vunpack.c.l.b16 %v860
  %v4134 = vunpack.c.h.b16 %v860
  %v4135 = vunpack.c.l.b16 %v861
  %v4136 = vunpack.c.h.b16 %v861
  %v4137 = vunpack.c.l.b16 %v862
  %v4138 = vunpack.c.h.b16 %v862
  %v4139 = vunpack.c.l.b16 %v863
  %v4140 = vunpack.c.h.b16 %v863
  %v4141 = vunpack.c.l.b16 %v864
  %v4142 = vunpack.c.h.b16 %v864
  %v4143 = vunpack.c.l.b16 %v865
  %v4144 = vunpack.c.h.b16 %v865
  %v4145 = vunpack.c.l.b16 %v866
  %v4146 = vunpack.c.h.b16 %v866
  %v4147 = vunpack.c.l.b16 %v867
  %v4148 = vunpack.c.h.b16 %v867
  %v4149 = vunpack.c.l.b16 %v868
  %v4150 = vunpack.c.h.b16 %v868
  %v4151 = vunpack.c.l.b16 %v869
  %v4152 = vunpack.c.h.b16 %v869
  %v4153 = vunpack.c.l.b16 %v870
  %v4154 = vunpack.c.h.b16 %v870
  %v4155 = vunpack.c.l.b16 %v871
  %v4156 = vunpack.c.h.b16 %v871
  %v4157 = vunpack.c.l.b16 %v872
  %v4158 = vunpack.c.h.b16 %v872
  %v4159 = vunpack.c.l.b16 %v873
  %v4160 = vunpack.c.h.b16 %v873
  %v4161 = vunpack.c.l.b16 %v874
  %v4162 = vunpack.c.h.b16 %v874
  %v4163 = vunpack.c.l.b16 %v875
  %v4164 = vunpack.c.h.b16 %v875
  %v4165 = vunpack.c.l.b16 %v876
  %v4166 = vunpack.c.h.b16 %v876
  %v4167 = vunpack.c.l.b16 %v877
  %v4168 = vunpack.c.h.b16 %v877
  %v4169 = vunpack.c.l.b16 %v878
  %v4170 = vunpack.c.h.b16 %v878
  %v4171 = vunpack.c.l.b16 %v879
  %v4172 = vunpack.c.h.b16 %v879
  %v4173 = vunpack.c.l.b16 %v880
  %v4174 = vunpack.c.h.b16 %v880
  %v4175 = vunpack.c.l.b16 %v881
  %v4176 = vunpack.c.h.b16 %v881
  %v4177 = vunpack.c.l.b16 %v882
  %v4178 = vunpack.c.h.b16 %v882
  %v4179 = vunpack.c.l.b16 %v883
  %v4180 = vunpack.c.h.b16 %v883
  %v4181 = vunpack.c.l.b16 %v884
  %v4182 = vunpack.c.h.b16 %v884
  %v4183 = vunpack.c.l.b16 %v885
  %v4184 = vunpack.c.h.b16 %v885
  %v4185 = vunpack.c.l.b16 %v886
  %v4186 = vunpack.c.h.b16 %v886
  %v4187 = vunpack.c.l.b16 %v887
  %v4188 = vunpack.c.h.b16 %v887
  %v4189 = vunpack.c.l.b16 %v888
  %v4190 = vunpack.c.h.b16 %v888
  %v4191 = vunpack.c.l.b16 %v889
  %v4192 = vunpack.c.h.b16 %v889
  %v4193 = vunpack.c.l.b16 %v890
  %v4194 = vunpack.c.h.b16 %v890
  %v4195 = vunpack.c.l.b16 %v891
  %v4196 = vunpack.c.h.b16 %v891
  %v4197 = vunpack.c.l.b16 %v892
  %v4198 = vunpack.c.h.b16 %v892
  %v4199 = vunpack.c.l.b16 %v893
  %v4200 = vunpack.c.h.b16 %v893
  %v4201 = vunpack.c.l.b16 %v894
  %v4202 = vunpack.c.h.b16 %v894
  %v4203 = vunpack.c.l.b16 %v895
  %v4204 = vunpack.c.h.b16 %v895
  %v4205 = vunpack.c.l.b16 %v896
  %v4206 = vunpack.c.h.b16 %v896
  %v4207 = vunpack.c.l.b16 %v897
  %v4208 = vunpack.c.h.b16 %v897
  %v4209 = vunpack.c.l.b16 %v898
  %v4210 = vunpack.c.h.b16 %v898
  %v4211 = vunpack.c.l.b16 %v899
  %v4212 = vunpack.c.h.b16 %v899
  %v4213 = vunpack.c.l.b16 %v900
  %v4214 = vunpack.c.h.b16 %v900
  %v4215 = vunpack.c.l.b16 %v901
  %v4216 = vunpack.c.h.b16 %v901
  %v4217 = vunpack.c.l.b16 %v902
  %v4218 = vunpack.c.h.b16 %v902
  %v4219 = vunpack.c.l.b16 %v903
  %v4220 = vunpack.c.h.b16 %v903
  %v4221 = vunpack.c.l.b16 %v904
  %v4222 = vunpack.c.h.b16 %v904
  %v4223 = vunpack.c.l.b16 %v905
  %v4224 = vunpack.c.h.b16 %v905
  %v4225 = vunpack.c.l.b16 %v906
  %v4226 = vunpack.c.h.b16 %v906
  %v4227 = vunpack.c.l.b16 %v907
  %v4228 = vunpack.c.h.b16 %v907
  %v4229 = vunpack.c.l.b16 %v908
  %v4230 = vunpack.c.h.b16 %v908
  %v4231 = vunpack.c.l.b16 %v909
  %v4232 = vunpack.c.h.b16 %v909
  %v4233 = vunpack.c.l.b16 %v910
  %v4234 = vunpack.c.h.b16 %v910
  %v4235 = vunpack.c.l.b16 %v911
  %v4236 = vunpack.c.h.b16 %v911
  %v4237 = vunpack.c.l.b16 %v912
  %v4238 = vunpack.c.h.b16 %v912
  %v4239 = vunpack.c.l.b16 %v913
  %v4240 = vunpack.c.h.b16 %v913
  %v4241 = vunpack.c.l.b16 %v914
  %v4242 = vunpack.c.h.b16 %v914
  %v4243 = vunpack.c.l.b16 %v915
  %v4244 = vunpack.c.h.b16 %v915
  %v4245 = vunpack.c.l.b16 %v916
  %v4246 = vunpack.c.h.b16 %v916
  %v4247 = vunpack.c.l.b16 %v917
  %v4248 = vunpack.c.h.b16 %v917
  %v4249 = vunpack.c.l.b16 %v918
  %v4250 = vunpack.c.h.b16 %v918
  %v4251 = vunpack.c.l.b16 %v919
  %v4252 = vunpack.c.h.b16 %v919
  %v4253 = vunpack.c.l.b16 %v920
  %v4254 = vunpack.c.h.b16 %v920
  %v4255 = vunpack.c.l.b16 %v921
  %v4256 = vunpack.c.h.b16 %v921
  %v4257 = vunpack.c.l.b16 %v922
  %v4258 = vunpack.c.h.b16 %v922
  %v4259 = vunpack.c.l.b16 %v923
  %v4260 = vunpack.c.h.b16 %v923
  %v4261 = vunpack.c.l.b16 %v924
  %v4262 = vunpack.c.h.b16 %v924
  %v4263 = vunpack.c.l.b16 %v925
  %v4264 = vunpack.c.h.b16 %v925
  %v4265 = vunpack.c.l.b16 %v926
  %v4266 = vunpack.c.h.b16 %v926
  %v4267 = vunpack.c.l.b16 %v927
  %v4268 = vunpack.c.h.b16 %v927
  %v4269 = vunpack.c.l.b16 %v928
  %v4270 = vunpack.c.h.b16 %v928
  %v4271 = vunpack.c.l.b16 %v929
  %v4272 = vunpack.c.h.b16 %v929
  %v4273 = vunpack.c.l.b16 %v930
  %v4274 = vunpack.c.h.b16 %v930
  %v4275 = vunpack.c.l.b16 %v931
  %v4276 = vunpack.c.h.b16 %v931
  %v4277 = vunpack.c.l.b16 %v932
  %v4278 = vunpack.c.h.b16 %v932
  %v4279 = vunpack.c.l.b16 %v933
  %v4280 = vunpack.c.h.b16 %v933
  %v4281 = vunpack.c.l.b16 %v934
  %v4282 = vunpack.c.h.b16 %v934
  %v4283 = vunpack.c.l.b16 %v935
  %v4284 = vunpack.c.h.b16 %v935
  %v4285 = vunpack.c.l.b16 %v936
  %v4286 = vunpack.c.h.b16 %v936
  %v4287 = vunpack.c.l.b16 %v937
  %v4288 = vunpack.c.h.b16 %v937
  %v4289 = vunpack.c.l.b16 %v938
  %v4290 = vunpack.c.h.b16 %v938
  %v4291 = vunpack.c.l.b16 %v939
  %v4292 = vunpack.c.h.b16 %v939
  %v4293 = vunpack.c.l.b16 %v940
  %v4294 = vunpack.c.h.b16 %v940
  %v4295 = vunpack.c.l.b16 %v941
  %v4296 = vunpack.c.h.b16 %v941
  %v4297 = vunpack.c.l.b16 %v942
  %v4298 = vunpack.c.h.b16 %v942
  %v4299 = vunpack.c.l.b16 %v943
  %v4300 = vunpack.c.h.b16 %v943
  %v4301 = vunpack.c.l.b16 %v944
  %v4302 = vunpack.c.h.b16 %v944
  %v4303 = vunpack.c.l.b16 %v945
  %v4304 = vunpack.c.h.b16 %v945
  %v4305 = vunpack.c.l.b16 %v946
  %v4306 = vunpack.c.h.b16 %v946
  %v4307 = vunpack.c.l.b16 %v947
  %v4308 = vunpack.c.h.b16 %v947
  %v4309 = vunpack.c.l.b16 %v948
  %v4310 = vunpack.c.h.b16 %v948
  %v4311 = vunpack.c.l.b16 %v949
  %v4312 = vunpack.c.h.b16 %v949
  %v4313 = vunpack.c.l.b16 %v950
  %v4314 = vunpack.c.h.b16 %v950
  %v4315 = vunpack.c.l.b16 %v951
  %v4316 = vunpack.c.h.b16 %v951
  %v4317 = vunpack.c.l.b16 %v952
  %v4318 = vunpack.c.h.b16 %v952
  %v4319 = vunpack.c.l.b16 %v953
  %v4320 = vunpack.c.h.b16 %v953
  %v4321 = vunpack.c.l.b16 %v954
  %v4322 = vunpack.c.h.b16 %v954
  %v4323 = vunpack.c.l.b16 %v955
  %v4324 = vunpack.c.h.b16 %v955
  %v4325 = vunpack.c.l.b16 %v956
  %v4326 = vunpack.c.h.b16 %v956
  %v4327 = vunpack.c.l.b16 %v957
  %v4328 = vunpack.c.h.b16 %v957
  %v4329 = vunpack.c.l.b16 %v958
  %v4330 = vunpack.c.h.b16 %v958
  %v4331 = vunpack.c.l.b16 %v959
  %v4332 = vunpack.c.h.b16 %v959
  %v4333 = vunpack.c.l.b16 %v960
  %v4334 = vunpack.c.h.b16 %v960
  %v4335 = vunpack.c.l.b16 %v961
  %v4336 = vunpack.c.h.b16 %v961
  %v4337 = vunpack.c.l.b16 %v962
  %v4338 = vunpack.c.h.b16 %v962
  %v4339 = vunpack.c.l.b16 %v963
  %v4340 = vunpack.c.h.b16 %v963
  %v4341 = vunpack.c.l.b16 %v964
  %v4342 = vunpack.c.h.b16 %v964
  %v4343 = vunpack.c.l.b16 %v965
  %v4344 = vunpack.c.h.b16 %v965
  %v4345 = vunpack.c.l.b16 %v966
  %v4346 = vunpack.c.h.b16 %v966
  %v4347 = vunpack.c.l.b16 %v967
  %v4348 = vunpack.c.h.b16 %v967
  %v4349 = vunpack.c.l.b16 %v968
  %v4350 = vunpack.c.h.b16 %v968
  %v4351 = vunpack.c.l.b16 %v969
  %v4352 = vunpack.c.h.b16 %v969
  %v4353 = vunpack.c.l.b16 %v970
  %v4354 = vunpack.c.h.b16 %v970
  %v4355 = vunpack.c.l.b16 %v971
  %v4356 = vunpack.c.h.b16 %v971
  %v4357 = vunpack.c.l.b16 %v972
  %v4358 = vunpack.c.h.b16 %v972
  %v4359 = vunpack.c.l.b16 %v973
  %v4360 = vunpack.c.h.b16 %v973
  %v4361 = vunpack.c.l.b16 %v974
  %v4362 = vunpack.c.h.b16 %v974
  %v4363 = vunpack.c.l.b16 %v975
  %v4364 = vunpack.c.h.b16 %v975
  %v4365 = vunpack.c.l.b16 %v976
  %v4366 = vunpack.c.h.b16 %v976
  %v4367 = vunpack.c.l.b16 %v977
  %v4368 = vunpack.c.h.b16 %v977
  %v4369 = vunpack.c.l.b16 %v978
  %v4370 = vunpack.c.h.b16 %v978
  %v4371 = vunpack.c.l.b16 %v979
  %v4372 = vunpack.c.h.b16 %v979
  %v4373 = vunpack.c.l.b16 %v980
  %v4374 = vunpack.c.h.b16 %v980
  %v4375 = vunpack.c.l.b16 %v981
  %v4376 = vunpack.c.h.b16 %v981
  %v4377 = vunpack.c.l.b16 %v982
  %v4378 = vunpack.c.h.b16 %v982
  %v4379 = vunpack.c.l.b16 %v983
  %v4380 = vunpack.c.h.b16 %v983
  %v4381 = vunpack.c.l.b16 %v984
  %v4382 = vunpack.c.h.b16 %v984
  %v4383 = vunpack.c.l.b16 %v985
  %v4384 = vunpack.c.h.b16 %v985
  %v4385 = vunpack.c.l.b16 %v986
  %v4386 = vunpack.c.h.b16 %v986
  %v4387 = vunpack.c.l.b16 %v987
  %v4388 = vunpack.c.h.b16 %v987
  %v4389 = vunpack.c.l.b16 %v988
  %v4390 = vunpack.c.h.b16 %v988
  %v4391 = vunpack.c.l.b16 %v989
  %v4392 = vunpack.c.h.b16 %v989
  %v4393 = vunpack.c.l.b16 %v990
  %v4394 = vunpack.c.h.b16 %v990
  %v4395 = vunpack.c.l.b16 %v991
  %v4396 = vunpack.c.h.b16 %v991
  %v4397 = vunpack.c.l.b16 %v992
  %v4398 = vunpack.c.h.b16 %v992
  %v4399 = vunpack.c.l.b16 %v993
  %v4400 = vunpack.c.h.b16 %v993
  %v4401 = vunpack.c.l.b16 %v994
  %v4402 = vunpack.c.h.b16 %v994
  %v4403 = vunpack.c.l.b16 %v995
  %v4404 = vunpack.c.h.b16 %v995
  %v4405 = vunpack.c.l.b16 %v996
  %v4406 = vunpack.c.h.b16 %v996
  %v4407 = vunpack.c.l.b16 %v997
  %v4408 = vunpack.c.h.b16 %v997
  %v4409 = vunpack.c.l.b16 %v998
  %v4410 = vunpack.c.h.b16 %v998
  %v4411 = vunpack.c.l.b16 %v999
  %v4412 = vunpack.c.h.b16 %v999
  %v4413 = vunpack.c.l.b16 %v1000
  %v4414 = vunpack.c.h.b16 %v1000
  %v4415 = vunpack.c.l.b16 %v1001
  %v4416 = vunpack.c.h.b16 %v1001
  %v4417 = vunpack.c.l.b16 %v1002
  %v4418 = vunpack.c.h.b16 %v1002
  %v4419 = vunpack.c.l.b16 %v1003
  %v4420 = vunpack.c.h.b16 %v1003
  %v4421 = vunpack.c.l.b16 %v1004
  %v4422 = vunpack.c.h.b16 %v1004
  %v4423 = vunpack.c.l.b16 %v1005
  %v4424 = vunpack.c.h.b16 %v1005
  %v4425 = vunpack.c.l.b16 %v1006
  %v4426 = vunpack.c.h.b16 %v1006
  %v4427 = vunpack.c.l.b16 %v1007
  %v4428 = vunpack.c.h.b16 %v1007
  %v4429 = vunpack.c.l.b16 %v1008
  %v4430 = vunpack.c.h.b16 %v1008
  %v4431 = vunpack.c.l.b16 %v1009
  %v4432 = vunpack.c.h.b16 %v1009
  %v4433 = vunpack.c.l.b16 %v1010
  %v4434 = vunpack.c.h.b16 %v1010
  %v4435 = vunpack.c.l.b16 %v1011
  %v4436 = vunpack.c.h.b16 %v1011
  %v4437 = vunpack.c.l.b16 %v1012
  %v4438 = vunpack.c.h.b16 %v1012
  %v4439 = vunpack.c.l.b16 %v1013
  %v4440 = vunpack.c.h.b16 %v1013
  %v4441 = vunpack.c.l.b16 %v1014
  %v4442 = vunpack.c.h.b16 %v1014
  %v4443 = vunpack.c.l.b16 %v1015
  %v4444 = vunpack.c.h.b16 %v1015
  %v4445 = vunpack.c.l.b16 %v1016
  %v4446 = vunpack.c.h.b16 %v1016
  %v4447 = vunpack.c.l.b16 %v1017
  %v4448 = vunpack.c.h.b16 %v1017
  %v4449 = vunpack.c.l.b16 %v1018
  %v4450 = vunpack.c.h.b16 %v1018
  %v4451 = vunpack.c.l.b16 %v1019
  %v4452 = vunpack.c.h.b16 %v1019
  %v4453 = vunpack.c.l.b16 %v1020
  %v4454 = vunpack.c.h.b16 %v1020
  %v4455 = vunpack.c.l.b16 %v1021
  %v4456 = vunpack.c.h.b16 %v1021
  %v4457 = vunpack.c.l.b16 %v1022
  %v4458 = vunpack.c.h.b16 %v1022
  %v4459 = vunpack.c.l.b16 %v1023
  %v4460 = vunpack.c.h.b16 %v1023
  %v4461 = vunpack.c.l.b16 %v1024
  %v4462 = vunpack.c.h.b16 %v1024
  %v4463 = vunpack.c.l.b16 %v1025
  %v4464 = vunpack.c.h.b16 %v1025
  %v4465 = vunpack.c.l.b16 %v1026
  %v4466 = vunpack.c.h.b16 %v1026
  %v4467 = vunpack.c.l.b16 %v1027
  %v4468 = vunpack.c.h.b16 %v1027
  %v4469 = vunpack.c.l.b16 %v1028
  %v4470 = vunpack.c.h.b16 %v1028
  %v4471 = vunpack.c.l.b16 %v1029
  %v4472 = vunpack.c.h.b16 %v1029
  %v4473 = vunpack.c.l.b16 %v1030
  %v4474 = vunpack.c.h.b16 %v1030
  %v4475 = vunpack.c.l.b16 %v1031
  %v4476 = vunpack.c.h.b16 %v1031
  %v4477 = vunpack.c.l.b16 %v1032
  %v4478 = vunpack.c.h.b16 %v1032
  %v4479 = vunpack.c.l.b16 %v1033
  %v4480 = vunpack.c.h.b16 %v1033
  %v4481 = vunpack.c.l.b16 %v1034
  %v4482 = vunpack.c.h.b16 %v1034
  %v4483 = vunpack.c.l.b16 %v1035
  %v4484 = vunpack.c.h.b16 %v1035
  %v4485 = vunpack.c.l.b16 %v1036
  %v4486 = vunpack.c.h.b16 %v1036
  %v4487 = vunpack.c.l.b16 %v1037
  %v4488 = vunpack.c.h.b16 %v1037
  %v4489 = vunpack.c.l.b16 %v1038
  %v4490 = vunpack.c.h.b16 %v1038
  %v4491 = vunpack.c.l.b16 %v1039
  %v4492 = vunpack.c.h.b16 %v1039
  %v4493 = vunpack.c.l.b16 %v1040
  %v4494 = vunpack.c.h.b16 %v1040
  %v4495 = vunpack.c.l.b16 %v1041
  %v4496 = vunpack.c.h.b16 %v1041
  %v4497 = vunpack.c.l.b16 %v1042
  %v4498 = vunpack.c.h.b16 %v1042
  %v4499 = vunpack.c.l.b16 %v1043
  %v4500 = vunpack.c.h.b16 %v1043
  %v4501 = vunpack.c.l.b16 %v1044
  %v4502 = vunpack.c.h.b16 %v1044
  %v4503 = vunpack.c.l.b16 %v1045
  %v4504 = vunpack.c.h.b16 %v1045
  %v4505 = vunpack.c.l.b16 %v1046
  %v4506 = vunpack.c.h.b16 %v1046
  %v4507 = vunpack.c.l.b16 %v1047
  %v4508 = vunpack.c.h.b16 %v1047
  %v4509 = vunpack.c.l.b16 %v1048
  %v4510 = vunpack.c.h.b16 %v1048
  %v4511 = vunpack.c.l.b16 %v1049
  %v4512 = vunpack.c.h.b16 %v1049
  %v4513 = vunpack.c.l.b16 %v1050
  %v4514 = vunpack.c.h.b16 %v1050
  %v4515 = vunpack.c.l.b16 %v1051
  %v4516 = vunpack.c.h.b16 %v1051
  %v4517 = vunpack.c.l.b16 %v1052
  %v4518 = vunpack.c.h.b16 %v1052
  %v4519 = vunpack.c.l.b16 %v1053
  %v4520 = vunpack.c.h.b16 %v1053
  %v4521 = vunpack.c.l.b16 %v1054
  %v4522 = vunpack.c.h.b16 %v1054
  %v4523 = vunpack.c.l.b16 %v1055
  %v4524 = vunpack.c.h.b16 %v1055
  %v4525 = vunpack.c.l.b16 %v1056
  %v4526 = vunpack.c.h.b16 %v1056
  %v4527 = vunpack.c.l.b16 %v1057
  %v4528 = vunpack.c.h.b16 %v1057
  %v4529 = vunpack.c.l.b16 %v1058
  %v4530 = vunpack.c.h.b16 %v1058
  %v4531 = vunpack.c.l.b16 %v1059
  %v4532 = vunpack.c.h.b16 %v1059
  %v4533 = vunpack.c.l.b16 %v1060
  %v4534 = vunpack.c.h.b16 %v1060
  %v4535 = vunpack.c.l.b16 %v1061
  %v4536 = vunpack.c.h.b16 %v1061
  %v4537 = vunpack.c.l.b16 %v1062
  %v4538 = vunpack.c.h.b16 %v1062
  %v4539 = vunpack.c.l.b16 %v1063
  %v4540 = vunpack.c.h.b16 %v1063
  %v4541 = vunpack.c.l.b16 %v1064
  %v4542 = vunpack.c.h.b16 %v1064
  %v4543 = vunpack.c.l.b16 %v1065
  %v4544 = vunpack.c.h.b16 %v1065
  %v4545 = vunpack.c.l.b16 %v1066
  %v4546 = vunpack.c.h.b16 %v1066
  %v4547 = vunpack.c.l.b16 %v1067
  %v4548 = vunpack.c.h.b16 %v1067
  %v4549 = vunpack.c.l.b16 %v1068
  %v4550 = vunpack.c.h.b16 %v1068
  %v4551 = vunpack.c.l.b16 %v1069
  %v4552 = vunpack.c.h.b16 %v1069
  %v4553 = vunpack.c.l.b16 %v1070
  %v4554 = vunpack.c.h.b16 %v1070
  %v4555 = vunpack.c.l.b16 %v1071
  %v4556 = vunpack.c.h.b16 %v1071
  %v4557 = vunpack.c.l.b16 %v1072
  %v4558 = vunpack.c.h.b16 %v1072
  %v4559 = vunpack.c.l.b16 %v1073
  %v4560 = vunpack.c.h.b16 %v1073
  %v4561 = vunpack.c.l.b16 %v1074
  %v4562 = vunpack.c.h.b16 %v1074
  %v4563 = vunpack.c.l.b16 %v1075
  %v4564 = vunpack.c.h.b16 %v1075
  %v4565 = vunpack.c.l.b16 %v1076
  %v4566 = vunpack.c.h.b16 %v1076
  %v4567 = vunpack.c.l.b16 %v1077
  %v4568 = vunpack.c.h.b16 %v1077
  %v4569 = vunpack.c.l.b16 %v1078
  %v4570 = vunpack.c.h.b16 %v1078
  %v4571 = vunpack.c.l.b16 %v1079
  %v4572 = vunpack.c.h.b16 %v1079
  %v4573 = vunpack.c.l.b16 %v1080
  %v4574 = vunpack.c.h.b16 %v1080
  %v4575 = vunpack.c.l.b16 %v1081
  %v4576 = vunpack.c.h.b16 %v1081
  %v4577 = vunpack.c.l.b16 %v1082
  %v4578 = vunpack.c.h.b16 %v1082
  %v4579 = vunpack.c.l.b16 %v1083
  %v4580 = vunpack.c.h.b16 %v1083
  %v4581 = vunpack.c.l.b16 %v1084
  %v4582 = vunpack.c.h.b16 %v1084
  %v4583 = vunpack.c.l.b16 %v1085
  %v4584 = vunpack.c.h.b16 %v1085
  %v4585 = vunpack.c.l.b16 %v1086
  %v4586 = vunpack.c.h.b16 %v1086
  %v4587 = vunpack.c.l.b16 %v1087
  %v4588 = vunpack.c.h.b16 %v1087
  %v4589 = vunpack.c.l.b16 %v1088
  %v4590 = vunpack.c.h.b16 %v1088
  %v4591 = vunpack.c.l.b16 %v1089
  %v4592 = vunpack.c.h.b16 %v1089
  %v4593 = vunpack.c.l.b16 %v1090
  %v4594 = vunpack.c.h.b16 %v1090
  %v4595 = vunpack.c.l.b16 %v1091
  %v4596 = vunpack.c.h.b16 %v1091
  %v4597 = vunpack.c.l.b16 %v1092
  %v4598 = vunpack.c.h.b16 %v1092
  %v4599 = vunpack.c.l.b16 %v1093
  %v4600 = vunpack.c.h.b16 %v1093
  %v4601 = vunpack.c.l.b16 %v1094
  %v4602 = vunpack.c.h.b16 %v1094
  %v4603 = vunpack.c.l.b16 %v1095
  %v4604 = vunpack.c.h.b16 %v1095
  %v4605 = vunpack.c.l.b16 %v1096
  %v4606 = vunpack.c.h.b16 %v1096
  %v4607 = vunpack.c.l.b16 %v1097
  %v4608 = vunpack.c.h.b16 %v1097
  %v4609 = vunpack.c.l.b16 %v1098
  %v4610 = vunpack.c.h.b16 %v1098
  %v4611 = vunpack.c.l.b16 %v1099
  %v4612 = vunpack.c.h.b16 %v1099
  %v4613 = vunpack.c.l.b16 %v1100
  %v4614 = vunpack.c.h.b16 %v1100
  %v4615 = vunpack.c.l.b16 %v1101
  %v4616 = vunpack.c.h.b16 %v1101
  %v4617 = vunpack.c.l.b16 %v1102
  %v4618 = vunpack.c.h.b16 %v1102
  %v4619 = vunpack.c.l.b16 %v1103
  %v4620 = vunpack.c.h.b16 %v1103
  %v4621 = vunpack.c.l.b16 %v1104
  %v4622 = vunpack.c.h.b16 %v1104
  %v4623 = vunpack.c.l.b16 %v1105
  %v4624 = vunpack.c.h.b16 %v1105
  %v4625 = vunpack.c.l.b16 %v1106
  %v4626 = vunpack.c.h.b16 %v1106
  %v4627 = vunpack.c.l.b16 %v1107
  %v4628 = vunpack.c.h.b16 %v1107
  %v4629 = vunpack.c.l.b16 %v1108
  %v4630 = vunpack.c.h.b16 %v1108
  %v4631 = vunpack.c.l.b16 %v1109
  %v4632 = vunpack.c.h.b16 %v1109
  %v4633 = vunpack.c.l.b16 %v1110
  %v4634 = vunpack.c.h.b16 %v1110
  %v4635 = vunpack.c.l.b16 %v1111
  %v4636 = vunpack.c.h.b16 %v1111
  %v4637 = vunpack.c.l.b16 %v1112
  %v4638 = vunpack.c.h.b16 %v1112
  %v4639 = vunpack.c.l.b16 %v1113
  %v4640 = vunpack.c.h.b16 %v1113
  %v4641 = vunpack.c.l.b16 %v1114
  %v4642 = vunpack.c.h.b16 %v1114
  %v4643 = vunpack.c.l.b16 %v1115
  %v4644 = vunpack.c.h.b16 %v1115
  %v4645 = vunpack.c.l.b16 %v1116
  %v4646 = vunpack.c.h.b16 %v1116
  %v4647 = vunpack.c.l.b16 %v1117
  %v4648 = vunpack.c.h.b16 %v1117
  %v4649 = vunpack.c.l.b16 %v1118
  %v4650 = vunpack.c.h.b16 %v1118
  %v4651 = vunpack.c.l.b16 %v1119
  %v4652 = vunpack.c.h.b16 %v1119
  %v4653 = vunpack.c.l.b16 %v1120
  %v4654 = vunpack.c.h.b16 %v1120
  %v4655 = vunpack.c.l.b16 %v1121
  %v4656 = vunpack.c.h.b16 %v1121
  %v4657 = vunpack.c.l.b16 %v1122
  %v4658 = vunpack.c.h.b16 %v1122
  %v4659 = vunpack.c.l.b16 %v1123
  %v4660 = vunpack.c.h.b16 %v1123
  %v4661 = vunpack.c.l.b16 %v1124
  %v4662 = vunpack.c.h.b16 %v1124
  %v4663 = vunpack.c.l.b16 %v1125
  %v4664 = vunpack.c.h.b16 %v1125
  %v4665 = vunpack.c.l.b16 %v1126
  %v4666 = vunpack.c.h.b16 %v1126
  %v4667 = vunpack.c.l.b16 %v1127
  %v4668 = vunpack.c.h.b16 %v1127
  %v4669 = vunpack.c.l.b16 %v1128
  %v4670 = vunpack.c.h.b16 %v1128
  %v4671 = vunpack.c.l.b16 %v1129
  %v4672 = vunpack.c.h.b16 %v1129
  %v4673 = vunpack.c.l.b16 %v1130
  %v4674 = vunpack.c.h.b16 %v1130
  %v4675 = vunpack.c.l.b16 %v1131
  %v4676 = vunpack.c.h.b16 %v1131
  %v4677 = vunpack.c.l.b16 %v1132
  %v4678 = vunpack.c.h.b16 %v1132
  %v4679 = vunpack.c.l.b16 %v1133
  %v4680 = vunpack.c.h.b16 %v1133
  %v4681 = vunpack.c.l.b16 %v1134
  %v4682 = vunpack.c.h.b16 %v1134
  %v4683 = vunpack.c.l.b16 %v1135
  %v4684 = vunpack.c.h.b16 %v1135
  %v4685 = vunpack.c.l.b16 %v1136
  %v4686 = vunpack.c.h.b16 %v1136
  %v4687 = vunpack.c.l.b16 %v1137
  %v4688 = vunpack.c.h.b16 %v1137
  %v4689 = vunpack.c.l.b16 %v1138
  %v4690 = vunpack.c.h.b16 %v1138
  %v4691 = vunpack.c.l.b16 %v1139
  %v4692 = vunpack.c.h.b16 %v1139
  %v4693 = vunpack.c.l.b16 %v1140
  %v4694 = vunpack.c.h.b16 %v1140
  %v4695 = vunpack.c.l.b16 %v1141
  %v4696 = vunpack.c.h.b16 %v1141
  %v4697 = vunpack.c.l.b16 %v1142
  %v4698 = vunpack.c.h.b16 %v1142
  %v4699 = vunpack.c.l.b16 %v1143
  %v4700 = vunpack.c.h.b16 %v1143
  %v4701 = vunpack.c.l.b16 %v1144
  %v4702 = vunpack.c.h.b16 %v1144
  %v4703 = vunpack.c.l.b16 %v1145
  %v4704 = vunpack.c.h.b16 %v1145
  %v4705 = vunpack.c.l.b16 %v1146
  %v4706 = vunpack.c.h.b16 %v1146
  %v4707 = vunpack.c.l.b16 %v1147
  %v4708 = vunpack.c.h.b16 %v1147
  %v4709 = vunpack.c.l.b16 %v1148
  %v4710 = vunpack.c.h.b16 %v1148
  %v4711 = vunpack.c.l.b16 %v1149
  %v4712 = vunpack.c.h.b16 %v1149
  %v4713 = vunpack.c.l.b16 %v1150
  %v4714 = vunpack.c.h.b16 %v1150
  %v4715 = vunpack.c.l.b16 %v1151
  %v4716 = vunpack.c.h.b16 %v1151
  %v4717 = vunpack.c.l.b16 %v1152
  %v4718 = vunpack.c.h.b16 %v1152
  %v4719 = vunpack.c.l.b16 %v1153
  %v4720 = vunpack.c.h.b16 %v1153
  %v4721 = vunpack.c.l.b16 %v1154
  %v4722 = vunpack.c.h.b16 %v1154
  %v4723 = vunpack.c.l.b16 %v1155
  %v4724 = vunpack.c.h.b16 %v1155
  %v4725 = vunpack.c.l.b16 %v1156
  %v4726 = vunpack.c.h.b16 %v1156
  %v4727 = vunpack.c.l.b16 %v1157
  %v4728 = vunpack.c.h.b16 %v1157
  %v4729 = vunpack.c.l.b16 %v1158
  %v4730 = vunpack.c.h.b16 %v1158
  %v4731 = vunpack.c.l.b16 %v1159
  %v4732 = vunpack.c.h.b16 %v1159
  %v4733 = vunpack.c.l.b16 %v1160
  %v4734 = vunpack.c.h.b16 %v1160
  %v4735 = vunpack.c.l.b16 %v1161
  %v4736 = vunpack.c.h.b16 %v1161
  %v4737 = vunpack.c.l.b16 %v1162
  %v4738 = vunpack.c.h.b16 %v1162
  %v4739 = vunpack.c.l.b16 %v1163
  %v4740 = vunpack.c.h.b16 %v1163
  %v4741 = vunpack.c.l.b16 %v1164
  %v4742 = vunpack.c.h.b16 %v1164
  %v4743 = vunpack.c.l.b16 %v1165
  %v4744 = vunpack.c.h.b16 %v1165
  %v4745 = vunpack.c.l.b16 %v1166
  %v4746 = vunpack.c.h.b16 %v1166
  %v4747 = vunpack.c.l.b16 %v1167
  %v4748 = vunpack.c.h.b16 %v1167
  %v4749 = vunpack.c.l.b16 %v1168
  %v4750 = vunpack.c.h.b16 %v1168
  %v4751 = vunpack.c.l.b16 %v1169
  %v4752 = vunpack.c.h.b16 %v1169
  %v4753 = vunpack.c.l.b16 %v1170
  %v4754 = vunpack.c.h.b16 %v1170
  %v4755 = vunpack.c.l.b16 %v1171
  %v4756 = vunpack.c.h.b16 %v1171
  %v4757 = vunpack.c.l.b16 %v1172
  %v4758 = vunpack.c.h.b16 %v1172
  %v4759 = vunpack.c.l.b16 %v1173
  %v4760 = vunpack.c.h.b16 %v1173
  %v4761 = vunpack.c.l.b16 %v1174
  %v4762 = vunpack.c.h.b16 %v1174
  %v4763 = vunpack.c.l.b16 %v1175
  %v4764 = vunpack.c.h.b16 %v1175
  %v4765 = vunpack.c.l.b16 %v1176
  %v4766 = vunpack.c.h.b16 %v1176
  %v4767 = vunpack.c.l.b16 %v1177
  %v4768 = vunpack.c.h.b16 %v1177
  %v4769 = vunpack.c.l.b16 %v1178
  %v4770 = vunpack.c.h.b16 %v1178
  %v4771 = vunpack.c.l.b16 %v1179
  %v4772 = vunpack.c.h.b16 %v1179
  %v4773 = vunpack.c.l.b16 %v1180
  %v4774 = vunpack.c.h.b16 %v1180
  %v4775 = vunpack.c.l.b16 %v1181
  %v4776 = vunpack.c.h.b16 %v1181
  %v4777 = vunpack.c.l.b16 %v1182
  %v4778 = vunpack.c.h.b16 %v1182
  %v4779 = vunpack.c.l.b16 %v1183
  %v4780 = vunpack.c.h.b16 %v1183
  %v4781 = vunpack.c.l.b16 %v1184
  %v4782 = vunpack.c.h.b16 %v1184
  %v4783 = vunpack.c.l.b16 %v1185
  %v4784 = vunpack.c.h.b16 %v1185
  %v4785 = vunpack.c.l.b16 %v1186
  %v4786 = vunpack.c.h.b16 %v1186
  %v4787 = vunpack.c.l.b16 %v1187
  %v4788 = vunpack.c.h.b16 %v1187
  %v4789 = vunpack.c.l.b16 %v1188
  %v4790 = vunpack.c.h.b16 %v1188
  %v4791 = vunpack.c.l.b16 %v1189
  %v4792 = vunpack.c.h.b16 %v1189
  %v4793 = vunpack.c.l.b16 %v1190
  %v4794 = vunpack.c.h.b16 %v1190
  %v4795 = vpack.c.b16 %v2495, %v2491
  %v4796 = vpack.c.b16 %v2496, %v2492
  %v4797 = vpack.c.b16 %v2497, %v2493
  %v4798 = vpack.c.b16 %v2498, %v2494
  %v4799 = vpack.c.b16 %v2503, %v2499
  %v4800 = vpack.c.b16 %v2504, %v2500
  %v4801 = vpack.c.b16 %v2505, %v2501
  %v4802 = vpack.c.b16 %v2506, %v2502
  %v4803 = vpack.c.b16 %v2511, %v2507
  %v4804 = vpack.c.b16 %v2512, %v2508
  %v4805 = vpack.c.b16 %v2513, %v2509
  %v4806 = vpack.c.b16 %v2514, %v2510
  %v4807 = vpack.c.b16 %v2519, %v2515
  %v4808 = vpack.c.b16 %v2520, %v2516
  %v4809 = vpack.c.b16 %v2521, %v2517
  %v4810 = vpack.c.b16 %v2522, %v2518
  %v4811 = vpack.c.b16 %v2527, %v2523
  %v4812 = vpack.c.b16 %v2528, %v2524
  %v4813 = vpack.c.b16 %v2529, %v2525
  %v4814 = vpack.c.b16 %v2530, %v2526
  %v4815 = vpack.c.b16 %v2535, %v2531
  %v4816 = vpack.c.b16 %v2536, %v2532
  %v4817 = vpack.c.b16 %v2537, %v2533
  %v4818 = vpack.c.b16 %v2538, %v2534
  %v4819 = vpack.c.b16 %v2543, %v2539
  %v4820 = vpack.c.b16 %v2544, %v2540
  %v4821 = vpack.c.b16 %v2545, %v2541
  %v4822 = vpack.c.b16 %v2546, %v2542
  %v4823 = vpack.c.b16 %v2551, %v2547
  %v4824 = vpack.c.b16 %v2552, %v2548
  %v4825 = vpack.c.b16 %v2553, %v2549
  %v4826 = vpack.c.b16 %v2554, %v2550
  %v4827 = vpack.c.b16 %v2559, %v2555
  %v4828 = vpack.c.b16 %v2560, %v2556
  %v4829 = vpack.c.b16 %v2561, %v2557
  %v4830 = vpack.c.b16 %v2562, %v2558
  %v4831 = vpack.c.b16 %v2567, %v2563
  %v4832 = vpack.c.b16 %v2568, %v2564
  %v4833 = vpack.c.b16 %v2569, %v2565
  %v4834 = vpack.c.b16 %v2570, %v2566
  %v4835 = vpack.c.b16 %v2575, %v2571
  %v4836 = vpack.c.b16 %v2576, %v2572
  %v4837 = vpack.c.b16 %v2577, %v2573
  %v4838 = vpack.c.b16 %v2578, %v2574
  %v4839 = vpack.c.b16 %v2583, %v2579
  %v4840 = vpack.c.b16 %v2584, %v2580
  %v4841 = vpack.c.b16 %v2585, %v2581
  %v4842 = vpack.c.b16 %v2586, %v2582
  %v4843 = vpack.c.b16 %v2591, %v2587
  %v4844 = vpack.c.b16 %v2592, %v2588
  %v4845 = vpack.c.b16 %v2593, %v2589
  %v4846 = vpack.c.b16 %v2594, %v2590
  %v4847 = vpack.c.b16 %v2599, %v2595
  %v4848 = vpack.c.b16 %v2600, %v2596
  %v4849 = vpack.c.b16 %v2601, %v2597
  %v4850 = vpack.c.b16 %v2602, %v2598
  %v4851 = vpack.c.b16 %v2607, %v2603
  %v4852 = vpack.c.b16 %v2608, %v2604
  %v4853 = vpack.c.b16 %v2609, %v2605
  %v4854 = vpack.c.b16 %v2610, %v2606
  %v4855 = vpack.c.b16 %v2615, %v2611
  %v4856 = vpack.c.b16 %v2616, %v2612
  %v4857 = vpack.c.b16 %v2617, %v2613
  %v4858 = vpack.c.b16 %v2618, %v2614
  %v4859 = vpack.c.b16 %v2623, %v2619
  %v4860 = vpack.c.b16 %v2624, %v2620
  %v4861 = vpack.c.b16 %v2625, %v2621
  %v4862 = vpack.c.b16 %v2626, %v2622
  %v4863 = vpack.c.b16 %v2631, %v2627
  %v4864 = vpack.c.b16 %v2632, %v2628
  %v4865 = vpack.c.b16 %v2633, %v2629
  %v4866 = vpack.c.b16 %v2634, %v2630
  %v4867 = vpack.c.b16 %v2639, %v2635
  %v4868 = vpack.c.b16 %v2640, %v2636
  %v4869 = vpack.c.b16 %v2641, %v2637
  %v4870 = vpack.c.b16 %v2642, %v2638
  %v4871 = vpack.c.b16 %v2647, %v2643
  %v4872 = vpack.c.b16 %v2648, %v2644
  %v4873 = vpack.c.b16 %v2649, %v2645
  %v4874 = vpack.c.b16 %v2650, %v2646
  %v4875 = vpack.c.b16 %v2655, %v2651
  %v4876 = vpack.c.b16 %v2656, %v2652
  %v4877 = vpack.c.b16 %v2657, %v2653
  %v4878 = vpack.c.b16 %v2658, %v2654
  %v4879 = vpack.c.b16 %v2663, %v2659
  %v4880 = vpack.c.b16 %v2664, %v2660
  %v4881 = vpack.c.b16 %v2665, %v2661
  %v4882 = vpack.c.b16 %v2666, %v2662
  %v4883 = vpack.c.b16 %v2671, %v2667
  %v4884 = vpack.c.b16 %v2672, %v2668
  %v4885 = vpack.c.b16 %v2673, %v2669
  %v4886 = vpack.c.b16 %v2674, %v2670
  %v4887 = vpack.c.b16 %v2679, %v2675
  %v4888 = vpack.c.b16 %v2680, %v2676
  %v4889 = vpack.c.b16 %v2681, %v2677
  %v4890 = vpack.c.b16 %v2682, %v2678
  %v4891 = vpack.c.b16 %v2687, %v2683
  %v4892 = vpack.c.b16 %v2688, %v2684
  %v4893 = vpack.c.b16 %v2689, %v2685
  %v4894 = vpack.c.b16 %v2690, %v2686
  %v4895 = vpack.c.b16 %v2695, %v2691
  %v4896 = vpack.c.b16 %v2696, %v2692
  %v4897 = vpack.c.b16 %v2697, %v2693
  %v4898 = vpack.c.b16 %v2698, %v2694
  %v4899 = vpack.c.b16 %v2703, %v2699
  %v4900 = vpack.c.b16 %v2704, %v2700
  %v4901 = vpack.c.b16 %v2705, %v2701
  %v4902 = vpack.c.b16 %v2706, %v2702
  %v4903 = vpack.c.b16 %v2711, %v2707
  %v4904 = vpack.c.b16 %v2712, %v2708
  %v4905 = vpack.c.b16 %v2713, %v2709
  %v4906 = vpack.c.b16 %v2714, %v2710
  %v4907 = vpack.c.b16 %v2719, %v2715
  %v4908 = vpack.c.b16 %v2720, %v2716
  %v4909 = vpack.c.b16 %v2721, %v2717
  %v4910 = vpack.c.b16 %v2722, %v2718
  %v4911 = vpack.c.b16 %v2727, %v2723
  %v4912 = vpack.c.b16 %v2728, %v2724
  %v4913 = vpack.c.b16 %v2729, %v2725
  %v4914 = vpack.c.b16 %v2730, %v2726
  %v4915 = vpack.c.b16 %v2735, %v2731
  %v4916 = vpack.c.b16 %v2736, %v2732
  %v4917 = vpack.c.b16 %v2737, %v2733
  %v4918 = vpack.c.b16 %v2738, %v2734
  %v4919 = vpack.c.b16 %v2743, %v2739
  %v4920 = vpack.c.b16 %v2744, %v2740
  %v4921 = vpack.c.b16 %v2745, %v2741
  %v4922 = vpack.c.b16 %v2746, %v2742
  %v4923 = vpack.c.b16 %v2751, %v2747
  %v4924 = vpack.c.b16 %v2752, %v2748
  %v4925 = vpack.c.b16 %v2753, %v2749
  %v4926 = vpack.c.b16 %v2754, %v2750
  %v4927 = vpack.c.b16 %v2759, %v2755
  %v4928 = vpack.c.b16 %v2760, %v2756
  %v4929 = vpack.c.b16 %v2761, %v2757
  %v4930 = vpack.c.b16 %v2762, %v2758
  %v4931 = vpack.c.b16 %v2767, %v2763
  %v4932 = vpack.c.b16 %v2768, %v2764
  %v4933 = vpack.c.b16 %v2769, %v2765
  %v4934 = vpack.c.b16 %v2770, %v2766
  %v4935 = vpack.c.b16 %v2775, %v2771
  %v4936 = vpack.c.b16 %v2776, %v2772
  %v4937 = vpack.c.b16 %v2777, %v2773
  %v4938 = vpack.c.b16 %v2778, %v2774
  %v4939 = vpack.c.b16 %v2783, %v2779
  %v4940 = vpack.c.b16 %v2784, %v2780
  %v4941 = vpack.c.b16 %v2785, %v2781
  %v4942 = vpack.c.b16 %v2786, %v2782
  %v4943 = vpack.c.b16 %v2791, %v2787
  %v4944 = vpack.c.b16 %v2792, %v2788
  %v4945 = vpack.c.b16 %v2793, %v2789
  %v4946 = vpack.c.b16 %v2794, %v2790
  %v4947 = vpack.c.b16 %v2799, %v2795
  %v4948 = vpack.c.b16 %v2800, %v2796
  %v4949 = vpack.c.b16 %v2801, %v2797
  %v4950 = vpack.c.b16 %v2802, %v2798
  %v4951 = vpack.c.b16 %v2807, %v2803
  %v4952 = vpack.c.b16 %v2808, %v2804
  %v4953 = vpack.c.b16 %v2809, %v2805
  %v4954 = vpack.c.b16 %v2810, %v2806
  %v4955 = vpack.c.b16 %v2815, %v2811
  %v4956 = vpack.c.b16 %v2816, %v2812
  %v4957 = vpack.c.b16 %v2817, %v2813
  %v4958 = vpack.c.b16 %v2818, %v2814
  %v4959 = vpack.c.b16 %v2823, %v2819
  %v4960 = vpack.c.b16 %v2824, %v2820
  %v4961 = vpack.c.b16 %v2825, %v2821
  %v4962 = vpack.c.b16 %v2826, %v2822
  %v4963 = vpack.c.b16 %v2831, %v2827
  %v4964 = vpack.c.b16 %v2832, %v2828
  %v4965 = vpack.c.b16 %v2833, %v2829
  %v4966 = vpack.c.b16 %v2834, %v2830
  %v4967 = vpack.c.b16 %v2839, %v2835
  %v4968 = vpack.c.b16 %v2840, %v2836
  %v4969 = vpack.c.b16 %v2841, %v2837
  %v4970 = vpack.c.b16 %v2842, %v2838
  %v4971 = vpack.c.b16 %v2847, %v2843
  %v4972 = vpack.c.b16 %v2848, %v2844
  %v4973 = vpack.c.b16 %v2849, %v2845
  %v4974 = vpack.c.b16 %v2850, %v2846
  %v4975 = vpack.c.b16 %v2855, %v2851
  %v4976 = vpack.c.b16 %v2856, %v2852
  %v4977 = vpack.c.b16 %v2857, %v2853
  %v4978 = vpack.c.b16 %v2858, %v2854
  %v4979 = vpack.c.b16 %v2863, %v2859
  %v4980 = vpack.c.b16 %v2864, %v2860
  %v4981 = vpack.c.b16 %v2865, %v2861
  %v4982 = vpack.c.b16 %v2866, %v2862
  %v4983 = vpack.c.b16 %v2871, %v2867
  %v4984 = vpack.c.b16 %v2872, %v2868
  %v4985 = vpack.c.b16 %v2873, %v2869
  %v4986 = vpack.c.b16 %v2874, %v2870
  %v4987 = vpack.c.b16 %v2879, %v2875
  %v4988 = vpack.c.b16 %v2880, %v2876
  %v4989 = vpack.c.b16 %v2881, %v2877
  %v4990 = vpack.c.b16 %v2882, %v2878
  %v4991 = vpack.c.b16 %v2887, %v2883
  %v4992 = vpack.c.b16 %v2888, %v2884
  %v4993 = vpack.c.b16 %v2889, %v2885
  %v4994 = vpack.c.b16 %v2890, %v2886
  %v4995 = vpack.c.b16 %v2895, %v2891
  %v4996 = vpack.c.b16 %v2896, %v2892
  %v4997 = vpack.c.b16 %v2897, %v2893
  %v4998 = vpack.c.b16 %v2898, %v2894
  %v4999 = vpack.c.b16 %v2903, %v2899
  %v5000 = vpack.c.b16 %v2904, %v2900
  %v5001 = vpack.c.b16 %v2905, %v2901
  %v5002 = vpack.c.b16 %v2906, %v2902
  %v5003 = vpack.c.b16 %v2911, %v2907
  %v5004 = vpack.c.b16 %v2912, %v2908
  %v5005 = vpack.c.b16 %v2913, %v2909
  %v5006 = vpack.c.b16 %v2914, %v2910
  %v5007 = vpack.c.b16 %v2919, %v2915
  %v5008 = vpack.c.b16 %v2920, %v2916
  %v5009 = vpack.c.b16 %v2921, %v2917
  %v5010 = vpack.c.b16 %v2922, %v2918
  %v5011 = vpack.c.b16 %v2927, %v2923
  %v5012 = vpack.c.b16 %v2928, %v2924
  %v5013 = vpack.c.b16 %v2929, %v2925
  %v5014 = vpack.c.b16 %v2930, %v2926
  %v5015 = vpack.c.b16 %v2935, %v2931
  %v5016 = vpack.c.b16 %v2936, %v2932
  %v5017 = vpack.c.b16 %v2937, %v2933
  %v5018 = vpack.c.b16 %v2938, %v2934
  %v5019 = vpack.c.b16 %v2943, %v2939
  %v5020 = vpack.c.b16 %v2944, %v2940
  %v5021 = vpack.c.b16 %v2945, %v2941
  %v5022 = vpack.c.b16 %v2946, %v2942
  %v5023 = vpack.c.b16 %v2951, %v2947
  %v5024 = vpack.c.b16 %v2952, %v2948
  %v5025 = vpack.c.b16 %v2953, %v2949
  %v5026 = vpack.c.b16 %v2954, %v2950
  %v5027 = vpack.c.b16 %v2959, %v2955
  %v5028 = vpack.c.b16 %v2960, %v2956
  %v5029 = vpack.c.b16 %v2961, %v2957
  %v5030 = vpack.c.b16 %v2962, %v2958
  %v5031 = vpack.c.b16 %v2967, %v2963
  %v5032 = vpack.c.b16 %v2968, %v2964
  %v5033 = vpack.c.b16 %v2969, %v2965
  %v5034 = vpack.c.b16 %v2970, %v2966
  %v5035 = vpack.c.b16 %v2975, %v2971
  %v5036 = vpack.c.b16 %v2976, %v2972
  %v5037 = vpack.c.b16 %v2977, %v2973
  %v5038 = vpack.c.b16 %v2978, %v2974
  %v5039 = vpack.c.b16 %v2983, %v2979
  %v5040 = vpack.c.b16 %v2984, %v2980
  %v5041 = vpack.c.b16 %v2985, %v2981
  %v5042 = vpack.c.b16 %v2986, %v2982
  %v5043 = vpack.c.b16 %v2991, %v2987
  %v5044 = vpack.c.b16 %v2992, %v2988
  %v5045 = vpack.c.b16 %v2993, %v2989
  %v5046 = vpack.c.b16 %v2994, %v2990
  %v5047 = vpack.c.b16 %v2999, %v2995
  %v5048 = vpack.c.b16 %v3000, %v2996
  %v5049 = vpack.c.b16 %v3001, %v2997
  %v5050 = vpack.c.b16 %v3002, %v2998
  %v5051 = vpack.c.b16 %v3007, %v3003
  %v5052 = vpack.c.b16 %v3008, %v3004
  %v5053 = vpack.c.b16 %v3009, %v3005
  %v5054 = vpack.c.b16 %v3010, %v3006
  %v5055 = vpack.c.b16 %v3015, %v3011
  %v5056 = vpack.c.b16 %v3016, %v3012
  %v5057 = vpack.c.b16 %v3017, %v3013
  %v5058 = vpack.c.b16 %v3018, %v3014
  %v5059 = vpack.c.b16 %v3023, %v3019
  %v5060 = vpack.c.b16 %v3024, %v3020
  %v5061 = vpack.c.b16 %v3025, %v3021
  %v5062 = vpack.c.b16 %v3026, %v3022
  %v5063 = vpack.c.b16 %v3031, %v3027
  %v5064 = vpack.c.b16 %v3032, %v3028
  %v5065 = vpack.c.b16 %v3033, %v3029
  %v5066 = vpack.c.b16 %v3034, %v3030
  %v5067 = vpack.c.b16 %v3039, %v3035
  %v5068 = vpack.c.b16 %v3040, %v3036
  %v5069 = vpack.c.b16 %v3041, %v3037
  %v5070 = vpack.c.b16 %v3042, %v3038
  %v5071 = vpack.c.b16 %v3047, %v3043
  %v5072 = vpack.c.b16 %v3048, %v3044
  %v5073 = vpack.c.b16 %v3049, %v3045
  %v5074 = vpack.c.b16 %v3050, %v3046
  %v5075 = vpack.c.b16 %v3055, %v3051
  %v5076 = vpack.c.b16 %v3056, %v3052
  %v5077 = vpack.c.b16 %v3057, %v3053
  %v5078 = vpack.c.b16 %v3058, %v3054
  %v5079 = vpack.c.b16 %v3063, %v3059
  %v5080 = vpack.c.b16 %v3064, %v3060
  %v5081 = vpack.c.b16 %v3065, %v3061
  %v5082 = vpack.c.b16 %v3066, %v3062
  %v5083 = vpack.c.b16 %v3071, %v3067
  %v5084 = vpack.c.b16 %v3072, %v3068
  %v5085 = vpack.c.b16 %v3073, %v3069
  %v5086 = vpack.c.b16 %v3074, %v3070
  %v5087 = vpack.c.b16 %v3079, %v3075
  %v5088 = vpack.c.b16 %v3080, %v3076
  %v5089 = vpack.c.b16 %v3081, %v3077
  %v5090 = vpack.c.b16 %v3082, %v3078
  %v5091 = vpack.c.b16 %v3087, %v3083
  %v5092 = vpack.c.b16 %v3088, %v3084
  %v5093 = vpack.c.b16 %v3089, %v3085
  %v5094 = vpack.c.b16 %v3090, %v3086
  %v5095 = vpack.c.b16 %v3095, %v3091
  %v5096 = vpack.c.b16 %v3096, %v3092
  %v5097 = vpack.c.b16 %v3097, %v3093
  %v5098 = vpack.c.b16 %v3098, %v3094
  %v5099 = vpack.c.b16 %v3103, %v3099
  %v5100 = vpack.c.b16 %v3104, %v3100
  %v5101 = vpack.c.b16 %v3105, %v3101
  %v5102 = vpack.c.b16 %v3106, %v3102
  %v5103 = vpack.c.b16 %v3111, %v3107
  %v5104 = vpack.c.b16 %v3112, %v3108
  %v5105 = vpack.c.b16 %v3113, %v3109
  %v5106 = vpack.c.b16 %v3114, %v3110
  %v5107 = vpack.c.b16 %v3119, %v3115
  %v5108 = vpack.c.b16 %v3120, %v3116
  %v5109 = vpack.c.b16 %v3121, %v3117
  %v5110 = vpack.c.b16 %v3122, %v3118
  %v5111 = vpack.c.b16 %v3127, %v3123
  %v5112 = vpack.c.b16 %v3128, %v3124
  %v5113 = vpack.c.b16 %v3129, %v3125
  %v5114 = vpack.c.b16 %v3130, %v3126
  %v5115 = vpack.c.b16 %v3135, %v3131
  %v5116 = vpack.c.b16 %v3136, %v3132
  %v5117 = vpack.c.b16 %v3137, %v3133
  %v5118 = vpack.c.b16 %v3138, %v3134
  %v5119 = vpack.c.b16 %v3143, %v3139
  %v5120 = vpack.c.b16 %v3144, %v3140
  %v5121 = vpack.c.b16 %v3145, %v3141
  %v5122 = vpack.c.b16 %v3146, %v3142
  %v5123 = vpack.c.b16 %v3151, %v3147
  %v5124 = vpack.c.b16 %v3152, %v3148
  %v5125 = vpack.c.b16 %v3153, %v3149
  %v5126 = vpack.c.b16 %v3154, %v3150
  %v5127 = vpack.c.b16 %v3159, %v3155
  %v5128 = vpack.c.b16 %v3160, %v3156
  %v5129 = vpack.c.b16 %v3161, %v3157
  %v5130 = vpack.c.b16 %v3162, %v3158
  %v5131 = vpack.c.b16 %v3167, %v3163
  %v5132 = vpack.c.b16 %v3168, %v3164
  %v5133 = vpack.c.b16 %v3169, %v3165
  %v5134 = vpack.c.b16 %v3170, %v3166
  %v5135 = vpack.c.b16 %v3175, %v3171
  %v5136 = vpack.c.b16 %v3176, %v3172
  %v5137 = vpack.c.b16 %v3177, %v3173
  %v5138 = vpack.c.b16 %v3178, %v3174
  %v5139 = vpack.c.b16 %v3183, %v3179
  %v5140 = vpack.c.b16 %v3184, %v3180
  %v5141 = vpack.c.b16 %v3185, %v3181
  %v5142 = vpack.c.b16 %v3186, %v3182
  %v5143 = vpack.c.b16 %v3191, %v3187
  %v5144 = vpack.c.b16 %v3192, %v3188
  %v5145 = vpack.c.b16 %v3193, %v3189
  %v5146 = vpack.c.b16 %v3194, %v3190
  %v5147 = vpack.c.b16 %v3199, %v3195
  %v5148 = vpack.c.b16 %v3200, %v3196
  %v5149 = vpack.c.b16 %v3201, %v3197
  %v5150 = vpack.c.b16 %v3202, %v3198
  %v5151 = vpack.c.b16 %v3207, %v3203
  %v5152 = vpack.c.b16 %v3208, %v3204
  %v5153 = vpack.c.b16 %v3209, %v3205
  %v5154 = vpack.c.b16 %v3210, %v3206
  %v5155 = vpack.c.b16 %v3215, %v3211
  %v5156 = vpack.c.b16 %v3216, %v3212
  %v5157 = vpack.c.b16 %v3217, %v3213
  %v5158 = vpack.c.b16 %v3218, %v3214
  %v5159 = vpack.c.b16 %v3223, %v3219
  %v5160 = vpack.c.b16 %v3224, %v3220
  %v5161 = vpack.c.b16 %v3225, %v3221
  %v5162 = vpack.c.b16 %v3226, %v3222
  %v5163 = vpack.c.b16 %v3231, %v3227
  %v5164 = vpack.c.b16 %v3232, %v3228
  %v5165 = vpack.c.b16 %v3233, %v3229
  %v5166 = vpack.c.b16 %v3234, %v3230
  %v5167 = vpack.c.b16 %v3239, %v3235
  %v5168 = vpack.c.b16 %v3240, %v3236
  %v5169 = vpack.c.b16 %v3241, %v3237
  %v5170 = vpack.c.b16 %v3242, %v3238
  %v5171 = vpack.c.b16 %v3247, %v3243
  %v5172 = vpack.c.b16 %v3248, %v3244
  %v5173 = vpack.c.b16 %v3249, %v3245
  %v5174 = vpack.c.b16 %v3250, %v3246
  %v5175 = vpack.c.b16 %v3255, %v3251
  %v5176 = vpack.c.b16 %v3256, %v3252
  %v5177 = vpack.c.b16 %v3257, %v3253
  %v5178 = vpack.c.b16 %v3258, %v3254
  %v5179 = vpack.c.b16 %v3263, %v3259
  %v5180 = vpack.c.b16 %v3264, %v3260
  %v5181 = vpack.c.b16 %v3265, %v3261
  %v5182 = vpack.c.b16 %v3266, %v3262
  %v5183 = vpack.c.b16 %v3271, %v3267
  %v5184 = vpack.c.b16 %v3272, %v3268
  %v5185 = vpack.c.b16 %v3273, %v3269
  %v5186 = vpack.c.b16 %v3274, %v3270
  %v5187 = vpack.c.b16 %v3279, %v3275
  %v5188 = vpack.c.b16 %v3280, %v3276
  %v5189 = vpack.c.b16 %v3281, %v3277
  %v5190 = vpack.c.b16 %v3282, %v3278
  %v5191 = vpack.c.b16 %v3287, %v3283
  %v5192 = vpack.c.b16 %v3288, %v3284
  %v5193 = vpack.c.b16 %v3289, %v3285
  %v5194 = vpack.c.b16 %v3290, %v3286
  %v5195 = vpack.c.b16 %v3295, %v3291
  %v5196 = vpack.c.b16 %v3296, %v3292
  %v5197 = vpack.c.b16 %v3297, %v3293
  %v5198 = vpack.c.b16 %v3298, %v3294
  %v5199 = vpack.c.b16 %v3303, %v3299
  %v5200 = vpack.c.b16 %v3304, %v3300
  %v5201 = vpack.c.b16 %v3305, %v3301
  %v5202 = vpack.c.b16 %v3306, %v3302
  %v5203 = vpack.c.b16 %v3311, %v3307
  %v5204 = vpack.c.b16 %v3312, %v3308
  %v5205 = vpack.c.b16 %v3313, %v3309
  %v5206 = vpack.c.b16 %v3314, %v3310
  %v5207 = vpack.c.b16 %v3319, %v3315
  %v5208 = vpack.c.b16 %v3320, %v3316
  %v5209 = vpack.c.b16 %v3321, %v3317
  %v5210 = vpack.c.b16 %v3322, %v3318
  %v5211 = vpack.c.b16 %v3327, %v3323
  %v5212 = vpack.c.b16 %v3328, %v3324
  %v5213 = vpack.c.b16 %v3329, %v3325
  %v5214 = vpack.c.b16 %v3330, %v3326
  %v5215 = vpack.c.b16 %v3335, %v3331
  %v5216 = vpack.c.b16 %v3336, %v3332
  %v5217 = vpack.c.b16 %v3337, %v3333
  %v5218 = vpack.c.b16 %v3338, %v3334
  %v5219 = vpack.c.b16 %v3343, %v3339
  %v5220 = vpack.c.b16 %v3344, %v3340
  %v5221 = vpack.c.b16 %v3345, %v3341
  %v5222 = vpack.c.b16 %v3346, %v3342
  %v5223 = vpack.c.b16 %v3351, %v3347
  %v5224 = vpack.c.b16 %v3352, %v3348
  %v5225 = vpack.c.b16 %v3353, %v3349
  %v5226 = vpack.c.b16 %v3354, %v3350
  %v5227 = vpack.c.b16 %v3359, %v3355
  %v5228 = vpack.c.b16 %v3360, %v3356
  %v5229 = vpack.c.b16 %v3361, %v3357
  %v5230 = vpack.c.b16 %v3362, %v3358
  %v5231 = vpack.c.b16 %v3367, %v3363
  %v5232 = vpack.c.b16 %v3368, %v3364
  %v5233 = vpack.c.b16 %v3369, %v3365
  %v5234 = vpack.c.b16 %v3370, %v3366
  %v5235 = vpack.c.b16 %v3375, %v3371
  %v5236 = vpack.c.b16 %v3376, %v3372
  %v5237 = vpack.c.b16 %v3377, %v3373
  %v5238 = vpack.c.b16 %v3378, %v3374
  %v5239 = vpack.c.b16 %v3383, %v3379
  %v5240 = vpack.c.b16 %v3384, %v3380
  %v5241 = vpack.c.b16 %v3385, %v3381
  %v5242 = vpack.c.b16 %v3386, %v3382
  %v5243 = vpack.c.b16 %v3391, %v3387
  %v5244 = vpack.c.b16 %v3392, %v3388
  %v5245 = vpack.c.b16 %v3393, %v3389
  %v5246 = vpack.c.b16 %v3394, %v3390
  %v5247 = vpack.c.b16 %v3399, %v3395
  %v5248 = vpack.c.b16 %v3400, %v3396
  %v5249 = vpack.c.b16 %v3401, %v3397
  %v5250 = vpack.c.b16 %v3402, %v3398
  %v5251 = vpack.c.b16 %v3407, %v3403
  %v5252 = vpack.c.b16 %v3408, %v3404
  %v5253 = vpack.c.b16 %v3409, %v3405
  %v5254 = vpack.c.b16 %v3410, %v3406
  %v5255 = vpack.c.b16 %v3415, %v3411
  %v5256 = vpack.c.b16 %v3416, %v3412
  %v5257 = vpack.c.b16 %v3417, %v3413
  %v5258 = vpack.c.b16 %v3418, %v3414
  %v5259 = vpack.c.b16 %v3423, %v3419
  %v5260 = vpack.c.b16 %v3424, %v3420
  %v5261 = vpack.c.b16 %v3425, %v3421
  %v5262 = vpack.c.b16 %v3426, %v3422
  %v5263 = vpack.c.b16 %v3431, %v3427
  %v5264 = vpack.c.b16 %v3432, %v3428
  %v5265 = vpack.c.b16 %v3433, %v3429
  %v5266 = vpack.c.b16 %v3434, %v3430
  %v5267 = vpack.c.b16 %v3439, %v3435
  %v5268 = vpack.c.b16 %v3440, %v3436
  %v5269 = vpack.c.b16 %v3441, %v3437
  %v5270 = vpack.c.b16 %v3442, %v3438
  %v5271 = vpack.c.b16 %v3447, %v3443
  %v5272 = vpack.c.b16 %v3448, %v3444
  %v5273 = vpack.c.b16 %v3449, %v3445
  %v5274 = vpack.c.b16 %v3450, %v3446
  %v5275 = vpack.c.b16 %v3455, %v3451
  %v5276 = vpack.c.b16 %v3456, %v3452
  %v5277 = vpack.c.b16 %v3457, %v3453
  %v5278 = vpack.c.b16 %v3458, %v3454
  %v5279 = vpack.c.b16 %v3463, %v3459
  %v5280 = vpack.c.b16 %v3464, %v3460
  %v5281 = vpack.c.b16 %v3465, %v3461
  %v5282 = vpack.c.b16 %v3466, %v3462
  %v5283 = vpack.c.b16 %v3471, %v3467
  %v5284 = vpack.c.b16 %v3472, %v3468
  %v5285 = vpack.c.b16 %v3473, %v3469
  %v5286 = vpack.c.b16 %v3474, %v3470
  %v5287 = vpack.c.b16 %v3479, %v3475
  %v5288 = vpack.c.b16 %v3480, %v3476
  %v5289 = vpack.c.b16 %v3481, %v3477
  %v5290 = vpack.c.b16 %v3482, %v3478
  %v5291 = vpack.c.b16 %v3487, %v3483
  %v5292 = vpack.c.b16 %v3488, %v3484
  %v5293 = vpack.c.b16 %v3489, %v3485
  %v5294 = vpack.c.b16 %v3490, %v3486
  %v5295 = vpack.c.b16 %v3495, %v3491
  %v5296 = vpack.c.b16 %v3496, %v3492
  %v5297 = vpack.c.b16 %v3497, %v3493
  %v5298 = vpack.c.b16 %v3498, %v3494
  %v5299 = vpack.c.b16 %v3503, %v3499
  %v5300 = vpack.c.b16 %v3504, %v3500
  %v5301 = vpack.c.b16 %v3505, %v3501
  %v5302 = vpack.c.b16 %v3506, %v3502
  %v5303 = vpack.c.b16 %v3511, %v3507
  %v5304 = vpack.c.b16 %v3512, %v3508
  %v5305 = vpack.c.b16 %v3513, %v3509
  %v5306 = vpack.c.b16 %v3514, %v3510
  %v5307 = vpack.c.b16 %v3519, %v3515
  %v5308 = vpack.c.b16 %v3520, %v3516
  %v5309 = vpack.c.b16 %v3521, %v3517
  %v5310 = vpack.c.b16 %v3522, %v3518
  %v5311 = vpack.c.b16 %v3527, %v3523
  %v5312 = vpack.c.b16 %v3528, %v3524
  %v5313 = vpack.c.b16 %v3529, %v3525
  %v5314 = vpack.c.b16 %v3530, %v3526
  %v5315 = vpack.c.b16 %v3535, %v3531
  %v5316 = vpack.c.b16 %v3536, %v3532
  %v5317 = vpack.c.b16 %v3537, %v3533
  %v5318 = vpack.c.b16 %v3538, %v3534
  %v5319 = vpack.c.b16 %v3543, %v3539
  %v5320 = vpack.c.b16 %v3544, %v3540
  %v5321 = vpack.c.b16 %v3545, %v3541
  %v5322 = vpack.c.b16 %v3546, %v3542
  %v5323 = vpack.c.b16 %v3551, %v3547
  %v5324 = vpack.c.b16 %v3552, %v3548
  %v5325 = vpack.c.b16 %v3553, %v3549
  %v5326 = vpack.c.b16 %v3554, %v3550
  %v5327 = vpack.c.b16 %v3559, %v3555
  %v5328 = vpack.c.b16 %v3560, %v3556
  %v5329 = vpack.c.b16 %v3561, %v3557
  %v5330 = vpack.c.b16 %v3562, %v3558
  %v5331 = vpack.c.b16 %v3567, %v3563
  %v5332 = vpack.c.b16 %v3568, %v3564
  %v5333 = vpack.c.b16 %v3569, %v3565
  %v5334 = vpack.c.b16 %v3570, %v3566
  %v5335 = vpack.c.b16 %v3575, %v3571
  %v5336 = vpack.c.b16 %v3576, %v3572
  %v5337 = vpack.c.b16 %v3577, %v3573
  %v5338 = vpack.c.b16 %v3578, %v3574
  %v5339 = vpack.c.b16 %v3583, %v3579
  %v5340 = vpack.c.b16 %v3584, %v3580
  %v5341 = vpack.c.b16 %v3585, %v3581
  %v5342 = vpack.c.b16 %v3586, %v3582
  %v5343 = vpack.c.b16 %v3591, %v3587
  %v5344 = vpack.c.b16 %v3592, %v3588
  %v5345 = vpack.c.b16 %v3593, %v3589
  %v5346 = vpack.c.b16 %v3594, %v3590
  %v5347 = vpack.c.b16 %v3599, %v3595
  %v5348 = vpack.c.b16 %v3600, %v3596
  %v5349 = vpack.c.b16 %v3601, %v3597
  %v5350 = vpack.c.b16 %v3602, %v3598
  %v5351 = vpack.c.b16 %v3607, %v3603
  %v5352 = vpack.c.b16 %v3608, %v3604
  %v5353 = vpack.c.b16 %v3609, %v3605
  %v5354 = vpack.c.b16 %v3610, %v3606
  %v5355 = vpack.c.b16 %v3615, %v3611
  %v5356 = vpack.c.b16 %v3616, %v3612
  %v5357 = vpack.c.b16 %v3617, %v3613
  %v5358 = vpack.c.b16 %v3618, %v3614
  %v5359 = vpack.c.b16 %v3623, %v3619
  %v5360 = vpack.c.b16 %v3624, %v3620
  %v5361 = vpack.c.b16 %v3625, %v3621
  %v5362 = vpack.c.b16 %v3626, %v3622
  %v5363 = vpack.c.b16 %v3631, %v3627
  %v5364 = vpack.c.b16 %v3632, %v3628
  %v5365 = vpack.c.b16 %v3633, %v3629
  %v5366 = vpack.c.b16 %v3634, %v3630
  %v5367 = vpack.c.b16 %v3639, %v3635
  %v5368 = vpack.c.b16 %v3640, %v3636
  %v5369 = vpack.c.b16 %v3641, %v3637
  %v5370 = vpack.c.b16 %v3642, %v3638
  %v5371 = vpack.c.b16 %v3647, %v3643
  %v5372 = vpack.c.b16 %v3648, %v3644
  %v5373 = vpack.c.b16 %v3649, %v3645
  %v5374 = vpack.c.b16 %v3650, %v3646
  %v5375 = vpack.c.b16 %v3655, %v3651
  %v5376 = vpack.c.b16 %v3656, %v3652
  %v5377 = vpack.c.b16 %v3657, %v3653
  %v5378 = vpack.c.b16 %v3658, %v3654
  %v5379 = vpack.c.b16 %v3663, %v3659
  %v5380 = vpack.c.b16 %v3664, %v3660
  %v5381 = vpack.c.b16 %v3665, %v3661
  %v5382 = vpack.c.b16 %v3666, %v3662
  %v5383 = vpack.c.b16 %v3671, %v3667
  %v5384 = vpack.c.b16 %v3672, %v3668
  %v5385 = vpack.c.b16 %v3673, %v3669
  %v5386 = vpack.c.b16 %v3674, %v3670
  %v5387 = vpack.c.b16 %v3679, %v3675
  %v5388 = vpack.c.b16 %v3680, %v3676
  %v5389 = vpack.c.b16 %v3681, %v3677
  %v5390 = vpack.c.b16 %v3682, %v3678
  %v5391 = vpack.c.b16 %v3687, %v3683
  %v5392 = vpack.c.b16 %v3688, %v3684
  %v5393 = vpack.c.b16 %v3689, %v3685
  %v5394 = vpack.c.b16 %v3690, %v3686
  %v5395 = vpack.c.b16 %v3695, %v3691
  %v5396 = vpack.c.b16 %v3696, %v3692
  %v5397 = vpack.c.b16 %v3697, %v3693
  %v5398 = vpack.c.b16 %v3698, %v3694
  %v5399 = vpack.c.b16 %v3703, %v3699
  %v5400 = vpack.c.b16 %v3704, %v3700
  %v5401 = vpack.c.b16 %v3705, %v3701
  %v5402 = vpack.c.b16 %v3706, %v3702
  %v5403 = vpack.c.b16 %v3711, %v3707
  %v5404 = vpack.c.b16 %v3712, %v3708
  %v5405 = vpack.c.b16 %v3713, %v3709
  %v5406 = vpack.c.b16 %v3714, %v3710
  %v5407 = vpack.c.b16 %v3719, %v3715
  %v5408 = vpack.c.b16 %v3720, %v3716
  %v5409 = vpack.c.b16 %v3721, %v3717
  %v5410 = vpack.c.b16 %v3722, %v3718
  %v5411 = vpack.c.b16 %v3727, %v3723
  %v5412 = vpack.c.b16 %v3728, %v3724
  %v5413 = vpack.c.b16 %v3729, %v3725
  %v5414 = vpack.c.b16 %v3730, %v3726
  %v5415 = vpack.c.b16 %v3735, %v3731
  %v5416 = vpack.c.b16 %v3736, %v3732
  %v5417 = vpack.c.b16 %v3737, %v3733
  %v5418 = vpack.c.b16 %v3738, %v3734
  %v5419 = vpack.c.b16 %v3743, %v3739
  %v5420 = vpack.c.b16 %v3744, %v3740
  %v5421 = vpack.c.b16 %v3745, %v3741
  %v5422 = vpack.c.b16 %v3746, %v3742
  %v5423 = vpack.c.b16 %v3751, %v3747
  %v5424 = vpack.c.b16 %v3752, %v3748
  %v5425 = vpack.c.b16 %v3753, %v3749
  %v5426 = vpack.c.b16 %v3754, %v3750
  %v5427 = vpack.c.b16 %v3759, %v3755
  %v5428 = vpack.c.b16 %v3760, %v3756
  %v5429 = vpack.c.b16 %v3761, %v3757
  %v5430 = vpack.c.b16 %v3762, %v3758
  %v5431 = vpack.c.b16 %v3767, %v3763
  %v5432 = vpack.c.b16 %v3768, %v3764
  %v5433 = vpack.c.b16 %v3769, %v3765
  %v5434 = vpack.c.b16 %v3770, %v3766
  %v5435 = vpack.c.b16 %v3775, %v3771
  %v5436 = vpack.c.b16 %v3776, %v3772
  %v5437 = vpack.c.b16 %v3777, %v3773
  %v5438 = vpack.c.b16 %v3778, %v3774
  %v5439 = vpack.c.b16 %v3783, %v3779
  %v5440 = vpack.c.b16 %v3784, %v3780
  %v5441 = vpack.c.b16 %v3785, %v3781
  %v5442 = vpack.c.b16 %v3786, %v3782
  %v5443 = vpack.c.b16 %v3791, %v3787
  %v5444 = vpack.c.b16 %v3792, %v3788
  %v5445 = vpack.c.b16 %v3793, %v3789
  %v5446 = vpack.c.b16 %v3794, %v3790
  %v5447 = vpack.c.b16 %v3799, %v3795
  %v5448 = vpack.c.b16 %v3800, %v3796
  %v5449 = vpack.c.b16 %v3801, %v3797
  %v5450 = vpack.c.b16 %v3802, %v3798
  %v5451 = vpack.c.b16 %v3807, %v3803
  %v5452 = vpack.c.b16 %v3808, %v3804
  %v5453 = vpack.c.b16 %v3809, %v3805
  %v5454 = vpack.c.b16 %v3810, %v3806
  %v5455 = vpack.c.b16 %v3815, %v3811
  %v5456 = vpack.c.b16 %v3816, %v3812
  %v5457 = vpack.c.b16 %v3817, %v3813
  %v5458 = vpack.c.b16 %v3818, %v3814
  %v5459 = vpack.c.b16 %v3823, %v3819
  %v5460 = vpack.c.b16 %v3824, %v3820
  %v5461 = vpack.c.b16 %v3825, %v3821
  %v5462 = vpack.c.b16 %v3826, %v3822
  %v5463 = vpack.c.b16 %v3831, %v3827
  %v5464 = vpack.c.b16 %v3832, %v3828
  %v5465 = vpack.c.b16 %v3833, %v3829
  %v5466 = vpack.c.b16 %v3834, %v3830
  %v5467 = vpack.c.b16 %v3839, %v3835
  %v5468 = vpack.c.b16 %v3840, %v3836
  %v5469 = vpack.c.b16 %v3841, %v3837
  %v5470 = vpack.c.b16 %v3842, %v3838
  %v5471 = vpack.c.b16 %v3847, %v3843
  %v5472 = vpack.c.b16 %v3848, %v3844
  %v5473 = vpack.c.b16 %v3849, %v3845
  %v5474 = vpack.c.b16 %v3850, %v3846
  %v5475 = vpack.c.b16 %v3855, %v3851
  %v5476 = vpack.c.b16 %v3856, %v3852
  %v5477 = vpack.c.b16 %v3857, %v3853
  %v5478 = vpack.c.b16 %v3858, %v3854
  %v5479 = vpack.c.b16 %v3863, %v3859
  %v5480 = vpack.c.b16 %v3864, %v3860
  %v5481 = vpack.c.b16 %v3865, %v3861
  %v5482 = vpack.c.b16 %v3866, %v3862
  %v5483 = vpack.c.b16 %v3871, %v3867
  %v5484 = vpack.c.b16 %v3872, %v3868
  %v5485 = vpack.c.b16 %v3873, %v3869
  %v5486 = vpack.c.b16 %v3874, %v3870
  %v5487 = vpack.c.b16 %v3879, %v3875
  %v5488 = vpack.c.b16 %v3880, %v3876
  %v5489 = vpack.c.b16 %v3881, %v3877
  %v5490 = vpack.c.b16 %v3882, %v3878
  %v5491 = vpack.c.b16 %v3887, %v3883
  %v5492 = vpack.c.b16 %v3888, %v3884
  %v5493 = vpack.c.b16 %v3889, %v3885
  %v5494 = vpack.c.b16 %v3890, %v3886
  %v5495 = vpack.c.b16 %v3895, %v3891
  %v5496 = vpack.c.b16 %v3896, %v3892
  %v5497 = vpack.c.b16 %v3897, %v3893
  %v5498 = vpack.c.b16 %v3898, %v3894
  %v5499 = vpack.c.b16 %v3903, %v3899
  %v5500 = vpack.c.b16 %v3904, %v3900
  %v5501 = vpack.c.b16 %v3905, %v3901
  %v5502 = vpack.c.b16 %v3906, %v3902
  %v5503 = vpack.c.b16 %v3911, %v3907
  %v5504 = vpack.c.b16 %v3912, %v3908
  %v5505 = vpack.c.b16 %v3913, %v3909
  %v5506 = vpack.c.b16 %v3914, %v3910
  %v5507 = vpack.c.b16 %v3919, %v3915
  %v5508 = vpack.c.b16 %v3920, %v3916
  %v5509 = vpack.c.b16 %v3921, %v3917
  %v5510 = vpack.c.b16 %v3922, %v3918
  %v5511 = vpack.c.b16 %v3927, %v3923
  %v5512 = vpack.c.b16 %v3928, %v3924
  %v5513 = vpack.c.b16 %v3929, %v3925
  %v5514 = vpack.c.b16 %v3930, %v3926
  %v5515 = vpack.c.b16 %v3935, %v3931
  %v5516 = vpack.c.b16 %v3936, %v3932
  %v5517 = vpack.c.b16 %v3937, %v3933
  %v5518 = vpack.c.b16 %v3938, %v3934
  %v5519 = vpack.c.b16 %v3943, %v3939
  %v5520 = vpack.c.b16 %v3944, %v3940
  %v5521 = vpack.c.b16 %v3945, %v3941
  %v5522 = vpack.c.b16 %v3946, %v3942
  %v5523 = vpack.c.b16 %v3951, %v3947
  %v5524 = vpack.c.b16 %v3952, %v3948
  %v5525 = vpack.c.b16 %v3953, %v3949
  %v5526 = vpack.c.b16 %v3954, %v3950
  %v5527 = vpack.c.b16 %v3959, %v3955
  %v5528 = vpack.c.b16 %v3960, %v3956
  %v5529 = vpack.c.b16 %v3961, %v3957
  %v5530 = vpack.c.b16 %v3962, %v3958
  %v5531 = vpack.c.b16 %v3967, %v3963
  %v5532 = vpack.c.b16 %v3968, %v3964
  %v5533 = vpack.c.b16 %v3969, %v3965
  %v5534 = vpack.c.b16 %v3970, %v3966
  %v5535 = vpack.c.b16 %v3975, %v3971
  %v5536 = vpack.c.b16 %v3976, %v3972
  %v5537 = vpack.c.b16 %v3977, %v3973
  %v5538 = vpack.c.b16 %v3978, %v3974
  %v5539 = vpack.c.b16 %v3983, %v3979
  %v5540 = vpack.c.b16 %v3984, %v3980
  %v5541 = vpack.c.b16 %v3985, %v3981
  %v5542 = vpack.c.b16 %v3986, %v3982
  %v5543 = vpack.c.b16 %v3991, %v3987
  %v5544 = vpack.c.b16 %v3992, %v3988
  %v5545 = vpack.c.b16 %v3993, %v3989
  %v5546 = vpack.c.b16 %v3994, %v3990
  %v5547 = vpack.c.b16 %v3999, %v3995
  %v5548 = vpack.c.b16 %v4000, %v3996
  %v5549 = vpack.c.b16 %v4001, %v3997
  %v5550 = vpack.c.b16 %v4002, %v3998
  %v5551 = vpack.c.b16 %v4007, %v4003
  %v5552 = vpack.c.b16 %v4008, %v4004
  %v5553 = vpack.c.b16 %v4009, %v4005
  %v5554 = vpack.c.b16 %v4010, %v4006
  %v5555 = vpack.c.b16 %v4015, %v4011
  %v5556 = vpack.c.b16 %v4016, %v4012
  %v5557 = vpack.c.b16 %v4017, %v4013
  %v5558 = vpack.c.b16 %v4018, %v4014
  %v5559 = vpack.c.b16 %v4023, %v4019
  %v5560 = vpack.c.b16 %v4024, %v4020
  %v5561 = vpack.c.b16 %v4025, %v4021
  %v5562 = vpack.c.b16 %v4026, %v4022
  %v5563 = vpack.c.b16 %v4031, %v4027
  %v5564 = vpack.c.b16 %v4032, %v4028
  %v5565 = vpack.c.b16 %v4033, %v4029
  %v5566 = vpack.c.b16 %v4034, %v4030
  %v5567 = vpack.c.b16 %v4039, %v4035
  %v5568 = vpack.c.b16 %v4040, %v4036
  %v5569 = vpack.c.b16 %v4041, %v4037
  %v5570 = vpack.c.b16 %v4042, %v4038
  %v5571 = vpack.c.b16 %v4047, %v4043
  %v5572 = vpack.c.b16 %v4048, %v4044
  %v5573 = vpack.c.b16 %v4049, %v4045
  %v5574 = vpack.c.b16 %v4050, %v4046
  %v5575 = vpack.c.b16 %v4055, %v4051
  %v5576 = vpack.c.b16 %v4056, %v4052
  %v5577 = vpack.c.b16 %v4057, %v4053
  %v5578 = vpack.c.b16 %v4058, %v4054
  %v5579 = vpack.c.b16 %v4063, %v4059
  %v5580 = vpack.c.b16 %v4064, %v4060
  %v5581 = vpack.c.b16 %v4065, %v4061
  %v5582 = vpack.c.b16 %v4066, %v4062
  %v5583 = vpack.c.b16 %v4071, %v4067
  %v5584 = vpack.c.b16 %v4072, %v4068
  %v5585 = vpack.c.b16 %v4073, %v4069
  %v5586 = vpack.c.b16 %v4074, %v4070
  %v5587 = vpack.c.b16 %v4079, %v4075
  %v5588 = vpack.c.b16 %v4080, %v4076
  %v5589 = vpack.c.b16 %v4081, %v4077
  %v5590 = vpack.c.b16 %v4082, %v4078
  %v5591 = vpack.c.b16 %v4087, %v4083
  %v5592 = vpack.c.b16 %v4088, %v4084
  %v5593 = vpack.c.b16 %v4089, %v4085
  %v5594 = vpack.c.b16 %v4090, %v4086
  %v5595 = vpack.c.b16 %v4095, %v4091
  %v5596 = vpack.c.b16 %v4096, %v4092
  %v5597 = vpack.c.b16 %v4097, %v4093
  %v5598 = vpack.c.b16 %v4098, %v4094
  %v5599 = vpack.c.b16 %v4103, %v4099
  %v5600 = vpack.c.b16 %v4104, %v4100
  %v5601 = vpack.c.b16 %v4105, %v4101
  %v5602 = vpack.c.b16 %v4106, %v4102
  %v5603 = vpack.c.b16 %v4111, %v4107
  %v5604 = vpack.c.b16 %v4112, %v4108
  %v5605 = vpack.c.b16 %v4113, %v4109
  %v5606 = vpack.c.b16 %v4114, %v4110
  %v5607 = vpack.c.b16 %v4119, %v4115
  %v5608 = vpack.c.b16 %v4120, %v4116
  %v5609 = vpack.c.b16 %v4121, %v4117
  %v5610 = vpack.c.b16 %v4122, %v4118
  %v5611 = vpack.c.b16 %v4127, %v4123
  %v5612 = vpack.c.b16 %v4128, %v4124
  %v5613 = vpack.c.b16 %v4129, %v4125
  %v5614 = vpack.c.b16 %v4130, %v4126
  %v5615 = vpack.c.b16 %v4135, %v4131
  %v5616 = vpack.c.b16 %v4136, %v4132
  %v5617 = vpack.c.b16 %v4137, %v4133
  %v5618 = vpack.c.b16 %v4138, %v4134
  %v5619 = vpack.c.b16 %v4143, %v4139
  %v5620 = vpack.c.b16 %v4144, %v4140
  %v5621 = vpack.c.b16 %v4145, %v4141
  %v5622 = vpack.c.b16 %v4146, %v4142
  %v5623 = vpack.c.b16 %v4151, %v4147
  %v5624 = vpack.c.b16 %v4152, %v4148
  %v5625 = vpack.c.b16 %v4153, %v4149
  %v5626 = vpack.c.b16 %v4154, %v4150
  %v5627 = vpack.c.b16 %v4159, %v4155
  %v5628 = vpack.c.b16 %v4160, %v4156
  %v5629 = vpack.c.b16 %v4161, %v4157
  %v5630 = vpack.c.b16 %v4162, %v4158
  %v5631 = vpack.c.b16 %v4167, %v4163
  %v5632 = vpack.c.b16 %v4168, %v4164
  %v5633 = vpack.c.b16 %v4169, %v4165
  %v5634 = vpack.c.b16 %v4170, %v4166
  %v5635 = vpack.c.b16 %v4175, %v4171
  %v5636 = vpack.c.b16 %v4176, %v4172
  %v5637 = vpack.c.b16 %v4177, %v4173
  %v5638 = vpack.c.b16 %v4178, %v4174
  %v5639 = vpack.c.b16 %v4183, %v4179
  %v5640 = vpack.c.b16 %v4184, %v4180
  %v5641 = vpack.c.b16 %v4185, %v4181
  %v5642 = vpack.c.b16 %v4186, %v4182
  %v5643 = vpack.c.b16 %v4191, %v4187
  %v5644 = vpack.c.b16 %v4192, %v4188
  %v5645 = vpack.c.b16 %v4193, %v4189
  %v5646 = vpack.c.b16 %v4194, %v4190
  %v5647 = vpack.c.b16 %v4199, %v4195
  %v5648 = vpack.c.b16 %v4200, %v4196
  %v5649 = vpack.c.b16 %v4201, %v4197
  %v5650 = vpack.c.b16 %v4202, %v4198
  %v5651 = vpack.c.b16 %v4207, %v4203
  %v5652 = vpack.c.b16 %v4208, %v4204
  %v5653 = vpack.c.b16 %v4209, %v4205
  %v5654 = vpack.c.b16 %v4210, %v4206
  %v5655 = vpack.c.b16 %v4215, %v4211
  %v5656 = vpack.c.b16 %v4216, %v4212
  %v5657 = vpack.c.b16 %v4217, %v4213
  %v5658 = vpack.c.b16 %v4218, %v4214
  %v5659 = vpack.c.b16 %v4223, %v4219
  %v5660 = vpack.c.b16 %v4224, %v4220
  %v5661 = vpack.c.b16 %v4225, %v4221
  %v5662 = vpack.c.b16 %v4226, %v4222
  %v5663 = vpack.c.b16 %v4231, %v4227
  %v5664 = vpack.c.b16 %v4232, %v4228
  %v5665 = vpack.c.b16 %v4233, %v4229
  %v5666 = vpack.c.b16 %v4234, %v4230
  %v5667 = vpack.c.b16 %v4239, %v4235
  %v5668 = vpack.c.b16 %v4240, %v4236
  %v5669 = vpack.c.b16 %v4241, %v4237
  %v5670 = vpack.c.b16 %v4242, %v4238
  %v5671 = vpack.c.b16 %v4247, %v4243
  %v5672 = vpack.c.b16 %v4248, %v4244
  %v5673 = vpack.c.b16 %v4249, %v4245
  %v5674 = vpack.c.b16 %v4250, %v4246
  %v5675 = vpack.c.b16 %v4255, %v4251
  %v5676 = vpack.c.b16 %v4256, %v4252
  %v5677 = vpack.c.b16 %v4257, %v4253
  %v5678 = vpack.c.b16 %v4258, %v4254
  %v5679 = vpack.c.b16 %v4263, %v4259
  %v5680 = vpack.c.b16 %v4264, %v4260
  %v5681 = vpack.c.b16 %v4265, %v4261
  %v5682 = vpack.c.b16 %v4266, %v4262
  %v5683 = vpack.c.b16 %v4271, %v4267
  %v5684 = vpack.c.b16 %v4272, %v4268
  %v5685 = vpack.c.b16 %v4273, %v4269
  %v5686 = vpack.c.b16 %v4274, %v4270
  %v5687 = vpack.c.b16 %v4279, %v4275
  %v5688 = vpack.c.b16 %v4280, %v4276
  %v5689 = vpack.c.b16 %v4281, %v4277
  %v5690 = vpack.c.b16 %v4282, %v4278
  %v5691 = vpack.c.b16 %v4287, %v4283
  %v5692 = vpack.c.b16 %v4288, %v4284
  %v5693 = vpack.c.b16 %v4289, %v4285
  %v5694 = vpack.c.b16 %v4290, %v4286
  %v5695 = vpack.c.b16 %v4295, %v4291
  %v5696 = vpack.c.b16 %v4296, %v4292
  %v5697 = vpack.c.b16 %v4297, %v4293
  %v5698 = vpack.c.b16 %v4298, %v4294
  %v5699 = vpack.c.b16 %v4303, %v4299
  %v5700 = vpack.c.b16 %v4304, %v4300
  %v5701 = vpack.c.b16 %v4305, %v4301
  %v5702 = vpack.c.b16 %v4306, %v4302
  %v5703 = vpack.c.b16 %v4311, %v4307
  %v5704 = vpack.c.b16 %v4312, %v4308
  %v5705 = vpack.c.b16 %v4313, %v4309
  %v5706 = vpack.c.b16 %v4314, %v4310
  %v5707 = vpack.c.b16 %v4319, %v4315
  %v5708 = vpack.c.b16 %v4320, %v4316
  %v5709 = vpack.c.b16 %v4321, %v4317
  %v5710 = vpack.c.b16 %v4322, %v4318
  %v5711 = vpack.c.b16 %v4327, %v4323
  %v5712 = vpack.c.b16 %v4328, %v4324
  %v5713 = vpack.c.b16 %v4329, %v4325
  %v5714 = vpack.c.b16 %v4330, %v4326
  %v5715 = vpack.c.b16 %v4335, %v4331
  %v5716 = vpack.c.b16 %v4336, %v4332
  %v5717 = vpack.c.b16 %v4337, %v4333
  %v5718 = vpack.c.b16 %v4338, %v4334
  %v5719 = vpack.c.b16 %v4343, %v4339
  %v5720 = vpack.c.b16 %v4344, %v4340
  %v5721 = vpack.c.b16 %v4345, %v4341
  %v5722 = vpack.c.b16 %v4346, %v4342
  %v5723 = vpack.c.b16 %v4351, %v4347
  %v5724 = vpack.c.b16 %v4352, %v4348
  %v5725 = vpack.c.b16 %v4353, %v4349
  %v5726 = vpack.c.b16 %v4354, %v4350
  %v5727 = vpack.c.b16 %v4359, %v4355
  %v5728 = vpack.c.b16 %v4360, %v4356
  %v5729 = vpack.c.b16 %v4361, %v4357
  %v5730 = vpack.c.b16 %v4362, %v4358
  %v5731 = vpack.c.b16 %v4367, %v4363
  %v5732 = vpack.c.b16 %v4368, %v4364
  %v5733 = vpack.c.b16 %v4369, %v4365
  %v5734 = vpack.c.b16 %v4370, %v4366
  %v5735 = vpack.c.b16 %v4375, %v4371
  %v5736 = vpack.c.b16 %v4376, %v4372
  %v5737 = vpack.c.b16 %v4377, %v4373
  %v5738 = vpack.c.b16 %v4378, %v4374
  %v5739 = vpack.c.b16 %v4383, %v4379
  %v5740 = vpack.c.b16 %v4384, %v4380
  %v5741 = vpack.c.b16 %v4385, %v4381
  %v5742 = vpack.c.b16 %v4386, %v4382
  %v5743 = vpack.c.b16 %v4391, %v4387
  %v5744 = vpack.c.b16 %v4392, %v4388
  %v5745 = vpack.c.b16 %v4393, %v4389
  %v5746 = vpack.c.b16 %v4394, %v4390
  %v5747 = vpack.c.b16 %v4399, %v4395
  %v5748 = vpack.c.b16 %v4400, %v4396
  %v5749 = vpack.c.b16 %v4401, %v4397
  %v5750 = vpack.c.b16 %v4402, %v4398
  %v5751 = vpack.c.b16 %v4407, %v4403
  %v5752 = vpack.c.b16 %v4408, %v4404
  %v5753 = vpack.c.b16 %v4409, %v4405
  %v5754 = vpack.c.b16 %v4410, %v4406
  %v5755 = vpack.c.b16 %v4415, %v4411
  %v5756 = vpack.c.b16 %v4416, %v4412
  %v5757 = vpack.c.b16 %v4417, %v4413
  %v5758 = vpack.c.b16 %v4418, %v4414
  %v5759 = vpack.c.b16 %v4423, %v4419
  %v5760 = vpack.c.b16 %v4424, %v4420
  %v5761 = vpack.c.b16 %v4425, %v4421
  %v5762 = vpack.c.b16 %v4426, %v4422
  %v5763 = vpack.c.b16 %v4431, %v4427
  %v5764 = vpack.c.b16 %v4432, %v4428
  %v5765 = vpack.c.b16 %v4433, %v4429
  %v5766 = vpack.c.b16 %v4434, %v4430
  %v5767 = vpack.c.b16 %v4439, %v4435
  %v5768 = vpack.c.b16 %v4440, %v4436
  %v5769 = vpack.c.b16 %v4441, %v4437
  %v5770 = vpack.c.b16 %v4442, %v4438
  %v5771 = vpack.c.b16 %v4447, %v4443
  %v5772 = vpack.c.b16 %v4448, %v4444
  %v5773 = vpack.c.b16 %v4449, %v4445
  %v5774 = vpack.c.b16 %v4450, %v4446
  %v5775 = vpack.c.b16 %v4455, %v4451
  %v5776 = vpack.c.b16 %v4456, %v4452
  %v5777 = vpack.c.b16 %v4457, %v4453
  %v5778 = vpack.c.b16 %v4458, %v4454
  %v5779 = vpack.c.b16 %v4463, %v4459
  %v5780 = vpack.c.b16 %v4464, %v4460
  %v5781 = vpack.c.b16 %v4465, %v4461
  %v5782 = vpack.c.b16 %v4466, %v4462
  %v5783 = vpack.c.b16 %v4471, %v4467
  %v5784 = vpack.c.b16 %v4472, %v4468
  %v5785 = vpack.c.b16 %v4473, %v4469
  %v5786 = vpack.c.b16 %v4474, %v4470
  %v5787 = vpack.c.b16 %v4479, %v4475
  %v5788 = vpack.c.b16 %v4480, %v4476
  %v5789 = vpack.c.b16 %v4481, %v4477
  %v5790 = vpack.c.b16 %v4482, %v4478
  %v5791 = vpack.c.b16 %v4487, %v4483
  %v5792 = vpack.c.b16 %v4488, %v4484
  %v5793 = vpack.c.b16 %v4489, %v4485
  %v5794 = vpack.c.b16 %v4490, %v4486
  %v5795 = vpack.c.b16 %v4495, %v4491
  %v5796 = vpack.c.b16 %v4496, %v4492
  %v5797 = vpack.c.b16 %v4497, %v4493
  %v5798 = vpack.c.b16 %v4498, %v4494
  %v5799 = vpack.c.b16 %v4503, %v4499
  %v5800 = vpack.c.b16 %v4504, %v4500
  %v5801 = vpack.c.b16 %v4505, %v4501
  %v5802 = vpack.c.b16 %v4506, %v4502
  %v5803 = vpack.c.b16 %v4511, %v4507
  %v5804 = vpack.c.b16 %v4512, %v4508
  %v5805 = vpack.c.b16 %v4513, %v4509
  %v5806 = vpack.c.b16 %v4514, %v4510
  %v5807 = vpack.c.b16 %v4519, %v4515
  %v5808 = vpack.c.b16 %v4520, %v4516
  %v5809 = vpack.c.b16 %v4521, %v4517
  %v5810 = vpack.c.b16 %v4522, %v4518
  %v5811 = vpack.c.b16 %v4527, %v4523
  %v5812 = vpack.c.b16 %v4528, %v4524
  %v5813 = vpack.c.b16 %v4529, %v4525
  %v5814 = vpack.c.b16 %v4530, %v4526
  %v5815 = vpack.c.b16 %v4535, %v4531
  %v5816 = vpack.c.b16 %v4536, %v4532
  %v5817 = vpack.c.b16 %v4537, %v4533
  %v5818 = vpack.c.b16 %v4538, %v4534
  %v5819 = vpack.c.b16 %v4543, %v4539
  %v5820 = vpack.c.b16 %v4544, %v4540
  %v5821 = vpack.c.b16 %v4545, %v4541
  %v5822 = vpack.c.b16 %v4546, %v4542
  %v5823 = vpack.c.b16 %v4551, %v4547
  %v5824 = vpack.c.b16 %v4552, %v4548
  %v5825 = vpack.c.b16 %v4553, %v4549
  %v5826 = vpack.c.b16 %v4554, %v4550
  %v5827 = vpack.c.b16 %v4559, %v4555
  %v5828 = vpack.c.b16 %v4560, %v4556
  %v5829 = vpack.c.b16 %v4561, %v4557
  %v5830 = vpack.c.b16 %v4562, %v4558
  %v5831 = vpack.c.b16 %v4567, %v4563
  %v5832 = vpack.c.b16 %v4568, %v4564
  %v5833 = vpack.c.b16 %v4569, %v4565
  %v5834 = vpack.c.b16 %v4570, %v4566
  %v5835 = vpack.c.b16 %v4575, %v4571
  %v5836 = vpack.c.b16 %v4576, %v4572
  %v5837 = vpack.c.b16 %v4577, %v4573
  %v5838 = vpack.c.b16 %v4578, %v4574
  %v5839 = vpack.c.b16 %v4583, %v4579
  %v5840 = vpack.c.b16 %v4584, %v4580
  %v5841 = vpack.c.b16 %v4585, %v4581
  %v5842 = vpack.c.b16 %v4586, %v4582
  %v5843 = vpack.c.b16 %v4591, %v4587
  %v5844 = vpack.c.b16 %v4592, %v4588
  %v5845 = vpack.c.b16 %v4593, %v4589
  %v5846 = vpack.c.b16 %v4594, %v4590
  %v5847 = vpack.c.b16 %v4599, %v4595
  %v5848 = vpack.c.b16 %v4600, %v4596
  %v5849 = vpack.c.b16 %v4601, %v4597
  %v5850 = vpack.c.b16 %v4602, %v4598
  %v5851 = vpack.c.b16 %v4607, %v4603
  %v5852 = vpack.c.b16 %v4608, %v4604
  %v5853 = vpack.c.b16 %v4609, %v4605
  %v5854 = vpack.c.b16 %v4610, %v4606
  %v5855 = vpack.c.b16 %v4615, %v4611
  %v5856 = vpack.c.b16 %v4616, %v4612
  %v5857 = vpack.c.b16 %v4617, %v4613
  %v5858 = vpack.c.b16 %v4618, %v4614
  %v5859 = vpack.c.b16 %v4623, %v4619
  %v5860 = vpack.c.b16 %v4624, %v4620
  %v5861 = vpack.c.b16 %v4625, %v4621
  %v5862 = vpack.c.b16 %v4626, %v4622
  %v5863 = vpack.c.b16 %v4631, %v4627
  %v5864 = vpack.c.b16 %v4632, %v4628
  %v5865 = vpack.c.b16 %v4633, %v4629
  %v5866 = vpack.c.b16 %v4634, %v4630
  %v5867 = vpack.c.b16 %v4639, %v4635
  %v5868 = vpack.c.b16 %v4640, %v4636
  %v5869 = vpack.c.b16 %v4641, %v4637
  %v5870 = vpack.c.b16 %v4642, %v4638
  %v5871 = vpack.c.b16 %v4647, %v4643
  %v5872 = vpack.c.b16 %v4648, %v4644
  %v5873 = vpack.c.b16 %v4649, %v4645
  %v5874 = vpack.c.b16 %v4650, %v4646
  %v5875 = vpack.c.b16 %v4655, %v4651
  %v5876 = vpack.c.b16 %v4656, %v4652
  %v5877 = vpack.c.b16 %v4657, %v4653
  %v5878 = vpack.c.b16 %v4658, %v4654
  %v5879 = vpack.c.b16 %v4663, %v4659
  %v5880 = vpack.c.b16 %v4664, %v4660
  %v5881 = vpack.c.b16 %v4665, %v4661
  %v5882 = vpack.c.b16 %v4666, %v4662
  %v5883 = vpack.c.b16 %v4671, %v4667
  %v5884 = vpack.c.b16 %v4672, %v4668
  %v5885 = vpack.c.b16 %v4673, %v4669
  %v5886 = vpack.c.b16 %v4674, %v4670
  %v5887 = vpack.c.b16 %v4679, %v4675
  %v5888 = vpack.c.b16 %v4680, %v4676
  %v5889 = vpack.c.b16 %v4681, %v4677
  %v5890 = vpack.c.b16 %v4682, %v4678
  %v5891 = vpack.c.b16 %v4687, %v4683
  %v5892 = vpack.c.b16 %v4688, %v4684
  %v5893 = vpack.c.b16 %v4689, %v4685
  %v5894 = vpack.c.b16 %v4690, %v4686
  %v5895 = vpack.c.b16 %v4695, %v4691
  %v5896 = vpack.c.b16 %v4696, %v4692
  %v5897 = vpack.c.b16 %v4697, %v4693
  %v5898 = vpack.c.b16 %v4698, %v4694
  %v5899 = vpack.c.b16 %v4703, %v4699
  %v5900 = vpack.c.b16 %v4704, %v4700
  %v5901 = vpack.c.b16 %v4705, %v4701
  %v5902 = vpack.c.b16 %v4706, %v4702
  %v5903 = vpack.c.b16 %v4711, %v4707
  %v5904 = vpack.c.b16 %v4712, %v4708
  %v5905 = vpack.c.b16 %v4713, %v4709
  %v5906 = vpack.c.b16 %v4714, %v4710
  %v5907 = vpack.c.b16 %v4719, %v4715
  %v5908 = vpack.c.b16 %v4720, %v4716
  %v5909 = vpack.c.b16 %v4721, %v4717
  %v5910 = vpack.c.b16 %v4722, %v4718
  %v5911 = vpack.c.b16 %v4727, %v4723
  %v5912 = vpack.c.b16 %v4728, %v4724
  %v5913 = vpack.c.b16 %v4729, %v4725
  %v5914 = vpack.c.b16 %v4730, %v4726
  %v5915 = vpack.c.b16 %v4735, %v4731
  %v5916 = vpack.c.b16 %v4736, %v4732
  %v5917 = vpack.c.b16 %v4737, %v4733
  %v5918 = vpack.c.b16 %v4738, %v4734
  %v5919 = vpack.c.b16 %v4743, %v4739
  %v5920 = vpack.c.b16 %v4744, %v4740
  %v5921 = vpack.c.b16 %v4745, %v4741
  %v5922 = vpack.c.b16 %v4746, %v4742
  %v5923 = vpack.c.b16 %v4751, %v4747
  %v5924 = vpack.c.b16 %v4752, %v4748
  %v5925 = vpack.c.b16 %v4753, %v4749
  %v5926 = vpack.c.b16 %v4754, %v4750
  %v5927 = vpack.c.b16 %v4759, %v4755
  %v5928 = vpack.c.b16 %v4760, %v4756
  %v5929 = vpack.c.b16 %v4761, %v4757
  %v5930 = vpack.c.b16 %v4762, %v4758
  %v5931 = vpack.c.b16 %v4767, %v4763
  %v5932 = vpack.c.b16 %v4768, %v4764
  %v5933 = vpack.c.b16 %v4769, %v4765
  %v5934 = vpack.c.b16 %v4770, %v4766
  %v5935 = vpack.c.b16 %v4775, %v4771
  %v5936 = vpack.c.b16 %v4776, %v4772
  %v5937 = vpack.c.b16 %v4777, %v4773
  %v5938 = vpack.c.b16 %v4778, %v4774
  %v5939 = vpack.c.b16 %v4783, %v4779
  %v5940 = vpack.c.b16 %v4784, %v4780
  %v5941 = vpack.c.b16 %v4785, %v4781
  %v5942 = vpack.c.b16 %v4786, %v4782
  %v5943 = vpack.c.b16 %v4791, %v4787
  %v5944 = vpack.c.b16 %v4792, %v4788
  %v5945 = vpack.c.b16 %v4793, %v4789
  %v5946 = vpack.c.b16 %v4794, %v4790
  %7099 = vmatprep.subr.bf16.mxu0 %v4824
  %7100 = vmatpush1.bf16.msra.mxu0 %v4823
  %7101 = vmatprep.subr.bf16.mxu0 %v4820
  %7102 = vmatpush1.bf16.msra.mxu0 %v4819
  %7103 = vmatprep.subr.bf16.mxu0 %v4816
  %7104 = vmatpush1.bf16.msra.mxu0 %v4815
  %7105 = vmatprep.subr.bf16.mxu0 %v4812
  %7106 = vmatpush1.bf16.msra.mxu0 %v4811
  %7107 = vmatprep.subr.bf16.mxu0 %v4808
  %7108 = vmatpush1.bf16.msra.mxu0 %v4807
  %7109 = vmatprep.subr.bf16.mxu0 %v4804
  %7110 = vmatpush1.bf16.msra.mxu0 %v4803
  %7111 = vmatprep.subr.bf16.mxu0 %v4800
  %7112 = vmatpush1.bf16.msra.mxu0 %v4799
  %7113 = vmatprep.subr.bf16.mxu0 %v4796
  %7114 = vmatpush1.bf16.msra.mxu0 %v4795
  %7115 = vmatprep.subr.bf16.mxu0 %v4856
  %7116 = vmatpush2.bf16.msra.mxu0 %v4855
  %7117 = vmatprep.subr.bf16.mxu0 %v4852
  %7118 = vmatpush2.bf16.msra.mxu0 %v4851
  %7119 = vmatprep.subr.bf16.mxu0 %v4848
  %7120 = vmatpush2.bf16.msra.mxu0 %v4847
  %7121 = vmatprep.subr.bf16.mxu0 %v4844
  %7122 = vmatpush2.bf16.msra.mxu0 %v4843
  %7123 = vmatprep.subr.bf16.mxu0 %v4840
  %7124 = vmatpush2.bf16.msra.mxu0 %v4839
  %7125 = vmatprep.subr.bf16.mxu0 %v4836
  %7126 = vmatpush2.bf16.msra.mxu0 %v4835
  %7127 = vmatprep.subr.bf16.mxu0 %v4832
  %7128 = vmatpush2.bf16.msra.mxu0 %v4831
  %7129 = vmatprep.subr.bf16.mxu0 %v4828
  %7130 = vmatpush2.bf16.msra.mxu0 %v4827
  %7131 = vmatprep.mubr.bf16.mxu0 %v1268
  %7132 = vmatmul.mubr.bf16.gmra.mxu0 %v1267
  %v7133 = vpop.f32.mrf.mxu0
  %v7134 = vadd.f32 %v1196, %v7133
  %v7135 = vpop.f32.mrf.mxu0
  %v7136 = vadd.f32 %v1200, %v7135
  %v7137 = vpop.f32.mrf.mxu0
  %v7138 = vpop.f32.mrf.mxu0
  %7139 = vdwg.mxu0
  %7140 = vmatprep.subr.bf16.mxu0 %v4888
  %7141 = vmatpush1.bf16.msra.mxu0 %v4887
  %7142 = vmatprep.subr.bf16.mxu0 %v4884
  %7143 = vmatpush1.bf16.msra.mxu0 %v4883
  %7144 = vmatprep.subr.bf16.mxu0 %v4880
  %7145 = vmatpush1.bf16.msra.mxu0 %v4879
  %7146 = vmatprep.subr.bf16.mxu0 %v4876
  %7147 = vmatpush1.bf16.msra.mxu0 %v4875
  %7148 = vmatprep.subr.bf16.mxu0 %v4872
  %7149 = vmatpush1.bf16.msra.mxu0 %v4871
  %7150 = vmatprep.subr.bf16.mxu0 %v4868
  %7151 = vmatpush1.bf16.msra.mxu0 %v4867
  %7152 = vmatprep.subr.bf16.mxu0 %v4864
  %7153 = vmatpush1.bf16.msra.mxu0 %v4863
  %7154 = vmatprep.subr.bf16.mxu0 %v4860
  %7155 = vmatpush1.bf16.msra.mxu0 %v4859
  %7156 = vmatprep.subr.bf16.mxu0 %v4920
  %7157 = vmatpush2.bf16.msra.mxu0 %v4919
  %7158 = vmatprep.subr.bf16.mxu0 %v4916
  %7159 = vmatpush2.bf16.msra.mxu0 %v4915
  %7160 = vmatprep.subr.bf16.mxu0 %v4912
  %7161 = vmatpush2.bf16.msra.mxu0 %v4911
  %7162 = vmatprep.subr.bf16.mxu0 %v4908
  %7163 = vmatpush2.bf16.msra.mxu0 %v4907
  %7164 = vmatprep.subr.bf16.mxu0 %v4904
  %7165 = vmatpush2.bf16.msra.mxu0 %v4903
  %7166 = vmatprep.subr.bf16.mxu0 %v4900
  %7167 = vmatpush2.bf16.msra.mxu0 %v4899
  %7168 = vmatprep.subr.bf16.mxu0 %v4896
  %7169 = vmatpush2.bf16.msra.mxu0 %v4895
  %7170 = vmatprep.subr.bf16.mxu0 %v4892
  %7171 = vmatpush2.bf16.msra.mxu0 %v4891
  %7172 = vmatprep.mubr.bf16.mxu0 %v1270
  %7173 = vmatmul.mubr.bf16.gmra.mxu0 %v1269
  %v7174 = vpop.f32.mrf.mxu0
  %v7175 = vadd.f32 %v7134, %v7174
  %v7176 = vpop.f32.mrf.mxu0
  %v7177 = vadd.f32 %v7136, %v7176
  %v7178 = vpop.f32.mrf.mxu0
  %v7179 = vpop.f32.mrf.mxu0
  %7180 = vdwg.mxu0
  %7181 = vmatprep.subr.bf16.mxu0 %v4952
  %7182 = vmatpush1.bf16.msra.mxu0 %v4951
  %7183 = vmatprep.subr.bf16.mxu0 %v4948
  %7184 = vmatpush1.bf16.msra.mxu0 %v4947
  %7185 = vmatprep.subr.bf16.mxu0 %v4944
  %7186 = vmatpush1.bf16.msra.mxu0 %v4943
  %7187 = vmatprep.subr.bf16.mxu0 %v4940
  %7188 = vmatpush1.bf16.msra.mxu0 %v4939
  %7189 = vmatprep.subr.bf16.mxu0 %v4936
  %7190 = vmatpush1.bf16.msra.mxu0 %v4935
  %7191 = vmatprep.subr.bf16.mxu0 %v4932
  %7192 = vmatpush1.bf16.msra.mxu0 %v4931
  %7193 = vmatprep.subr.bf16.mxu0 %v4928
  %7194 = vmatpush1.bf16.msra.mxu0 %v4927
  %7195 = vmatprep.subr.bf16.mxu0 %v4924
  %7196 = vmatpush1.bf16.msra.mxu0 %v4923
  %7197 = vmatprep.subr.bf16.mxu0 %v4984
  %7198 = vmatpush2.bf16.msra.mxu0 %v4983
  %7199 = vmatprep.subr.bf16.mxu0 %v4980
  %7200 = vmatpush2.bf16.msra.mxu0 %v4979
  %7201 = vmatprep.subr.bf16.mxu0 %v4976
  %7202 = vmatpush2.bf16.msra.mxu0 %v4975
  %7203 = vmatprep.subr.bf16.mxu0 %v4972
  %7204 = vmatpush2.bf16.msra.mxu0 %v4971
  %7205 = vmatprep.subr.bf16.mxu0 %v4968
  %7206 = vmatpush2.bf16.msra.mxu0 %v4967
  %7207 = vmatprep.subr.bf16.mxu0 %v4964
  %7208 = vmatpush2.bf16.msra.mxu0 %v4963
  %7209 = vmatprep.subr.bf16.mxu0 %v4960
  %7210 = vmatpush2.bf16.msra.mxu0 %v4959
  %7211 = vmatprep.subr.bf16.mxu0 %v4956
  %7212 = vmatpush2.bf16.msra.mxu0 %v4955
  %7213 = vmatprep.mubr.bf16.mxu0 %v1272
  %7214 = vmatmul.mubr.bf16.gmra.mxu0 %v1271
  %v7215 = vpop.f32.mrf.mxu0
  %v7216 = vadd.f32 %v7175, %v7215
  %v7217 = vpop.f32.mrf.mxu0
  %v7218 = vadd.f32 %v7177, %v7217
  %v7219 = vpop.f32.mrf.mxu0
  %v7220 = vpop.f32.mrf.mxu0
  %7221 = vdwg.mxu0
  %7222 = vmatprep.subr.bf16.mxu0 %v5016
  %7223 = vmatpush1.bf16.msra.mxu0 %v5015
  %7224 = vmatprep.subr.bf16.mxu0 %v5012
  %7225 = vmatpush1.bf16.msra.mxu0 %v5011
  %7226 = vmatprep.subr.bf16.mxu0 %v5008
  %7227 = vmatpush1.bf16.msra.mxu0 %v5007
  %7228 = vmatprep.subr.bf16.mxu0 %v5004
  %7229 = vmatpush1.bf16.msra.mxu0 %v5003
  %7230 = vmatprep.subr.bf16.mxu0 %v5000
  %7231 = vmatpush1.bf16.msra.mxu0 %v4999
  %7232 = vmatprep.subr.bf16.mxu0 %v4996
  %7233 = vmatpush1.bf16.msra.mxu0 %v4995
  %7234 = vmatprep.subr.bf16.mxu0 %v4992
  %7235 = vmatpush1.bf16.msra.mxu0 %v4991
  %7236 = vmatprep.subr.bf16.mxu0 %v4988
  %7237 = vmatpush1.bf16.msra.mxu0 %v4987
  %7238 = vmatprep.subr.bf16.mxu0 %v5048
  %7239 = vmatpush2.bf16.msra.mxu0 %v5047
  %7240 = vmatprep.subr.bf16.mxu0 %v5044
  %7241 = vmatpush2.bf16.msra.mxu0 %v5043
  %7242 = vmatprep.subr.bf16.mxu0 %v5040
  %7243 = vmatpush2.bf16.msra.mxu0 %v5039
  %7244 = vmatprep.subr.bf16.mxu0 %v5036
  %7245 = vmatpush2.bf16.msra.mxu0 %v5035
  %7246 = vmatprep.subr.bf16.mxu0 %v5032
  %7247 = vmatpush2.bf16.msra.mxu0 %v5031
  %7248 = vmatprep.subr.bf16.mxu0 %v5028
  %7249 = vmatpush2.bf16.msra.mxu0 %v5027
  %7250 = vmatprep.subr.bf16.mxu0 %v5024
  %7251 = vmatpush2.bf16.msra.mxu0 %v5023
  %7252 = vmatprep.subr.bf16.mxu0 %v5020
  %7253 = vmatpush2.bf16.msra.mxu0 %v5019
  %7254 = vmatprep.mubr.bf16.mxu0 %v1274
  %7255 = vmatmul.mubr.bf16.gmra.mxu0 %v1273
  %v7256 = vpop.f32.mrf.mxu0
  %v7257 = vadd.f32 %v7216, %v7256
  %v7258 = vpop.f32.mrf.mxu0
  %v7259 = vadd.f32 %v7218, %v7258
  %v7260 = vpop.f32.mrf.mxu0
  %v7261 = vpop.f32.mrf.mxu0
  %7262 = vdwg.mxu0
  %7263 = vmatprep.subr.bf16.mxu0 %v5080
  %7264 = vmatpush1.bf16.msra.mxu0 %v5079
  %7265 = vmatprep.subr.bf16.mxu0 %v5076
  %7266 = vmatpush1.bf16.msra.mxu0 %v5075
  %7267 = vmatprep.subr.bf16.mxu0 %v5072
  %7268 = vmatpush1.bf16.msra.mxu0 %v5071
  %7269 = vmatprep.subr.bf16.mxu0 %v5068
  %7270 = vmatpush1.bf16.msra.mxu0 %v5067
  %7271 = vmatprep.subr.bf16.mxu0 %v5064
  %7272 = vmatpush1.bf16.msra.mxu0 %v5063
  %7273 = vmatprep.subr.bf16.mxu0 %v5060
  %7274 = vmatpush1.bf16.msra.mxu0 %v5059
  %7275 = vmatprep.subr.bf16.mxu0 %v5056
  %7276 = vmatpush1.bf16.msra.mxu0 %v5055
  %7277 = vmatprep.subr.bf16.mxu0 %v5052
  %7278 = vmatpush1.bf16.msra.mxu0 %v5051
  %7279 = vmatprep.subr.bf16.mxu0 %v5112
  %7280 = vmatpush2.bf16.msra.mxu0 %v5111
  %7281 = vmatprep.subr.bf16.mxu0 %v5108
  %7282 = vmatpush2.bf16.msra.mxu0 %v5107
  %7283 = vmatprep.subr.bf16.mxu0 %v5104
  %7284 = vmatpush2.bf16.msra.mxu0 %v5103
  %7285 = vmatprep.subr.bf16.mxu0 %v5100
  %7286 = vmatpush2.bf16.msra.mxu0 %v5099
  %7287 = vmatprep.subr.bf16.mxu0 %v5096
  %7288 = vmatpush2.bf16.msra.mxu0 %v5095
  %7289 = vmatprep.subr.bf16.mxu0 %v5092
  %7290 = vmatpush2.bf16.msra.mxu0 %v5091
  %7291 = vmatprep.subr.bf16.mxu0 %v5088
  %7292 = vmatpush2.bf16.msra.mxu0 %v5087
  %7293 = vmatprep.subr.bf16.mxu0 %v5084
  %7294 = vmatpush2.bf16.msra.mxu0 %v5083
  %7295 = vmatprep.mubr.bf16.mxu0 %v1276
  %7296 = vmatmul.mubr.bf16.gmra.mxu0 %v1275
  %v7297 = vpop.f32.mrf.mxu0
  %v7298 = vadd.f32 %v7257, %v7297
  %v7299 = vpop.f32.mrf.mxu0
  %v7300 = vadd.f32 %v7259, %v7299
  %v7301 = vpop.f32.mrf.mxu0
  %v7302 = vpop.f32.mrf.mxu0
  %7303 = vdwg.mxu0
  %7304 = vmatprep.subr.bf16.mxu0 %v5144
  %7305 = vmatpush1.bf16.msra.mxu0 %v5143
  %7306 = vmatprep.subr.bf16.mxu0 %v5140
  %7307 = vmatpush1.bf16.msra.mxu0 %v5139
  %7308 = vmatprep.subr.bf16.mxu0 %v5136
  %7309 = vmatpush1.bf16.msra.mxu0 %v5135
  %7310 = vmatprep.subr.bf16.mxu0 %v5132
  %7311 = vmatpush1.bf16.msra.mxu0 %v5131
  %7312 = vmatprep.subr.bf16.mxu0 %v5128
  %7313 = vmatpush1.bf16.msra.mxu0 %v5127
  %7314 = vmatprep.subr.bf16.mxu0 %v5124
  %7315 = vmatpush1.bf16.msra.mxu0 %v5123
  %7316 = vmatprep.subr.bf16.mxu0 %v5120
  %7317 = vmatpush1.bf16.msra.mxu0 %v5119
  %7318 = vmatprep.subr.bf16.mxu0 %v5116
  %7319 = vmatpush1.bf16.msra.mxu0 %v5115
  %7320 = vmatprep.subr.bf16.mxu0 %v5176
  %7321 = vmatpush2.bf16.msra.mxu0 %v5175
  %7322 = vmatprep.subr.bf16.mxu0 %v5172
  %7323 = vmatpush2.bf16.msra.mxu0 %v5171
  %7324 = vmatprep.subr.bf16.mxu0 %v5168
  %7325 = vmatpush2.bf16.msra.mxu0 %v5167
  %7326 = vmatprep.subr.bf16.mxu0 %v5164
  %7327 = vmatpush2.bf16.msra.mxu0 %v5163
  %7328 = vmatprep.subr.bf16.mxu0 %v5160
  %7329 = vmatpush2.bf16.msra.mxu0 %v5159
  %7330 = vmatprep.subr.bf16.mxu0 %v5156
  %7331 = vmatpush2.bf16.msra.mxu0 %v5155
  %7332 = vmatprep.subr.bf16.mxu0 %v5152
  %7333 = vmatpush2.bf16.msra.mxu0 %v5151
  %7334 = vmatprep.subr.bf16.mxu0 %v5148
  %7335 = vmatpush2.bf16.msra.mxu0 %v5147
  %7336 = vmatprep.mubr.bf16.mxu0 %v1278
  %7337 = vmatmul.mubr.bf16.gmra.mxu0 %v1277
  %v7338 = vpop.f32.mrf.mxu0
  %v7339 = vadd.f32 %v7298, %v7338
  %v7340 = vpop.f32.mrf.mxu0
  %v7341 = vadd.f32 %v7300, %v7340
  %v7342 = vpop.f32.mrf.mxu0
  %v7343 = vpop.f32.mrf.mxu0
  %7344 = vdwg.mxu0
  %7345 = vmatprep.subr.bf16.mxu0 %v5208
  %7346 = vmatpush1.bf16.msra.mxu0 %v5207
  %7347 = vmatprep.subr.bf16.mxu0 %v5204
  %7348 = vmatpush1.bf16.msra.mxu0 %v5203
  %7349 = vmatprep.subr.bf16.mxu0 %v5200
  %7350 = vmatpush1.bf16.msra.mxu0 %v5199
  %7351 = vmatprep.subr.bf16.mxu0 %v5196
  %7352 = vmatpush1.bf16.msra.mxu0 %v5195
  %7353 = vmatprep.subr.bf16.mxu0 %v5192
  %7354 = vmatpush1.bf16.msra.mxu0 %v5191
  %7355 = vmatprep.subr.bf16.mxu0 %v5188
  %7356 = vmatpush1.bf16.msra.mxu0 %v5187
  %7357 = vmatprep.subr.bf16.mxu0 %v5184
  %7358 = vmatpush1.bf16.msra.mxu0 %v5183
  %7359 = vmatprep.subr.bf16.mxu0 %v5180
  %7360 = vmatpush1.bf16.msra.mxu0 %v5179
  %7361 = vmatprep.subr.bf16.mxu0 %v5240
  %7362 = vmatpush2.bf16.msra.mxu0 %v5239
  %7363 = vmatprep.subr.bf16.mxu0 %v5236
  %7364 = vmatpush2.bf16.msra.mxu0 %v5235
  %7365 = vmatprep.subr.bf16.mxu0 %v5232
  %7366 = vmatpush2.bf16.msra.mxu0 %v5231
  %7367 = vmatprep.subr.bf16.mxu0 %v5228
  %7368 = vmatpush2.bf16.msra.mxu0 %v5227
  %7369 = vmatprep.subr.bf16.mxu0 %v5224
  %7370 = vmatpush2.bf16.msra.mxu0 %v5223
  %7371 = vmatprep.subr.bf16.mxu0 %v5220
  %7372 = vmatpush2.bf16.msra.mxu0 %v5219
  %7373 = vmatprep.subr.bf16.mxu0 %v5216
  %7374 = vmatpush2.bf16.msra.mxu0 %v5215
  %7375 = vmatprep.subr.bf16.mxu0 %v5212
  %7376 = vmatpush2.bf16.msra.mxu0 %v5211
  %7377 = vmatprep.mubr.bf16.mxu0 %v1280
  %7378 = vmatmul.mubr.bf16.gmra.mxu0 %v1279
  %v7379 = vpop.f32.mrf.mxu0
  %v7380 = vadd.f32 %v7339, %v7379
  %v7381 = vpop.f32.mrf.mxu0
  %v7382 = vadd.f32 %v7341, %v7381
  %v7383 = vpop.f32.mrf.mxu0
  %v7384 = vpop.f32.mrf.mxu0
  %7385 = vdwg.mxu0
  %7386 = vmatprep.subr.bf16.mxu0 %v5272
  %7387 = vmatpush1.bf16.msra.mxu0 %v5271
  %7388 = vmatprep.subr.bf16.mxu0 %v5268
  %7389 = vmatpush1.bf16.msra.mxu0 %v5267
  %7390 = vmatprep.subr.bf16.mxu0 %v5264
  %7391 = vmatpush1.bf16.msra.mxu0 %v5263
  %7392 = vmatprep.subr.bf16.mxu0 %v5260
  %7393 = vmatpush1.bf16.msra.mxu0 %v5259
  %7394 = vmatprep.subr.bf16.mxu0 %v5256
  %7395 = vmatpush1.bf16.msra.mxu0 %v5255
  %7396 = vmatprep.subr.bf16.mxu0 %v5252
  %7397 = vmatpush1.bf16.msra.mxu0 %v5251
  %7398 = vmatprep.subr.bf16.mxu0 %v5248
  %7399 = vmatpush1.bf16.msra.mxu0 %v5247
  %7400 = vmatprep.subr.bf16.mxu0 %v5244
  %7401 = vmatpush1.bf16.msra.mxu0 %v5243
  %7402 = vmatprep.subr.bf16.mxu0 %v5304
  %7403 = vmatpush2.bf16.msra.mxu0 %v5303
  %7404 = vmatprep.subr.bf16.mxu0 %v5300
  %7405 = vmatpush2.bf16.msra.mxu0 %v5299
  %7406 = vmatprep.subr.bf16.mxu0 %v5296
  %7407 = vmatpush2.bf16.msra.mxu0 %v5295
  %7408 = vmatprep.subr.bf16.mxu0 %v5292
  %7409 = vmatpush2.bf16.msra.mxu0 %v5291
  %7410 = vmatprep.subr.bf16.mxu0 %v5288
  %7411 = vmatpush2.bf16.msra.mxu0 %v5287
  %7412 = vmatprep.subr.bf16.mxu0 %v5284
  %7413 = vmatpush2.bf16.msra.mxu0 %v5283
  %7414 = vmatprep.subr.bf16.mxu0 %v5280
  %7415 = vmatpush2.bf16.msra.mxu0 %v5279
  %7416 = vmatprep.subr.bf16.mxu0 %v5276
  %7417 = vmatpush2.bf16.msra.mxu0 %v5275
  %7418 = vmatprep.mubr.bf16.mxu0 %v1282
  %7419 = vmatmul.mubr.bf16.gmra.mxu0 %v1281
  %v7420 = vpop.f32.mrf.mxu0
  %v7421 = vadd.f32 %v7380, %v7420
  %v7422 = vpop.f32.mrf.mxu0
  %v7423 = vadd.f32 %v7382, %v7422
  %v7424 = vpop.f32.mrf.mxu0
  %v7425 = vpop.f32.mrf.mxu0
  %7426 = vdwg.mxu0
  %7427 = vmatprep.subr.bf16.mxu0 %v5336
  %7428 = vmatpush1.bf16.msra.mxu0 %v5335
  %7429 = vmatprep.subr.bf16.mxu0 %v5332
  %7430 = vmatpush1.bf16.msra.mxu0 %v5331
  %7431 = vmatprep.subr.bf16.mxu0 %v5328
  %7432 = vmatpush1.bf16.msra.mxu0 %v5327
  %7433 = vmatprep.subr.bf16.mxu0 %v5324
  %7434 = vmatpush1.bf16.msra.mxu0 %v5323
  %7435 = vmatprep.subr.bf16.mxu0 %v5320
  %7436 = vmatpush1.bf16.msra.mxu0 %v5319
  %7437 = vmatprep.subr.bf16.mxu0 %v5316
  %7438 = vmatpush1.bf16.msra.mxu0 %v5315
  %7439 = vmatprep.subr.bf16.mxu0 %v5312
  %7440 = vmatpush1.bf16.msra.mxu0 %v5311
  %7441 = vmatprep.subr.bf16.mxu0 %v5308
  %7442 = vmatpush1.bf16.msra.mxu0 %v5307
  %7443 = vmatprep.subr.bf16.mxu0 %v5368
  %7444 = vmatpush2.bf16.msra.mxu0 %v5367
  %7445 = vmatprep.subr.bf16.mxu0 %v5364
  %7446 = vmatpush2.bf16.msra.mxu0 %v5363
  %7447 = vmatprep.subr.bf16.mxu0 %v5360
  %7448 = vmatpush2.bf16.msra.mxu0 %v5359
  %7449 = vmatprep.subr.bf16.mxu0 %v5356
  %7450 = vmatpush2.bf16.msra.mxu0 %v5355
  %7451 = vmatprep.subr.bf16.mxu0 %v5352
  %7452 = vmatpush2.bf16.msra.mxu0 %v5351
  %7453 = vmatprep.subr.bf16.mxu0 %v5348
  %7454 = vmatpush2.bf16.msra.mxu0 %v5347
  %7455 = vmatprep.subr.bf16.mxu0 %v5344
  %7456 = vmatpush2.bf16.msra.mxu0 %v5343
  %7457 = vmatprep.subr.bf16.mxu0 %v5340
  %7458 = vmatpush2.bf16.msra.mxu0 %v5339
  %7459 = vmatprep.mubr.bf16.mxu0 %v1284
  %7460 = vmatmul.mubr.bf16.gmra.mxu0 %v1283
  %v7461 = vpop.f32.mrf.mxu0
  %v7462 = vadd.f32 %v7421, %v7461
  %v7463 = vpop.f32.mrf.mxu0
  %v7464 = vadd.f32 %v7423, %v7463
  %v7465 = vpop.f32.mrf.mxu0
  %v7466 = vpop.f32.mrf.mxu0
  %7467 = vdwg.mxu0
  %7468 = vmatprep.subr.bf16.mxu0 %v5400
  %7469 = vmatpush1.bf16.msra.mxu0 %v5399
  %7470 = vmatprep.subr.bf16.mxu0 %v5396
  %7471 = vmatpush1.bf16.msra.mxu0 %v5395
  %7472 = vmatprep.subr.bf16.mxu0 %v5392
  %7473 = vmatpush1.bf16.msra.mxu0 %v5391
  %7474 = vmatprep.subr.bf16.mxu0 %v5388
  %7475 = vmatpush1.bf16.msra.mxu0 %v5387
  %7476 = vmatprep.subr.bf16.mxu0 %v5384
  %7477 = vmatpush1.bf16.msra.mxu0 %v5383
  %7478 = vmatprep.subr.bf16.mxu0 %v5380
  %7479 = vmatpush1.bf16.msra.mxu0 %v5379
  %7480 = vmatprep.subr.bf16.mxu0 %v5376
  %7481 = vmatpush1.bf16.msra.mxu0 %v5375
  %7482 = vmatprep.subr.bf16.mxu0 %v5372
  %7483 = vmatpush1.bf16.msra.mxu0 %v5371
  %7484 = vmatprep.subr.bf16.mxu0 %v5432
  %7485 = vmatpush2.bf16.msra.mxu0 %v5431
  %7486 = vmatprep.subr.bf16.mxu0 %v5428
  %7487 = vmatpush2.bf16.msra.mxu0 %v5427
  %7488 = vmatprep.subr.bf16.mxu0 %v5424
  %7489 = vmatpush2.bf16.msra.mxu0 %v5423
  %7490 = vmatprep.subr.bf16.mxu0 %v5420
  %7491 = vmatpush2.bf16.msra.mxu0 %v5419
  %7492 = vmatprep.subr.bf16.mxu0 %v5416
  %7493 = vmatpush2.bf16.msra.mxu0 %v5415
  %7494 = vmatprep.subr.bf16.mxu0 %v5412
  %7495 = vmatpush2.bf16.msra.mxu0 %v5411
  %7496 = vmatprep.subr.bf16.mxu0 %v5408
  %7497 = vmatpush2.bf16.msra.mxu0 %v5407
  %7498 = vmatprep.subr.bf16.mxu0 %v5404
  %7499 = vmatpush2.bf16.msra.mxu0 %v5403
  %7500 = vmatprep.mubr.bf16.mxu0 %v1286
  %7501 = vmatmul.mubr.bf16.gmra.mxu0 %v1285
  %v7502 = vpop.f32.mrf.mxu0
  %v7503 = vadd.f32 %v7462, %v7502
  %v7504 = vpop.f32.mrf.mxu0
  %v7505 = vadd.f32 %v7464, %v7504
  %v7506 = vpop.f32.mrf.mxu0
  %v7507 = vpop.f32.mrf.mxu0
  %7508 = vdwg.mxu0
  %7509 = vmatprep.subr.bf16.mxu0 %v5464
  %7510 = vmatpush1.bf16.msra.mxu0 %v5463
  %7511 = vmatprep.subr.bf16.mxu0 %v5460
  %7512 = vmatpush1.bf16.msra.mxu0 %v5459
  %7513 = vmatprep.subr.bf16.mxu0 %v5456
  %7514 = vmatpush1.bf16.msra.mxu0 %v5455
  %7515 = vmatprep.subr.bf16.mxu0 %v5452
  %7516 = vmatpush1.bf16.msra.mxu0 %v5451
  %7517 = vmatprep.subr.bf16.mxu0 %v5448
  %7518 = vmatpush1.bf16.msra.mxu0 %v5447
  %7519 = vmatprep.subr.bf16.mxu0 %v5444
  %7520 = vmatpush1.bf16.msra.mxu0 %v5443
  %7521 = vmatprep.subr.bf16.mxu0 %v5440
  %7522 = vmatpush1.bf16.msra.mxu0 %v5439
  %7523 = vmatprep.subr.bf16.mxu0 %v5436
  %7524 = vmatpush1.bf16.msra.mxu0 %v5435
  %7525 = vmatprep.subr.bf16.mxu0 %v5496
  %7526 = vmatpush2.bf16.msra.mxu0 %v5495
  %7527 = vmatprep.subr.bf16.mxu0 %v5492
  %7528 = vmatpush2.bf16.msra.mxu0 %v5491
  %7529 = vmatprep.subr.bf16.mxu0 %v5488
  %7530 = vmatpush2.bf16.msra.mxu0 %v5487
  %7531 = vmatprep.subr.bf16.mxu0 %v5484
  %7532 = vmatpush2.bf16.msra.mxu0 %v5483
  %7533 = vmatprep.subr.bf16.mxu0 %v5480
  %7534 = vmatpush2.bf16.msra.mxu0 %v5479
  %7535 = vmatprep.subr.bf16.mxu0 %v5476
  %7536 = vmatpush2.bf16.msra.mxu0 %v5475
  %7537 = vmatprep.subr.bf16.mxu0 %v5472
  %7538 = vmatpush2.bf16.msra.mxu0 %v5471
  %7539 = vmatprep.subr.bf16.mxu0 %v5468
  %7540 = vmatpush2.bf16.msra.mxu0 %v5467
  %7541 = vmatprep.mubr.bf16.mxu0 %v1288
  %7542 = vmatmul.mubr.bf16.gmra.mxu0 %v1287
  %v7543 = vpop.f32.mrf.mxu0
  %v7544 = vadd.f32 %v7503, %v7543
  %v7545 = vpop.f32.mrf.mxu0
  %v7546 = vadd.f32 %v7505, %v7545
  %v7547 = vpop.f32.mrf.mxu0
  %v7548 = vpop.f32.mrf.mxu0
  %7549 = vdwg.mxu0
  %7550 = vmatprep.subr.bf16.mxu0 %v5528
  %7551 = vmatpush1.bf16.msra.mxu0 %v5527
  %7552 = vmatprep.subr.bf16.mxu0 %v5524
  %7553 = vmatpush1.bf16.msra.mxu0 %v5523
  %7554 = vmatprep.subr.bf16.mxu0 %v5520
  %7555 = vmatpush1.bf16.msra.mxu0 %v5519
  %7556 = vmatprep.subr.bf16.mxu0 %v5516
  %7557 = vmatpush1.bf16.msra.mxu0 %v5515
  %7558 = vmatprep.subr.bf16.mxu0 %v5512
  %7559 = vmatpush1.bf16.msra.mxu0 %v5511
  %7560 = vmatprep.subr.bf16.mxu0 %v5508
  %7561 = vmatpush1.bf16.msra.mxu0 %v5507
  %7562 = vmatprep.subr.bf16.mxu0 %v5504
  %7563 = vmatpush1.bf16.msra.mxu0 %v5503
  %7564 = vmatprep.subr.bf16.mxu0 %v5500
  %7565 = vmatpush1.bf16.msra.mxu0 %v5499
  %7566 = vmatprep.subr.bf16.mxu0 %v5560
  %7567 = vmatpush2.bf16.msra.mxu0 %v5559
  %7568 = vmatprep.subr.bf16.mxu0 %v5556
  %7569 = vmatpush2.bf16.msra.mxu0 %v5555
  %7570 = vmatprep.subr.bf16.mxu0 %v5552
  %7571 = vmatpush2.bf16.msra.mxu0 %v5551
  %7572 = vmatprep.subr.bf16.mxu0 %v5548
  %7573 = vmatpush2.bf16.msra.mxu0 %v5547
  %7574 = vmatprep.subr.bf16.mxu0 %v5544
  %7575 = vmatpush2.bf16.msra.mxu0 %v5543
  %7576 = vmatprep.subr.bf16.mxu0 %v5540
  %7577 = vmatpush2.bf16.msra.mxu0 %v5539
  %7578 = vmatprep.subr.bf16.mxu0 %v5536
  %7579 = vmatpush2.bf16.msra.mxu0 %v5535
  %7580 = vmatprep.subr.bf16.mxu0 %v5532
  %7581 = vmatpush2.bf16.msra.mxu0 %v5531
  %7582 = vmatprep.mubr.bf16.mxu0 %v1290
  %7583 = vmatmul.mubr.bf16.gmra.mxu0 %v1289
  %v7584 = vpop.f32.mrf.mxu0
  %v7585 = vadd.f32 %v7544, %v7584
  %v7586 = vpop.f32.mrf.mxu0
  %v7587 = vadd.f32 %v7546, %v7586
  %v7588 = vpop.f32.mrf.mxu0
  %v7589 = vpop.f32.mrf.mxu0
  %7590 = vdwg.mxu0
  %7591 = vmatprep.subr.bf16.mxu0 %v5592
  %7592 = vmatpush1.bf16.msra.mxu0 %v5591
  %7593 = vmatprep.subr.bf16.mxu0 %v5588
  %7594 = vmatpush1.bf16.msra.mxu0 %v5587
  %7595 = vmatprep.subr.bf16.mxu0 %v5584
  %7596 = vmatpush1.bf16.msra.mxu0 %v5583
  %7597 = vmatprep.subr.bf16.mxu0 %v5580
  %7598 = vmatpush1.bf16.msra.mxu0 %v5579
  %7599 = vmatprep.subr.bf16.mxu0 %v5576
  %7600 = vmatpush1.bf16.msra.mxu0 %v5575
  %7601 = vmatprep.subr.bf16.mxu0 %v5572
  %7602 = vmatpush1.bf16.msra.mxu0 %v5571
  %7603 = vmatprep.subr.bf16.mxu0 %v5568
  %7604 = vmatpush1.bf16.msra.mxu0 %v5567
  %7605 = vmatprep.subr.bf16.mxu0 %v5564
  %7606 = vmatpush1.bf16.msra.mxu0 %v5563
  %7607 = vmatprep.subr.bf16.mxu0 %v5624
  %7608 = vmatpush2.bf16.msra.mxu0 %v5623
  %7609 = vmatprep.subr.bf16.mxu0 %v5620
  %7610 = vmatpush2.bf16.msra.mxu0 %v5619
  %7611 = vmatprep.subr.bf16.mxu0 %v5616
  %7612 = vmatpush2.bf16.msra.mxu0 %v5615
  %7613 = vmatprep.subr.bf16.mxu0 %v5612
  %7614 = vmatpush2.bf16.msra.mxu0 %v5611
  %7615 = vmatprep.subr.bf16.mxu0 %v5608
  %7616 = vmatpush2.bf16.msra.mxu0 %v5607
  %7617 = vmatprep.subr.bf16.mxu0 %v5604
  %7618 = vmatpush2.bf16.msra.mxu0 %v5603
  %7619 = vmatprep.subr.bf16.mxu0 %v5600
  %7620 = vmatpush2.bf16.msra.mxu0 %v5599
  %7621 = vmatprep.subr.bf16.mxu0 %v5596
  %7622 = vmatpush2.bf16.msra.mxu0 %v5595
  %7623 = vmatprep.mubr.bf16.mxu0 %v1292
  %7624 = vmatmul.mubr.bf16.gmra.mxu0 %v1291
  %v7625 = vpop.f32.mrf.mxu0
  %v7626 = vadd.f32 %v7585, %v7625
  %v7627 = vpop.f32.mrf.mxu0
  %v7628 = vadd.f32 %v7587, %v7627
  %v7629 = vpop.f32.mrf.mxu0
  %v7630 = vpop.f32.mrf.mxu0
  %7631 = vdwg.mxu0
  %7632 = vmatprep.subr.bf16.mxu0 %v5656
  %7633 = vmatpush1.bf16.msra.mxu0 %v5655
  %7634 = vmatprep.subr.bf16.mxu0 %v5652
  %7635 = vmatpush1.bf16.msra.mxu0 %v5651
  %7636 = vmatprep.subr.bf16.mxu0 %v5648
  %7637 = vmatpush1.bf16.msra.mxu0 %v5647
  %7638 = vmatprep.subr.bf16.mxu0 %v5644
  %7639 = vmatpush1.bf16.msra.mxu0 %v5643
  %7640 = vmatprep.subr.bf16.mxu0 %v5640
  %7641 = vmatpush1.bf16.msra.mxu0 %v5639
  %7642 = vmatprep.subr.bf16.mxu0 %v5636
  %7643 = vmatpush1.bf16.msra.mxu0 %v5635
  %7644 = vmatprep.subr.bf16.mxu0 %v5632
  %7645 = vmatpush1.bf16.msra.mxu0 %v5631
  %7646 = vmatprep.subr.bf16.mxu0 %v5628
  %7647 = vmatpush1.bf16.msra.mxu0 %v5627
  %7648 = vmatprep.subr.bf16.mxu0 %v5688
  %7649 = vmatpush2.bf16.msra.mxu0 %v5687
  %7650 = vmatprep.subr.bf16.mxu0 %v5684
  %7651 = vmatpush2.bf16.msra.mxu0 %v5683
  %7652 = vmatprep.subr.bf16.mxu0 %v5680
  %7653 = vmatpush2.bf16.msra.mxu0 %v5679
  %7654 = vmatprep.subr.bf16.mxu0 %v5676
  %7655 = vmatpush2.bf16.msra.mxu0 %v5675
  %7656 = vmatprep.subr.bf16.mxu0 %v5672
  %7657 = vmatpush2.bf16.msra.mxu0 %v5671
  %7658 = vmatprep.subr.bf16.mxu0 %v5668
  %7659 = vmatpush2.bf16.msra.mxu0 %v5667
  %7660 = vmatprep.subr.bf16.mxu0 %v5664
  %7661 = vmatpush2.bf16.msra.mxu0 %v5663
  %7662 = vmatprep.subr.bf16.mxu0 %v5660
  %7663 = vmatpush2.bf16.msra.mxu0 %v5659
  %7664 = vmatprep.mubr.bf16.mxu0 %v1294
  %7665 = vmatmul.mubr.bf16.gmra.mxu0 %v1293
  %v7666 = vpop.f32.mrf.mxu0
  %v7667 = vadd.f32 %v7626, %v7666
  %v7668 = vpop.f32.mrf.mxu0
  %v7669 = vadd.f32 %v7628, %v7668
  %v7670 = vpop.f32.mrf.mxu0
  %v7671 = vpop.f32.mrf.mxu0
  %7672 = vdwg.mxu0
  %7673 = vmatprep.subr.bf16.mxu0 %v5720
  %7674 = vmatpush1.bf16.msra.mxu0 %v5719
  %7675 = vmatprep.subr.bf16.mxu0 %v5716
  %7676 = vmatpush1.bf16.msra.mxu0 %v5715
  %7677 = vmatprep.subr.bf16.mxu0 %v5712
  %7678 = vmatpush1.bf16.msra.mxu0 %v5711
  %7679 = vmatprep.subr.bf16.mxu0 %v5708
  %7680 = vmatpush1.bf16.msra.mxu0 %v5707
  %7681 = vmatprep.subr.bf16.mxu0 %v5704
  %7682 = vmatpush1.bf16.msra.mxu0 %v5703
  %7683 = vmatprep.subr.bf16.mxu0 %v5700
  %7684 = vmatpush1.bf16.msra.mxu0 %v5699
  %7685 = vmatprep.subr.bf16.mxu0 %v5696
  %7686 = vmatpush1.bf16.msra.mxu0 %v5695
  %7687 = vmatprep.subr.bf16.mxu0 %v5692
  %7688 = vmatpush1.bf16.msra.mxu0 %v5691
  %7689 = vmatprep.subr.bf16.mxu0 %v5752
  %7690 = vmatpush2.bf16.msra.mxu0 %v5751
  %7691 = vmatprep.subr.bf16.mxu0 %v5748
  %7692 = vmatpush2.bf16.msra.mxu0 %v5747
  %7693 = vmatprep.subr.bf16.mxu0 %v5744
  %7694 = vmatpush2.bf16.msra.mxu0 %v5743
  %7695 = vmatprep.subr.bf16.mxu0 %v5740
  %7696 = vmatpush2.bf16.msra.mxu0 %v5739
  %7697 = vmatprep.subr.bf16.mxu0 %v5736
  %7698 = vmatpush2.bf16.msra.mxu0 %v5735
  %7699 = vmatprep.subr.bf16.mxu0 %v5732
  %7700 = vmatpush2.bf16.msra.mxu0 %v5731
  %7701 = vmatprep.subr.bf16.mxu0 %v5728
  %7702 = vmatpush2.bf16.msra.mxu0 %v5727
  %7703 = vmatprep.subr.bf16.mxu0 %v5724
  %7704 = vmatpush2.bf16.msra.mxu0 %v5723
  %7705 = vmatprep.mubr.bf16.mxu0 %v1296
  %7706 = vmatmul.mubr.bf16.gmra.mxu0 %v1295
  %v7707 = vpop.f32.mrf.mxu0
  %v7708 = vadd.f32 %v7667, %v7707
  %v7709 = vpop.f32.mrf.mxu0
  %v7710 = vadd.f32 %v7669, %v7709
  %v7711 = vpop.f32.mrf.mxu0
  %v7712 = vpop.f32.mrf.mxu0
  %7713 = vdwg.mxu0
  %7714 = vmatprep.subr.bf16.mxu0 %v5784
  %7715 = vmatpush1.bf16.msra.mxu0 %v5783
  %7716 = vmatprep.subr.bf16.mxu0 %v5780
  %7717 = vmatpush1.bf16.msra.mxu0 %v5779
  %7718 = vmatprep.subr.bf16.mxu0 %v5776
  %7719 = vmatpush1.bf16.msra.mxu0 %v5775
  %7720 = vmatprep.subr.bf16.mxu0 %v5772
  %7721 = vmatpush1.bf16.msra.mxu0 %v5771
  %7722 = vmatprep.subr.bf16.mxu0 %v5768
  %7723 = vmatpush1.bf16.msra.mxu0 %v5767
  %7724 = vmatprep.subr.bf16.mxu0 %v5764
  %7725 = vmatpush1.bf16.msra.mxu0 %v5763
  %7726 = vmatprep.subr.bf16.mxu0 %v5760
  %7727 = vmatpush1.bf16.msra.mxu0 %v5759
  %7728 = vmatprep.subr.bf16.mxu0 %v5756
  %7729 = vmatpush1.bf16.msra.mxu0 %v5755
  %7730 = vmatprep.subr.bf16.mxu0 %v5816
  %7731 = vmatpush2.bf16.msra.mxu0 %v5815
  %7732 = vmatprep.subr.bf16.mxu0 %v5812
  %7733 = vmatpush2.bf16.msra.mxu0 %v5811
  %7734 = vmatprep.subr.bf16.mxu0 %v5808
  %7735 = vmatpush2.bf16.msra.mxu0 %v5807
  %7736 = vmatprep.subr.bf16.mxu0 %v5804
  %7737 = vmatpush2.bf16.msra.mxu0 %v5803
  %7738 = vmatprep.subr.bf16.mxu0 %v5800
  %7739 = vmatpush2.bf16.msra.mxu0 %v5799
  %7740 = vmatprep.subr.bf16.mxu0 %v5796
  %7741 = vmatpush2.bf16.msra.mxu0 %v5795
  %7742 = vmatprep.subr.bf16.mxu0 %v5792
  %7743 = vmatpush2.bf16.msra.mxu0 %v5791
  %7744 = vmatprep.subr.bf16.mxu0 %v5788
  %7745 = vmatpush2.bf16.msra.mxu0 %v5787
  %7746 = vmatprep.mubr.bf16.mxu0 %v1298
  %7747 = vmatmul.mubr.bf16.gmra.mxu0 %v1297
  %v7748 = vpop.f32.mrf.mxu0
  %v7749 = vadd.f32 %v7708, %v7748
  %v7750 = vpop.f32.mrf.mxu0
  %v7751 = vadd.f32 %v7710, %v7750
  %v7752 = vpop.f32.mrf.mxu0
  %v7753 = vpop.f32.mrf.mxu0
  %7754 = vdwg.mxu0
  %7755 = vmatprep.subr.bf16.mxu0 %v5848
  %7756 = vmatpush1.bf16.msra.mxu0 %v5847
  %7757 = vmatprep.subr.bf16.mxu0 %v5844
  %7758 = vmatpush1.bf16.msra.mxu0 %v5843
  %7759 = vmatprep.subr.bf16.mxu0 %v5840
  %7760 = vmatpush1.bf16.msra.mxu0 %v5839
  %7761 = vmatprep.subr.bf16.mxu0 %v5836
  %7762 = vmatpush1.bf16.msra.mxu0 %v5835
  %7763 = vmatprep.subr.bf16.mxu0 %v5832
  %7764 = vmatpush1.bf16.msra.mxu0 %v5831
  %7765 = vmatprep.subr.bf16.mxu0 %v5828
  %7766 = vmatpush1.bf16.msra.mxu0 %v5827
  %7767 = vmatprep.subr.bf16.mxu0 %v5824
  %7768 = vmatpush1.bf16.msra.mxu0 %v5823
  %7769 = vmatprep.subr.bf16.mxu0 %v5820
  %7770 = vmatpush1.bf16.msra.mxu0 %v5819
  %7771 = vmatprep.subr.bf16.mxu0 %v5880
  %7772 = vmatpush2.bf16.msra.mxu0 %v5879
  %7773 = vmatprep.subr.bf16.mxu0 %v5876
  %7774 = vmatpush2.bf16.msra.mxu0 %v5875
  %7775 = vmatprep.subr.bf16.mxu0 %v5872
  %7776 = vmatpush2.bf16.msra.mxu0 %v5871
  %7777 = vmatprep.subr.bf16.mxu0 %v5868
  %7778 = vmatpush2.bf16.msra.mxu0 %v5867
  %7779 = vmatprep.subr.bf16.mxu0 %v5864
  %7780 = vmatpush2.bf16.msra.mxu0 %v5863
  %7781 = vmatprep.subr.bf16.mxu0 %v5860
  %7782 = vmatpush2.bf16.msra.mxu0 %v5859
  %7783 = vmatprep.subr.bf16.mxu0 %v5856
  %7784 = vmatpush2.bf16.msra.mxu0 %v5855
  %7785 = vmatprep.subr.bf16.mxu0 %v5852
  %7786 = vmatpush2.bf16.msra.mxu0 %v5851
  %7787 = vmatprep.mubr.bf16.mxu0 %v1300
  %7788 = vmatmul.mubr.bf16.gmra.mxu0 %v1299
  %v7789 = vpop.f32.mrf.mxu0
  %v7790 = vadd.f32 %v7749, %v7789
  %v7791 = vpop.f32.mrf.mxu0
  %v7792 = vadd.f32 %v7751, %v7791
  %v7793 = vpop.f32.mrf.mxu0
  %v7794 = vpop.f32.mrf.mxu0
  %7795 = vdwg.mxu0
  %7796 = vmatprep.subr.bf16.mxu0 %v5912
  %7797 = vmatpush1.bf16.msra.mxu0 %v5911
  %7798 = vmatprep.subr.bf16.mxu0 %v5908
  %7799 = vmatpush1.bf16.msra.mxu0 %v5907
  %7800 = vmatprep.subr.bf16.mxu0 %v5904
  %7801 = vmatpush1.bf16.msra.mxu0 %v5903
  %7802 = vmatprep.subr.bf16.mxu0 %v5900
  %7803 = vmatpush1.bf16.msra.mxu0 %v5899
  %7804 = vmatprep.subr.bf16.mxu0 %v5896
  %7805 = vmatpush1.bf16.msra.mxu0 %v5895
  %7806 = vmatprep.subr.bf16.mxu0 %v5892
  %7807 = vmatpush1.bf16.msra.mxu0 %v5891
  %7808 = vmatprep.subr.bf16.mxu0 %v5888
  %7809 = vmatpush1.bf16.msra.mxu0 %v5887
  %7810 = vmatprep.subr.bf16.mxu0 %v5884
  %7811 = vmatpush1.bf16.msra.mxu0 %v5883
  %7812 = vmatprep.subr.bf16.mxu0 %v5944
  %7813 = vmatpush2.bf16.msra.mxu0 %v5943
  %7814 = vmatprep.subr.bf16.mxu0 %v5940
  %7815 = vmatpush2.bf16.msra.mxu0 %v5939
  %7816 = vmatprep.subr.bf16.mxu0 %v5936
  %7817 = vmatpush2.bf16.msra.mxu0 %v5935
  %7818 = vmatprep.subr.bf16.mxu0 %v5932
  %7819 = vmatpush2.bf16.msra.mxu0 %v5931
  %7820 = vmatprep.subr.bf16.mxu0 %v5928
  %7821 = vmatpush2.bf16.msra.mxu0 %v5927
  %7822 = vmatprep.subr.bf16.mxu0 %v5924
  %7823 = vmatpush2.bf16.msra.mxu0 %v5923
  %7824 = vmatprep.subr.bf16.mxu0 %v5920
  %7825 = vmatpush2.bf16.msra.mxu0 %v5919
  %7826 = vmatprep.subr.bf16.mxu0 %v5916
  %7827 = vmatpush2.bf16.msra.mxu0 %v5915
  %7828 = vmatprep.mubr.bf16.mxu0 %v1302
  %7829 = vmatmul.mubr.bf16.gmra.mxu0 %v1301
  %v7830 = vpop.f32.mrf.mxu0
  %v7831 = vadd.f32 %v7790, %v7830
  %v7832 = vpop.f32.mrf.mxu0
  %v7833 = vadd.f32 %v7792, %v7832
  %v7834 = vpop.f32.mrf.mxu0
  %v7835 = vpop.f32.mrf.mxu0
  %7836 = vdwg.mxu0
  %7837 = vmatprep.subr.bf16.mxu0 %v4826
  %7838 = vmatpush1.bf16.msra.mxu0 %v4825
  %7839 = vmatprep.subr.bf16.mxu0 %v4822
  %7840 = vmatpush1.bf16.msra.mxu0 %v4821
  %7841 = vmatprep.subr.bf16.mxu0 %v4818
  %7842 = vmatpush1.bf16.msra.mxu0 %v4817
  %7843 = vmatprep.subr.bf16.mxu0 %v4814
  %7844 = vmatpush1.bf16.msra.mxu0 %v4813
  %7845 = vmatprep.subr.bf16.mxu0 %v4810
  %7846 = vmatpush1.bf16.msra.mxu0 %v4809
  %7847 = vmatprep.subr.bf16.mxu0 %v4806
  %7848 = vmatpush1.bf16.msra.mxu0 %v4805
  %7849 = vmatprep.subr.bf16.mxu0 %v4802
  %7850 = vmatpush1.bf16.msra.mxu0 %v4801
  %7851 = vmatprep.subr.bf16.mxu0 %v4798
  %7852 = vmatpush1.bf16.msra.mxu0 %v4797
  %7853 = vmatprep.subr.bf16.mxu0 %v4858
  %7854 = vmatpush2.bf16.msra.mxu0 %v4857
  %7855 = vmatprep.subr.bf16.mxu0 %v4854
  %7856 = vmatpush2.bf16.msra.mxu0 %v4853
  %7857 = vmatprep.subr.bf16.mxu0 %v4850
  %7858 = vmatpush2.bf16.msra.mxu0 %v4849
  %7859 = vmatprep.subr.bf16.mxu0 %v4846
  %7860 = vmatpush2.bf16.msra.mxu0 %v4845
  %7861 = vmatprep.subr.bf16.mxu0 %v4842
  %7862 = vmatpush2.bf16.msra.mxu0 %v4841
  %7863 = vmatprep.subr.bf16.mxu0 %v4838
  %7864 = vmatpush2.bf16.msra.mxu0 %v4837
  %7865 = vmatprep.subr.bf16.mxu0 %v4834
  %7866 = vmatpush2.bf16.msra.mxu0 %v4833
  %7867 = vmatprep.subr.bf16.mxu0 %v4830
  %7868 = vmatpush2.bf16.msra.mxu0 %v4829
  %7869 = vmatprep.mubr.bf16.mxu0 %v1268
  %7870 = vmatmul.mubr.bf16.gmra.mxu0 %v1267
  %v7871 = vpop.f32.mrf.mxu0
  %v7872 = vadd.f32 %v1204, %v7871
  %v7873 = vpop.f32.mrf.mxu0
  %v7874 = vadd.f32 %v1208, %v7873
  %v7875 = vpop.f32.mrf.mxu0
  %v7876 = vpop.f32.mrf.mxu0
  %7877 = vdwg.mxu0
  %7878 = vmatprep.subr.bf16.mxu0 %v4890
  %7879 = vmatpush1.bf16.msra.mxu0 %v4889
  %7880 = vmatprep.subr.bf16.mxu0 %v4886
  %7881 = vmatpush1.bf16.msra.mxu0 %v4885
  %7882 = vmatprep.subr.bf16.mxu0 %v4882
  %7883 = vmatpush1.bf16.msra.mxu0 %v4881
  %7884 = vmatprep.subr.bf16.mxu0 %v4878
  %7885 = vmatpush1.bf16.msra.mxu0 %v4877
  %7886 = vmatprep.subr.bf16.mxu0 %v4874
  %7887 = vmatpush1.bf16.msra.mxu0 %v4873
  %7888 = vmatprep.subr.bf16.mxu0 %v4870
  %7889 = vmatpush1.bf16.msra.mxu0 %v4869
  %7890 = vmatprep.subr.bf16.mxu0 %v4866
  %7891 = vmatpush1.bf16.msra.mxu0 %v4865
  %7892 = vmatprep.subr.bf16.mxu0 %v4862
  %7893 = vmatpush1.bf16.msra.mxu0 %v4861
  %7894 = vmatprep.subr.bf16.mxu0 %v4922
  %7895 = vmatpush2.bf16.msra.mxu0 %v4921
  %7896 = vmatprep.subr.bf16.mxu0 %v4918
  %7897 = vmatpush2.bf16.msra.mxu0 %v4917
  %7898 = vmatprep.subr.bf16.mxu0 %v4914
  %7899 = vmatpush2.bf16.msra.mxu0 %v4913
  %7900 = vmatprep.subr.bf16.mxu0 %v4910
  %7901 = vmatpush2.bf16.msra.mxu0 %v4909
  %7902 = vmatprep.subr.bf16.mxu0 %v4906
  %7903 = vmatpush2.bf16.msra.mxu0 %v4905
  %7904 = vmatprep.subr.bf16.mxu0 %v4902
  %7905 = vmatpush2.bf16.msra.mxu0 %v4901
  %7906 = vmatprep.subr.bf16.mxu0 %v4898
  %7907 = vmatpush2.bf16.msra.mxu0 %v4897
  %7908 = vmatprep.subr.bf16.mxu0 %v4894
  %7909 = vmatpush2.bf16.msra.mxu0 %v4893
  %7910 = vmatprep.mubr.bf16.mxu0 %v1270
  %7911 = vmatmul.mubr.bf16.gmra.mxu0 %v1269
  %v7912 = vpop.f32.mrf.mxu0
  %v7913 = vadd.f32 %v7872, %v7912
  %v7914 = vpop.f32.mrf.mxu0
  %v7915 = vadd.f32 %v7874, %v7914
  %v7916 = vpop.f32.mrf.mxu0
  %v7917 = vpop.f32.mrf.mxu0
  %7918 = vdwg.mxu0
  %7919 = vmatprep.subr.bf16.mxu0 %v4954
  %7920 = vmatpush1.bf16.msra.mxu0 %v4953
  %7921 = vmatprep.subr.bf16.mxu0 %v4950
  %7922 = vmatpush1.bf16.msra.mxu0 %v4949
  %7923 = vmatprep.subr.bf16.mxu0 %v4946
  %7924 = vmatpush1.bf16.msra.mxu0 %v4945
  %7925 = vmatprep.subr.bf16.mxu0 %v4942
  %7926 = vmatpush1.bf16.msra.mxu0 %v4941
  %7927 = vmatprep.subr.bf16.mxu0 %v4938
  %7928 = vmatpush1.bf16.msra.mxu0 %v4937
  %7929 = vmatprep.subr.bf16.mxu0 %v4934
  %7930 = vmatpush1.bf16.msra.mxu0 %v4933
  %7931 = vmatprep.subr.bf16.mxu0 %v4930
  %7932 = vmatpush1.bf16.msra.mxu0 %v4929
  %7933 = vmatprep.subr.bf16.mxu0 %v4926
  %7934 = vmatpush1.bf16.msra.mxu0 %v4925
  %7935 = vmatprep.subr.bf16.mxu0 %v4986
  %7936 = vmatpush2.bf16.msra.mxu0 %v4985
  %7937 = vmatprep.subr.bf16.mxu0 %v4982
  %7938 = vmatpush2.bf16.msra.mxu0 %v4981
  %7939 = vmatprep.subr.bf16.mxu0 %v4978
  %7940 = vmatpush2.bf16.msra.mxu0 %v4977
  %7941 = vmatprep.subr.bf16.mxu0 %v4974
  %7942 = vmatpush2.bf16.msra.mxu0 %v4973
  %7943 = vmatprep.subr.bf16.mxu0 %v4970
  %7944 = vmatpush2.bf16.msra.mxu0 %v4969
  %7945 = vmatprep.subr.bf16.mxu0 %v4966
  %7946 = vmatpush2.bf16.msra.mxu0 %v4965
  %7947 = vmatprep.subr.bf16.mxu0 %v4962
  %7948 = vmatpush2.bf16.msra.mxu0 %v4961
  %7949 = vmatprep.subr.bf16.mxu0 %v4958
  %7950 = vmatpush2.bf16.msra.mxu0 %v4957
  %7951 = vmatprep.mubr.bf16.mxu0 %v1272
  %7952 = vmatmul.mubr.bf16.gmra.mxu0 %v1271
  %v7953 = vpop.f32.mrf.mxu0
  %v7954 = vadd.f32 %v7913, %v7953
  %v7955 = vpop.f32.mrf.mxu0
  %v7956 = vadd.f32 %v7915, %v7955
  %v7957 = vpop.f32.mrf.mxu0
  %v7958 = vpop.f32.mrf.mxu0
  %7959 = vdwg.mxu0
  %7960 = vmatprep.subr.bf16.mxu0 %v5018
  %7961 = vmatpush1.bf16.msra.mxu0 %v5017
  %7962 = vmatprep.subr.bf16.mxu0 %v5014
  %7963 = vmatpush1.bf16.msra.mxu0 %v5013
  %7964 = vmatprep.subr.bf16.mxu0 %v5010
  %7965 = vmatpush1.bf16.msra.mxu0 %v5009
  %7966 = vmatprep.subr.bf16.mxu0 %v5006
  %7967 = vmatpush1.bf16.msra.mxu0 %v5005
  %7968 = vmatprep.subr.bf16.mxu0 %v5002
  %7969 = vmatpush1.bf16.msra.mxu0 %v5001
  %7970 = vmatprep.subr.bf16.mxu0 %v4998
  %7971 = vmatpush1.bf16.msra.mxu0 %v4997
  %7972 = vmatprep.subr.bf16.mxu0 %v4994
  %7973 = vmatpush1.bf16.msra.mxu0 %v4993
  %7974 = vmatprep.subr.bf16.mxu0 %v4990
  %7975 = vmatpush1.bf16.msra.mxu0 %v4989
  %7976 = vmatprep.subr.bf16.mxu0 %v5050
  %7977 = vmatpush2.bf16.msra.mxu0 %v5049
  %7978 = vmatprep.subr.bf16.mxu0 %v5046
  %7979 = vmatpush2.bf16.msra.mxu0 %v5045
  %7980 = vmatprep.subr.bf16.mxu0 %v5042
  %7981 = vmatpush2.bf16.msra.mxu0 %v5041
  %7982 = vmatprep.subr.bf16.mxu0 %v5038
  %7983 = vmatpush2.bf16.msra.mxu0 %v5037
  %7984 = vmatprep.subr.bf16.mxu0 %v5034
  %7985 = vmatpush2.bf16.msra.mxu0 %v5033
  %7986 = vmatprep.subr.bf16.mxu0 %v5030
  %7987 = vmatpush2.bf16.msra.mxu0 %v5029
  %7988 = vmatprep.subr.bf16.mxu0 %v5026
  %7989 = vmatpush2.bf16.msra.mxu0 %v5025
  %7990 = vmatprep.subr.bf16.mxu0 %v5022
  %7991 = vmatpush2.bf16.msra.mxu0 %v5021
  %7992 = vmatprep.mubr.bf16.mxu0 %v1274
  %7993 = vmatmul.mubr.bf16.gmra.mxu0 %v1273
  %v7994 = vpop.f32.mrf.mxu0
  %v7995 = vadd.f32 %v7954, %v7994
  %v7996 = vpop.f32.mrf.mxu0
  %v7997 = vadd.f32 %v7956, %v7996
  %v7998 = vpop.f32.mrf.mxu0
  %v7999 = vpop.f32.mrf.mxu0
  %8000 = vdwg.mxu0
  %8001 = vmatprep.subr.bf16.mxu0 %v5082
  %8002 = vmatpush1.bf16.msra.mxu0 %v5081
  %8003 = vmatprep.subr.bf16.mxu0 %v5078
  %8004 = vmatpush1.bf16.msra.mxu0 %v5077
  %8005 = vmatprep.subr.bf16.mxu0 %v5074
  %8006 = vmatpush1.bf16.msra.mxu0 %v5073
  %8007 = vmatprep.subr.bf16.mxu0 %v5070
  %8008 = vmatpush1.bf16.msra.mxu0 %v5069
  %8009 = vmatprep.subr.bf16.mxu0 %v5066
  %8010 = vmatpush1.bf16.msra.mxu0 %v5065
  %8011 = vmatprep.subr.bf16.mxu0 %v5062
  %8012 = vmatpush1.bf16.msra.mxu0 %v5061
  %8013 = vmatprep.subr.bf16.mxu0 %v5058
  %8014 = vmatpush1.bf16.msra.mxu0 %v5057
  %8015 = vmatprep.subr.bf16.mxu0 %v5054
  %8016 = vmatpush1.bf16.msra.mxu0 %v5053
  %8017 = vmatprep.subr.bf16.mxu0 %v5114
  %8018 = vmatpush2.bf16.msra.mxu0 %v5113
  %8019 = vmatprep.subr.bf16.mxu0 %v5110
  %8020 = vmatpush2.bf16.msra.mxu0 %v5109
  %8021 = vmatprep.subr.bf16.mxu0 %v5106
  %8022 = vmatpush2.bf16.msra.mxu0 %v5105
  %8023 = vmatprep.subr.bf16.mxu0 %v5102
  %8024 = vmatpush2.bf16.msra.mxu0 %v5101
  %8025 = vmatprep.subr.bf16.mxu0 %v5098
  %8026 = vmatpush2.bf16.msra.mxu0 %v5097
  %8027 = vmatprep.subr.bf16.mxu0 %v5094
  %8028 = vmatpush2.bf16.msra.mxu0 %v5093
  %8029 = vmatprep.subr.bf16.mxu0 %v5090
  %8030 = vmatpush2.bf16.msra.mxu0 %v5089
  %8031 = vmatprep.subr.bf16.mxu0 %v5086
  %8032 = vmatpush2.bf16.msra.mxu0 %v5085
  %8033 = vmatprep.mubr.bf16.mxu0 %v1276
  %8034 = vmatmul.mubr.bf16.gmra.mxu0 %v1275
  %v8035 = vpop.f32.mrf.mxu0
  %v8036 = vadd.f32 %v7995, %v8035
  %v8037 = vpop.f32.mrf.mxu0
  %v8038 = vadd.f32 %v7997, %v8037
  %v8039 = vpop.f32.mrf.mxu0
  %v8040 = vpop.f32.mrf.mxu0
  %8041 = vdwg.mxu0
  %8042 = vmatprep.subr.bf16.mxu0 %v5146
  %8043 = vmatpush1.bf16.msra.mxu0 %v5145
  %8044 = vmatprep.subr.bf16.mxu0 %v5142
  %8045 = vmatpush1.bf16.msra.mxu0 %v5141
  %8046 = vmatprep.subr.bf16.mxu0 %v5138
  %8047 = vmatpush1.bf16.msra.mxu0 %v5137
  %8048 = vmatprep.subr.bf16.mxu0 %v5134
  %8049 = vmatpush1.bf16.msra.mxu0 %v5133
  %8050 = vmatprep.subr.bf16.mxu0 %v5130
  %8051 = vmatpush1.bf16.msra.mxu0 %v5129
  %8052 = vmatprep.subr.bf16.mxu0 %v5126
  %8053 = vmatpush1.bf16.msra.mxu0 %v5125
  %8054 = vmatprep.subr.bf16.mxu0 %v5122
  %8055 = vmatpush1.bf16.msra.mxu0 %v5121
  %8056 = vmatprep.subr.bf16.mxu0 %v5118
  %8057 = vmatpush1.bf16.msra.mxu0 %v5117
  %8058 = vmatprep.subr.bf16.mxu0 %v5178
  %8059 = vmatpush2.bf16.msra.mxu0 %v5177
  %8060 = vmatprep.subr.bf16.mxu0 %v5174
  %8061 = vmatpush2.bf16.msra.mxu0 %v5173
  %8062 = vmatprep.subr.bf16.mxu0 %v5170
  %8063 = vmatpush2.bf16.msra.mxu0 %v5169
  %8064 = vmatprep.subr.bf16.mxu0 %v5166
  %8065 = vmatpush2.bf16.msra.mxu0 %v5165
  %8066 = vmatprep.subr.bf16.mxu0 %v5162
  %8067 = vmatpush2.bf16.msra.mxu0 %v5161
  %8068 = vmatprep.subr.bf16.mxu0 %v5158
  %8069 = vmatpush2.bf16.msra.mxu0 %v5157
  %8070 = vmatprep.subr.bf16.mxu0 %v5154
  %8071 = vmatpush2.bf16.msra.mxu0 %v5153
  %8072 = vmatprep.subr.bf16.mxu0 %v5150
  %8073 = vmatpush2.bf16.msra.mxu0 %v5149
  %8074 = vmatprep.mubr.bf16.mxu0 %v1278
  %8075 = vmatmul.mubr.bf16.gmra.mxu0 %v1277
  %v8076 = vpop.f32.mrf.mxu0
  %v8077 = vadd.f32 %v8036, %v8076
  %v8078 = vpop.f32.mrf.mxu0
  %v8079 = vadd.f32 %v8038, %v8078
  %v8080 = vpop.f32.mrf.mxu0
  %v8081 = vpop.f32.mrf.mxu0
  %8082 = vdwg.mxu0
  %8083 = vmatprep.subr.bf16.mxu0 %v5210
  %8084 = vmatpush1.bf16.msra.mxu0 %v5209
  %8085 = vmatprep.subr.bf16.mxu0 %v5206
  %8086 = vmatpush1.bf16.msra.mxu0 %v5205
  %8087 = vmatprep.subr.bf16.mxu0 %v5202
  %8088 = vmatpush1.bf16.msra.mxu0 %v5201
  %8089 = vmatprep.subr.bf16.mxu0 %v5198
  %8090 = vmatpush1.bf16.msra.mxu0 %v5197
  %8091 = vmatprep.subr.bf16.mxu0 %v5194
  %8092 = vmatpush1.bf16.msra.mxu0 %v5193
  %8093 = vmatprep.subr.bf16.mxu0 %v5190
  %8094 = vmatpush1.bf16.msra.mxu0 %v5189
  %8095 = vmatprep.subr.bf16.mxu0 %v5186
  %8096 = vmatpush1.bf16.msra.mxu0 %v5185
  %8097 = vmatprep.subr.bf16.mxu0 %v5182
  %8098 = vmatpush1.bf16.msra.mxu0 %v5181
  %8099 = vmatprep.subr.bf16.mxu0 %v5242
  %8100 = vmatpush2.bf16.msra.mxu0 %v5241
  %8101 = vmatprep.subr.bf16.mxu0 %v5238
  %8102 = vmatpush2.bf16.msra.mxu0 %v5237
  %8103 = vmatprep.subr.bf16.mxu0 %v5234
  %8104 = vmatpush2.bf16.msra.mxu0 %v5233
  %8105 = vmatprep.subr.bf16.mxu0 %v5230
  %8106 = vmatpush2.bf16.msra.mxu0 %v5229
  %8107 = vmatprep.subr.bf16.mxu0 %v5226
  %8108 = vmatpush2.bf16.msra.mxu0 %v5225
  %8109 = vmatprep.subr.bf16.mxu0 %v5222
  %8110 = vmatpush2.bf16.msra.mxu0 %v5221
  %8111 = vmatprep.subr.bf16.mxu0 %v5218
  %8112 = vmatpush2.bf16.msra.mxu0 %v5217
  %8113 = vmatprep.subr.bf16.mxu0 %v5214
  %8114 = vmatpush2.bf16.msra.mxu0 %v5213
  %8115 = vmatprep.mubr.bf16.mxu0 %v1280
  %8116 = vmatmul.mubr.bf16.gmra.mxu0 %v1279
  %v8117 = vpop.f32.mrf.mxu0
  %v8118 = vadd.f32 %v8077, %v8117
  %v8119 = vpop.f32.mrf.mxu0
  %v8120 = vadd.f32 %v8079, %v8119
  %v8121 = vpop.f32.mrf.mxu0
  %v8122 = vpop.f32.mrf.mxu0
  %8123 = vdwg.mxu0
  %8124 = vmatprep.subr.bf16.mxu0 %v5274
  %8125 = vmatpush1.bf16.msra.mxu0 %v5273
  %8126 = vmatprep.subr.bf16.mxu0 %v5270
  %8127 = vmatpush1.bf16.msra.mxu0 %v5269
  %8128 = vmatprep.subr.bf16.mxu0 %v5266
  %8129 = vmatpush1.bf16.msra.mxu0 %v5265
  %8130 = vmatprep.subr.bf16.mxu0 %v5262
  %8131 = vmatpush1.bf16.msra.mxu0 %v5261
  %8132 = vmatprep.subr.bf16.mxu0 %v5258
  %8133 = vmatpush1.bf16.msra.mxu0 %v5257
  %8134 = vmatprep.subr.bf16.mxu0 %v5254
  %8135 = vmatpush1.bf16.msra.mxu0 %v5253
  %8136 = vmatprep.subr.bf16.mxu0 %v5250
  %8137 = vmatpush1.bf16.msra.mxu0 %v5249
  %8138 = vmatprep.subr.bf16.mxu0 %v5246
  %8139 = vmatpush1.bf16.msra.mxu0 %v5245
  %8140 = vmatprep.subr.bf16.mxu0 %v5306
  %8141 = vmatpush2.bf16.msra.mxu0 %v5305
  %8142 = vmatprep.subr.bf16.mxu0 %v5302
  %8143 = vmatpush2.bf16.msra.mxu0 %v5301
  %8144 = vmatprep.subr.bf16.mxu0 %v5298
  %8145 = vmatpush2.bf16.msra.mxu0 %v5297
  %8146 = vmatprep.subr.bf16.mxu0 %v5294
  %8147 = vmatpush2.bf16.msra.mxu0 %v5293
  %8148 = vmatprep.subr.bf16.mxu0 %v5290
  %8149 = vmatpush2.bf16.msra.mxu0 %v5289
  %8150 = vmatprep.subr.bf16.mxu0 %v5286
  %8151 = vmatpush2.bf16.msra.mxu0 %v5285
  %8152 = vmatprep.subr.bf16.mxu0 %v5282
  %8153 = vmatpush2.bf16.msra.mxu0 %v5281
  %8154 = vmatprep.subr.bf16.mxu0 %v5278
  %8155 = vmatpush2.bf16.msra.mxu0 %v5277
  %8156 = vmatprep.mubr.bf16.mxu0 %v1282
  %8157 = vmatmul.mubr.bf16.gmra.mxu0 %v1281
  %v8158 = vpop.f32.mrf.mxu0
  %v8159 = vadd.f32 %v8118, %v8158
  %v8160 = vpop.f32.mrf.mxu0
  %v8161 = vadd.f32 %v8120, %v8160
  %v8162 = vpop.f32.mrf.mxu0
  %v8163 = vpop.f32.mrf.mxu0
  %8164 = vdwg.mxu0
  %8165 = vmatprep.subr.bf16.mxu0 %v5338
  %8166 = vmatpush1.bf16.msra.mxu0 %v5337
  %8167 = vmatprep.subr.bf16.mxu0 %v5334
  %8168 = vmatpush1.bf16.msra.mxu0 %v5333
  %8169 = vmatprep.subr.bf16.mxu0 %v5330
  %8170 = vmatpush1.bf16.msra.mxu0 %v5329
  %8171 = vmatprep.subr.bf16.mxu0 %v5326
  %8172 = vmatpush1.bf16.msra.mxu0 %v5325
  %8173 = vmatprep.subr.bf16.mxu0 %v5322
  %8174 = vmatpush1.bf16.msra.mxu0 %v5321
  %8175 = vmatprep.subr.bf16.mxu0 %v5318
  %8176 = vmatpush1.bf16.msra.mxu0 %v5317
  %8177 = vmatprep.subr.bf16.mxu0 %v5314
  %8178 = vmatpush1.bf16.msra.mxu0 %v5313
  %8179 = vmatprep.subr.bf16.mxu0 %v5310
  %8180 = vmatpush1.bf16.msra.mxu0 %v5309
  %8181 = vmatprep.subr.bf16.mxu0 %v5370
  %8182 = vmatpush2.bf16.msra.mxu0 %v5369
  %8183 = vmatprep.subr.bf16.mxu0 %v5366
  %8184 = vmatpush2.bf16.msra.mxu0 %v5365
  %8185 = vmatprep.subr.bf16.mxu0 %v5362
  %8186 = vmatpush2.bf16.msra.mxu0 %v5361
  %8187 = vmatprep.subr.bf16.mxu0 %v5358
  %8188 = vmatpush2.bf16.msra.mxu0 %v5357
  %8189 = vmatprep.subr.bf16.mxu0 %v5354
  %8190 = vmatpush2.bf16.msra.mxu0 %v5353
  %8191 = vmatprep.subr.bf16.mxu0 %v5350
  %8192 = vmatpush2.bf16.msra.mxu0 %v5349
  %8193 = vmatprep.subr.bf16.mxu0 %v5346
  %8194 = vmatpush2.bf16.msra.mxu0 %v5345
  %8195 = vmatprep.subr.bf16.mxu0 %v5342
  %8196 = vmatpush2.bf16.msra.mxu0 %v5341
  %8197 = vmatprep.mubr.bf16.mxu0 %v1284
  %8198 = vmatmul.mubr.bf16.gmra.mxu0 %v1283
  %v8199 = vpop.f32.mrf.mxu0
  %v8200 = vadd.f32 %v8159, %v8199
  %v8201 = vpop.f32.mrf.mxu0
  %v8202 = vadd.f32 %v8161, %v8201
  %v8203 = vpop.f32.mrf.mxu0
  %v8204 = vpop.f32.mrf.mxu0
  %8205 = vdwg.mxu0
  %8206 = vmatprep.subr.bf16.mxu0 %v5402
  %8207 = vmatpush1.bf16.msra.mxu0 %v5401
  %8208 = vmatprep.subr.bf16.mxu0 %v5398
  %8209 = vmatpush1.bf16.msra.mxu0 %v5397
  %8210 = vmatprep.subr.bf16.mxu0 %v5394
  %8211 = vmatpush1.bf16.msra.mxu0 %v5393
  %8212 = vmatprep.subr.bf16.mxu0 %v5390
  %8213 = vmatpush1.bf16.msra.mxu0 %v5389
  %8214 = vmatprep.subr.bf16.mxu0 %v5386
  %8215 = vmatpush1.bf16.msra.mxu0 %v5385
  %8216 = vmatprep.subr.bf16.mxu0 %v5382
  %8217 = vmatpush1.bf16.msra.mxu0 %v5381
  %8218 = vmatprep.subr.bf16.mxu0 %v5378
  %8219 = vmatpush1.bf16.msra.mxu0 %v5377
  %8220 = vmatprep.subr.bf16.mxu0 %v5374
  %8221 = vmatpush1.bf16.msra.mxu0 %v5373
  %8222 = vmatprep.subr.bf16.mxu0 %v5434
  %8223 = vmatpush2.bf16.msra.mxu0 %v5433
  %8224 = vmatprep.subr.bf16.mxu0 %v5430
  %8225 = vmatpush2.bf16.msra.mxu0 %v5429
  %8226 = vmatprep.subr.bf16.mxu0 %v5426
  %8227 = vmatpush2.bf16.msra.mxu0 %v5425
  %8228 = vmatprep.subr.bf16.mxu0 %v5422
  %8229 = vmatpush2.bf16.msra.mxu0 %v5421
  %8230 = vmatprep.subr.bf16.mxu0 %v5418
  %8231 = vmatpush2.bf16.msra.mxu0 %v5417
  %8232 = vmatprep.subr.bf16.mxu0 %v5414
  %8233 = vmatpush2.bf16.msra.mxu0 %v5413
  %8234 = vmatprep.subr.bf16.mxu0 %v5410
  %8235 = vmatpush2.bf16.msra.mxu0 %v5409
  %8236 = vmatprep.subr.bf16.mxu0 %v5406
  %8237 = vmatpush2.bf16.msra.mxu0 %v5405
  %8238 = vmatprep.mubr.bf16.mxu0 %v1286
  %8239 = vmatmul.mubr.bf16.gmra.mxu0 %v1285
  %v8240 = vpop.f32.mrf.mxu0
  %v8241 = vadd.f32 %v8200, %v8240
  %v8242 = vpop.f32.mrf.mxu0
  %v8243 = vadd.f32 %v8202, %v8242
  %v8244 = vpop.f32.mrf.mxu0
  %v8245 = vpop.f32.mrf.mxu0
  %8246 = vdwg.mxu0
  %8247 = vmatprep.subr.bf16.mxu0 %v5466
  %8248 = vmatpush1.bf16.msra.mxu0 %v5465
  %8249 = vmatprep.subr.bf16.mxu0 %v5462
  %8250 = vmatpush1.bf16.msra.mxu0 %v5461
  %8251 = vmatprep.subr.bf16.mxu0 %v5458
  %8252 = vmatpush1.bf16.msra.mxu0 %v5457
  %8253 = vmatprep.subr.bf16.mxu0 %v5454
  %8254 = vmatpush1.bf16.msra.mxu0 %v5453
  %8255 = vmatprep.subr.bf16.mxu0 %v5450
  %8256 = vmatpush1.bf16.msra.mxu0 %v5449
  %8257 = vmatprep.subr.bf16.mxu0 %v5446
  %8258 = vmatpush1.bf16.msra.mxu0 %v5445
  %8259 = vmatprep.subr.bf16.mxu0 %v5442
  %8260 = vmatpush1.bf16.msra.mxu0 %v5441
  %8261 = vmatprep.subr.bf16.mxu0 %v5438
  %8262 = vmatpush1.bf16.msra.mxu0 %v5437
  %8263 = vmatprep.subr.bf16.mxu0 %v5498
  %8264 = vmatpush2.bf16.msra.mxu0 %v5497
  %8265 = vmatprep.subr.bf16.mxu0 %v5494
  %8266 = vmatpush2.bf16.msra.mxu0 %v5493
  %8267 = vmatprep.subr.bf16.mxu0 %v5490
  %8268 = vmatpush2.bf16.msra.mxu0 %v5489
  %8269 = vmatprep.subr.bf16.mxu0 %v5486
  %8270 = vmatpush2.bf16.msra.mxu0 %v5485
  %8271 = vmatprep.subr.bf16.mxu0 %v5482
  %8272 = vmatpush2.bf16.msra.mxu0 %v5481
  %8273 = vmatprep.subr.bf16.mxu0 %v5478
  %8274 = vmatpush2.bf16.msra.mxu0 %v5477
  %8275 = vmatprep.subr.bf16.mxu0 %v5474
  %8276 = vmatpush2.bf16.msra.mxu0 %v5473
  %8277 = vmatprep.subr.bf16.mxu0 %v5470
  %8278 = vmatpush2.bf16.msra.mxu0 %v5469
  %8279 = vmatprep.mubr.bf16.mxu0 %v1288
  %8280 = vmatmul.mubr.bf16.gmra.mxu0 %v1287
  %v8281 = vpop.f32.mrf.mxu0
  %v8282 = vadd.f32 %v8241, %v8281
  %v8283 = vpop.f32.mrf.mxu0
  %v8284 = vadd.f32 %v8243, %v8283
  %v8285 = vpop.f32.mrf.mxu0
  %v8286 = vpop.f32.mrf.mxu0
  %8287 = vdwg.mxu0
  %8288 = vmatprep.subr.bf16.mxu0 %v5530
  %8289 = vmatpush1.bf16.msra.mxu0 %v5529
  %8290 = vmatprep.subr.bf16.mxu0 %v5526
  %8291 = vmatpush1.bf16.msra.mxu0 %v5525
  %8292 = vmatprep.subr.bf16.mxu0 %v5522
  %8293 = vmatpush1.bf16.msra.mxu0 %v5521
  %8294 = vmatprep.subr.bf16.mxu0 %v5518
  %8295 = vmatpush1.bf16.msra.mxu0 %v5517
  %8296 = vmatprep.subr.bf16.mxu0 %v5514
  %8297 = vmatpush1.bf16.msra.mxu0 %v5513
  %8298 = vmatprep.subr.bf16.mxu0 %v5510
  %8299 = vmatpush1.bf16.msra.mxu0 %v5509
  %8300 = vmatprep.subr.bf16.mxu0 %v5506
  %8301 = vmatpush1.bf16.msra.mxu0 %v5505
  %8302 = vmatprep.subr.bf16.mxu0 %v5502
  %8303 = vmatpush1.bf16.msra.mxu0 %v5501
  %8304 = vmatprep.subr.bf16.mxu0 %v5562
  %8305 = vmatpush2.bf16.msra.mxu0 %v5561
  %8306 = vmatprep.subr.bf16.mxu0 %v5558
  %8307 = vmatpush2.bf16.msra.mxu0 %v5557
  %8308 = vmatprep.subr.bf16.mxu0 %v5554
  %8309 = vmatpush2.bf16.msra.mxu0 %v5553
  %8310 = vmatprep.subr.bf16.mxu0 %v5550
  %8311 = vmatpush2.bf16.msra.mxu0 %v5549
  %8312 = vmatprep.subr.bf16.mxu0 %v5546
  %8313 = vmatpush2.bf16.msra.mxu0 %v5545
  %8314 = vmatprep.subr.bf16.mxu0 %v5542
  %8315 = vmatpush2.bf16.msra.mxu0 %v5541
  %8316 = vmatprep.subr.bf16.mxu0 %v5538
  %8317 = vmatpush2.bf16.msra.mxu0 %v5537
  %8318 = vmatprep.subr.bf16.mxu0 %v5534
  %8319 = vmatpush2.bf16.msra.mxu0 %v5533
  %8320 = vmatprep.mubr.bf16.mxu0 %v1290
  %8321 = vmatmul.mubr.bf16.gmra.mxu0 %v1289
  %v8322 = vpop.f32.mrf.mxu0
  %v8323 = vadd.f32 %v8282, %v8322
  %v8324 = vpop.f32.mrf.mxu0
  %v8325 = vadd.f32 %v8284, %v8324
  %v8326 = vpop.f32.mrf.mxu0
  %v8327 = vpop.f32.mrf.mxu0
  %8328 = vdwg.mxu0
  %8329 = vmatprep.subr.bf16.mxu0 %v5594
  %8330 = vmatpush1.bf16.msra.mxu0 %v5593
  %8331 = vmatprep.subr.bf16.mxu0 %v5590
  %8332 = vmatpush1.bf16.msra.mxu0 %v5589
  %8333 = vmatprep.subr.bf16.mxu0 %v5586
  %8334 = vmatpush1.bf16.msra.mxu0 %v5585
  %8335 = vmatprep.subr.bf16.mxu0 %v5582
  %8336 = vmatpush1.bf16.msra.mxu0 %v5581
  %8337 = vmatprep.subr.bf16.mxu0 %v5578
  %8338 = vmatpush1.bf16.msra.mxu0 %v5577
  %8339 = vmatprep.subr.bf16.mxu0 %v5574
  %8340 = vmatpush1.bf16.msra.mxu0 %v5573
  %8341 = vmatprep.subr.bf16.mxu0 %v5570
  %8342 = vmatpush1.bf16.msra.mxu0 %v5569
  %8343 = vmatprep.subr.bf16.mxu0 %v5566
  %8344 = vmatpush1.bf16.msra.mxu0 %v5565
  %8345 = vmatprep.subr.bf16.mxu0 %v5626
  %8346 = vmatpush2.bf16.msra.mxu0 %v5625
  %8347 = vmatprep.subr.bf16.mxu0 %v5622
  %8348 = vmatpush2.bf16.msra.mxu0 %v5621
  %8349 = vmatprep.subr.bf16.mxu0 %v5618
  %8350 = vmatpush2.bf16.msra.mxu0 %v5617
  %8351 = vmatprep.subr.bf16.mxu0 %v5614
  %8352 = vmatpush2.bf16.msra.mxu0 %v5613
  %8353 = vmatprep.subr.bf16.mxu0 %v5610
  %8354 = vmatpush2.bf16.msra.mxu0 %v5609
  %8355 = vmatprep.subr.bf16.mxu0 %v5606
  %8356 = vmatpush2.bf16.msra.mxu0 %v5605
  %8357 = vmatprep.subr.bf16.mxu0 %v5602
  %8358 = vmatpush2.bf16.msra.mxu0 %v5601
  %8359 = vmatprep.subr.bf16.mxu0 %v5598
  %8360 = vmatpush2.bf16.msra.mxu0 %v5597
  %8361 = vmatprep.mubr.bf16.mxu0 %v1292
  %8362 = vmatmul.mubr.bf16.gmra.mxu0 %v1291
  %v8363 = vpop.f32.mrf.mxu0
  %v8364 = vadd.f32 %v8323, %v8363
  %v8365 = vpop.f32.mrf.mxu0
  %v8366 = vadd.f32 %v8325, %v8365
  %v8367 = vpop.f32.mrf.mxu0
  %v8368 = vpop.f32.mrf.mxu0
  %8369 = vdwg.mxu0
  %8370 = vmatprep.subr.bf16.mxu0 %v5658
  %8371 = vmatpush1.bf16.msra.mxu0 %v5657
  %8372 = vmatprep.subr.bf16.mxu0 %v5654
  %8373 = vmatpush1.bf16.msra.mxu0 %v5653
  %8374 = vmatprep.subr.bf16.mxu0 %v5650
  %8375 = vmatpush1.bf16.msra.mxu0 %v5649
  %8376 = vmatprep.subr.bf16.mxu0 %v5646
  %8377 = vmatpush1.bf16.msra.mxu0 %v5645
  %8378 = vmatprep.subr.bf16.mxu0 %v5642
  %8379 = vmatpush1.bf16.msra.mxu0 %v5641
  %8380 = vmatprep.subr.bf16.mxu0 %v5638
  %8381 = vmatpush1.bf16.msra.mxu0 %v5637
  %8382 = vmatprep.subr.bf16.mxu0 %v5634
  %8383 = vmatpush1.bf16.msra.mxu0 %v5633
  %8384 = vmatprep.subr.bf16.mxu0 %v5630
  %8385 = vmatpush1.bf16.msra.mxu0 %v5629
  %8386 = vmatprep.subr.bf16.mxu0 %v5690
  %8387 = vmatpush2.bf16.msra.mxu0 %v5689
  %8388 = vmatprep.subr.bf16.mxu0 %v5686
  %8389 = vmatpush2.bf16.msra.mxu0 %v5685
  %8390 = vmatprep.subr.bf16.mxu0 %v5682
  %8391 = vmatpush2.bf16.msra.mxu0 %v5681
  %8392 = vmatprep.subr.bf16.mxu0 %v5678
  %8393 = vmatpush2.bf16.msra.mxu0 %v5677
  %8394 = vmatprep.subr.bf16.mxu0 %v5674
  %8395 = vmatpush2.bf16.msra.mxu0 %v5673
  %8396 = vmatprep.subr.bf16.mxu0 %v5670
  %8397 = vmatpush2.bf16.msra.mxu0 %v5669
  %8398 = vmatprep.subr.bf16.mxu0 %v5666
  %8399 = vmatpush2.bf16.msra.mxu0 %v5665
  %8400 = vmatprep.subr.bf16.mxu0 %v5662
  %8401 = vmatpush2.bf16.msra.mxu0 %v5661
  %8402 = vmatprep.mubr.bf16.mxu0 %v1294
  %8403 = vmatmul.mubr.bf16.gmra.mxu0 %v1293
  %v8404 = vpop.f32.mrf.mxu0
  %v8405 = vadd.f32 %v8364, %v8404
  %v8406 = vpop.f32.mrf.mxu0
  %v8407 = vadd.f32 %v8366, %v8406
  %v8408 = vpop.f32.mrf.mxu0
  %v8409 = vpop.f32.mrf.mxu0
  %8410 = vdwg.mxu0
  %8411 = vmatprep.subr.bf16.mxu0 %v5722
  %8412 = vmatpush1.bf16.msra.mxu0 %v5721
  %8413 = vmatprep.subr.bf16.mxu0 %v5718
  %8414 = vmatpush1.bf16.msra.mxu0 %v5717
  %8415 = vmatprep.subr.bf16.mxu0 %v5714
  %8416 = vmatpush1.bf16.msra.mxu0 %v5713
  %8417 = vmatprep.subr.bf16.mxu0 %v5710
  %8418 = vmatpush1.bf16.msra.mxu0 %v5709
  %8419 = vmatprep.subr.bf16.mxu0 %v5706
  %8420 = vmatpush1.bf16.msra.mxu0 %v5705
  %8421 = vmatprep.subr.bf16.mxu0 %v5702
  %8422 = vmatpush1.bf16.msra.mxu0 %v5701
  %8423 = vmatprep.subr.bf16.mxu0 %v5698
  %8424 = vmatpush1.bf16.msra.mxu0 %v5697
  %8425 = vmatprep.subr.bf16.mxu0 %v5694
  %8426 = vmatpush1.bf16.msra.mxu0 %v5693
  %8427 = vmatprep.subr.bf16.mxu0 %v5754
  %8428 = vmatpush2.bf16.msra.mxu0 %v5753
  %8429 = vmatprep.subr.bf16.mxu0 %v5750
  %8430 = vmatpush2.bf16.msra.mxu0 %v5749
  %8431 = vmatprep.subr.bf16.mxu0 %v5746
  %8432 = vmatpush2.bf16.msra.mxu0 %v5745
  %8433 = vmatprep.subr.bf16.mxu0 %v5742
  %8434 = vmatpush2.bf16.msra.mxu0 %v5741
  %8435 = vmatprep.subr.bf16.mxu0 %v5738
  %8436 = vmatpush2.bf16.msra.mxu0 %v5737
  %8437 = vmatprep.subr.bf16.mxu0 %v5734
  %8438 = vmatpush2.bf16.msra.mxu0 %v5733
  %8439 = vmatprep.subr.bf16.mxu0 %v5730
  %8440 = vmatpush2.bf16.msra.mxu0 %v5729
  %8441 = vmatprep.subr.bf16.mxu0 %v5726
  %8442 = vmatpush2.bf16.msra.mxu0 %v5725
  %8443 = vmatprep.mubr.bf16.mxu0 %v1296
  %8444 = vmatmul.mubr.bf16.gmra.mxu0 %v1295
  %v8445 = vpop.f32.mrf.mxu0
  %v8446 = vadd.f32 %v8405, %v8445
  %v8447 = vpop.f32.mrf.mxu0
  %v8448 = vadd.f32 %v8407, %v8447
  %v8449 = vpop.f32.mrf.mxu0
  %v8450 = vpop.f32.mrf.mxu0
  %8451 = vdwg.mxu0
  %8452 = vmatprep.subr.bf16.mxu0 %v5786
  %8453 = vmatpush1.bf16.msra.mxu0 %v5785
  %8454 = vmatprep.subr.bf16.mxu0 %v5782
  %8455 = vmatpush1.bf16.msra.mxu0 %v5781
  %8456 = vmatprep.subr.bf16.mxu0 %v5778
  %8457 = vmatpush1.bf16.msra.mxu0 %v5777
  %8458 = vmatprep.subr.bf16.mxu0 %v5774
  %8459 = vmatpush1.bf16.msra.mxu0 %v5773
  %8460 = vmatprep.subr.bf16.mxu0 %v5770
  %8461 = vmatpush1.bf16.msra.mxu0 %v5769
  %8462 = vmatprep.subr.bf16.mxu0 %v5766
  %8463 = vmatpush1.bf16.msra.mxu0 %v5765
  %8464 = vmatprep.subr.bf16.mxu0 %v5762
  %8465 = vmatpush1.bf16.msra.mxu0 %v5761
  %8466 = vmatprep.subr.bf16.mxu0 %v5758
  %8467 = vmatpush1.bf16.msra.mxu0 %v5757
  %8468 = vmatprep.subr.bf16.mxu0 %v5818
  %8469 = vmatpush2.bf16.msra.mxu0 %v5817
  %8470 = vmatprep.subr.bf16.mxu0 %v5814
  %8471 = vmatpush2.bf16.msra.mxu0 %v5813
  %8472 = vmatprep.subr.bf16.mxu0 %v5810
  %8473 = vmatpush2.bf16.msra.mxu0 %v5809
  %8474 = vmatprep.subr.bf16.mxu0 %v5806
  %8475 = vmatpush2.bf16.msra.mxu0 %v5805
  %8476 = vmatprep.subr.bf16.mxu0 %v5802
  %8477 = vmatpush2.bf16.msra.mxu0 %v5801
  %8478 = vmatprep.subr.bf16.mxu0 %v5798
  %8479 = vmatpush2.bf16.msra.mxu0 %v5797
  %8480 = vmatprep.subr.bf16.mxu0 %v5794
  %8481 = vmatpush2.bf16.msra.mxu0 %v5793
  %8482 = vmatprep.subr.bf16.mxu0 %v5790
  %8483 = vmatpush2.bf16.msra.mxu0 %v5789
  %8484 = vmatprep.mubr.bf16.mxu0 %v1298
  %8485 = vmatmul.mubr.bf16.gmra.mxu0 %v1297
  %v8486 = vpop.f32.mrf.mxu0
  %v8487 = vadd.f32 %v8446, %v8486
  %v8488 = vpop.f32.mrf.mxu0
  %v8489 = vadd.f32 %v8448, %v8488
  %v8490 = vpop.f32.mrf.mxu0
  %v8491 = vpop.f32.mrf.mxu0
  %8492 = vdwg.mxu0
  %8493 = vmatprep.subr.bf16.mxu0 %v5850
  %8494 = vmatpush1.bf16.msra.mxu0 %v5849
  %8495 = vmatprep.subr.bf16.mxu0 %v5846
  %8496 = vmatpush1.bf16.msra.mxu0 %v5845
  %8497 = vmatprep.subr.bf16.mxu0 %v5842
  %8498 = vmatpush1.bf16.msra.mxu0 %v5841
  %8499 = vmatprep.subr.bf16.mxu0 %v5838
  %8500 = vmatpush1.bf16.msra.mxu0 %v5837
  %8501 = vmatprep.subr.bf16.mxu0 %v5834
  %8502 = vmatpush1.bf16.msra.mxu0 %v5833
  %8503 = vmatprep.subr.bf16.mxu0 %v5830
  %8504 = vmatpush1.bf16.msra.mxu0 %v5829
  %8505 = vmatprep.subr.bf16.mxu0 %v5826
  %8506 = vmatpush1.bf16.msra.mxu0 %v5825
  %8507 = vmatprep.subr.bf16.mxu0 %v5822
  %8508 = vmatpush1.bf16.msra.mxu0 %v5821
  %8509 = vmatprep.subr.bf16.mxu0 %v5882
  %8510 = vmatpush2.bf16.msra.mxu0 %v5881
  %8511 = vmatprep.subr.bf16.mxu0 %v5878
  %8512 = vmatpush2.bf16.msra.mxu0 %v5877
  %8513 = vmatprep.subr.bf16.mxu0 %v5874
  %8514 = vmatpush2.bf16.msra.mxu0 %v5873
  %8515 = vmatprep.subr.bf16.mxu0 %v5870
  %8516 = vmatpush2.bf16.msra.mxu0 %v5869
  %8517 = vmatprep.subr.bf16.mxu0 %v5866
  %8518 = vmatpush2.bf16.msra.mxu0 %v5865
  %8519 = vmatprep.subr.bf16.mxu0 %v5862
  %8520 = vmatpush2.bf16.msra.mxu0 %v5861
  %8521 = vmatprep.subr.bf16.mxu0 %v5858
  %8522 = vmatpush2.bf16.msra.mxu0 %v5857
  %8523 = vmatprep.subr.bf16.mxu0 %v5854
  %8524 = vmatpush2.bf16.msra.mxu0 %v5853
  %8525 = vmatprep.mubr.bf16.mxu0 %v1300
  %8526 = vmatmul.mubr.bf16.gmra.mxu0 %v1299
  %v8527 = vpop.f32.mrf.mxu0
  %v8528 = vadd.f32 %v8487, %v8527
  %v8529 = vpop.f32.mrf.mxu0
  %v8530 = vadd.f32 %v8489, %v8529
  %v8531 = vpop.f32.mrf.mxu0
  %v8532 = vpop.f32.mrf.mxu0
  %8533 = vdwg.mxu0
  %8534 = vmatprep.subr.bf16.mxu0 %v5914
  %8535 = vmatpush1.bf16.msra.mxu0 %v5913
  %8536 = vmatprep.subr.bf16.mxu0 %v5910
  %8537 = vmatpush1.bf16.msra.mxu0 %v5909
  %8538 = vmatprep.subr.bf16.mxu0 %v5906
  %8539 = vmatpush1.bf16.msra.mxu0 %v5905
  %8540 = vmatprep.subr.bf16.mxu0 %v5902
  %8541 = vmatpush1.bf16.msra.mxu0 %v5901
  %8542 = vmatprep.subr.bf16.mxu0 %v5898
  %8543 = vmatpush1.bf16.msra.mxu0 %v5897
  %8544 = vmatprep.subr.bf16.mxu0 %v5894
  %8545 = vmatpush1.bf16.msra.mxu0 %v5893
  %8546 = vmatprep.subr.bf16.mxu0 %v5890
  %8547 = vmatpush1.bf16.msra.mxu0 %v5889
  %8548 = vmatprep.subr.bf16.mxu0 %v5886
  %8549 = vmatpush1.bf16.msra.mxu0 %v5885
  %8550 = vmatprep.subr.bf16.mxu0 %v5946
  %8551 = vmatpush2.bf16.msra.mxu0 %v5945
  %8552 = vmatprep.subr.bf16.mxu0 %v5942
  %8553 = vmatpush2.bf16.msra.mxu0 %v5941
  %8554 = vmatprep.subr.bf16.mxu0 %v5938
  %8555 = vmatpush2.bf16.msra.mxu0 %v5937
  %8556 = vmatprep.subr.bf16.mxu0 %v5934
  %8557 = vmatpush2.bf16.msra.mxu0 %v5933
  %8558 = vmatprep.subr.bf16.mxu0 %v5930
  %8559 = vmatpush2.bf16.msra.mxu0 %v5929
  %8560 = vmatprep.subr.bf16.mxu0 %v5926
  %8561 = vmatpush2.bf16.msra.mxu0 %v5925
  %8562 = vmatprep.subr.bf16.mxu0 %v5922
  %8563 = vmatpush2.bf16.msra.mxu0 %v5921
  %8564 = vmatprep.subr.bf16.mxu0 %v5918
  %8565 = vmatpush2.bf16.msra.mxu0 %v5917
  %8566 = vmatprep.mubr.bf16.mxu0 %v1302
  %8567 = vmatmul.mubr.bf16.gmra.mxu0 %v1301
  %v8568 = vpop.f32.mrf.mxu0
  %v8569 = vadd.f32 %v8528, %v8568
  %v8570 = vpop.f32.mrf.mxu0
  %v8571 = vadd.f32 %v8530, %v8570
  %v8572 = vpop.f32.mrf.mxu0
  %v8573 = vpop.f32.mrf.mxu0
  %8574 = vdwg.mxu0
  %v8575 = vmax.f32 %v7831, 0.0
  %v8576 = vmax.f32 %v7833, 0.0
  %v8577 = vmax.f32 %v8569, 0.0
  %v8578 = vmax.f32 %v8571, 0.0
  %v8579 = vpack.c.bf16 %v8575, %v8575
  %v8580 = vpack.c.bf16 %v8576, %v8576
  %v8581 = vpack.c.bf16 %v8577, %v8577
  %v8582 = vpack.c.bf16 %v8578, %v8578
  %v8583 = vld [vmem:[%s3] sm:$0xf]
  %v8584 = vld [vmem:[%s3 + $0x4] sm:$0xf]
  %v8585 = vld [vmem:[%s3 + $0x8] sm:$0xf]
  %v8586 = vld [vmem:[%s3 + $0xc] sm:$0xf]
  %v8587 = vld [vmem:[%s3 + $0x10] sm:$0xf]
  %v8588 = vld [vmem:[%s3 + $0x14] sm:$0xf]
  %v8589 = vld [vmem:[%s3 + $0x18] sm:$0xf]
  %v8590 = vld [vmem:[%s3 + $0x1c] sm:$0xf]
  %v8591 = vld [vmem:[%s3 + $0x20] sm:$0xf]
  %v8592 = vld [vmem:[%s3 + $0x24] sm:$0xf]
  %v8593 = vld [vmem:[%s3 + $0x28] sm:$0xf]
  %v8594 = vld [vmem:[%s3 + $0x2c] sm:$0xf]
  %v8595 = vld [vmem:[%s3 + $0x30] sm:$0xf]
  %v8596 = vld [vmem:[%s3 + $0x34] sm:$0xf]
  %v8597 = vld [vmem:[%s3 + $0x38] sm:$0xf]
  %v8598 = vld [vmem:[%s3 + $0x3c] sm:$0xf]
  %v8599 = vld [vmem:[%s3 + $0x40] sm:$0xf]
  %v8600 = vld [vmem:[%s3 + $0x44] sm:$0xf]
  %v8601 = vld [vmem:[%s3 + $0x48] sm:$0xf]
  %v8602 = vld [vmem:[%s3 + $0x4c] sm:$0xf]
  %v8603 = vld [vmem:[%s3 + $0x50] sm:$0xf]
  %v8604 = vld [vmem:[%s3 + $0x54] sm:$0xf]
  %v8605 = vld [vmem:[%s3 + $0x58] sm:$0xf]
  %v8606 = vld [vmem:[%s3 + $0x5c] sm:$0xf]
  %v8607 = vld [vmem:[%s3 + $0x60] sm:$0xf]
  %v8608 = vld [vmem:[%s3 + $0x64] sm:$0xf]
  %v8609 = vld [vmem:[%s3 + $0x68] sm:$0xf]
  %v8610 = vld [vmem:[%s3 + $0x6c] sm:$0xf]
  %v8611 = vld [vmem:[%s3 + $0x70] sm:$0xf]
  %v8612 = vld [vmem:[%s3 + $0x74] sm:$0xf]
  %v8613 = vld [vmem:[%s3 + $0x78] sm:$0xf]
  %v8614 = vld [vmem:[%s3 + $0x7c] sm:$0xf]
  %v8615 = vld [vmem:[%s3 + $0x80] sm:$0xf]
  %v8616 = vld [vmem:[%s3 + $0x84] sm:$0xf]
  %v8617 = vld [vmem:[%s3 + $0x88] sm:$0xf]
  %v8618 = vld [vmem:[%s3 + $0x8c] sm:$0xf]
  %v8619 = vld [vmem:[%s3 + $0x90] sm:$0xf]
  %v8620 = vld [vmem:[%s3 + $0x94] sm:$0xf]
  %v8621 = vld [vmem:[%s3 + $0x98] sm:$0xf]
  %v8622 = vld [vmem:[%s3 + $0x9c] sm:$0xf]
  %v8623 = vld [vmem:[%s3 + $0xa0] sm:$0xf]
  %v8624 = vld [vmem:[%s3 + $0xa4] sm:$0xf]
  %v8625 = vld [vmem:[%s3 + $0xa8] sm:$0xf]
  %v8626 = vld [vmem:[%s3 + $0xac] sm:$0xf]
  %v8627 = vld [vmem:[%s3 + $0xb0] sm:$0xf]
  %v8628 = vld [vmem:[%s3 + $0xb4] sm:$0xf]
  %v8629 = vld [vmem:[%s3 + $0xb8] sm:$0xf]
  %v8630 = vld [vmem:[%s3 + $0xbc] sm:$0xf]
  %v8631 = vld [vmem:[%s3 + $0xc0] sm:$0xf]
  %v8632 = vld [vmem:[%s3 + $0xc4] sm:$0xf]
  %v8633 = vld [vmem:[%s3 + $0xc8] sm:$0xf]
  %v8634 = vld [vmem:[%s3 + $0xcc] sm:$0xf]
  %v8635 = vld [vmem:[%s3 + $0xd0] sm:$0xf]
  %v8636 = vld [vmem:[%s3 + $0xd4] sm:$0xf]
  %v8637 = vld [vmem:[%s3 + $0xd8] sm:$0xf]
  %v8638 = vld [vmem:[%s3 + $0xdc] sm:$0xf]
  %v8639 = vld [vmem:[%s3 + $0xe0] sm:$0xf]
  %v8640 = vld [vmem:[%s3 + $0xe4] sm:$0xf]
  %v8641 = vld [vmem:[%s3 + $0xe8] sm:$0xf]
  %v8642 = vld [vmem:[%s3 + $0xec] sm:$0xf]
  %v8643 = vld [vmem:[%s3 + $0xf0] sm:$0xf]
  %v8644 = vld [vmem:[%s3 + $0xf4] sm:$0xf]
  %v8645 = vld [vmem:[%s3 + $0xf8] sm:$0xf]
  %v8646 = vld [vmem:[%s3 + $0xfc] sm:$0xf]
  %v8647 = vld [vmem:[%s4] sm:$0x1]
  %v8649 = vlaneseq
  %v8650 = vshrl.u32 %v8649, 7
  %v8651 = vsub.s32 0, %v8650
  %v8652 = vrot.slane %v8647, %v8651
  %v8718 = vunpack.c.l.b16 %v8583
  %v8719 = vunpack.c.l.b16 %v8584
  %v8720 = vunpack.c.l.b16 %v8585
  %v8721 = vunpack.c.l.b16 %v8586
  %v8722 = vunpack.c.l.b16 %v8587
  %v8723 = vunpack.c.l.b16 %v8588
  %v8724 = vunpack.c.l.b16 %v8589
  %v8725 = vunpack.c.l.b16 %v8590
  %v8726 = vunpack.c.l.b16 %v8591
  %v8727 = vunpack.c.l.b16 %v8592
  %v8728 = vunpack.c.l.b16 %v8593
  %v8729 = vunpack.c.l.b16 %v8594
  %v8730 = vunpack.c.l.b16 %v8595
  %v8731 = vunpack.c.l.b16 %v8596
  %v8732 = vunpack.c.l.b16 %v8597
  %v8733 = vunpack.c.l.b16 %v8598
  %v8734 = vunpack.c.l.b16 %v8599
  %v8735 = vunpack.c.l.b16 %v8600
  %v8736 = vunpack.c.l.b16 %v8601
  %v8737 = vunpack.c.l.b16 %v8602
  %v8738 = vunpack.c.l.b16 %v8603
  %v8739 = vunpack.c.l.b16 %v8604
  %v8740 = vunpack.c.l.b16 %v8605
  %v8741 = vunpack.c.l.b16 %v8606
  %v8742 = vunpack.c.l.b16 %v8607
  %v8743 = vunpack.c.l.b16 %v8608
  %v8744 = vunpack.c.l.b16 %v8609
  %v8745 = vunpack.c.l.b16 %v8610
  %v8746 = vunpack.c.l.b16 %v8611
  %v8747 = vunpack.c.l.b16 %v8612
  %v8748 = vunpack.c.l.b16 %v8613
  %v8749 = vunpack.c.l.b16 %v8614
  %v8750 = vunpack.c.l.b16 %v8615
  %v8751 = vunpack.c.l.b16 %v8616
  %v8752 = vunpack.c.l.b16 %v8617
  %v8753 = vunpack.c.l.b16 %v8618
  %v8754 = vunpack.c.l.b16 %v8619
  %v8755 = vunpack.c.l.b16 %v8620
  %v8756 = vunpack.c.l.b16 %v8621
  %v8757 = vunpack.c.l.b16 %v8622
  %v8758 = vunpack.c.l.b16 %v8623
  %v8759 = vunpack.c.l.b16 %v8624
  %v8760 = vunpack.c.l.b16 %v8625
  %v8761 = vunpack.c.l.b16 %v8626
  %v8762 = vunpack.c.l.b16 %v8627
  %v8763 = vunpack.c.l.b16 %v8628
  %v8764 = vunpack.c.l.b16 %v8629
  %v8765 = vunpack.c.l.b16 %v8630
  %v8766 = vunpack.c.l.b16 %v8631
  %v8767 = vunpack.c.l.b16 %v8632
  %v8768 = vunpack.c.l.b16 %v8633
  %v8769 = vunpack.c.l.b16 %v8634
  %v8770 = vunpack.c.l.b16 %v8635
  %v8771 = vunpack.c.l.b16 %v8636
  %v8772 = vunpack.c.l.b16 %v8637
  %v8773 = vunpack.c.l.b16 %v8638
  %v8774 = vunpack.c.l.b16 %v8639
  %v8775 = vunpack.c.l.b16 %v8640
  %v8776 = vunpack.c.l.b16 %v8641
  %v8777 = vunpack.c.l.b16 %v8642
  %v8778 = vunpack.c.l.b16 %v8643
  %v8779 = vunpack.c.l.b16 %v8644
  %v8780 = vunpack.c.l.b16 %v8645
  %v8781 = vunpack.c.l.b16 %v8646
  %v8782 = vpack.c.b16 %v8719, %v8718
  %v8783 = vpack.c.b16 %v8721, %v8720
  %v8784 = vpack.c.b16 %v8723, %v8722
  %v8785 = vpack.c.b16 %v8725, %v8724
  %v8786 = vpack.c.b16 %v8727, %v8726
  %v8787 = vpack.c.b16 %v8729, %v8728
  %v8788 = vpack.c.b16 %v8731, %v8730
  %v8789 = vpack.c.b16 %v8733, %v8732
  %v8790 = vpack.c.b16 %v8735, %v8734
  %v8791 = vpack.c.b16 %v8737, %v8736
  %v8792 = vpack.c.b16 %v8739, %v8738
  %v8793 = vpack.c.b16 %v8741, %v8740
  %v8794 = vpack.c.b16 %v8743, %v8742
  %v8795 = vpack.c.b16 %v8745, %v8744
  %v8796 = vpack.c.b16 %v8747, %v8746
  %v8797 = vpack.c.b16 %v8749, %v8748
  %v8798 = vpack.c.b16 %v8751, %v8750
  %v8799 = vpack.c.b16 %v8753, %v8752
  %v8800 = vpack.c.b16 %v8755, %v8754
  %v8801 = vpack.c.b16 %v8757, %v8756
  %v8802 = vpack.c.b16 %v8759, %v8758
  %v8803 = vpack.c.b16 %v8761, %v8760
  %v8804 = vpack.c.b16 %v8763, %v8762
  %v8805 = vpack.c.b16 %v8765, %v8764
  %v8806 = vpack.c.b16 %v8767, %v8766
  %v8807 = vpack.c.b16 %v8769, %v8768
  %v8808 = vpack.c.b16 %v8771, %v8770
  %v8809 = vpack.c.b16 %v8773, %v8772
  %v8810 = vpack.c.b16 %v8775, %v8774
  %v8811 = vpack.c.b16 %v8777, %v8776
  %v8812 = vpack.c.b16 %v8779, %v8778
  %v8813 = vpack.c.b16 %v8781, %v8780
  %8846 = vmatprep.subr.bf16.mxu0 0
  %8847 = vmatpush1.bf16.msra.mxu0 %v8789
  %8848 = vmatprep.subr.bf16.mxu0 0
  %8849 = vmatpush1.bf16.msra.mxu0 %v8788
  %8850 = vmatprep.subr.bf16.mxu0 0
  %8851 = vmatpush1.bf16.msra.mxu0 %v8787
  %8852 = vmatprep.subr.bf16.mxu0 0
  %8853 = vmatpush1.bf16.msra.mxu0 %v8786
  %8854 = vmatprep.subr.bf16.mxu0 0
  %8855 = vmatpush1.bf16.msra.mxu0 %v8785
  %8856 = vmatprep.subr.bf16.mxu0 0
  %8857 = vmatpush1.bf16.msra.mxu0 %v8784
  %8858 = vmatprep.subr.bf16.mxu0 0
  %8859 = vmatpush1.bf16.msra.mxu0 %v8783
  %8860 = vmatprep.subr.bf16.mxu0 0
  %8861 = vmatpush1.bf16.msra.mxu0 %v8782
  %8862 = vmatprep.subr.bf16.mxu0 0
  %8863 = vmatpush2.bf16.msra.mxu0 %v8797
  %8864 = vmatprep.subr.bf16.mxu0 0
  %8865 = vmatpush2.bf16.msra.mxu0 %v8796
  %8866 = vmatprep.subr.bf16.mxu0 0
  %8867 = vmatpush2.bf16.msra.mxu0 %v8795
  %8868 = vmatprep.subr.bf16.mxu0 0
  %8869 = vmatpush2.bf16.msra.mxu0 %v8794
  %8870 = vmatprep.subr.bf16.mxu0 0
  %8871 = vmatpush2.bf16.msra.mxu0 %v8793
  %8872 = vmatprep.subr.bf16.mxu0 0
  %8873 = vmatpush2.bf16.msra.mxu0 %v8792
  %8874 = vmatprep.subr.bf16.mxu0 0
  %8875 = vmatpush2.bf16.msra.mxu0 %v8791
  %8876 = vmatprep.subr.bf16.mxu0 0
  %8877 = vmatpush2.bf16.msra.mxu0 %v8790
  %8878 = vmatprep.mubr.bf16.mxu0 %v8580
  %8879 = vmatmul.mubr.bf16.gmra.mxu0 %v8579
  %v8880 = vpop.f32.mrf.mxu0
  %v8881 = vadd.f32 %v8652, %v8880
  %v8882 = vpop.f32.mrf.mxu0
  %v8883 = vpop.f32.mrf.mxu0
  %v8884 = vpop.f32.mrf.mxu0
  %8885 = vdwg.mxu0
  %8886 = vmatprep.subr.bf16.mxu0 0
  %8887 = vmatpush1.bf16.msra.mxu0 %v8805
  %8888 = vmatprep.subr.bf16.mxu0 0
  %8889 = vmatpush1.bf16.msra.mxu0 %v8804
  %8890 = vmatprep.subr.bf16.mxu0 0
  %8891 = vmatpush1.bf16.msra.mxu0 %v8803
  %8892 = vmatprep.subr.bf16.mxu0 0
  %8893 = vmatpush1.bf16.msra.mxu0 %v8802
  %8894 = vmatprep.subr.bf16.mxu0 0
  %8895 = vmatpush1.bf16.msra.mxu0 %v8801
  %8896 = vmatprep.subr.bf16.mxu0 0
  %8897 = vmatpush1.bf16.msra.mxu0 %v8800
  %8898 = vmatprep.subr.bf16.mxu0 0
  %8899 = vmatpush1.bf16.msra.mxu0 %v8799
  %8900 = vmatprep.subr.bf16.mxu0 0
  %8901 = vmatpush1.bf16.msra.mxu0 %v8798
  %8902 = vmatprep.subr.bf16.mxu0 0
  %8903 = vmatpush2.bf16.msra.mxu0 %v8813
  %8904 = vmatprep.subr.bf16.mxu0 0
  %8905 = vmatpush2.bf16.msra.mxu0 %v8812
  %8906 = vmatprep.subr.bf16.mxu0 0
  %8907 = vmatpush2.bf16.msra.mxu0 %v8811
  %8908 = vmatprep.subr.bf16.mxu0 0
  %8909 = vmatpush2.bf16.msra.mxu0 %v8810
  %8910 = vmatprep.subr.bf16.mxu0 0
  %8911 = vmatpush2.bf16.msra.mxu0 %v8809
  %8912 = vmatprep.subr.bf16.mxu0 0
  %8913 = vmatpush2.bf16.msra.mxu0 %v8808
  %8914 = vmatprep.subr.bf16.mxu0 0
  %8915 = vmatpush2.bf16.msra.mxu0 %v8807
  %8916 = vmatprep.subr.bf16.mxu0 0
  %8917 = vmatpush2.bf16.msra.mxu0 %v8806
  %8918 = vmatprep.mubr.bf16.mxu0 %v8582
  %8919 = vmatmul.mubr.bf16.gmra.mxu0 %v8581
  %v8920 = vpop.f32.mrf.mxu0
  %v8921 = vadd.f32 %v8881, %v8920
  %v8922 = vpop.f32.mrf.mxu0
  %v8923 = vpop.f32.mrf.mxu0
  %v8924 = vpop.f32.mrf.mxu0
  %8925 = vdwg.mxu0
  %8926 = vmax.xlane.f32.xlu0 %v8921
  %v8927 = vpop.xlane.xlu0 %8926
  %v8928 = vsub.f32 %v8921, %v8927
  %v8929 = vmul.f32 %v8928, 1.442695
  %v8930 = vpow.pop %v8929
  %8931 = vadd.xlane.f32.xlu0 %v8930
  %v8932 = vpop.xlane.xlu0 %8931
  %v8933 = vrcp.pop %v8932
  %v8934 = vmul.f32 %v8930, %v8933
  %8935 = vst [vmem:[%s5] sm:$0xff] %v8934
  // Predicated region
  $region22: #{neural_network_forward.3} parent=0 // pred_check
    _
  $region23: #{neural_network_forward.3} parent=0 // pred_check_branch
    %8937 = sbr.rel (0) target = $region25
  $region24: #{neural_network_forward.3} parent=0 // pred_region
    _
  $region25: #{neural_network_forward.3} parent=0 // pred_fallthru
    _
  // Predicated region
  $region26: #{neural_network_forward.3} parent=0 // pred_check
    _
  $region27: #{neural_network_forward.3} parent=0 // pred_check_branch
    %8939 = sbr.rel (0) target = $region29
  $region28: #{neural_network_forward.3} parent=0 // pred_region
    _
  $region29: #{neural_network_forward.3} parent=0 // pred_fallthru
    _

</llo_original>
